<compile_context>
chip_gen: v7x
topology: tpu7x:2x2x1
jax: 0.10.0
libtpu: 0.0.40
codegen_flags: <defaults>
</compile_context>

<pallas_src>
import math
import jax
import jax.numpy as jnp
from jax.experimental import pallas as pl
from jax.experimental.pallas import tpu as pltpu

# ------------------------- model config (small, TPU-friendly) -----------------
D_MODEL = 32
NUM_HEADS = 4
HEAD_DIM = D_MODEL // NUM_HEADS
DIM_FF = 64
NUM_LAYERS = 2
VOCAB = 64
MAX_LEN = 16

PACKED_ORDER = ["attn_w", "attn_b", "attn_wo", "attn_bo",
                "w1", "b1", "w2", "b2", "ln_g", "ln_b", "fc_w", "fc_b"]


# ------------------------------ static index helpers ---------------------------
def _qkv_idx(l, a, p, h):          # (layer, self/cross, q/k/v, head) -> flat
    return ((l * 2 + a) * 3 + p) * NUM_HEADS + h


def _wo_idx(l, a, h):
    return (l * 2 + a) * NUM_HEADS + h


# ------------------------------ in-kernel helpers ------------------------------
def _layer_norm(x, g, b, eps=1e-5):
    mu = jnp.mean(x, axis=-1, keepdims=True)
    var = jnp.mean(jnp.square(x - mu), axis=-1, keepdims=True)
    return (x - mu) * jax.lax.rsqrt(var + eps) * g + b


# --------------------------------- fused kernel --------------------------------
def decoder_fwd_kernel(tgt_ref, mem_ref, pos_ref,
                       attn_w, attn_b, attn_wo, attn_bo,
                       w1_ref, b1_ref, w2_ref, b2_ref,
                       lng_ref, lnb_ref, fcw_ref, fcb_ref,
                       out_ref):
    x = tgt_ref[...] + pos_ref[...]          # (T, D) positional-encoding add
    mem = mem_ref[...]                       # (S, D)
    T = x.shape[0]

    # causal additive mask built in-kernel (iota + where, no HBM operand / DMA)
    row = jax.lax.broadcasted_iota(jnp.int32, (T, T), 0)
    col = jax.lax.broadcasted_iota(jnp.int32, (T, T), 1)
    causal_bias = jnp.where(col <= row, jnp.float32(0.0), jnp.float32(-1e30))

    scale = jnp.float32(1.0 / math.sqrt(HEAD_DIM))

    def mha(xq, xkv, l, a, bias):
        # per-head pre-split weights: no lane slicing, no concatenate
        o = jnp.zeros((xq.shape[0], D_MODEL), jnp.float32)
        for h in range(NUM_HEADS):
            q = (jnp.dot(xq, attn_w[_qkv_idx(l, a, 0, h)],
                         preferred_element_type=jnp.float32)
                 + attn_b[_qkv_idx(l, a, 0, h)])
            k = (jnp.dot(xkv, attn_w[_qkv_idx(l, a, 1, h)],
                         preferred_element_type=jnp.float32)
                 + attn_b[_qkv_idx(l, a, 1, h)])
            v = (jnp.dot(xkv, attn_w[_qkv_idx(l, a, 2, h)],
                         preferred_element_type=jnp.float32)
                 + attn_b[_qkv_idx(l, a, 2, h)])
            # q @ k^T via dot_general (contracts last dims, no explicit transpose)
            s = jax.lax.dot_general(q, k, (((1,), (1,)), ((), ())),
                                    preferred_element_type=jnp.float32) * scale
            if bias is not None:
                s = s + bias
            s = s - jnp.max(s, axis=-1, keepdims=True)
            p = jnp.exp(s)
            p = p * pl.reciprocal(jnp.sum(p, axis=-1, keepdims=True), approx=True)
            ctx = jnp.dot(p, v, preferred_element_type=jnp.float32)        # (Tq, Hd)
            o = o + jnp.dot(ctx, attn_wo[_wo_idx(l, a, h)],
                            preferred_element_type=jnp.float32)
        return o + attn_bo[l * 2 + a]

    for l in range(NUM_LAYERS):
        # self-attention block (dropout = identity)
        x = _layer_norm(x + mha(x, x, l, 0, causal_bias),
                        lng_ref[l * 3 + 0], lnb_ref[l * 3 + 0])
        # cross-attention block
        x = _layer_norm(x + mha(x, mem, l, 1, None),
                        lng_ref[l * 3 + 1], lnb_ref[l * 3 + 1])
        # feed-forward block with LeakyReLU(0.01)
        hdn = jnp.dot(x, w1_ref[l], preferred_element_type=jnp.float32) + b1_ref[l]
        hdn = jnp.where(hdn > 0, hdn, 0.01 * hdn)
        f = jnp.dot(hdn, w2_ref[l], preferred_element_type=jnp.float32) + b2_ref[l]
        x = _layer_norm(x + f, lng_ref[l * 3 + 2], lnb_ref[l * 3 + 2])

    # final vocab projection, fused into the same kernel
    out_ref[...] = (jnp.dot(x, fcw_ref[...], preferred_element_type=jnp.float32)
                    + fcb_ref[...])


# --------------------------------- wrapper --------------------------------------
def decoder_forward(tgt, memory, pos_enc, params):
    B, T, D = tgt.shape
    S = memory.shape[1]
    pos = pos_enc[:T]

    # host-side packing: stack layers/attn-types/heads on leading axes (free
    # static indexing in-kernel), collapse to rank-3 operands.
    flat = {
        "attn_w": params["attn_w"].reshape(-1, D_MODEL, HEAD_DIM),
        "attn_b": params["attn_b"].reshape(-1, 1, HEAD_DIM),
        "attn_wo": params["attn_wo"].reshape(-1, HEAD_DIM, D_MODEL),
        "attn_bo": params["attn_bo"].reshape(-1, 1, D_MODEL),
        "w1": params["w1"], "b1": params["b1"],
        "w2": params["w2"], "b2": params["b2"],
        "ln_g": params["ln_g"].reshape(-1, 1, D_MODEL),
        "ln_b": params["ln_b"].reshape(-1, 1, D_MODEL),
        "fc_w": params["fc_w"], "fc_b": params["fc_b"],
    }
    weights = [flat[k] for k in PACKED_ORDER]

    def full_spec(a):
        nd = a.ndim
        return pl.BlockSpec(a.shape, lambda b, _nd=nd: (0,) * _nd)

    in_specs = ([pl.BlockSpec((pl.Squeezed(), T, D), lambda b: (b, 0, 0)),
                 pl.BlockSpec((pl.Squeezed(), S, D), lambda b: (b, 0, 0)),
                 full_spec(pos)]
                + [full_spec(w) for w in weights])

    return pl.pallas_call(
        decoder_fwd_kernel,
        grid=(B,),
        in_specs=in_specs,
        out_specs=pl.BlockSpec((pl.Squeezed(), T, VOCAB), lambda b: (b, 0, 0)),
        out_shape=jax.ShapeDtypeStruct((B, T, VOCAB), jnp.float32),
        compiler_params=pltpu.CompilerParams(dimension_semantics=("parallel",)),
    )(tgt, memory, pos, *weights)


# ---------------------------- pure-JAX reference ---------------------------------
def decoder_reference(tgt, memory, pos_enc, params):
    B, T, D = tgt.shape
    x = tgt + pos_enc[:T][None]
    row = jnp.arange(T)[:, None]
    col = jnp.arange(T)[None, :]
    bias = jnp.where(col <= row, 0.0, -1e30).astype(jnp.float32)

    def mha(xq, xkv, l, a, use_bias):
        outs = jnp.zeros(xq.shape, jnp.float32)
        for h in range(NUM_HEADS):
            q = xq @ params["attn_w"][l, a, 0, h] + params["attn_b"][l, a, 0, h]
            k = xkv @ params["attn_w"][l, a, 1, h] + params["attn_b"][l, a, 1, h]
            v = xkv @ params["attn_w"][l, a, 2, h] + params["attn_b"][l, a, 2, h]
            s = jnp.einsum("btd,bsd->bts", q, k) / math.sqrt(HEAD_DIM)
            if use_bias:
                s = s + bias
            p = jax.nn.softmax(s, axis=-1)
            outs = outs + jnp.einsum("bts,bsd->btd", p, v) @ params["attn_wo"][l, a, h]
        return outs + params["attn_bo"][l, a]

    def ln(v, g, b):
        mu = v.mean(-1, keepdims=True)
        var = ((v - mu) ** 2).mean(-1, keepdims=True)
        return (v - mu) / jnp.sqrt(var + 1e-5) * g + b

    for l in range(NUM_LAYERS):
        x = ln(x + mha(x, x, l, 0, True), params["ln_g"][l, 0], params["ln_b"][l, 0])
        x = ln(x + mha(x, memory, l, 1, False), params["ln_g"][l, 1], params["ln_b"][l, 1])
        hdn = x @ params["w1"][l] + params["b1"][l]
        hdn = jnp.where(hdn > 0, hdn, 0.01 * hdn)
        x = ln(x + hdn @ params["w2"][l] + params["b2"][l],
               params["ln_g"][l, 2], params["ln_b"][l, 2])
    return x @ params["fc_w"] + params["fc_b"]


# --------------------------- deterministic parameter init -----------------------
def init_params(key):
    ks = jax.random.split(key, 10)
    w = lambda k, shape, s=0.02: jax.random.normal(k, shape, jnp.float32) * s
    return {
        # (layer, self/cross, q/k/v, head, D, Hd)
        "attn_w": w(ks[0], (NUM_LAYERS, 2, 3, NUM_HEADS, D_MODEL, HEAD_DIM)),
        "attn_b": w(ks[1], (NUM_LAYERS, 2, 3, NUM_HEADS, 1, HEAD_DIM), 0.01),
        # (layer, self/cross, head, Hd, D)
        "attn_wo": w(ks[2], (NUM_LAYERS, 2, NUM_HEADS, HEAD_DIM, D_MODEL)),
        "attn_bo": w(ks[3], (NUM_LAYERS, 2, 1, D_MODEL), 0.01),
        "w1": w(ks[4], (NUM_LAYERS, D_MODEL, DIM_FF)),
        "b1": w(ks[5], (NUM_LAYERS, 1, DIM_FF), 0.01),
        "w2": w(ks[6], (NUM_LAYERS, DIM_FF, D_MODEL)),
        "b2": w(ks[7], (NUM_LAYERS, 1, D_MODEL), 0.01),
        "ln_g": jnp.ones((NUM_LAYERS, 3, 1, D_MODEL), jnp.float32),
        "ln_b": jnp.zeros((NUM_LAYERS, 3, 1, D_MODEL), jnp.float32),
        "fc_w": w(ks[8], (D_MODEL, VOCAB)),
        "fc_b": w(ks[9], (1, VOCAB), 0.01),
    }


if __name__ == "__main__":
    # TODO(synk): the PyTorch __init__ quirk `p.data.clamp_(5, 5)` (all >1-D params == 5.0)
    # is not reproduced; weights are deterministic from PRNGKey(0). Dropout = identity.
    key = jax.random.PRNGKey(0)
    k_in, k_mem, k_pos, k_par = jax.random.split(key, 4)

    B, T, S = 2, 8, 16
    tgt = jax.random.normal(k_in, (B, T, D_MODEL), jnp.float32)
    memory = jax.random.normal(k_mem, (B, S, D_MODEL), jnp.float32)
    pos_enc = jax.random.normal(k_pos, (MAX_LEN, D_MODEL), jnp.float32) * 0.02
    params = init_params(k_par)

    logits = decoder_forward(tgt, memory, pos_enc, params)
    logits = jax.block_until_ready(logits)
    assert logits.shape == (B, T, VOCAB)
    assert bool(jnp.all(jnp.isfinite(logits)))

    with jax.default_matmul_precision("highest"):
        ref = decoder_reference(tgt, memory, pos_enc, params)
    err = float(jnp.max(jnp.abs(logits - ref)))
    assert err < 2e-2, f"max abs diff vs reference: {err}"

    print("KERNEL_OK")
</pallas_src>

<mosaic_0001>
module attributes {stable_mosaic.version = 11 : i64} {
  func.func @decoder_fwd_kernel(%arg0: i32, %arg1: memref<1x8x32xf32, #tpu.memory_space<vmem>>, %arg2: memref<1x16x32xf32, #tpu.memory_space<vmem>>, %arg3: memref<8x32xf32, #tpu.memory_space<vmem>>, %arg4: memref<48x32x8xf32, #tpu.memory_space<vmem>>, %arg5: memref<48x1x8xf32, #tpu.memory_space<vmem>>, %arg6: memref<16x8x32xf32, #tpu.memory_space<vmem>>, %arg7: memref<4x1x32xf32, #tpu.memory_space<vmem>>, %arg8: memref<2x32x64xf32, #tpu.memory_space<vmem>>, %arg9: memref<2x1x64xf32, #tpu.memory_space<vmem>>, %arg10: memref<2x64x32xf32, #tpu.memory_space<vmem>>, %arg11: memref<2x1x32xf32, #tpu.memory_space<vmem>>, %arg12: memref<6x1x32xf32, #tpu.memory_space<vmem>>, %arg13: memref<6x1x32xf32, #tpu.memory_space<vmem>>, %arg14: memref<32x64xf32, #tpu.memory_space<vmem>>, %arg15: memref<1x64xf32, #tpu.memory_space<vmem>>, %arg16: memref<1x8x64xf32, #tpu.memory_space<vmem>>) attributes {dimension_semantics = [#tpu.dimension_semantics<parallel>], iteration_bounds = array<i64: 2>, scalar_prefetch = 0 : i64, scratch_operands = 0 : i64, tpu.core_type = #tpu.core_type<tc>, window_params = [{transform_indices = @transform_0, window_bounds = array<i64: 1, 8, 32>}, {transform_indices = @transform_1, window_bounds = array<i64: 1, 16, 32>}, {pipeline_mode = #tpu.pipeline_mode<synchronous>, transform_indices = @transform_2, window_bounds = array<i64: 8, 32>}, {pipeline_mode = #tpu.pipeline_mode<synchronous>, transform_indices = @transform_3, window_bounds = array<i64: 48, 32, 8>}, {pipeline_mode = #tpu.pipeline_mode<synchronous>, transform_indices = @transform_4, window_bounds = array<i64: 48, 1, 8>}, {pipeline_mode = #tpu.pipeline_mode<synchronous>, transform_indices = @transform_5, window_bounds = array<i64: 16, 8, 32>}, {pipeline_mode = #tpu.pipeline_mode<synchronous>, transform_indices = @transform_6, window_bounds = array<i64: 4, 1, 32>}, {pipeline_mode = #tpu.pipeline_mode<synchronous>, transform_indices = @transform_7, window_bounds = array<i64: 2, 32, 64>}, {pipeline_mode = #tpu.pipeline_mode<synchronous>, transform_indices = @transform_8, window_bounds = array<i64: 2, 1, 64>}, {pipeline_mode = #tpu.pipeline_mode<synchronous>, transform_indices = @transform_9, window_bounds = array<i64: 2, 64, 32>}, {pipeline_mode = #tpu.pipeline_mode<synchronous>, transform_indices = @transform_10, window_bounds = array<i64: 2, 1, 32>}, {pipeline_mode = #tpu.pipeline_mode<synchronous>, transform_indices = @transform_11, window_bounds = array<i64: 6, 1, 32>}, {pipeline_mode = #tpu.pipeline_mode<synchronous>, transform_indices = @transform_12, window_bounds = array<i64: 6, 1, 32>}, {pipeline_mode = #tpu.pipeline_mode<synchronous>, transform_indices = @transform_13, window_bounds = array<i64: 32, 64>}, {pipeline_mode = #tpu.pipeline_mode<synchronous>, transform_indices = @transform_14, window_bounds = array<i64: 1, 64>}, {transform_indices = @transform_15, window_bounds = array<i64: 1, 8, 64>}]} {
    %c0 = arith.constant 0 : index
    %c0_0 = arith.constant 0 : index
    %c0_1 = arith.constant 0 : index
    %0 = vector.load %arg1[%c0, %c0_0, %c0_1] : memref<1x8x32xf32, #tpu.memory_space<vmem>>, vector<1x8x32xf32>
    %1 = vector.shape_cast %0 : vector<1x8x32xf32> to vector<8x32xf32>
    %c0_2 = arith.constant 0 : index
    %c0_3 = arith.constant 0 : index
    %2 = vector.load %arg3[%c0_2, %c0_3] : memref<8x32xf32, #tpu.memory_space<vmem>>, vector<8x32xf32>
    %3 = arith.addf %1, %2 : vector<8x32xf32>
    %c0_4 = arith.constant 0 : index
    %c0_5 = arith.constant 0 : index
    %c0_6 = arith.constant 0 : index
    %4 = vector.load %arg2[%c0_4, %c0_5, %c0_6] : memref<1x16x32xf32, #tpu.memory_space<vmem>>, vector<1x16x32xf32>
    %5 = vector.shape_cast %4 : vector<1x16x32xf32> to vector<16x32xf32>
    %6 = tpu.iota {dimensions = array<i32: 0>} : vector<8x8xi32>
    %7 = tpu.iota {dimensions = array<i32: 1>} : vector<8x8xi32>
    %8 = arith.cmpi sle, %7, %6 : vector<8x8xi32>
    %cst = arith.constant 0.000000e+00 : f32
    %cst_7 = arith.constant -1.000000e+30 : f32
    %9 = vector.broadcast %cst : f32 to vector<8x8xf32>
    %10 = vector.broadcast %cst_7 : f32 to vector<8x8xf32>
    %11 = arith.select %8, %9, %10 : vector<8x8xi1>, vector<8x8xf32>
    %cst_8 = arith.constant 0.000000e+00 : f32
    %12 = vector.broadcast %cst_8 : f32 to vector<8x32xf32>
    %c0_9 = arith.constant 0 : index
    %c0_10 = arith.constant 0 : index
    %c0_11 = arith.constant 0 : index
    %13 = vector.load %arg4[%c0_9, %c0_10, %c0_11] : memref<48x32x8xf32, #tpu.memory_space<vmem>>, vector<1x32x8xf32>
    %14 = vector.shape_cast %13 : vector<1x32x8xf32> to vector<32x8xf32>
    %cst_12 = arith.constant dense<0.000000e+00> : vector<8x8xf32>
    %15 = tpu.matmul %3, %14, %cst_12 {dimension_numbers = #tpu.dot_dimension_numbers<[1], [0], [0], [1], [0, 0, 1, 1], [], []>} : vector<8x32xf32>, vector<32x8xf32>, vector<8x8xf32> -> vector<8x8xf32>
    %c0_13 = arith.constant 0 : index
    %c0_14 = arith.constant 0 : index
    %c0_15 = arith.constant 0 : index
    %16 = vector.load %arg5[%c0_13, %c0_14, %c0_15] : memref<48x1x8xf32, #tpu.memory_space<vmem>>, vector<1x1x8xf32>
    %17 = vector.shape_cast %16 : vector<1x1x8xf32> to vector<1x8xf32>
    %18 = vector.broadcast %17 : vector<1x8xf32> to vector<8x8xf32>
    %19 = arith.addf %15, %18 : vector<8x8xf32>
    %c4 = arith.constant 4 : index
    %c0_16 = arith.constant 0 : index
    %c0_17 = arith.constant 0 : index
    %20 = vector.load %arg4[%c4, %c0_16, %c0_17] : memref<48x32x8xf32, #tpu.memory_space<vmem>>, vector<1x32x8xf32>
    %21 = vector.shape_cast %20 : vector<1x32x8xf32> to vector<32x8xf32>
    %cst_18 = arith.constant dense<0.000000e+00> : vector<8x8xf32>
    %22 = tpu.matmul %3, %21, %cst_18 {dimension_numbers = #tpu.dot_dimension_numbers<[1], [0], [0], [1], [0, 0, 1, 1], [], []>} : vector<8x32xf32>, vector<32x8xf32>, vector<8x8xf32> -> vector<8x8xf32>
    %c4_19 = arith.constant 4 : index
    %c0_20 = arith.constant 0 : index
    %c0_21 = arith.constant 0 : index
    %23 = vector.load %arg5[%c4_19, %c0_20, %c0_21] : memref<48x1x8xf32, #tpu.memory_space<vmem>>, vector<1x1x8xf32>
    %24 = vector.shape_cast %23 : vector<1x1x8xf32> to vector<1x8xf32>
    %25 = vector.broadcast %24 : vector<1x8xf32> to vector<8x8xf32>
    %26 = arith.addf %22, %25 : vector<8x8xf32>
    %c8 = arith.constant 8 : index
    %c0_22 = arith.constant 0 : index
    %c0_23 = arith.constant 0 : index
    %27 = vector.load %arg4[%c8, %c0_22, %c0_23] : memref<48x32x8xf32, #tpu.memory_space<vmem>>, vector<1x32x8xf32>
    %28 = vector.shape_cast %27 : vector<1x32x8xf32> to vector<32x8xf32>
    %cst_24 = arith.constant dense<0.000000e+00> : vector<8x8xf32>
    %29 = tpu.matmul %3, %28, %cst_24 {dimension_numbers = #tpu.dot_dimension_numbers<[1], [0], [0], [1], [0, 0, 1, 1], [], []>} : vector<8x32xf32>, vector<32x8xf32>, vector<8x8xf32> -> vector<8x8xf32>
    %c8_25 = arith.constant 8 : index
    %c0_26 = arith.constant 0 : index
    %c0_27 = arith.constant 0 : index
    %30 = vector.load %arg5[%c8_25, %c0_26, %c0_27] : memref<48x1x8xf32, #tpu.memory_space<vmem>>, vector<1x1x8xf32>
    %31 = vector.shape_cast %30 : vector<1x1x8xf32> to vector<1x8xf32>
    %32 = vector.broadcast %31 : vector<1x8xf32> to vector<8x8xf32>
    %33 = arith.addf %29, %32 : vector<8x8xf32>
    %cst_28 = arith.constant dense<0.000000e+00> : vector<8x8xf32>
    %34 = tpu.matmul %19, %26, %cst_28 {dimension_numbers = #tpu.dot_dimension_numbers<[1], [1], [0], [0], [0, 0, 1, 0], [], []>} : vector<8x8xf32>, vector<8x8xf32>, vector<8x8xf32> -> vector<8x8xf32>
    %cst_29 = arith.constant 0.353553385 : f32
    %35 = vector.broadcast %cst_29 : f32 to vector<8x8xf32>
    %36 = arith.mulf %34, %35 : vector<8x8xf32>
    %37 = arith.addf %36, %11 : vector<8x8xf32>
    %cst_30 = arith.constant dense<0xFF800000> : vector<8xf32>
    %38 = vector.multi_reduction <maximumf>, %37, %cst_30 [1] : vector<8x8xf32> to vector<8xf32>
    %39 = vector.shape_cast %38 : vector<8xf32> to vector<8x1xf32>
    %40 = vector.broadcast %39 : vector<8x1xf32> to vector<8x8xf32>
    %41 = arith.subf %37, %40 : vector<8x8xf32>
    %42 = math.exp %41 : vector<8x8xf32>
    %cst_31 = arith.constant dense<0.000000e+00> : vector<8xf32>
    %43 = vector.multi_reduction <add>, %42, %cst_31 [1] : vector<8x8xf32> to vector<8xf32>
    %44 = vector.shape_cast %43 : vector<8xf32> to vector<8x1xf32>
    %45 = tpu.reciprocal %44 {approx = true} : vector<8x1xf32> -> vector<8x1xf32>
    %46 = vector.broadcast %45 : vector<8x1xf32> to vector<8x8xf32>
    %47 = arith.mulf %42, %46 : vector<8x8xf32>
    %cst_32 = arith.constant dense<0.000000e+00> : vector<8x8xf32>
    %48 = tpu.matmul %47, %33, %cst_32 {dimension_numbers = #tpu.dot_dimension_numbers<[1], [0], [0], [1], [0, 0, 1, 1], [], []>} : vector<8x8xf32>, vector<8x8xf32>, vector<8x8xf32> -> vector<8x8xf32>
    %c0_33 = arith.constant 0 : index
    %c0_34 = arith.constant 0 : index
    %c0_35 = arith.constant 0 : index
    %49 = vector.load %arg6[%c0_33, %c0_34, %c0_35] : memref<16x8x32xf32, #tpu.memory_space<vmem>>, vector<1x8x32xf32>
    %50 = vector.shape_cast %49 : vector<1x8x32xf32> to vector<8x32xf32>
    %cst_36 = arith.constant dense<0.000000e+00> : vector<8x32xf32>
    %51 = tpu.matmul %48, %50, %cst_36 {dimension_numbers = #tpu.dot_dimension_numbers<[1], [0], [0], [1], [0, 0, 1, 1], [], []>} : vector<8x8xf32>, vector<8x32xf32>, vector<8x32xf32> -> vector<8x32xf32>
    %52 = arith.addf %12, %51 : vector<8x32xf32>
    %c1 = arith.constant 1 : index
    %c0_37 = arith.constant 0 : index
    %c0_38 = arith.constant 0 : index
    %53 = vector.load %arg4[%c1, %c0_37, %c0_38] : memref<48x32x8xf32, #tpu.memory_space<vmem>>, vector<1x32x8xf32>
    %54 = vector.shape_cast %53 : vector<1x32x8xf32> to vector<32x8xf32>
    %cst_39 = arith.constant dense<0.000000e+00> : vector<8x8xf32>
    %55 = tpu.matmul %3, %54, %cst_39 {dimension_numbers = #tpu.dot_dimension_numbers<[1], [0], [0], [1], [0, 0, 1, 1], [], []>} : vector<8x32xf32>, vector<32x8xf32>, vector<8x8xf32> -> vector<8x8xf32>
    %c1_40 = arith.constant 1 : index
    %c0_41 = arith.constant 0 : index
    %c0_42 = arith.constant 0 : index
    %56 = vector.load %arg5[%c1_40, %c0_41, %c0_42] : memref<48x1x8xf32, #tpu.memory_space<vmem>>, vector<1x1x8xf32>
    %57 = vector.shape_cast %56 : vector<1x1x8xf32> to vector<1x8xf32>
    %58 = vector.broadcast %57 : vector<1x8xf32> to vector<8x8xf32>
    %59 = arith.addf %55, %58 : vector<8x8xf32>
    %c5 = arith.constant 5 : index
    %c0_43 = arith.constant 0 : index
    %c0_44 = arith.constant 0 : index
    %60 = vector.load %arg4[%c5, %c0_43, %c0_44] : memref<48x32x8xf32, #tpu.memory_space<vmem>>, vector<1x32x8xf32>
    %61 = vector.shape_cast %60 : vector<1x32x8xf32> to vector<32x8xf32>
    %cst_45 = arith.constant dense<0.000000e+00> : vector<8x8xf32>
    %62 = tpu.matmul %3, %61, %cst_45 {dimension_numbers = #tpu.dot_dimension_numbers<[1], [0], [0], [1], [0, 0, 1, 1], [], []>} : vector<8x32xf32>, vector<32x8xf32>, vector<8x8xf32> -> vector<8x8xf32>
    %c5_46 = arith.constant 5 : index
    %c0_47 = arith.constant 0 : index
    %c0_48 = arith.constant 0 : index
    %63 = vector.load %arg5[%c5_46, %c0_47, %c0_48] : memref<48x1x8xf32, #tpu.memory_space<vmem>>, vector<1x1x8xf32>
    %64 = vector.shape_cast %63 : vector<1x1x8xf32> to vector<1x8xf32>
    %65 = vector.broadcast %64 : vector<1x8xf32> to vector<8x8xf32>
    %66 = arith.addf %62, %65 : vector<8x8xf32>
    %c9 = arith.constant 9 : index
    %c0_49 = arith.constant 0 : index
    %c0_50 = arith.constant 0 : index
    %67 = vector.load %arg4[%c9, %c0_49, %c0_50] : memref<48x32x8xf32, #tpu.memory_space<vmem>>, vector<1x32x8xf32>
    %68 = vector.shape_cast %67 : vector<1x32x8xf32> to vector<32x8xf32>
    %cst_51 = arith.constant dense<0.000000e+00> : vector<8x8xf32>
    %69 = tpu.matmul %3, %68, %cst_51 {dimension_numbers = #tpu.dot_dimension_numbers<[1], [0], [0], [1], [0, 0, 1, 1], [], []>} : vector<8x32xf32>, vector<32x8xf32>, vector<8x8xf32> -> vector<8x8xf32>
    %c9_52 = arith.constant 9 : index
    %c0_53 = arith.constant 0 : index
    %c0_54 = arith.constant 0 : index
    %70 = vector.load %arg5[%c9_52, %c0_53, %c0_54] : memref<48x1x8xf32, #tpu.memory_space<vmem>>, vector<1x1x8xf32>
    %71 = vector.shape_cast %70 : vector<1x1x8xf32> to vector<1x8xf32>
    %72 = vector.broadcast %71 : vector<1x8xf32> to vector<8x8xf32>
    %73 = arith.addf %69, %72 : vector<8x8xf32>
    %cst_55 = arith.constant dense<0.000000e+00> : vector<8x8xf32>
    %74 = tpu.matmul %59, %66, %cst_55 {dimension_numbers = #tpu.dot_dimension_numbers<[1], [1], [0], [0], [0, 0, 1, 0], [], []>} : vector<8x8xf32>, vector<8x8xf32>, vector<8x8xf32> -> vector<8x8xf32>
    %cst_56 = arith.constant 0.353553385 : f32
    %75 = vector.broadcast %cst_56 : f32 to vector<8x8xf32>
    %76 = arith.mulf %74, %75 : vector<8x8xf32>
    %77 = arith.addf %76, %11 : vector<8x8xf32>
    %cst_57 = arith.constant dense<0xFF800000> : vector<8xf32>
    %78 = vector.multi_reduction <maximumf>, %77, %cst_57 [1] : vector<8x8xf32> to vector<8xf32>
    %79 = vector.shape_cast %78 : vector<8xf32> to vector<8x1xf32>
    %80 = vector.broadcast %79 : vector<8x1xf32> to vector<8x8xf32>
    %81 = arith.subf %77, %80 : vector<8x8xf32>
    %82 = math.exp %81 : vector<8x8xf32>
    %cst_58 = arith.constant dense<0.000000e+00> : vector<8xf32>
    %83 = vector.multi_reduction <add>, %82, %cst_58 [1] : vector<8x8xf32> to vector<8xf32>
    %84 = vector.shape_cast %83 : vector<8xf32> to vector<8x1xf32>
    %85 = tpu.reciprocal %84 {approx = true} : vector<8x1xf32> -> vector<8x1xf32>
    %86 = vector.broadcast %85 : vector<8x1xf32> to vector<8x8xf32>
    %87 = arith.mulf %82, %86 : vector<8x8xf32>
    %cst_59 = arith.constant dense<0.000000e+00> : vector<8x8xf32>
    %88 = tpu.matmul %87, %73, %cst_59 {dimension_numbers = #tpu.dot_dimension_numbers<[1], [0], [0], [1], [0, 0, 1, 1], [], []>} : vector<8x8xf32>, vector<8x8xf32>, vector<8x8xf32> -> vector<8x8xf32>
    %c1_60 = arith.constant 1 : index
    %c0_61 = arith.constant 0 : index
    %c0_62 = arith.constant 0 : index
    %89 = vector.load %arg6[%c1_60, %c0_61, %c0_62] : memref<16x8x32xf32, #tpu.memory_space<vmem>>, vector<1x8x32xf32>
    %90 = vector.shape_cast %89 : vector<1x8x32xf32> to vector<8x32xf32>
    %cst_63 = arith.constant dense<0.000000e+00> : vector<8x32xf32>
    %91 = tpu.matmul %88, %90, %cst_63 {dimension_numbers = #tpu.dot_dimension_numbers<[1], [0], [0], [1], [0, 0, 1, 1], [], []>} : vector<8x8xf32>, vector<8x32xf32>, vector<8x32xf32> -> vector<8x32xf32>
    %92 = arith.addf %52, %91 : vector<8x32xf32>
    %c2 = arith.constant 2 : index
    %c0_64 = arith.constant 0 : index
    %c0_65 = arith.constant 0 : index
    %93 = vector.load %arg4[%c2, %c0_64, %c0_65] : memref<48x32x8xf32, #tpu.memory_space<vmem>>, vector<1x32x8xf32>
    %94 = vector.shape_cast %93 : vector<1x32x8xf32> to vector<32x8xf32>
    %cst_66 = arith.constant dense<0.000000e+00> : vector<8x8xf32>
    %95 = tpu.matmul %3, %94, %cst_66 {dimension_numbers = #tpu.dot_dimension_numbers<[1], [0], [0], [1], [0, 0, 1, 1], [], []>} : vector<8x32xf32>, vector<32x8xf32>, vector<8x8xf32> -> vector<8x8xf32>
    %c2_67 = arith.constant 2 : index
    %c0_68 = arith.constant 0 : index
    %c0_69 = arith.constant 0 : index
    %96 = vector.load %arg5[%c2_67, %c0_68, %c0_69] : memref<48x1x8xf32, #tpu.memory_space<vmem>>, vector<1x1x8xf32>
    %97 = vector.shape_cast %96 : vector<1x1x8xf32> to vector<1x8xf32>
    %98 = vector.broadcast %97 : vector<1x8xf32> to vector<8x8xf32>
    %99 = arith.addf %95, %98 : vector<8x8xf32>
    %c6 = arith.constant 6 : index
    %c0_70 = arith.constant 0 : index
    %c0_71 = arith.constant 0 : index
    %100 = vector.load %arg4[%c6, %c0_70, %c0_71] : memref<48x32x8xf32, #tpu.memory_space<vmem>>, vector<1x32x8xf32>
    %101 = vector.shape_cast %100 : vector<1x32x8xf32> to vector<32x8xf32>
    %cst_72 = arith.constant dense<0.000000e+00> : vector<8x8xf32>
    %102 = tpu.matmul %3, %101, %cst_72 {dimension_numbers = #tpu.dot_dimension_numbers<[1], [0], [0], [1], [0, 0, 1, 1], [], []>} : vector<8x32xf32>, vector<32x8xf32>, vector<8x8xf32> -> vector<8x8xf32>
    %c6_73 = arith.constant 6 : index
    %c0_74 = arith.constant 0 : index
    %c0_75 = arith.constant 0 : index
    %103 = vector.load %arg5[%c6_73, %c0_74, %c0_75] : memref<48x1x8xf32, #tpu.memory_space<vmem>>, vector<1x1x8xf32>
    %104 = vector.shape_cast %103 : vector<1x1x8xf32> to vector<1x8xf32>
    %105 = vector.broadcast %104 : vector<1x8xf32> to vector<8x8xf32>
    %106 = arith.addf %102, %105 : vector<8x8xf32>
    %c10 = arith.constant 10 : index
    %c0_76 = arith.constant 0 : index
    %c0_77 = arith.constant 0 : index
    %107 = vector.load %arg4[%c10, %c0_76, %c0_77] : memref<48x32x8xf32, #tpu.memory_space<vmem>>, vector<1x32x8xf32>
    %108 = vector.shape_cast %107 : vector<1x32x8xf32> to vector<32x8xf32>
    %cst_78 = arith.constant dense<0.000000e+00> : vector<8x8xf32>
    %109 = tpu.matmul %3, %108, %cst_78 {dimension_numbers = #tpu.dot_dimension_numbers<[1], [0], [0], [1], [0, 0, 1, 1], [], []>} : vector<8x32xf32>, vector<32x8xf32>, vector<8x8xf32> -> vector<8x8xf32>
    %c10_79 = arith.constant 10 : index
    %c0_80 = arith.constant 0 : index
    %c0_81 = arith.constant 0 : index
    %110 = vector.load %arg5[%c10_79, %c0_80, %c0_81] : memref<48x1x8xf32, #tpu.memory_space<vmem>>, vector<1x1x8xf32>
    %111 = vector.shape_cast %110 : vector<1x1x8xf32> to vector<1x8xf32>
    %112 = vector.broadcast %111 : vector<1x8xf32> to vector<8x8xf32>
    %113 = arith.addf %109, %112 : vector<8x8xf32>
    %cst_82 = arith.constant dense<0.000000e+00> : vector<8x8xf32>
    %114 = tpu.matmul %99, %106, %cst_82 {dimension_numbers = #tpu.dot_dimension_numbers<[1], [1], [0], [0], [0, 0, 1, 0], [], []>} : vector<8x8xf32>, vector<8x8xf32>, vector<8x8xf32> -> vector<8x8xf32>
    %cst_83 = arith.constant 0.353553385 : f32
    %115 = vector.broadcast %cst_83 : f32 to vector<8x8xf32>
    %116 = arith.mulf %114, %115 : vector<8x8xf32>
    %117 = arith.addf %116, %11 : vector<8x8xf32>
    %cst_84 = arith.constant dense<0xFF800000> : vector<8xf32>
    %118 = vector.multi_reduction <maximumf>, %117, %cst_84 [1] : vector<8x8xf32> to vector<8xf32>
    %119 = vector.shape_cast %118 : vector<8xf32> to vector<8x1xf32>
    %120 = vector.broadcast %119 : vector<8x1xf32> to vector<8x8xf32>
    %121 = arith.subf %117, %120 : vector<8x8xf32>
    %122 = math.exp %121 : vector<8x8xf32>
    %cst_85 = arith.constant dense<0.000000e+00> : vector<8xf32>
    %123 = vector.multi_reduction <add>, %122, %cst_85 [1] : vector<8x8xf32> to vector<8xf32>
    %124 = vector.shape_cast %123 : vector<8xf32> to vector<8x1xf32>
    %125 = tpu.reciprocal %124 {approx = true} : vector<8x1xf32> -> vector<8x1xf32>
    %126 = vector.broadcast %125 : vector<8x1xf32> to vector<8x8xf32>
    %127 = arith.mulf %122, %126 : vector<8x8xf32>
    %cst_86 = arith.constant dense<0.000000e+00> : vector<8x8xf32>
    %128 = tpu.matmul %127, %113, %cst_86 {dimension_numbers = #tpu.dot_dimension_numbers<[1], [0], [0], [1], [0, 0, 1, 1], [], []>} : vector<8x8xf32>, vector<8x8xf32>, vector<8x8xf32> -> vector<8x8xf32>
    %c2_87 = arith.constant 2 : index
    %c0_88 = arith.constant 0 : index
    %c0_89 = arith.constant 0 : index
    %129 = vector.load %arg6[%c2_87, %c0_88, %c0_89] : memref<16x8x32xf32, #tpu.memory_space<vmem>>, vector<1x8x32xf32>
    %130 = vector.shape_cast %129 : vector<1x8x32xf32> to vector<8x32xf32>
    %cst_90 = arith.constant dense<0.000000e+00> : vector<8x32xf32>
    %131 = tpu.matmul %128, %130, %cst_90 {dimension_numbers = #tpu.dot_dimension_numbers<[1], [0], [0], [1], [0, 0, 1, 1], [], []>} : vector<8x8xf32>, vector<8x32xf32>, vector<8x32xf32> -> vector<8x32xf32>
    %132 = arith.addf %92, %131 : vector<8x32xf32>
    %c3 = arith.constant 3 : index
    %c0_91 = arith.constant 0 : index
    %c0_92 = arith.constant 0 : index
    %133 = vector.load %arg4[%c3, %c0_91, %c0_92] : memref<48x32x8xf32, #tpu.memory_space<vmem>>, vector<1x32x8xf32>
    %134 = vector.shape_cast %133 : vector<1x32x8xf32> to vector<32x8xf32>
    %cst_93 = arith.constant dense<0.000000e+00> : vector<8x8xf32>
    %135 = tpu.matmul %3, %134, %cst_93 {dimension_numbers = #tpu.dot_dimension_numbers<[1], [0], [0], [1], [0, 0, 1, 1], [], []>} : vector<8x32xf32>, vector<32x8xf32>, vector<8x8xf32> -> vector<8x8xf32>
    %c3_94 = arith.constant 3 : index
    %c0_95 = arith.constant 0 : index
    %c0_96 = arith.constant 0 : index
    %136 = vector.load %arg5[%c3_94, %c0_95, %c0_96] : memref<48x1x8xf32, #tpu.memory_space<vmem>>, vector<1x1x8xf32>
    %137 = vector.shape_cast %136 : vector<1x1x8xf32> to vector<1x8xf32>
    %138 = vector.broadcast %137 : vector<1x8xf32> to vector<8x8xf32>
    %139 = arith.addf %135, %138 : vector<8x8xf32>
    %c7 = arith.constant 7 : index
    %c0_97 = arith.constant 0 : index
    %c0_98 = arith.constant 0 : index
    %140 = vector.load %arg4[%c7, %c0_97, %c0_98] : memref<48x32x8xf32, #tpu.memory_space<vmem>>, vector<1x32x8xf32>
    %141 = vector.shape_cast %140 : vector<1x32x8xf32> to vector<32x8xf32>
    %cst_99 = arith.constant dense<0.000000e+00> : vector<8x8xf32>
    %142 = tpu.matmul %3, %141, %cst_99 {dimension_numbers = #tpu.dot_dimension_numbers<[1], [0], [0], [1], [0, 0, 1, 1], [], []>} : vector<8x32xf32>, vector<32x8xf32>, vector<8x8xf32> -> vector<8x8xf32>
    %c7_100 = arith.constant 7 : index
    %c0_101 = arith.constant 0 : index
    %c0_102 = arith.constant 0 : index
    %143 = vector.load %arg5[%c7_100, %c0_101, %c0_102] : memref<48x1x8xf32, #tpu.memory_space<vmem>>, vector<1x1x8xf32>
    %144 = vector.shape_cast %143 : vector<1x1x8xf32> to vector<1x8xf32>
    %145 = vector.broadcast %144 : vector<1x8xf32> to vector<8x8xf32>
    %146 = arith.addf %142, %145 : vector<8x8xf32>
    %c11 = arith.constant 11 : index
    %c0_103 = arith.constant 0 : index
    %c0_104 = arith.constant 0 : index
    %147 = vector.load %arg4[%c11, %c0_103, %c0_104] : memref<48x32x8xf32, #tpu.memory_space<vmem>>, vector<1x32x8xf32>
    %148 = vector.shape_cast %147 : vector<1x32x8xf32> to vector<32x8xf32>
    %cst_105 = arith.constant dense<0.000000e+00> : vector<8x8xf32>
    %149 = tpu.matmul %3, %148, %cst_105 {dimension_numbers = #tpu.dot_dimension_numbers<[1], [0], [0], [1], [0, 0, 1, 1], [], []>} : vector<8x32xf32>, vector<32x8xf32>, vector<8x8xf32> -> vector<8x8xf32>
    %c11_106 = arith.constant 11 : index
    %c0_107 = arith.constant 0 : index
    %c0_108 = arith.constant 0 : index
    %150 = vector.load %arg5[%c11_106, %c0_107, %c0_108] : memref<48x1x8xf32, #tpu.memory_space<vmem>>, vector<1x1x8xf32>
    %151 = vector.shape_cast %150 : vector<1x1x8xf32> to vector<1x8xf32>
    %152 = vector.broadcast %151 : vector<1x8xf32> to vector<8x8xf32>
    %153 = arith.addf %149, %152 : vector<8x8xf32>
    %cst_109 = arith.constant dense<0.000000e+00> : vector<8x8xf32>
    %154 = tpu.matmul %139, %146, %cst_109 {dimension_numbers = #tpu.dot_dimension_numbers<[1], [1], [0], [0], [0, 0, 1, 0], [], []>} : vector<8x8xf32>, vector<8x8xf32>, vector<8x8xf32> -> vector<8x8xf32>
    %cst_110 = arith.constant 0.353553385 : f32
    %155 = vector.broadcast %cst_110 : f32 to vector<8x8xf32>
    %156 = arith.mulf %154, %155 : vector<8x8xf32>
    %157 = arith.addf %156, %11 : vector<8x8xf32>
    %cst_111 = arith.constant dense<0xFF800000> : vector<8xf32>
    %158 = vector.multi_reduction <maximumf>, %157, %cst_111 [1] : vector<8x8xf32> to vector<8xf32>
    %159 = vector.shape_cast %158 : vector<8xf32> to vector<8x1xf32>
    %160 = vector.broadcast %159 : vector<8x1xf32> to vector<8x8xf32>
    %161 = arith.subf %157, %160 : vector<8x8xf32>
    %162 = math.exp %161 : vector<8x8xf32>
    %cst_112 = arith.constant dense<0.000000e+00> : vector<8xf32>
    %163 = vector.multi_reduction <add>, %162, %cst_112 [1] : vector<8x8xf32> to vector<8xf32>
    %164 = vector.shape_cast %163 : vector<8xf32> to vector<8x1xf32>
    %165 = tpu.reciprocal %164 {approx = true} : vector<8x1xf32> -> vector<8x1xf32>
    %166 = vector.broadcast %165 : vector<8x1xf32> to vector<8x8xf32>
    %167 = arith.mulf %162, %166 : vector<8x8xf32>
    %cst_113 = arith.constant dense<0.000000e+00> : vector<8x8xf32>
    %168 = tpu.matmul %167, %153, %cst_113 {dimension_numbers = #tpu.dot_dimension_numbers<[1], [0], [0], [1], [0, 0, 1, 1], [], []>} : vector<8x8xf32>, vector<8x8xf32>, vector<8x8xf32> -> vector<8x8xf32>
    %c3_114 = arith.constant 3 : index
    %c0_115 = arith.constant 0 : index
    %c0_116 = arith.constant 0 : index
    %169 = vector.load %arg6[%c3_114, %c0_115, %c0_116] : memref<16x8x32xf32, #tpu.memory_space<vmem>>, vector<1x8x32xf32>
    %170 = vector.shape_cast %169 : vector<1x8x32xf32> to vector<8x32xf32>
    %cst_117 = arith.constant dense<0.000000e+00> : vector<8x32xf32>
    %171 = tpu.matmul %168, %170, %cst_117 {dimension_numbers = #tpu.dot_dimension_numbers<[1], [0], [0], [1], [0, 0, 1, 1], [], []>} : vector<8x8xf32>, vector<8x32xf32>, vector<8x32xf32> -> vector<8x32xf32>
    %172 = arith.addf %132, %171 : vector<8x32xf32>
    %c0_118 = arith.constant 0 : index
    %c0_119 = arith.constant 0 : index
    %c0_120 = arith.constant 0 : index
    %173 = vector.load %arg7[%c0_118, %c0_119, %c0_120] : memref<4x1x32xf32, #tpu.memory_space<vmem>>, vector<1x1x32xf32>
    %174 = vector.shape_cast %173 : vector<1x1x32xf32> to vector<1x32xf32>
    %175 = vector.broadcast %174 : vector<1x32xf32> to vector<8x32xf32>
    %176 = arith.addf %172, %175 : vector<8x32xf32>
    %177 = arith.addf %3, %176 : vector<8x32xf32>
    %c0_121 = arith.constant 0 : index
    %c0_122 = arith.constant 0 : index
    %c0_123 = arith.constant 0 : index
    %178 = vector.load %arg12[%c0_121, %c0_122, %c0_123] : memref<6x1x32xf32, #tpu.memory_space<vmem>>, vector<1x1x32xf32>
    %179 = vector.shape_cast %178 : vector<1x1x32xf32> to vector<1x32xf32>
    %c0_124 = arith.constant 0 : index
    %c0_125 = arith.constant 0 : index
    %c0_126 = arith.constant 0 : index
    %180 = vector.load %arg13[%c0_124, %c0_125, %c0_126] : memref<6x1x32xf32, #tpu.memory_space<vmem>>, vector<1x1x32xf32>
    %181 = vector.shape_cast %180 : vector<1x1x32xf32> to vector<1x32xf32>
    %cst_127 = arith.constant dense<0.000000e+00> : vector<8xf32>
    %182 = vector.multi_reduction <add>, %177, %cst_127 [1] : vector<8x32xf32> to vector<8xf32>
    %183 = vector.shape_cast %182 : vector<8xf32> to vector<8x1xf32>
    %cst_128 = arith.constant 3.200000e+01 : f32
    %184 = vector.broadcast %cst_128 : f32 to vector<8x1xf32>
    %185 = arith.divf %183, %184 : vector<8x1xf32>
    %186 = vector.broadcast %185 : vector<8x1xf32> to vector<8x32xf32>
    %187 = arith.subf %177, %186 : vector<8x32xf32>
    %188 = arith.mulf %187, %187 : vector<8x32xf32>
    %cst_129 = arith.constant dense<0.000000e+00> : vector<8xf32>
    %189 = vector.multi_reduction <add>, %188, %cst_129 [1] : vector<8x32xf32> to vector<8xf32>
    %190 = vector.shape_cast %189 : vector<8xf32> to vector<8x1xf32>
    %cst_130 = arith.constant 3.200000e+01 : f32
    %191 = vector.broadcast %cst_130 : f32 to vector<8x1xf32>
    %192 = arith.divf %190, %191 : vector<8x1xf32>
    %193 = vector.broadcast %185 : vector<8x1xf32> to vector<8x32xf32>
    %194 = arith.subf %177, %193 : vector<8x32xf32>
    %cst_131 = arith.constant 9.99999974E-6 : f32
    %195 = vector.broadcast %cst_131 : f32 to vector<8x1xf32>
    %196 = arith.addf %192, %195 : vector<8x1xf32>
    %197 = math.rsqrt %196 : vector<8x1xf32>
    %198 = vector.broadcast %197 : vector<8x1xf32> to vector<8x32xf32>
    %199 = arith.mulf %194, %198 : vector<8x32xf32>
    %200 = vector.broadcast %179 : vector<1x32xf32> to vector<8x32xf32>
    %201 = arith.mulf %199, %200 : vector<8x32xf32>
    %202 = vector.broadcast %181 : vector<1x32xf32> to vector<8x32xf32>
    %203 = arith.addf %201, %202 : vector<8x32xf32>
    %cst_132 = arith.constant 0.000000e+00 : f32
    %204 = vector.broadcast %cst_132 : f32 to vector<8x32xf32>
    %c12 = arith.constant 12 : index
    %c0_133 = arith.constant 0 : index
    %c0_134 = arith.constant 0 : index
    %205 = vector.load %arg4[%c12, %c0_133, %c0_134] : memref<48x32x8xf32, #tpu.memory_space<vmem>>, vector<1x32x8xf32>
    %206 = vector.shape_cast %205 : vector<1x32x8xf32> to vector<32x8xf32>
    %cst_135 = arith.constant dense<0.000000e+00> : vector<8x8xf32>
    %207 = tpu.matmul %203, %206, %cst_135 {dimension_numbers = #tpu.dot_dimension_numbers<[1], [0], [0], [1], [0, 0, 1, 1], [], []>} : vector<8x32xf32>, vector<32x8xf32>, vector<8x8xf32> -> vector<8x8xf32>
    %c12_136 = arith.constant 12 : index
    %c0_137 = arith.constant 0 : index
    %c0_138 = arith.constant 0 : index
    %208 = vector.load %arg5[%c12_136, %c0_137, %c0_138] : memref<48x1x8xf32, #tpu.memory_space<vmem>>, vector<1x1x8xf32>
    %209 = vector.shape_cast %208 : vector<1x1x8xf32> to vector<1x8xf32>
    %210 = vector.broadcast %209 : vector<1x8xf32> to vector<8x8xf32>
    %211 = arith.addf %207, %210 : vector<8x8xf32>
    %c16 = arith.constant 16 : index
    %c0_139 = arith.constant 0 : index
    %c0_140 = arith.constant 0 : index
    %212 = vector.load %arg4[%c16, %c0_139, %c0_140] : memref<48x32x8xf32, #tpu.memory_space<vmem>>, vector<1x32x8xf32>
    %213 = vector.shape_cast %212 : vector<1x32x8xf32> to vector<32x8xf32>
    %cst_141 = arith.constant dense<0.000000e+00> : vector<16x8xf32>
    %214 = tpu.matmul %5, %213, %cst_141 {dimension_numbers = #tpu.dot_dimension_numbers<[1], [0], [0], [1], [0, 0, 1, 1], [], []>} : vector<16x32xf32>, vector<32x8xf32>, vector<16x8xf32> -> vector<16x8xf32>
    %c16_142 = arith.constant 16 : index
    %c0_143 = arith.constant 0 : index
    %c0_144 = arith.constant 0 : index
    %215 = vector.load %arg5[%c16_142, %c0_143, %c0_144] : memref<48x1x8xf32, #tpu.memory_space<vmem>>, vector<1x1x8xf32>
    %216 = vector.shape_cast %215 : vector<1x1x8xf32> to vector<1x8xf32>
    %217 = vector.broadcast %216 : vector<1x8xf32> to vector<16x8xf32>
    %218 = arith.addf %214, %217 : vector<16x8xf32>
    %c20 = arith.constant 20 : index
    %c0_145 = arith.constant 0 : index
    %c0_146 = arith.constant 0 : index
    %219 = vector.load %arg4[%c20, %c0_145, %c0_146] : memref<48x32x8xf32, #tpu.memory_space<vmem>>, vector<1x32x8xf32>
    %220 = vector.shape_cast %219 : vector<1x32x8xf32> to vector<32x8xf32>
    %cst_147 = arith.constant dense<0.000000e+00> : vector<16x8xf32>
    %221 = tpu.matmul %5, %220, %cst_147 {dimension_numbers = #tpu.dot_dimension_numbers<[1], [0], [0], [1], [0, 0, 1, 1], [], []>} : vector<16x32xf32>, vector<32x8xf32>, vector<16x8xf32> -> vector<16x8xf32>
    %c20_148 = arith.constant 20 : index
    %c0_149 = arith.constant 0 : index
    %c0_150 = arith.constant 0 : index
    %222 = vector.load %arg5[%c20_148, %c0_149, %c0_150] : memref<48x1x8xf32, #tpu.memory_space<vmem>>, vector<1x1x8xf32>
    %223 = vector.shape_cast %222 : vector<1x1x8xf32> to vector<1x8xf32>
    %224 = vector.broadcast %223 : vector<1x8xf32> to vector<16x8xf32>
    %225 = arith.addf %221, %224 : vector<16x8xf32>
    %cst_151 = arith.constant dense<0.000000e+00> : vector<8x16xf32>
    %226 = tpu.matmul %211, %218, %cst_151 {dimension_numbers = #tpu.dot_dimension_numbers<[1], [1], [0], [0], [0, 0, 1, 0], [], []>} : vector<8x8xf32>, vector<16x8xf32>, vector<8x16xf32> -> vector<8x16xf32>
    %cst_152 = arith.constant 0.353553385 : f32
    %227 = vector.broadcast %cst_152 : f32 to vector<8x16xf32>
    %228 = arith.mulf %226, %227 : vector<8x16xf32>
    %cst_153 = arith.constant dense<0xFF800000> : vector<8xf32>
    %229 = vector.multi_reduction <maximumf>, %228, %cst_153 [1] : vector<8x16xf32> to vector<8xf32>
    %230 = vector.shape_cast %229 : vector<8xf32> to vector<8x1xf32>
    %231 = vector.broadcast %230 : vector<8x1xf32> to vector<8x16xf32>
    %232 = arith.subf %228, %231 : vector<8x16xf32>
    %233 = math.exp %232 : vector<8x16xf32>
    %cst_154 = arith.constant dense<0.000000e+00> : vector<8xf32>
    %234 = vector.multi_reduction <add>, %233, %cst_154 [1] : vector<8x16xf32> to vector<8xf32>
    %235 = vector.shape_cast %234 : vector<8xf32> to vector<8x1xf32>
    %236 = tpu.reciprocal %235 {approx = true} : vector<8x1xf32> -> vector<8x1xf32>
    %237 = vector.broadcast %236 : vector<8x1xf32> to vector<8x16xf32>
    %238 = arith.mulf %233, %237 : vector<8x16xf32>
    %cst_155 = arith.constant dense<0.000000e+00> : vector<8x8xf32>
    %239 = tpu.matmul %238, %225, %cst_155 {dimension_numbers = #tpu.dot_dimension_numbers<[1], [0], [0], [1], [0, 0, 1, 1], [], []>} : vector<8x16xf32>, vector<16x8xf32>, vector<8x8xf32> -> vector<8x8xf32>
    %c4_156 = arith.constant 4 : index
    %c0_157 = arith.constant 0 : index
    %c0_158 = arith.constant 0 : index
    %240 = vector.load %arg6[%c4_156, %c0_157, %c0_158] : memref<16x8x32xf32, #tpu.memory_space<vmem>>, vector<1x8x32xf32>
    %241 = vector.shape_cast %240 : vector<1x8x32xf32> to vector<8x32xf32>
    %cst_159 = arith.constant dense<0.000000e+00> : vector<8x32xf32>
    %242 = tpu.matmul %239, %241, %cst_159 {dimension_numbers = #tpu.dot_dimension_numbers<[1], [0], [0], [1], [0, 0, 1, 1], [], []>} : vector<8x8xf32>, vector<8x32xf32>, vector<8x32xf32> -> vector<8x32xf32>
    %243 = arith.addf %204, %242 : vector<8x32xf32>
    %c13 = arith.constant 13 : index
    %c0_160 = arith.constant 0 : index
    %c0_161 = arith.constant 0 : index
    %244 = vector.load %arg4[%c13, %c0_160, %c0_161] : memref<48x32x8xf32, #tpu.memory_space<vmem>>, vector<1x32x8xf32>
    %245 = vector.shape_cast %244 : vector<1x32x8xf32> to vector<32x8xf32>
    %cst_162 = arith.constant dense<0.000000e+00> : vector<8x8xf32>
    %246 = tpu.matmul %203, %245, %cst_162 {dimension_numbers = #tpu.dot_dimension_numbers<[1], [0], [0], [1], [0, 0, 1, 1], [], []>} : vector<8x32xf32>, vector<32x8xf32>, vector<8x8xf32> -> vector<8x8xf32>
    %c13_163 = arith.constant 13 : index
    %c0_164 = arith.constant 0 : index
    %c0_165 = arith.constant 0 : index
    %247 = vector.load %arg5[%c13_163, %c0_164, %c0_165] : memref<48x1x8xf32, #tpu.memory_space<vmem>>, vector<1x1x8xf32>
    %248 = vector.shape_cast %247 : vector<1x1x8xf32> to vector<1x8xf32>
    %249 = vector.broadcast %248 : vector<1x8xf32> to vector<8x8xf32>
    %250 = arith.addf %246, %249 : vector<8x8xf32>
    %c17 = arith.constant 17 : index
    %c0_166 = arith.constant 0 : index
    %c0_167 = arith.constant 0 : index
    %251 = vector.load %arg4[%c17, %c0_166, %c0_167] : memref<48x32x8xf32, #tpu.memory_space<vmem>>, vector<1x32x8xf32>
    %252 = vector.shape_cast %251 : vector<1x32x8xf32> to vector<32x8xf32>
    %cst_168 = arith.constant dense<0.000000e+00> : vector<16x8xf32>
    %253 = tpu.matmul %5, %252, %cst_168 {dimension_numbers = #tpu.dot_dimension_numbers<[1], [0], [0], [1], [0, 0, 1, 1], [], []>} : vector<16x32xf32>, vector<32x8xf32>, vector<16x8xf32> -> vector<16x8xf32>
    %c17_169 = arith.constant 17 : index
    %c0_170 = arith.constant 0 : index
    %c0_171 = arith.constant 0 : index
    %254 = vector.load %arg5[%c17_169, %c0_170, %c0_171] : memref<48x1x8xf32, #tpu.memory_space<vmem>>, vector<1x1x8xf32>
    %255 = vector.shape_cast %254 : vector<1x1x8xf32> to vector<1x8xf32>
    %256 = vector.broadcast %255 : vector<1x8xf32> to vector<16x8xf32>
    %257 = arith.addf %253, %256 : vector<16x8xf32>
    %c21 = arith.constant 21 : index
    %c0_172 = arith.constant 0 : index
    %c0_173 = arith.constant 0 : index
    %258 = vector.load %arg4[%c21, %c0_172, %c0_173] : memref<48x32x8xf32, #tpu.memory_space<vmem>>, vector<1x32x8xf32>
    %259 = vector.shape_cast %258 : vector<1x32x8xf32> to vector<32x8xf32>
    %cst_174 = arith.constant dense<0.000000e+00> : vector<16x8xf32>
    %260 = tpu.matmul %5, %259, %cst_174 {dimension_numbers = #tpu.dot_dimension_numbers<[1], [0], [0], [1], [0, 0, 1, 1], [], []>} : vector<16x32xf32>, vector<32x8xf32>, vector<16x8xf32> -> vector<16x8xf32>
    %c21_175 = arith.constant 21 : index
    %c0_176 = arith.constant 0 : index
    %c0_177 = arith.constant 0 : index
    %261 = vector.load %arg5[%c21_175, %c0_176, %c0_177] : memref<48x1x8xf32, #tpu.memory_space<vmem>>, vector<1x1x8xf32>
    %262 = vector.shape_cast %261 : vector<1x1x8xf32> to vector<1x8xf32>
    %263 = vector.broadcast %262 : vector<1x8xf32> to vector<16x8xf32>
    %264 = arith.addf %260, %263 : vector<16x8xf32>
    %cst_178 = arith.constant dense<0.000000e+00> : vector<8x16xf32>
    %265 = tpu.matmul %250, %257, %cst_178 {dimension_numbers = #tpu.dot_dimension_numbers<[1], [1], [0], [0], [0, 0, 1, 0], [], []>} : vector<8x8xf32>, vector<16x8xf32>, vector<8x16xf32> -> vector<8x16xf32>
    %cst_179 = arith.constant 0.353553385 : f32
    %266 = vector.broadcast %cst_179 : f32 to vector<8x16xf32>
    %267 = arith.mulf %265, %266 : vector<8x16xf32>
    %cst_180 = arith.constant dense<0xFF800000> : vector<8xf32>
    %268 = vector.multi_reduction <maximumf>, %267, %cst_180 [1] : vector<8x16xf32> to vector<8xf32>
    %269 = vector.shape_cast %268 : vector<8xf32> to vector<8x1xf32>
    %270 = vector.broadcast %269 : vector<8x1xf32> to vector<8x16xf32>
    %271 = arith.subf %267, %270 : vector<8x16xf32>
    %272 = math.exp %271 : vector<8x16xf32>
    %cst_181 = arith.constant dense<0.000000e+00> : vector<8xf32>
    %273 = vector.multi_reduction <add>, %272, %cst_181 [1] : vector<8x16xf32> to vector<8xf32>
    %274 = vector.shape_cast %273 : vector<8xf32> to vector<8x1xf32>
    %275 = tpu.reciprocal %274 {approx = true} : vector<8x1xf32> -> vector<8x1xf32>
    %276 = vector.broadcast %275 : vector<8x1xf32> to vector<8x16xf32>
    %277 = arith.mulf %272, %276 : vector<8x16xf32>
    %cst_182 = arith.constant dense<0.000000e+00> : vector<8x8xf32>
    %278 = tpu.matmul %277, %264, %cst_182 {dimension_numbers = #tpu.dot_dimension_numbers<[1], [0], [0], [1], [0, 0, 1, 1], [], []>} : vector<8x16xf32>, vector<16x8xf32>, vector<8x8xf32> -> vector<8x8xf32>
    %c5_183 = arith.constant 5 : index
    %c0_184 = arith.constant 0 : index
    %c0_185 = arith.constant 0 : index
    %279 = vector.load %arg6[%c5_183, %c0_184, %c0_185] : memref<16x8x32xf32, #tpu.memory_space<vmem>>, vector<1x8x32xf32>
    %280 = vector.shape_cast %279 : vector<1x8x32xf32> to vector<8x32xf32>
    %cst_186 = arith.constant dense<0.000000e+00> : vector<8x32xf32>
    %281 = tpu.matmul %278, %280, %cst_186 {dimension_numbers = #tpu.dot_dimension_numbers<[1], [0], [0], [1], [0, 0, 1, 1], [], []>} : vector<8x8xf32>, vector<8x32xf32>, vector<8x32xf32> -> vector<8x32xf32>
    %282 = arith.addf %243, %281 : vector<8x32xf32>
    %c14 = arith.constant 14 : index
    %c0_187 = arith.constant 0 : index
    %c0_188 = arith.constant 0 : index
    %283 = vector.load %arg4[%c14, %c0_187, %c0_188] : memref<48x32x8xf32, #tpu.memory_space<vmem>>, vector<1x32x8xf32>
    %284 = vector.shape_cast %283 : vector<1x32x8xf32> to vector<32x8xf32>
    %cst_189 = arith.constant dense<0.000000e+00> : vector<8x8xf32>
    %285 = tpu.matmul %203, %284, %cst_189 {dimension_numbers = #tpu.dot_dimension_numbers<[1], [0], [0], [1], [0, 0, 1, 1], [], []>} : vector<8x32xf32>, vector<32x8xf32>, vector<8x8xf32> -> vector<8x8xf32>
    %c14_190 = arith.constant 14 : index
    %c0_191 = arith.constant 0 : index
    %c0_192 = arith.constant 0 : index
    %286 = vector.load %arg5[%c14_190, %c0_191, %c0_192] : memref<48x1x8xf32, #tpu.memory_space<vmem>>, vector<1x1x8xf32>
    %287 = vector.shape_cast %286 : vector<1x1x8xf32> to vector<1x8xf32>
    %288 = vector.broadcast %287 : vector<1x8xf32> to vector<8x8xf32>
    %289 = arith.addf %285, %288 : vector<8x8xf32>
    %c18 = arith.constant 18 : index
    %c0_193 = arith.constant 0 : index
    %c0_194 = arith.constant 0 : index
    %290 = vector.load %arg4[%c18, %c0_193, %c0_194] : memref<48x32x8xf32, #tpu.memory_space<vmem>>, vector<1x32x8xf32>
    %291 = vector.shape_cast %290 : vector<1x32x8xf32> to vector<32x8xf32>
    %cst_195 = arith.constant dense<0.000000e+00> : vector<16x8xf32>
    %292 = tpu.matmul %5, %291, %cst_195 {dimension_numbers = #tpu.dot_dimension_numbers<[1], [0], [0], [1], [0, 0, 1, 1], [], []>} : vector<16x32xf32>, vector<32x8xf32>, vector<16x8xf32> -> vector<16x8xf32>
    %c18_196 = arith.constant 18 : index
    %c0_197 = arith.constant 0 : index
    %c0_198 = arith.constant 0 : index
    %293 = vector.load %arg5[%c18_196, %c0_197, %c0_198] : memref<48x1x8xf32, #tpu.memory_space<vmem>>, vector<1x1x8xf32>
    %294 = vector.shape_cast %293 : vector<1x1x8xf32> to vector<1x8xf32>
    %295 = vector.broadcast %294 : vector<1x8xf32> to vector<16x8xf32>
    %296 = arith.addf %292, %295 : vector<16x8xf32>
    %c22 = arith.constant 22 : index
    %c0_199 = arith.constant 0 : index
    %c0_200 = arith.constant 0 : index
    %297 = vector.load %arg4[%c22, %c0_199, %c0_200] : memref<48x32x8xf32, #tpu.memory_space<vmem>>, vector<1x32x8xf32>
    %298 = vector.shape_cast %297 : vector<1x32x8xf32> to vector<32x8xf32>
    %cst_201 = arith.constant dense<0.000000e+00> : vector<16x8xf32>
    %299 = tpu.matmul %5, %298, %cst_201 {dimension_numbers = #tpu.dot_dimension_numbers<[1], [0], [0], [1], [0, 0, 1, 1], [], []>} : vector<16x32xf32>, vector<32x8xf32>, vector<16x8xf32> -> vector<16x8xf32>
    %c22_202 = arith.constant 22 : index
    %c0_203 = arith.constant 0 : index
    %c0_204 = arith.constant 0 : index
    %300 = vector.load %arg5[%c22_202, %c0_203, %c0_204] : memref<48x1x8xf32, #tpu.memory_space<vmem>>, vector<1x1x8xf32>
    %301 = vector.shape_cast %300 : vector<1x1x8xf32> to vector<1x8xf32>
    %302 = vector.broadcast %301 : vector<1x8xf32> to vector<16x8xf32>
    %303 = arith.addf %299, %302 : vector<16x8xf32>
    %cst_205 = arith.constant dense<0.000000e+00> : vector<8x16xf32>
    %304 = tpu.matmul %289, %296, %cst_205 {dimension_numbers = #tpu.dot_dimension_numbers<[1], [1], [0], [0], [0, 0, 1, 0], [], []>} : vector<8x8xf32>, vector<16x8xf32>, vector<8x16xf32> -> vector<8x16xf32>
    %cst_206 = arith.constant 0.353553385 : f32
    %305 = vector.broadcast %cst_206 : f32 to vector<8x16xf32>
    %306 = arith.mulf %304, %305 : vector<8x16xf32>
    %cst_207 = arith.constant dense<0xFF800000> : vector<8xf32>
    %307 = vector.multi_reduction <maximumf>, %306, %cst_207 [1] : vector<8x16xf32> to vector<8xf32>
    %308 = vector.shape_cast %307 : vector<8xf32> to vector<8x1xf32>
    %309 = vector.broadcast %308 : vector<8x1xf32> to vector<8x16xf32>
    %310 = arith.subf %306, %309 : vector<8x16xf32>
    %311 = math.exp %310 : vector<8x16xf32>
    %cst_208 = arith.constant dense<0.000000e+00> : vector<8xf32>
    %312 = vector.multi_reduction <add>, %311, %cst_208 [1] : vector<8x16xf32> to vector<8xf32>
    %313 = vector.shape_cast %312 : vector<8xf32> to vector<8x1xf32>
    %314 = tpu.reciprocal %313 {approx = true} : vector<8x1xf32> -> vector<8x1xf32>
    %315 = vector.broadcast %314 : vector<8x1xf32> to vector<8x16xf32>
    %316 = arith.mulf %311, %315 : vector<8x16xf32>
    %cst_209 = arith.constant dense<0.000000e+00> : vector<8x8xf32>
    %317 = tpu.matmul %316, %303, %cst_209 {dimension_numbers = #tpu.dot_dimension_numbers<[1], [0], [0], [1], [0, 0, 1, 1], [], []>} : vector<8x16xf32>, vector<16x8xf32>, vector<8x8xf32> -> vector<8x8xf32>
    %c6_210 = arith.constant 6 : index
    %c0_211 = arith.constant 0 : index
    %c0_212 = arith.constant 0 : index
    %318 = vector.load %arg6[%c6_210, %c0_211, %c0_212] : memref<16x8x32xf32, #tpu.memory_space<vmem>>, vector<1x8x32xf32>
    %319 = vector.shape_cast %318 : vector<1x8x32xf32> to vector<8x32xf32>
    %cst_213 = arith.constant dense<0.000000e+00> : vector<8x32xf32>
    %320 = tpu.matmul %317, %319, %cst_213 {dimension_numbers = #tpu.dot_dimension_numbers<[1], [0], [0], [1], [0, 0, 1, 1], [], []>} : vector<8x8xf32>, vector<8x32xf32>, vector<8x32xf32> -> vector<8x32xf32>
    %321 = arith.addf %282, %320 : vector<8x32xf32>
    %c15 = arith.constant 15 : index
    %c0_214 = arith.constant 0 : index
    %c0_215 = arith.constant 0 : index
    %322 = vector.load %arg4[%c15, %c0_214, %c0_215] : memref<48x32x8xf32, #tpu.memory_space<vmem>>, vector<1x32x8xf32>
    %323 = vector.shape_cast %322 : vector<1x32x8xf32> to vector<32x8xf32>
    %cst_216 = arith.constant dense<0.000000e+00> : vector<8x8xf32>
    %324 = tpu.matmul %203, %323, %cst_216 {dimension_numbers = #tpu.dot_dimension_numbers<[1], [0], [0], [1], [0, 0, 1, 1], [], []>} : vector<8x32xf32>, vector<32x8xf32>, vector<8x8xf32> -> vector<8x8xf32>
    %c15_217 = arith.constant 15 : index
    %c0_218 = arith.constant 0 : index
    %c0_219 = arith.constant 0 : index
    %325 = vector.load %arg5[%c15_217, %c0_218, %c0_219] : memref<48x1x8xf32, #tpu.memory_space<vmem>>, vector<1x1x8xf32>
    %326 = vector.shape_cast %325 : vector<1x1x8xf32> to vector<1x8xf32>
    %327 = vector.broadcast %326 : vector<1x8xf32> to vector<8x8xf32>
    %328 = arith.addf %324, %327 : vector<8x8xf32>
    %c19 = arith.constant 19 : index
    %c0_220 = arith.constant 0 : index
    %c0_221 = arith.constant 0 : index
    %329 = vector.load %arg4[%c19, %c0_220, %c0_221] : memref<48x32x8xf32, #tpu.memory_space<vmem>>, vector<1x32x8xf32>
    %330 = vector.shape_cast %329 : vector<1x32x8xf32> to vector<32x8xf32>
    %cst_222 = arith.constant dense<0.000000e+00> : vector<16x8xf32>
    %331 = tpu.matmul %5, %330, %cst_222 {dimension_numbers = #tpu.dot_dimension_numbers<[1], [0], [0], [1], [0, 0, 1, 1], [], []>} : vector<16x32xf32>, vector<32x8xf32>, vector<16x8xf32> -> vector<16x8xf32>
    %c19_223 = arith.constant 19 : index
    %c0_224 = arith.constant 0 : index
    %c0_225 = arith.constant 0 : index
    %332 = vector.load %arg5[%c19_223, %c0_224, %c0_225] : memref<48x1x8xf32, #tpu.memory_space<vmem>>, vector<1x1x8xf32>
    %333 = vector.shape_cast %332 : vector<1x1x8xf32> to vector<1x8xf32>
    %334 = vector.broadcast %333 : vector<1x8xf32> to vector<16x8xf32>
    %335 = arith.addf %331, %334 : vector<16x8xf32>
    %c23 = arith.constant 23 : index
    %c0_226 = arith.constant 0 : index
    %c0_227 = arith.constant 0 : index
    %336 = vector.load %arg4[%c23, %c0_226, %c0_227] : memref<48x32x8xf32, #tpu.memory_space<vmem>>, vector<1x32x8xf32>
    %337 = vector.shape_cast %336 : vector<1x32x8xf32> to vector<32x8xf32>
    %cst_228 = arith.constant dense<0.000000e+00> : vector<16x8xf32>
    %338 = tpu.matmul %5, %337, %cst_228 {dimension_numbers = #tpu.dot_dimension_numbers<[1], [0], [0], [1], [0, 0, 1, 1], [], []>} : vector<16x32xf32>, vector<32x8xf32>, vector<16x8xf32> -> vector<16x8xf32>
    %c23_229 = arith.constant 23 : index
    %c0_230 = arith.constant 0 : index
    %c0_231 = arith.constant 0 : index
    %339 = vector.load %arg5[%c23_229, %c0_230, %c0_231] : memref<48x1x8xf32, #tpu.memory_space<vmem>>, vector<1x1x8xf32>
    %340 = vector.shape_cast %339 : vector<1x1x8xf32> to vector<1x8xf32>
    %341 = vector.broadcast %340 : vector<1x8xf32> to vector<16x8xf32>
    %342 = arith.addf %338, %341 : vector<16x8xf32>
    %cst_232 = arith.constant dense<0.000000e+00> : vector<8x16xf32>
    %343 = tpu.matmul %328, %335, %cst_232 {dimension_numbers = #tpu.dot_dimension_numbers<[1], [1], [0], [0], [0, 0, 1, 0], [], []>} : vector<8x8xf32>, vector<16x8xf32>, vector<8x16xf32> -> vector<8x16xf32>
    %cst_233 = arith.constant 0.353553385 : f32
    %344 = vector.broadcast %cst_233 : f32 to vector<8x16xf32>
    %345 = arith.mulf %343, %344 : vector<8x16xf32>
    %cst_234 = arith.constant dense<0xFF800000> : vector<8xf32>
    %346 = vector.multi_reduction <maximumf>, %345, %cst_234 [1] : vector<8x16xf32> to vector<8xf32>
    %347 = vector.shape_cast %346 : vector<8xf32> to vector<8x1xf32>
    %348 = vector.broadcast %347 : vector<8x1xf32> to vector<8x16xf32>
    %349 = arith.subf %345, %348 : vector<8x16xf32>
    %350 = math.exp %349 : vector<8x16xf32>
    %cst_235 = arith.constant dense<0.000000e+00> : vector<8xf32>
    %351 = vector.multi_reduction <add>, %350, %cst_235 [1] : vector<8x16xf32> to vector<8xf32>
    %352 = vector.shape_cast %351 : vector<8xf32> to vector<8x1xf32>
    %353 = tpu.reciprocal %352 {approx = true} : vector<8x1xf32> -> vector<8x1xf32>
    %354 = vector.broadcast %353 : vector<8x1xf32> to vector<8x16xf32>
    %355 = arith.mulf %350, %354 : vector<8x16xf32>
    %cst_236 = arith.constant dense<0.000000e+00> : vector<8x8xf32>
    %356 = tpu.matmul %355, %342, %cst_236 {dimension_numbers = #tpu.dot_dimension_numbers<[1], [0], [0], [1], [0, 0, 1, 1], [], []>} : vector<8x16xf32>, vector<16x8xf32>, vector<8x8xf32> -> vector<8x8xf32>
    %c7_237 = arith.constant 7 : index
    %c0_238 = arith.constant 0 : index
    %c0_239 = arith.constant 0 : index
    %357 = vector.load %arg6[%c7_237, %c0_238, %c0_239] : memref<16x8x32xf32, #tpu.memory_space<vmem>>, vector<1x8x32xf32>
    %358 = vector.shape_cast %357 : vector<1x8x32xf32> to vector<8x32xf32>
    %cst_240 = arith.constant dense<0.000000e+00> : vector<8x32xf32>
    %359 = tpu.matmul %356, %358, %cst_240 {dimension_numbers = #tpu.dot_dimension_numbers<[1], [0], [0], [1], [0, 0, 1, 1], [], []>} : vector<8x8xf32>, vector<8x32xf32>, vector<8x32xf32> -> vector<8x32xf32>
    %360 = arith.addf %321, %359 : vector<8x32xf32>
    %c1_241 = arith.constant 1 : index
    %c0_242 = arith.constant 0 : index
    %c0_243 = arith.constant 0 : index
    %361 = vector.load %arg7[%c1_241, %c0_242, %c0_243] : memref<4x1x32xf32, #tpu.memory_space<vmem>>, vector<1x1x32xf32>
    %362 = vector.shape_cast %361 : vector<1x1x32xf32> to vector<1x32xf32>
    %363 = vector.broadcast %362 : vector<1x32xf32> to vector<8x32xf32>
    %364 = arith.addf %360, %363 : vector<8x32xf32>
    %365 = arith.addf %203, %364 : vector<8x32xf32>
    %c1_244 = arith.constant 1 : index
    %c0_245 = arith.constant 0 : index
    %c0_246 = arith.constant 0 : index
    %366 = vector.load %arg12[%c1_244, %c0_245, %c0_246] : memref<6x1x32xf32, #tpu.memory_space<vmem>>, vector<1x1x32xf32>
    %367 = vector.shape_cast %366 : vector<1x1x32xf32> to vector<1x32xf32>
    %c1_247 = arith.constant 1 : index
    %c0_248 = arith.constant 0 : index
    %c0_249 = arith.constant 0 : index
    %368 = vector.load %arg13[%c1_247, %c0_248, %c0_249] : memref<6x1x32xf32, #tpu.memory_space<vmem>>, vector<1x1x32xf32>
    %369 = vector.shape_cast %368 : vector<1x1x32xf32> to vector<1x32xf32>
    %cst_250 = arith.constant dense<0.000000e+00> : vector<8xf32>
    %370 = vector.multi_reduction <add>, %365, %cst_250 [1] : vector<8x32xf32> to vector<8xf32>
    %371 = vector.shape_cast %370 : vector<8xf32> to vector<8x1xf32>
    %cst_251 = arith.constant 3.200000e+01 : f32
    %372 = vector.broadcast %cst_251 : f32 to vector<8x1xf32>
    %373 = arith.divf %371, %372 : vector<8x1xf32>
    %374 = vector.broadcast %373 : vector<8x1xf32> to vector<8x32xf32>
    %375 = arith.subf %365, %374 : vector<8x32xf32>
    %376 = arith.mulf %375, %375 : vector<8x32xf32>
    %cst_252 = arith.constant dense<0.000000e+00> : vector<8xf32>
    %377 = vector.multi_reduction <add>, %376, %cst_252 [1] : vector<8x32xf32> to vector<8xf32>
    %378 = vector.shape_cast %377 : vector<8xf32> to vector<8x1xf32>
    %cst_253 = arith.constant 3.200000e+01 : f32
    %379 = vector.broadcast %cst_253 : f32 to vector<8x1xf32>
    %380 = arith.divf %378, %379 : vector<8x1xf32>
    %381 = vector.broadcast %373 : vector<8x1xf32> to vector<8x32xf32>
    %382 = arith.subf %365, %381 : vector<8x32xf32>
    %cst_254 = arith.constant 9.99999974E-6 : f32
    %383 = vector.broadcast %cst_254 : f32 to vector<8x1xf32>
    %384 = arith.addf %380, %383 : vector<8x1xf32>
    %385 = math.rsqrt %384 : vector<8x1xf32>
    %386 = vector.broadcast %385 : vector<8x1xf32> to vector<8x32xf32>
    %387 = arith.mulf %382, %386 : vector<8x32xf32>
    %388 = vector.broadcast %367 : vector<1x32xf32> to vector<8x32xf32>
    %389 = arith.mulf %387, %388 : vector<8x32xf32>
    %390 = vector.broadcast %369 : vector<1x32xf32> to vector<8x32xf32>
    %391 = arith.addf %389, %390 : vector<8x32xf32>
    %c0_255 = arith.constant 0 : index
    %c0_256 = arith.constant 0 : index
    %c0_257 = arith.constant 0 : index
    %392 = vector.load %arg8[%c0_255, %c0_256, %c0_257] : memref<2x32x64xf32, #tpu.memory_space<vmem>>, vector<1x32x64xf32>
    %393 = vector.shape_cast %392 : vector<1x32x64xf32> to vector<32x64xf32>
    %cst_258 = arith.constant dense<0.000000e+00> : vector<8x64xf32>
    %394 = tpu.matmul %391, %393, %cst_258 {dimension_numbers = #tpu.dot_dimension_numbers<[1], [0], [0], [1], [0, 0, 1, 1], [], []>} : vector<8x32xf32>, vector<32x64xf32>, vector<8x64xf32> -> vector<8x64xf32>
    %c0_259 = arith.constant 0 : index
    %c0_260 = arith.constant 0 : index
    %c0_261 = arith.constant 0 : index
    %395 = vector.load %arg9[%c0_259, %c0_260, %c0_261] : memref<2x1x64xf32, #tpu.memory_space<vmem>>, vector<1x1x64xf32>
    %396 = vector.shape_cast %395 : vector<1x1x64xf32> to vector<1x64xf32>
    %397 = vector.broadcast %396 : vector<1x64xf32> to vector<8x64xf32>
    %398 = arith.addf %394, %397 : vector<8x64xf32>
    %cst_262 = arith.constant 0.000000e+00 : f32
    %399 = vector.broadcast %cst_262 : f32 to vector<8x64xf32>
    %400 = arith.cmpf ogt, %398, %399 : vector<8x64xf32>
    %cst_263 = arith.constant 0.00999999977 : f32
    %401 = vector.broadcast %cst_263 : f32 to vector<8x64xf32>
    %402 = arith.mulf %401, %398 : vector<8x64xf32>
    %403 = arith.select %400, %398, %402 : vector<8x64xi1>, vector<8x64xf32>
    %c0_264 = arith.constant 0 : index
    %c0_265 = arith.constant 0 : index
    %c0_266 = arith.constant 0 : index
    %404 = vector.load %arg10[%c0_264, %c0_265, %c0_266] : memref<2x64x32xf32, #tpu.memory_space<vmem>>, vector<1x64x32xf32>
    %405 = vector.shape_cast %404 : vector<1x64x32xf32> to vector<64x32xf32>
    %cst_267 = arith.constant dense<0.000000e+00> : vector<8x32xf32>
    %406 = tpu.matmul %403, %405, %cst_267 {dimension_numbers = #tpu.dot_dimension_numbers<[1], [0], [0], [1], [0, 0, 1, 1], [], []>} : vector<8x64xf32>, vector<64x32xf32>, vector<8x32xf32> -> vector<8x32xf32>
    %c0_268 = arith.constant 0 : index
    %c0_269 = arith.constant 0 : index
    %c0_270 = arith.constant 0 : index
    %407 = vector.load %arg11[%c0_268, %c0_269, %c0_270] : memref<2x1x32xf32, #tpu.memory_space<vmem>>, vector<1x1x32xf32>
    %408 = vector.shape_cast %407 : vector<1x1x32xf32> to vector<1x32xf32>
    %409 = vector.broadcast %408 : vector<1x32xf32> to vector<8x32xf32>
    %410 = arith.addf %406, %409 : vector<8x32xf32>
    %411 = arith.addf %391, %410 : vector<8x32xf32>
    %c2_271 = arith.constant 2 : index
    %c0_272 = arith.constant 0 : index
    %c0_273 = arith.constant 0 : index
    %412 = vector.load %arg12[%c2_271, %c0_272, %c0_273] : memref<6x1x32xf32, #tpu.memory_space<vmem>>, vector<1x1x32xf32>
    %413 = vector.shape_cast %412 : vector<1x1x32xf32> to vector<1x32xf32>
    %c2_274 = arith.constant 2 : index
    %c0_275 = arith.constant 0 : index
    %c0_276 = arith.constant 0 : index
    %414 = vector.load %arg13[%c2_274, %c0_275, %c0_276] : memref<6x1x32xf32, #tpu.memory_space<vmem>>, vector<1x1x32xf32>
    %415 = vector.shape_cast %414 : vector<1x1x32xf32> to vector<1x32xf32>
    %cst_277 = arith.constant dense<0.000000e+00> : vector<8xf32>
    %416 = vector.multi_reduction <add>, %411, %cst_277 [1] : vector<8x32xf32> to vector<8xf32>
    %417 = vector.shape_cast %416 : vector<8xf32> to vector<8x1xf32>
    %cst_278 = arith.constant 3.200000e+01 : f32
    %418 = vector.broadcast %cst_278 : f32 to vector<8x1xf32>
    %419 = arith.divf %417, %418 : vector<8x1xf32>
    %420 = vector.broadcast %419 : vector<8x1xf32> to vector<8x32xf32>
    %421 = arith.subf %411, %420 : vector<8x32xf32>
    %422 = arith.mulf %421, %421 : vector<8x32xf32>
    %cst_279 = arith.constant dense<0.000000e+00> : vector<8xf32>
    %423 = vector.multi_reduction <add>, %422, %cst_279 [1] : vector<8x32xf32> to vector<8xf32>
    %424 = vector.shape_cast %423 : vector<8xf32> to vector<8x1xf32>
    %cst_280 = arith.constant 3.200000e+01 : f32
    %425 = vector.broadcast %cst_280 : f32 to vector<8x1xf32>
    %426 = arith.divf %424, %425 : vector<8x1xf32>
    %427 = vector.broadcast %419 : vector<8x1xf32> to vector<8x32xf32>
    %428 = arith.subf %411, %427 : vector<8x32xf32>
    %cst_281 = arith.constant 9.99999974E-6 : f32
    %429 = vector.broadcast %cst_281 : f32 to vector<8x1xf32>
    %430 = arith.addf %426, %429 : vector<8x1xf32>
    %431 = math.rsqrt %430 : vector<8x1xf32>
    %432 = vector.broadcast %431 : vector<8x1xf32> to vector<8x32xf32>
    %433 = arith.mulf %428, %432 : vector<8x32xf32>
    %434 = vector.broadcast %413 : vector<1x32xf32> to vector<8x32xf32>
    %435 = arith.mulf %433, %434 : vector<8x32xf32>
    %436 = vector.broadcast %415 : vector<1x32xf32> to vector<8x32xf32>
    %437 = arith.addf %435, %436 : vector<8x32xf32>
    %cst_282 = arith.constant 0.000000e+00 : f32
    %438 = vector.broadcast %cst_282 : f32 to vector<8x32xf32>
    %c24 = arith.constant 24 : index
    %c0_283 = arith.constant 0 : index
    %c0_284 = arith.constant 0 : index
    %439 = vector.load %arg4[%c24, %c0_283, %c0_284] : memref<48x32x8xf32, #tpu.memory_space<vmem>>, vector<1x32x8xf32>
    %440 = vector.shape_cast %439 : vector<1x32x8xf32> to vector<32x8xf32>
    %cst_285 = arith.constant dense<0.000000e+00> : vector<8x8xf32>
    %441 = tpu.matmul %437, %440, %cst_285 {dimension_numbers = #tpu.dot_dimension_numbers<[1], [0], [0], [1], [0, 0, 1, 1], [], []>} : vector<8x32xf32>, vector<32x8xf32>, vector<8x8xf32> -> vector<8x8xf32>
    %c24_286 = arith.constant 24 : index
    %c0_287 = arith.constant 0 : index
    %c0_288 = arith.constant 0 : index
    %442 = vector.load %arg5[%c24_286, %c0_287, %c0_288] : memref<48x1x8xf32, #tpu.memory_space<vmem>>, vector<1x1x8xf32>
    %443 = vector.shape_cast %442 : vector<1x1x8xf32> to vector<1x8xf32>
    %444 = vector.broadcast %443 : vector<1x8xf32> to vector<8x8xf32>
    %445 = arith.addf %441, %444 : vector<8x8xf32>
    %c28 = arith.constant 28 : index
    %c0_289 = arith.constant 0 : index
    %c0_290 = arith.constant 0 : index
    %446 = vector.load %arg4[%c28, %c0_289, %c0_290] : memref<48x32x8xf32, #tpu.memory_space<vmem>>, vector<1x32x8xf32>
    %447 = vector.shape_cast %446 : vector<1x32x8xf32> to vector<32x8xf32>
    %cst_291 = arith.constant dense<0.000000e+00> : vector<8x8xf32>
    %448 = tpu.matmul %437, %447, %cst_291 {dimension_numbers = #tpu.dot_dimension_numbers<[1], [0], [0], [1], [0, 0, 1, 1], [], []>} : vector<8x32xf32>, vector<32x8xf32>, vector<8x8xf32> -> vector<8x8xf32>
    %c28_292 = arith.constant 28 : index
    %c0_293 = arith.constant 0 : index
    %c0_294 = arith.constant 0 : index
    %449 = vector.load %arg5[%c28_292, %c0_293, %c0_294] : memref<48x1x8xf32, #tpu.memory_space<vmem>>, vector<1x1x8xf32>
    %450 = vector.shape_cast %449 : vector<1x1x8xf32> to vector<1x8xf32>
    %451 = vector.broadcast %450 : vector<1x8xf32> to vector<8x8xf32>
    %452 = arith.addf %448, %451 : vector<8x8xf32>
    %c32 = arith.constant 32 : index
    %c0_295 = arith.constant 0 : index
    %c0_296 = arith.constant 0 : index
    %453 = vector.load %arg4[%c32, %c0_295, %c0_296] : memref<48x32x8xf32, #tpu.memory_space<vmem>>, vector<1x32x8xf32>
    %454 = vector.shape_cast %453 : vector<1x32x8xf32> to vector<32x8xf32>
    %cst_297 = arith.constant dense<0.000000e+00> : vector<8x8xf32>
    %455 = tpu.matmul %437, %454, %cst_297 {dimension_numbers = #tpu.dot_dimension_numbers<[1], [0], [0], [1], [0, 0, 1, 1], [], []>} : vector<8x32xf32>, vector<32x8xf32>, vector<8x8xf32> -> vector<8x8xf32>
    %c32_298 = arith.constant 32 : index
    %c0_299 = arith.constant 0 : index
    %c0_300 = arith.constant 0 : index
    %456 = vector.load %arg5[%c32_298, %c0_299, %c0_300] : memref<48x1x8xf32, #tpu.memory_space<vmem>>, vector<1x1x8xf32>
    %457 = vector.shape_cast %456 : vector<1x1x8xf32> to vector<1x8xf32>
    %458 = vector.broadcast %457 : vector<1x8xf32> to vector<8x8xf32>
    %459 = arith.addf %455, %458 : vector<8x8xf32>
    %cst_301 = arith.constant dense<0.000000e+00> : vector<8x8xf32>
    %460 = tpu.matmul %445, %452, %cst_301 {dimension_numbers = #tpu.dot_dimension_numbers<[1], [1], [0], [0], [0, 0, 1, 0], [], []>} : vector<8x8xf32>, vector<8x8xf32>, vector<8x8xf32> -> vector<8x8xf32>
    %cst_302 = arith.constant 0.353553385 : f32
    %461 = vector.broadcast %cst_302 : f32 to vector<8x8xf32>
    %462 = arith.mulf %460, %461 : vector<8x8xf32>
    %463 = arith.addf %462, %11 : vector<8x8xf32>
    %cst_303 = arith.constant dense<0xFF800000> : vector<8xf32>
    %464 = vector.multi_reduction <maximumf>, %463, %cst_303 [1] : vector<8x8xf32> to vector<8xf32>
    %465 = vector.shape_cast %464 : vector<8xf32> to vector<8x1xf32>
    %466 = vector.broadcast %465 : vector<8x1xf32> to vector<8x8xf32>
    %467 = arith.subf %463, %466 : vector<8x8xf32>
    %468 = math.exp %467 : vector<8x8xf32>
    %cst_304 = arith.constant dense<0.000000e+00> : vector<8xf32>
    %469 = vector.multi_reduction <add>, %468, %cst_304 [1] : vector<8x8xf32> to vector<8xf32>
    %470 = vector.shape_cast %469 : vector<8xf32> to vector<8x1xf32>
    %471 = tpu.reciprocal %470 {approx = true} : vector<8x1xf32> -> vector<8x1xf32>
    %472 = vector.broadcast %471 : vector<8x1xf32> to vector<8x8xf32>
    %473 = arith.mulf %468, %472 : vector<8x8xf32>
    %cst_305 = arith.constant dense<0.000000e+00> : vector<8x8xf32>
    %474 = tpu.matmul %473, %459, %cst_305 {dimension_numbers = #tpu.dot_dimension_numbers<[1], [0], [0], [1], [0, 0, 1, 1], [], []>} : vector<8x8xf32>, vector<8x8xf32>, vector<8x8xf32> -> vector<8x8xf32>
    %c8_306 = arith.constant 8 : index
    %c0_307 = arith.constant 0 : index
    %c0_308 = arith.constant 0 : index
    %475 = vector.load %arg6[%c8_306, %c0_307, %c0_308] : memref<16x8x32xf32, #tpu.memory_space<vmem>>, vector<1x8x32xf32>
    %476 = vector.shape_cast %475 : vector<1x8x32xf32> to vector<8x32xf32>
    %cst_309 = arith.constant dense<0.000000e+00> : vector<8x32xf32>
    %477 = tpu.matmul %474, %476, %cst_309 {dimension_numbers = #tpu.dot_dimension_numbers<[1], [0], [0], [1], [0, 0, 1, 1], [], []>} : vector<8x8xf32>, vector<8x32xf32>, vector<8x32xf32> -> vector<8x32xf32>
    %478 = arith.addf %438, %477 : vector<8x32xf32>
    %c25 = arith.constant 25 : index
    %c0_310 = arith.constant 0 : index
    %c0_311 = arith.constant 0 : index
    %479 = vector.load %arg4[%c25, %c0_310, %c0_311] : memref<48x32x8xf32, #tpu.memory_space<vmem>>, vector<1x32x8xf32>
    %480 = vector.shape_cast %479 : vector<1x32x8xf32> to vector<32x8xf32>
    %cst_312 = arith.constant dense<0.000000e+00> : vector<8x8xf32>
    %481 = tpu.matmul %437, %480, %cst_312 {dimension_numbers = #tpu.dot_dimension_numbers<[1], [0], [0], [1], [0, 0, 1, 1], [], []>} : vector<8x32xf32>, vector<32x8xf32>, vector<8x8xf32> -> vector<8x8xf32>
    %c25_313 = arith.constant 25 : index
    %c0_314 = arith.constant 0 : index
    %c0_315 = arith.constant 0 : index
    %482 = vector.load %arg5[%c25_313, %c0_314, %c0_315] : memref<48x1x8xf32, #tpu.memory_space<vmem>>, vector<1x1x8xf32>
    %483 = vector.shape_cast %482 : vector<1x1x8xf32> to vector<1x8xf32>
    %484 = vector.broadcast %483 : vector<1x8xf32> to vector<8x8xf32>
    %485 = arith.addf %481, %484 : vector<8x8xf32>
    %c29 = arith.constant 29 : index
    %c0_316 = arith.constant 0 : index
    %c0_317 = arith.constant 0 : index
    %486 = vector.load %arg4[%c29, %c0_316, %c0_317] : memref<48x32x8xf32, #tpu.memory_space<vmem>>, vector<1x32x8xf32>
    %487 = vector.shape_cast %486 : vector<1x32x8xf32> to vector<32x8xf32>
    %cst_318 = arith.constant dense<0.000000e+00> : vector<8x8xf32>
    %488 = tpu.matmul %437, %487, %cst_318 {dimension_numbers = #tpu.dot_dimension_numbers<[1], [0], [0], [1], [0, 0, 1, 1], [], []>} : vector<8x32xf32>, vector<32x8xf32>, vector<8x8xf32> -> vector<8x8xf32>
    %c29_319 = arith.constant 29 : index
    %c0_320 = arith.constant 0 : index
    %c0_321 = arith.constant 0 : index
    %489 = vector.load %arg5[%c29_319, %c0_320, %c0_321] : memref<48x1x8xf32, #tpu.memory_space<vmem>>, vector<1x1x8xf32>
    %490 = vector.shape_cast %489 : vector<1x1x8xf32> to vector<1x8xf32>
    %491 = vector.broadcast %490 : vector<1x8xf32> to vector<8x8xf32>
    %492 = arith.addf %488, %491 : vector<8x8xf32>
    %c33 = arith.constant 33 : index
    %c0_322 = arith.constant 0 : index
    %c0_323 = arith.constant 0 : index
    %493 = vector.load %arg4[%c33, %c0_322, %c0_323] : memref<48x32x8xf32, #tpu.memory_space<vmem>>, vector<1x32x8xf32>
    %494 = vector.shape_cast %493 : vector<1x32x8xf32> to vector<32x8xf32>
    %cst_324 = arith.constant dense<0.000000e+00> : vector<8x8xf32>
    %495 = tpu.matmul %437, %494, %cst_324 {dimension_numbers = #tpu.dot_dimension_numbers<[1], [0], [0], [1], [0, 0, 1, 1], [], []>} : vector<8x32xf32>, vector<32x8xf32>, vector<8x8xf32> -> vector<8x8xf32>
    %c33_325 = arith.constant 33 : index
    %c0_326 = arith.constant 0 : index
    %c0_327 = arith.constant 0 : index
    %496 = vector.load %arg5[%c33_325, %c0_326, %c0_327] : memref<48x1x8xf32, #tpu.memory_space<vmem>>, vector<1x1x8xf32>
    %497 = vector.shape_cast %496 : vector<1x1x8xf32> to vector<1x8xf32>
    %498 = vector.broadcast %497 : vector<1x8xf32> to vector<8x8xf32>
    %499 = arith.addf %495, %498 : vector<8x8xf32>
    %cst_328 = arith.constant dense<0.000000e+00> : vector<8x8xf32>
    %500 = tpu.matmul %485, %492, %cst_328 {dimension_numbers = #tpu.dot_dimension_numbers<[1], [1], [0], [0], [0, 0, 1, 0], [], []>} : vector<8x8xf32>, vector<8x8xf32>, vector<8x8xf32> -> vector<8x8xf32>
    %cst_329 = arith.constant 0.353553385 : f32
    %501 = vector.broadcast %cst_329 : f32 to vector<8x8xf32>
    %502 = arith.mulf %500, %501 : vector<8x8xf32>
    %503 = arith.addf %502, %11 : vector<8x8xf32>
    %cst_330 = arith.constant dense<0xFF800000> : vector<8xf32>
    %504 = vector.multi_reduction <maximumf>, %503, %cst_330 [1] : vector<8x8xf32> to vector<8xf32>
    %505 = vector.shape_cast %504 : vector<8xf32> to vector<8x1xf32>
    %506 = vector.broadcast %505 : vector<8x1xf32> to vector<8x8xf32>
    %507 = arith.subf %503, %506 : vector<8x8xf32>
    %508 = math.exp %507 : vector<8x8xf32>
    %cst_331 = arith.constant dense<0.000000e+00> : vector<8xf32>
    %509 = vector.multi_reduction <add>, %508, %cst_331 [1] : vector<8x8xf32> to vector<8xf32>
    %510 = vector.shape_cast %509 : vector<8xf32> to vector<8x1xf32>
    %511 = tpu.reciprocal %510 {approx = true} : vector<8x1xf32> -> vector<8x1xf32>
    %512 = vector.broadcast %511 : vector<8x1xf32> to vector<8x8xf32>
    %513 = arith.mulf %508, %512 : vector<8x8xf32>
    %cst_332 = arith.constant dense<0.000000e+00> : vector<8x8xf32>
    %514 = tpu.matmul %513, %499, %cst_332 {dimension_numbers = #tpu.dot_dimension_numbers<[1], [0], [0], [1], [0, 0, 1, 1], [], []>} : vector<8x8xf32>, vector<8x8xf32>, vector<8x8xf32> -> vector<8x8xf32>
    %c9_333 = arith.constant 9 : index
    %c0_334 = arith.constant 0 : index
    %c0_335 = arith.constant 0 : index
    %515 = vector.load %arg6[%c9_333, %c0_334, %c0_335] : memref<16x8x32xf32, #tpu.memory_space<vmem>>, vector<1x8x32xf32>
    %516 = vector.shape_cast %515 : vector<1x8x32xf32> to vector<8x32xf32>
    %cst_336 = arith.constant dense<0.000000e+00> : vector<8x32xf32>
    %517 = tpu.matmul %514, %516, %cst_336 {dimension_numbers = #tpu.dot_dimension_numbers<[1], [0], [0], [1], [0, 0, 1, 1], [], []>} : vector<8x8xf32>, vector<8x32xf32>, vector<8x32xf32> -> vector<8x32xf32>
    %518 = arith.addf %478, %517 : vector<8x32xf32>
    %c26 = arith.constant 26 : index
    %c0_337 = arith.constant 0 : index
    %c0_338 = arith.constant 0 : index
    %519 = vector.load %arg4[%c26, %c0_337, %c0_338] : memref<48x32x8xf32, #tpu.memory_space<vmem>>, vector<1x32x8xf32>
    %520 = vector.shape_cast %519 : vector<1x32x8xf32> to vector<32x8xf32>
    %cst_339 = arith.constant dense<0.000000e+00> : vector<8x8xf32>
    %521 = tpu.matmul %437, %520, %cst_339 {dimension_numbers = #tpu.dot_dimension_numbers<[1], [0], [0], [1], [0, 0, 1, 1], [], []>} : vector<8x32xf32>, vector<32x8xf32>, vector<8x8xf32> -> vector<8x8xf32>
    %c26_340 = arith.constant 26 : index
    %c0_341 = arith.constant 0 : index
    %c0_342 = arith.constant 0 : index
    %522 = vector.load %arg5[%c26_340, %c0_341, %c0_342] : memref<48x1x8xf32, #tpu.memory_space<vmem>>, vector<1x1x8xf32>
    %523 = vector.shape_cast %522 : vector<1x1x8xf32> to vector<1x8xf32>
    %524 = vector.broadcast %523 : vector<1x8xf32> to vector<8x8xf32>
    %525 = arith.addf %521, %524 : vector<8x8xf32>
    %c30 = arith.constant 30 : index
    %c0_343 = arith.constant 0 : index
    %c0_344 = arith.constant 0 : index
    %526 = vector.load %arg4[%c30, %c0_343, %c0_344] : memref<48x32x8xf32, #tpu.memory_space<vmem>>, vector<1x32x8xf32>
    %527 = vector.shape_cast %526 : vector<1x32x8xf32> to vector<32x8xf32>
    %cst_345 = arith.constant dense<0.000000e+00> : vector<8x8xf32>
    %528 = tpu.matmul %437, %527, %cst_345 {dimension_numbers = #tpu.dot_dimension_numbers<[1], [0], [0], [1], [0, 0, 1, 1], [], []>} : vector<8x32xf32>, vector<32x8xf32>, vector<8x8xf32> -> vector<8x8xf32>
    %c30_346 = arith.constant 30 : index
    %c0_347 = arith.constant 0 : index
    %c0_348 = arith.constant 0 : index
    %529 = vector.load %arg5[%c30_346, %c0_347, %c0_348] : memref<48x1x8xf32, #tpu.memory_space<vmem>>, vector<1x1x8xf32>
    %530 = vector.shape_cast %529 : vector<1x1x8xf32> to vector<1x8xf32>
    %531 = vector.broadcast %530 : vector<1x8xf32> to vector<8x8xf32>
    %532 = arith.addf %528, %531 : vector<8x8xf32>
    %c34 = arith.constant 34 : index
    %c0_349 = arith.constant 0 : index
    %c0_350 = arith.constant 0 : index
    %533 = vector.load %arg4[%c34, %c0_349, %c0_350] : memref<48x32x8xf32, #tpu.memory_space<vmem>>, vector<1x32x8xf32>
    %534 = vector.shape_cast %533 : vector<1x32x8xf32> to vector<32x8xf32>
    %cst_351 = arith.constant dense<0.000000e+00> : vector<8x8xf32>
    %535 = tpu.matmul %437, %534, %cst_351 {dimension_numbers = #tpu.dot_dimension_numbers<[1], [0], [0], [1], [0, 0, 1, 1], [], []>} : vector<8x32xf32>, vector<32x8xf32>, vector<8x8xf32> -> vector<8x8xf32>
    %c34_352 = arith.constant 34 : index
    %c0_353 = arith.constant 0 : index
    %c0_354 = arith.constant 0 : index
    %536 = vector.load %arg5[%c34_352, %c0_353, %c0_354] : memref<48x1x8xf32, #tpu.memory_space<vmem>>, vector<1x1x8xf32>
    %537 = vector.shape_cast %536 : vector<1x1x8xf32> to vector<1x8xf32>
    %538 = vector.broadcast %537 : vector<1x8xf32> to vector<8x8xf32>
    %539 = arith.addf %535, %538 : vector<8x8xf32>
    %cst_355 = arith.constant dense<0.000000e+00> : vector<8x8xf32>
    %540 = tpu.matmul %525, %532, %cst_355 {dimension_numbers = #tpu.dot_dimension_numbers<[1], [1], [0], [0], [0, 0, 1, 0], [], []>} : vector<8x8xf32>, vector<8x8xf32>, vector<8x8xf32> -> vector<8x8xf32>
    %cst_356 = arith.constant 0.353553385 : f32
    %541 = vector.broadcast %cst_356 : f32 to vector<8x8xf32>
    %542 = arith.mulf %540, %541 : vector<8x8xf32>
    %543 = arith.addf %542, %11 : vector<8x8xf32>
    %cst_357 = arith.constant dense<0xFF800000> : vector<8xf32>
    %544 = vector.multi_reduction <maximumf>, %543, %cst_357 [1] : vector<8x8xf32> to vector<8xf32>
    %545 = vector.shape_cast %544 : vector<8xf32> to vector<8x1xf32>
    %546 = vector.broadcast %545 : vector<8x1xf32> to vector<8x8xf32>
    %547 = arith.subf %543, %546 : vector<8x8xf32>
    %548 = math.exp %547 : vector<8x8xf32>
    %cst_358 = arith.constant dense<0.000000e+00> : vector<8xf32>
    %549 = vector.multi_reduction <add>, %548, %cst_358 [1] : vector<8x8xf32> to vector<8xf32>
    %550 = vector.shape_cast %549 : vector<8xf32> to vector<8x1xf32>
    %551 = tpu.reciprocal %550 {approx = true} : vector<8x1xf32> -> vector<8x1xf32>
    %552 = vector.broadcast %551 : vector<8x1xf32> to vector<8x8xf32>
    %553 = arith.mulf %548, %552 : vector<8x8xf32>
    %cst_359 = arith.constant dense<0.000000e+00> : vector<8x8xf32>
    %554 = tpu.matmul %553, %539, %cst_359 {dimension_numbers = #tpu.dot_dimension_numbers<[1], [0], [0], [1], [0, 0, 1, 1], [], []>} : vector<8x8xf32>, vector<8x8xf32>, vector<8x8xf32> -> vector<8x8xf32>
    %c10_360 = arith.constant 10 : index
    %c0_361 = arith.constant 0 : index
    %c0_362 = arith.constant 0 : index
    %555 = vector.load %arg6[%c10_360, %c0_361, %c0_362] : memref<16x8x32xf32, #tpu.memory_space<vmem>>, vector<1x8x32xf32>
    %556 = vector.shape_cast %555 : vector<1x8x32xf32> to vector<8x32xf32>
    %cst_363 = arith.constant dense<0.000000e+00> : vector<8x32xf32>
    %557 = tpu.matmul %554, %556, %cst_363 {dimension_numbers = #tpu.dot_dimension_numbers<[1], [0], [0], [1], [0, 0, 1, 1], [], []>} : vector<8x8xf32>, vector<8x32xf32>, vector<8x32xf32> -> vector<8x32xf32>
    %558 = arith.addf %518, %557 : vector<8x32xf32>
    %c27 = arith.constant 27 : index
    %c0_364 = arith.constant 0 : index
    %c0_365 = arith.constant 0 : index
    %559 = vector.load %arg4[%c27, %c0_364, %c0_365] : memref<48x32x8xf32, #tpu.memory_space<vmem>>, vector<1x32x8xf32>
    %560 = vector.shape_cast %559 : vector<1x32x8xf32> to vector<32x8xf32>
    %cst_366 = arith.constant dense<0.000000e+00> : vector<8x8xf32>
    %561 = tpu.matmul %437, %560, %cst_366 {dimension_numbers = #tpu.dot_dimension_numbers<[1], [0], [0], [1], [0, 0, 1, 1], [], []>} : vector<8x32xf32>, vector<32x8xf32>, vector<8x8xf32> -> vector<8x8xf32>
    %c27_367 = arith.constant 27 : index
    %c0_368 = arith.constant 0 : index
    %c0_369 = arith.constant 0 : index
    %562 = vector.load %arg5[%c27_367, %c0_368, %c0_369] : memref<48x1x8xf32, #tpu.memory_space<vmem>>, vector<1x1x8xf32>
    %563 = vector.shape_cast %562 : vector<1x1x8xf32> to vector<1x8xf32>
    %564 = vector.broadcast %563 : vector<1x8xf32> to vector<8x8xf32>
    %565 = arith.addf %561, %564 : vector<8x8xf32>
    %c31 = arith.constant 31 : index
    %c0_370 = arith.constant 0 : index
    %c0_371 = arith.constant 0 : index
    %566 = vector.load %arg4[%c31, %c0_370, %c0_371] : memref<48x32x8xf32, #tpu.memory_space<vmem>>, vector<1x32x8xf32>
    %567 = vector.shape_cast %566 : vector<1x32x8xf32> to vector<32x8xf32>
    %cst_372 = arith.constant dense<0.000000e+00> : vector<8x8xf32>
    %568 = tpu.matmul %437, %567, %cst_372 {dimension_numbers = #tpu.dot_dimension_numbers<[1], [0], [0], [1], [0, 0, 1, 1], [], []>} : vector<8x32xf32>, vector<32x8xf32>, vector<8x8xf32> -> vector<8x8xf32>
    %c31_373 = arith.constant 31 : index
    %c0_374 = arith.constant 0 : index
    %c0_375 = arith.constant 0 : index
    %569 = vector.load %arg5[%c31_373, %c0_374, %c0_375] : memref<48x1x8xf32, #tpu.memory_space<vmem>>, vector<1x1x8xf32>
    %570 = vector.shape_cast %569 : vector<1x1x8xf32> to vector<1x8xf32>
    %571 = vector.broadcast %570 : vector<1x8xf32> to vector<8x8xf32>
    %572 = arith.addf %568, %571 : vector<8x8xf32>
    %c35 = arith.constant 35 : index
    %c0_376 = arith.constant 0 : index
    %c0_377 = arith.constant 0 : index
    %573 = vector.load %arg4[%c35, %c0_376, %c0_377] : memref<48x32x8xf32, #tpu.memory_space<vmem>>, vector<1x32x8xf32>
    %574 = vector.shape_cast %573 : vector<1x32x8xf32> to vector<32x8xf32>
    %cst_378 = arith.constant dense<0.000000e+00> : vector<8x8xf32>
    %575 = tpu.matmul %437, %574, %cst_378 {dimension_numbers = #tpu.dot_dimension_numbers<[1], [0], [0], [1], [0, 0, 1, 1], [], []>} : vector<8x32xf32>, vector<32x8xf32>, vector<8x8xf32> -> vector<8x8xf32>
    %c35_379 = arith.constant 35 : index
    %c0_380 = arith.constant 0 : index
    %c0_381 = arith.constant 0 : index
    %576 = vector.load %arg5[%c35_379, %c0_380, %c0_381] : memref<48x1x8xf32, #tpu.memory_space<vmem>>, vector<1x1x8xf32>
    %577 = vector.shape_cast %576 : vector<1x1x8xf32> to vector<1x8xf32>
    %578 = vector.broadcast %577 : vector<1x8xf32> to vector<8x8xf32>
    %579 = arith.addf %575, %578 : vector<8x8xf32>
    %cst_382 = arith.constant dense<0.000000e+00> : vector<8x8xf32>
    %580 = tpu.matmul %565, %572, %cst_382 {dimension_numbers = #tpu.dot_dimension_numbers<[1], [1], [0], [0], [0, 0, 1, 0], [], []>} : vector<8x8xf32>, vector<8x8xf32>, vector<8x8xf32> -> vector<8x8xf32>
    %cst_383 = arith.constant 0.353553385 : f32
    %581 = vector.broadcast %cst_383 : f32 to vector<8x8xf32>
    %582 = arith.mulf %580, %581 : vector<8x8xf32>
    %583 = arith.addf %582, %11 : vector<8x8xf32>
    %cst_384 = arith.constant dense<0xFF800000> : vector<8xf32>
    %584 = vector.multi_reduction <maximumf>, %583, %cst_384 [1] : vector<8x8xf32> to vector<8xf32>
    %585 = vector.shape_cast %584 : vector<8xf32> to vector<8x1xf32>
    %586 = vector.broadcast %585 : vector<8x1xf32> to vector<8x8xf32>
    %587 = arith.subf %583, %586 : vector<8x8xf32>
    %588 = math.exp %587 : vector<8x8xf32>
    %cst_385 = arith.constant dense<0.000000e+00> : vector<8xf32>
    %589 = vector.multi_reduction <add>, %588, %cst_385 [1] : vector<8x8xf32> to vector<8xf32>
    %590 = vector.shape_cast %589 : vector<8xf32> to vector<8x1xf32>
    %591 = tpu.reciprocal %590 {approx = true} : vector<8x1xf32> -> vector<8x1xf32>
    %592 = vector.broadcast %591 : vector<8x1xf32> to vector<8x8xf32>
    %593 = arith.mulf %588, %592 : vector<8x8xf32>
    %cst_386 = arith.constant dense<0.000000e+00> : vector<8x8xf32>
    %594 = tpu.matmul %593, %579, %cst_386 {dimension_numbers = #tpu.dot_dimension_numbers<[1], [0], [0], [1], [0, 0, 1, 1], [], []>} : vector<8x8xf32>, vector<8x8xf32>, vector<8x8xf32> -> vector<8x8xf32>
    %c11_387 = arith.constant 11 : index
    %c0_388 = arith.constant 0 : index
    %c0_389 = arith.constant 0 : index
    %595 = vector.load %arg6[%c11_387, %c0_388, %c0_389] : memref<16x8x32xf32, #tpu.memory_space<vmem>>, vector<1x8x32xf32>
    %596 = vector.shape_cast %595 : vector<1x8x32xf32> to vector<8x32xf32>
    %cst_390 = arith.constant dense<0.000000e+00> : vector<8x32xf32>
    %597 = tpu.matmul %594, %596, %cst_390 {dimension_numbers = #tpu.dot_dimension_numbers<[1], [0], [0], [1], [0, 0, 1, 1], [], []>} : vector<8x8xf32>, vector<8x32xf32>, vector<8x32xf32> -> vector<8x32xf32>
    %598 = arith.addf %558, %597 : vector<8x32xf32>
    %c2_391 = arith.constant 2 : index
    %c0_392 = arith.constant 0 : index
    %c0_393 = arith.constant 0 : index
    %599 = vector.load %arg7[%c2_391, %c0_392, %c0_393] : memref<4x1x32xf32, #tpu.memory_space<vmem>>, vector<1x1x32xf32>
    %600 = vector.shape_cast %599 : vector<1x1x32xf32> to vector<1x32xf32>
    %601 = vector.broadcast %600 : vector<1x32xf32> to vector<8x32xf32>
    %602 = arith.addf %598, %601 : vector<8x32xf32>
    %603 = arith.addf %437, %602 : vector<8x32xf32>
    %c3_394 = arith.constant 3 : index
    %c0_395 = arith.constant 0 : index
    %c0_396 = arith.constant 0 : index
    %604 = vector.load %arg12[%c3_394, %c0_395, %c0_396] : memref<6x1x32xf32, #tpu.memory_space<vmem>>, vector<1x1x32xf32>
    %605 = vector.shape_cast %604 : vector<1x1x32xf32> to vector<1x32xf32>
    %c3_397 = arith.constant 3 : index
    %c0_398 = arith.constant 0 : index
    %c0_399 = arith.constant 0 : index
    %606 = vector.load %arg13[%c3_397, %c0_398, %c0_399] : memref<6x1x32xf32, #tpu.memory_space<vmem>>, vector<1x1x32xf32>
    %607 = vector.shape_cast %606 : vector<1x1x32xf32> to vector<1x32xf32>
    %cst_400 = arith.constant dense<0.000000e+00> : vector<8xf32>
    %608 = vector.multi_reduction <add>, %603, %cst_400 [1] : vector<8x32xf32> to vector<8xf32>
    %609 = vector.shape_cast %608 : vector<8xf32> to vector<8x1xf32>
    %cst_401 = arith.constant 3.200000e+01 : f32
    %610 = vector.broadcast %cst_401 : f32 to vector<8x1xf32>
    %611 = arith.divf %609, %610 : vector<8x1xf32>
    %612 = vector.broadcast %611 : vector<8x1xf32> to vector<8x32xf32>
    %613 = arith.subf %603, %612 : vector<8x32xf32>
    %614 = arith.mulf %613, %613 : vector<8x32xf32>
    %cst_402 = arith.constant dense<0.000000e+00> : vector<8xf32>
    %615 = vector.multi_reduction <add>, %614, %cst_402 [1] : vector<8x32xf32> to vector<8xf32>
    %616 = vector.shape_cast %615 : vector<8xf32> to vector<8x1xf32>
    %cst_403 = arith.constant 3.200000e+01 : f32
    %617 = vector.broadcast %cst_403 : f32 to vector<8x1xf32>
    %618 = arith.divf %616, %617 : vector<8x1xf32>
    %619 = vector.broadcast %611 : vector<8x1xf32> to vector<8x32xf32>
    %620 = arith.subf %603, %619 : vector<8x32xf32>
    %cst_404 = arith.constant 9.99999974E-6 : f32
    %621 = vector.broadcast %cst_404 : f32 to vector<8x1xf32>
    %622 = arith.addf %618, %621 : vector<8x1xf32>
    %623 = math.rsqrt %622 : vector<8x1xf32>
    %624 = vector.broadcast %623 : vector<8x1xf32> to vector<8x32xf32>
    %625 = arith.mulf %620, %624 : vector<8x32xf32>
    %626 = vector.broadcast %605 : vector<1x32xf32> to vector<8x32xf32>
    %627 = arith.mulf %625, %626 : vector<8x32xf32>
    %628 = vector.broadcast %607 : vector<1x32xf32> to vector<8x32xf32>
    %629 = arith.addf %627, %628 : vector<8x32xf32>
    %cst_405 = arith.constant 0.000000e+00 : f32
    %630 = vector.broadcast %cst_405 : f32 to vector<8x32xf32>
    %c36 = arith.constant 36 : index
    %c0_406 = arith.constant 0 : index
    %c0_407 = arith.constant 0 : index
    %631 = vector.load %arg4[%c36, %c0_406, %c0_407] : memref<48x32x8xf32, #tpu.memory_space<vmem>>, vector<1x32x8xf32>
    %632 = vector.shape_cast %631 : vector<1x32x8xf32> to vector<32x8xf32>
    %cst_408 = arith.constant dense<0.000000e+00> : vector<8x8xf32>
    %633 = tpu.matmul %629, %632, %cst_408 {dimension_numbers = #tpu.dot_dimension_numbers<[1], [0], [0], [1], [0, 0, 1, 1], [], []>} : vector<8x32xf32>, vector<32x8xf32>, vector<8x8xf32> -> vector<8x8xf32>
    %c36_409 = arith.constant 36 : index
    %c0_410 = arith.constant 0 : index
    %c0_411 = arith.constant 0 : index
    %634 = vector.load %arg5[%c36_409, %c0_410, %c0_411] : memref<48x1x8xf32, #tpu.memory_space<vmem>>, vector<1x1x8xf32>
    %635 = vector.shape_cast %634 : vector<1x1x8xf32> to vector<1x8xf32>
    %636 = vector.broadcast %635 : vector<1x8xf32> to vector<8x8xf32>
    %637 = arith.addf %633, %636 : vector<8x8xf32>
    %c40 = arith.constant 40 : index
    %c0_412 = arith.constant 0 : index
    %c0_413 = arith.constant 0 : index
    %638 = vector.load %arg4[%c40, %c0_412, %c0_413] : memref<48x32x8xf32, #tpu.memory_space<vmem>>, vector<1x32x8xf32>
    %639 = vector.shape_cast %638 : vector<1x32x8xf32> to vector<32x8xf32>
    %cst_414 = arith.constant dense<0.000000e+00> : vector<16x8xf32>
    %640 = tpu.matmul %5, %639, %cst_414 {dimension_numbers = #tpu.dot_dimension_numbers<[1], [0], [0], [1], [0, 0, 1, 1], [], []>} : vector<16x32xf32>, vector<32x8xf32>, vector<16x8xf32> -> vector<16x8xf32>
    %c40_415 = arith.constant 40 : index
    %c0_416 = arith.constant 0 : index
    %c0_417 = arith.constant 0 : index
    %641 = vector.load %arg5[%c40_415, %c0_416, %c0_417] : memref<48x1x8xf32, #tpu.memory_space<vmem>>, vector<1x1x8xf32>
    %642 = vector.shape_cast %641 : vector<1x1x8xf32> to vector<1x8xf32>
    %643 = vector.broadcast %642 : vector<1x8xf32> to vector<16x8xf32>
    %644 = arith.addf %640, %643 : vector<16x8xf32>
    %c44 = arith.constant 44 : index
    %c0_418 = arith.constant 0 : index
    %c0_419 = arith.constant 0 : index
    %645 = vector.load %arg4[%c44, %c0_418, %c0_419] : memref<48x32x8xf32, #tpu.memory_space<vmem>>, vector<1x32x8xf32>
    %646 = vector.shape_cast %645 : vector<1x32x8xf32> to vector<32x8xf32>
    %cst_420 = arith.constant dense<0.000000e+00> : vector<16x8xf32>
    %647 = tpu.matmul %5, %646, %cst_420 {dimension_numbers = #tpu.dot_dimension_numbers<[1], [0], [0], [1], [0, 0, 1, 1], [], []>} : vector<16x32xf32>, vector<32x8xf32>, vector<16x8xf32> -> vector<16x8xf32>
    %c44_421 = arith.constant 44 : index
    %c0_422 = arith.constant 0 : index
    %c0_423 = arith.constant 0 : index
    %648 = vector.load %arg5[%c44_421, %c0_422, %c0_423] : memref<48x1x8xf32, #tpu.memory_space<vmem>>, vector<1x1x8xf32>
    %649 = vector.shape_cast %648 : vector<1x1x8xf32> to vector<1x8xf32>
    %650 = vector.broadcast %649 : vector<1x8xf32> to vector<16x8xf32>
    %651 = arith.addf %647, %650 : vector<16x8xf32>
    %cst_424 = arith.constant dense<0.000000e+00> : vector<8x16xf32>
    %652 = tpu.matmul %637, %644, %cst_424 {dimension_numbers = #tpu.dot_dimension_numbers<[1], [1], [0], [0], [0, 0, 1, 0], [], []>} : vector<8x8xf32>, vector<16x8xf32>, vector<8x16xf32> -> vector<8x16xf32>
    %cst_425 = arith.constant 0.353553385 : f32
    %653 = vector.broadcast %cst_425 : f32 to vector<8x16xf32>
    %654 = arith.mulf %652, %653 : vector<8x16xf32>
    %cst_426 = arith.constant dense<0xFF800000> : vector<8xf32>
    %655 = vector.multi_reduction <maximumf>, %654, %cst_426 [1] : vector<8x16xf32> to vector<8xf32>
    %656 = vector.shape_cast %655 : vector<8xf32> to vector<8x1xf32>
    %657 = vector.broadcast %656 : vector<8x1xf32> to vector<8x16xf32>
    %658 = arith.subf %654, %657 : vector<8x16xf32>
    %659 = math.exp %658 : vector<8x16xf32>
    %cst_427 = arith.constant dense<0.000000e+00> : vector<8xf32>
    %660 = vector.multi_reduction <add>, %659, %cst_427 [1] : vector<8x16xf32> to vector<8xf32>
    %661 = vector.shape_cast %660 : vector<8xf32> to vector<8x1xf32>
    %662 = tpu.reciprocal %661 {approx = true} : vector<8x1xf32> -> vector<8x1xf32>
    %663 = vector.broadcast %662 : vector<8x1xf32> to vector<8x16xf32>
    %664 = arith.mulf %659, %663 : vector<8x16xf32>
    %cst_428 = arith.constant dense<0.000000e+00> : vector<8x8xf32>
    %665 = tpu.matmul %664, %651, %cst_428 {dimension_numbers = #tpu.dot_dimension_numbers<[1], [0], [0], [1], [0, 0, 1, 1], [], []>} : vector<8x16xf32>, vector<16x8xf32>, vector<8x8xf32> -> vector<8x8xf32>
    %c12_429 = arith.constant 12 : index
    %c0_430 = arith.constant 0 : index
    %c0_431 = arith.constant 0 : index
    %666 = vector.load %arg6[%c12_429, %c0_430, %c0_431] : memref<16x8x32xf32, #tpu.memory_space<vmem>>, vector<1x8x32xf32>
    %667 = vector.shape_cast %666 : vector<1x8x32xf32> to vector<8x32xf32>
    %cst_432 = arith.constant dense<0.000000e+00> : vector<8x32xf32>
    %668 = tpu.matmul %665, %667, %cst_432 {dimension_numbers = #tpu.dot_dimension_numbers<[1], [0], [0], [1], [0, 0, 1, 1], [], []>} : vector<8x8xf32>, vector<8x32xf32>, vector<8x32xf32> -> vector<8x32xf32>
    %669 = arith.addf %630, %668 : vector<8x32xf32>
    %c37 = arith.constant 37 : index
    %c0_433 = arith.constant 0 : index
    %c0_434 = arith.constant 0 : index
    %670 = vector.load %arg4[%c37, %c0_433, %c0_434] : memref<48x32x8xf32, #tpu.memory_space<vmem>>, vector<1x32x8xf32>
    %671 = vector.shape_cast %670 : vector<1x32x8xf32> to vector<32x8xf32>
    %cst_435 = arith.constant dense<0.000000e+00> : vector<8x8xf32>
    %672 = tpu.matmul %629, %671, %cst_435 {dimension_numbers = #tpu.dot_dimension_numbers<[1], [0], [0], [1], [0, 0, 1, 1], [], []>} : vector<8x32xf32>, vector<32x8xf32>, vector<8x8xf32> -> vector<8x8xf32>
    %c37_436 = arith.constant 37 : index
    %c0_437 = arith.constant 0 : index
    %c0_438 = arith.constant 0 : index
    %673 = vector.load %arg5[%c37_436, %c0_437, %c0_438] : memref<48x1x8xf32, #tpu.memory_space<vmem>>, vector<1x1x8xf32>
    %674 = vector.shape_cast %673 : vector<1x1x8xf32> to vector<1x8xf32>
    %675 = vector.broadcast %674 : vector<1x8xf32> to vector<8x8xf32>
    %676 = arith.addf %672, %675 : vector<8x8xf32>
    %c41 = arith.constant 41 : index
    %c0_439 = arith.constant 0 : index
    %c0_440 = arith.constant 0 : index
    %677 = vector.load %arg4[%c41, %c0_439, %c0_440] : memref<48x32x8xf32, #tpu.memory_space<vmem>>, vector<1x32x8xf32>
    %678 = vector.shape_cast %677 : vector<1x32x8xf32> to vector<32x8xf32>
    %cst_441 = arith.constant dense<0.000000e+00> : vector<16x8xf32>
    %679 = tpu.matmul %5, %678, %cst_441 {dimension_numbers = #tpu.dot_dimension_numbers<[1], [0], [0], [1], [0, 0, 1, 1], [], []>} : vector<16x32xf32>, vector<32x8xf32>, vector<16x8xf32> -> vector<16x8xf32>
    %c41_442 = arith.constant 41 : index
    %c0_443 = arith.constant 0 : index
    %c0_444 = arith.constant 0 : index
    %680 = vector.load %arg5[%c41_442, %c0_443, %c0_444] : memref<48x1x8xf32, #tpu.memory_space<vmem>>, vector<1x1x8xf32>
    %681 = vector.shape_cast %680 : vector<1x1x8xf32> to vector<1x8xf32>
    %682 = vector.broadcast %681 : vector<1x8xf32> to vector<16x8xf32>
    %683 = arith.addf %679, %682 : vector<16x8xf32>
    %c45 = arith.constant 45 : index
    %c0_445 = arith.constant 0 : index
    %c0_446 = arith.constant 0 : index
    %684 = vector.load %arg4[%c45, %c0_445, %c0_446] : memref<48x32x8xf32, #tpu.memory_space<vmem>>, vector<1x32x8xf32>
    %685 = vector.shape_cast %684 : vector<1x32x8xf32> to vector<32x8xf32>
    %cst_447 = arith.constant dense<0.000000e+00> : vector<16x8xf32>
    %686 = tpu.matmul %5, %685, %cst_447 {dimension_numbers = #tpu.dot_dimension_numbers<[1], [0], [0], [1], [0, 0, 1, 1], [], []>} : vector<16x32xf32>, vector<32x8xf32>, vector<16x8xf32> -> vector<16x8xf32>
    %c45_448 = arith.constant 45 : index
    %c0_449 = arith.constant 0 : index
    %c0_450 = arith.constant 0 : index
    %687 = vector.load %arg5[%c45_448, %c0_449, %c0_450] : memref<48x1x8xf32, #tpu.memory_space<vmem>>, vector<1x1x8xf32>
    %688 = vector.shape_cast %687 : vector<1x1x8xf32> to vector<1x8xf32>
    %689 = vector.broadcast %688 : vector<1x8xf32> to vector<16x8xf32>
    %690 = arith.addf %686, %689 : vector<16x8xf32>
    %cst_451 = arith.constant dense<0.000000e+00> : vector<8x16xf32>
    %691 = tpu.matmul %676, %683, %cst_451 {dimension_numbers = #tpu.dot_dimension_numbers<[1], [1], [0], [0], [0, 0, 1, 0], [], []>} : vector<8x8xf32>, vector<16x8xf32>, vector<8x16xf32> -> vector<8x16xf32>
    %cst_452 = arith.constant 0.353553385 : f32
    %692 = vector.broadcast %cst_452 : f32 to vector<8x16xf32>
    %693 = arith.mulf %691, %692 : vector<8x16xf32>
    %cst_453 = arith.constant dense<0xFF800000> : vector<8xf32>
    %694 = vector.multi_reduction <maximumf>, %693, %cst_453 [1] : vector<8x16xf32> to vector<8xf32>
    %695 = vector.shape_cast %694 : vector<8xf32> to vector<8x1xf32>
    %696 = vector.broadcast %695 : vector<8x1xf32> to vector<8x16xf32>
    %697 = arith.subf %693, %696 : vector<8x16xf32>
    %698 = math.exp %697 : vector<8x16xf32>
    %cst_454 = arith.constant dense<0.000000e+00> : vector<8xf32>
    %699 = vector.multi_reduction <add>, %698, %cst_454 [1] : vector<8x16xf32> to vector<8xf32>
    %700 = vector.shape_cast %699 : vector<8xf32> to vector<8x1xf32>
    %701 = tpu.reciprocal %700 {approx = true} : vector<8x1xf32> -> vector<8x1xf32>
    %702 = vector.broadcast %701 : vector<8x1xf32> to vector<8x16xf32>
    %703 = arith.mulf %698, %702 : vector<8x16xf32>
    %cst_455 = arith.constant dense<0.000000e+00> : vector<8x8xf32>
    %704 = tpu.matmul %703, %690, %cst_455 {dimension_numbers = #tpu.dot_dimension_numbers<[1], [0], [0], [1], [0, 0, 1, 1], [], []>} : vector<8x16xf32>, vector<16x8xf32>, vector<8x8xf32> -> vector<8x8xf32>
    %c13_456 = arith.constant 13 : index
    %c0_457 = arith.constant 0 : index
    %c0_458 = arith.constant 0 : index
    %705 = vector.load %arg6[%c13_456, %c0_457, %c0_458] : memref<16x8x32xf32, #tpu.memory_space<vmem>>, vector<1x8x32xf32>
    %706 = vector.shape_cast %705 : vector<1x8x32xf32> to vector<8x32xf32>
    %cst_459 = arith.constant dense<0.000000e+00> : vector<8x32xf32>
    %707 = tpu.matmul %704, %706, %cst_459 {dimension_numbers = #tpu.dot_dimension_numbers<[1], [0], [0], [1], [0, 0, 1, 1], [], []>} : vector<8x8xf32>, vector<8x32xf32>, vector<8x32xf32> -> vector<8x32xf32>
    %708 = arith.addf %669, %707 : vector<8x32xf32>
    %c38 = arith.constant 38 : index
    %c0_460 = arith.constant 0 : index
    %c0_461 = arith.constant 0 : index
    %709 = vector.load %arg4[%c38, %c0_460, %c0_461] : memref<48x32x8xf32, #tpu.memory_space<vmem>>, vector<1x32x8xf32>
    %710 = vector.shape_cast %709 : vector<1x32x8xf32> to vector<32x8xf32>
    %cst_462 = arith.constant dense<0.000000e+00> : vector<8x8xf32>
    %711 = tpu.matmul %629, %710, %cst_462 {dimension_numbers = #tpu.dot_dimension_numbers<[1], [0], [0], [1], [0, 0, 1, 1], [], []>} : vector<8x32xf32>, vector<32x8xf32>, vector<8x8xf32> -> vector<8x8xf32>
    %c38_463 = arith.constant 38 : index
    %c0_464 = arith.constant 0 : index
    %c0_465 = arith.constant 0 : index
    %712 = vector.load %arg5[%c38_463, %c0_464, %c0_465] : memref<48x1x8xf32, #tpu.memory_space<vmem>>, vector<1x1x8xf32>
    %713 = vector.shape_cast %712 : vector<1x1x8xf32> to vector<1x8xf32>
    %714 = vector.broadcast %713 : vector<1x8xf32> to vector<8x8xf32>
    %715 = arith.addf %711, %714 : vector<8x8xf32>
    %c42 = arith.constant 42 : index
    %c0_466 = arith.constant 0 : index
    %c0_467 = arith.constant 0 : index
    %716 = vector.load %arg4[%c42, %c0_466, %c0_467] : memref<48x32x8xf32, #tpu.memory_space<vmem>>, vector<1x32x8xf32>
    %717 = vector.shape_cast %716 : vector<1x32x8xf32> to vector<32x8xf32>
    %cst_468 = arith.constant dense<0.000000e+00> : vector<16x8xf32>
    %718 = tpu.matmul %5, %717, %cst_468 {dimension_numbers = #tpu.dot_dimension_numbers<[1], [0], [0], [1], [0, 0, 1, 1], [], []>} : vector<16x32xf32>, vector<32x8xf32>, vector<16x8xf32> -> vector<16x8xf32>
    %c42_469 = arith.constant 42 : index
    %c0_470 = arith.constant 0 : index
    %c0_471 = arith.constant 0 : index
    %719 = vector.load %arg5[%c42_469, %c0_470, %c0_471] : memref<48x1x8xf32, #tpu.memory_space<vmem>>, vector<1x1x8xf32>
    %720 = vector.shape_cast %719 : vector<1x1x8xf32> to vector<1x8xf32>
    %721 = vector.broadcast %720 : vector<1x8xf32> to vector<16x8xf32>
    %722 = arith.addf %718, %721 : vector<16x8xf32>
    %c46 = arith.constant 46 : index
    %c0_472 = arith.constant 0 : index
    %c0_473 = arith.constant 0 : index
    %723 = vector.load %arg4[%c46, %c0_472, %c0_473] : memref<48x32x8xf32, #tpu.memory_space<vmem>>, vector<1x32x8xf32>
    %724 = vector.shape_cast %723 : vector<1x32x8xf32> to vector<32x8xf32>
    %cst_474 = arith.constant dense<0.000000e+00> : vector<16x8xf32>
    %725 = tpu.matmul %5, %724, %cst_474 {dimension_numbers = #tpu.dot_dimension_numbers<[1], [0], [0], [1], [0, 0, 1, 1], [], []>} : vector<16x32xf32>, vector<32x8xf32>, vector<16x8xf32> -> vector<16x8xf32>
    %c46_475 = arith.constant 46 : index
    %c0_476 = arith.constant 0 : index
    %c0_477 = arith.constant 0 : index
    %726 = vector.load %arg5[%c46_475, %c0_476, %c0_477] : memref<48x1x8xf32, #tpu.memory_space<vmem>>, vector<1x1x8xf32>
    %727 = vector.shape_cast %726 : vector<1x1x8xf32> to vector<1x8xf32>
    %728 = vector.broadcast %727 : vector<1x8xf32> to vector<16x8xf32>
    %729 = arith.addf %725, %728 : vector<16x8xf32>
    %cst_478 = arith.constant dense<0.000000e+00> : vector<8x16xf32>
    %730 = tpu.matmul %715, %722, %cst_478 {dimension_numbers = #tpu.dot_dimension_numbers<[1], [1], [0], [0], [0, 0, 1, 0], [], []>} : vector<8x8xf32>, vector<16x8xf32>, vector<8x16xf32> -> vector<8x16xf32>
    %cst_479 = arith.constant 0.353553385 : f32
    %731 = vector.broadcast %cst_479 : f32 to vector<8x16xf32>
    %732 = arith.mulf %730, %731 : vector<8x16xf32>
    %cst_480 = arith.constant dense<0xFF800000> : vector<8xf32>
    %733 = vector.multi_reduction <maximumf>, %732, %cst_480 [1] : vector<8x16xf32> to vector<8xf32>
    %734 = vector.shape_cast %733 : vector<8xf32> to vector<8x1xf32>
    %735 = vector.broadcast %734 : vector<8x1xf32> to vector<8x16xf32>
    %736 = arith.subf %732, %735 : vector<8x16xf32>
    %737 = math.exp %736 : vector<8x16xf32>
    %cst_481 = arith.constant dense<0.000000e+00> : vector<8xf32>
    %738 = vector.multi_reduction <add>, %737, %cst_481 [1] : vector<8x16xf32> to vector<8xf32>
    %739 = vector.shape_cast %738 : vector<8xf32> to vector<8x1xf32>
    %740 = tpu.reciprocal %739 {approx = true} : vector<8x1xf32> -> vector<8x1xf32>
    %741 = vector.broadcast %740 : vector<8x1xf32> to vector<8x16xf32>
    %742 = arith.mulf %737, %741 : vector<8x16xf32>
    %cst_482 = arith.constant dense<0.000000e+00> : vector<8x8xf32>
    %743 = tpu.matmul %742, %729, %cst_482 {dimension_numbers = #tpu.dot_dimension_numbers<[1], [0], [0], [1], [0, 0, 1, 1], [], []>} : vector<8x16xf32>, vector<16x8xf32>, vector<8x8xf32> -> vector<8x8xf32>
    %c14_483 = arith.constant 14 : index
    %c0_484 = arith.constant 0 : index
    %c0_485 = arith.constant 0 : index
    %744 = vector.load %arg6[%c14_483, %c0_484, %c0_485] : memref<16x8x32xf32, #tpu.memory_space<vmem>>, vector<1x8x32xf32>
    %745 = vector.shape_cast %744 : vector<1x8x32xf32> to vector<8x32xf32>
    %cst_486 = arith.constant dense<0.000000e+00> : vector<8x32xf32>
    %746 = tpu.matmul %743, %745, %cst_486 {dimension_numbers = #tpu.dot_dimension_numbers<[1], [0], [0], [1], [0, 0, 1, 1], [], []>} : vector<8x8xf32>, vector<8x32xf32>, vector<8x32xf32> -> vector<8x32xf32>
    %747 = arith.addf %708, %746 : vector<8x32xf32>
    %c39 = arith.constant 39 : index
    %c0_487 = arith.constant 0 : index
    %c0_488 = arith.constant 0 : index
    %748 = vector.load %arg4[%c39, %c0_487, %c0_488] : memref<48x32x8xf32, #tpu.memory_space<vmem>>, vector<1x32x8xf32>
    %749 = vector.shape_cast %748 : vector<1x32x8xf32> to vector<32x8xf32>
    %cst_489 = arith.constant dense<0.000000e+00> : vector<8x8xf32>
    %750 = tpu.matmul %629, %749, %cst_489 {dimension_numbers = #tpu.dot_dimension_numbers<[1], [0], [0], [1], [0, 0, 1, 1], [], []>} : vector<8x32xf32>, vector<32x8xf32>, vector<8x8xf32> -> vector<8x8xf32>
    %c39_490 = arith.constant 39 : index
    %c0_491 = arith.constant 0 : index
    %c0_492 = arith.constant 0 : index
    %751 = vector.load %arg5[%c39_490, %c0_491, %c0_492] : memref<48x1x8xf32, #tpu.memory_space<vmem>>, vector<1x1x8xf32>
    %752 = vector.shape_cast %751 : vector<1x1x8xf32> to vector<1x8xf32>
    %753 = vector.broadcast %752 : vector<1x8xf32> to vector<8x8xf32>
    %754 = arith.addf %750, %753 : vector<8x8xf32>
    %c43 = arith.constant 43 : index
    %c0_493 = arith.constant 0 : index
    %c0_494 = arith.constant 0 : index
    %755 = vector.load %arg4[%c43, %c0_493, %c0_494] : memref<48x32x8xf32, #tpu.memory_space<vmem>>, vector<1x32x8xf32>
    %756 = vector.shape_cast %755 : vector<1x32x8xf32> to vector<32x8xf32>
    %cst_495 = arith.constant dense<0.000000e+00> : vector<16x8xf32>
    %757 = tpu.matmul %5, %756, %cst_495 {dimension_numbers = #tpu.dot_dimension_numbers<[1], [0], [0], [1], [0, 0, 1, 1], [], []>} : vector<16x32xf32>, vector<32x8xf32>, vector<16x8xf32> -> vector<16x8xf32>
    %c43_496 = arith.constant 43 : index
    %c0_497 = arith.constant 0 : index
    %c0_498 = arith.constant 0 : index
    %758 = vector.load %arg5[%c43_496, %c0_497, %c0_498] : memref<48x1x8xf32, #tpu.memory_space<vmem>>, vector<1x1x8xf32>
    %759 = vector.shape_cast %758 : vector<1x1x8xf32> to vector<1x8xf32>
    %760 = vector.broadcast %759 : vector<1x8xf32> to vector<16x8xf32>
    %761 = arith.addf %757, %760 : vector<16x8xf32>
    %c47 = arith.constant 47 : index
    %c0_499 = arith.constant 0 : index
    %c0_500 = arith.constant 0 : index
    %762 = vector.load %arg4[%c47, %c0_499, %c0_500] : memref<48x32x8xf32, #tpu.memory_space<vmem>>, vector<1x32x8xf32>
    %763 = vector.shape_cast %762 : vector<1x32x8xf32> to vector<32x8xf32>
    %cst_501 = arith.constant dense<0.000000e+00> : vector<16x8xf32>
    %764 = tpu.matmul %5, %763, %cst_501 {dimension_numbers = #tpu.dot_dimension_numbers<[1], [0], [0], [1], [0, 0, 1, 1], [], []>} : vector<16x32xf32>, vector<32x8xf32>, vector<16x8xf32> -> vector<16x8xf32>
    %c47_502 = arith.constant 47 : index
    %c0_503 = arith.constant 0 : index
    %c0_504 = arith.constant 0 : index
    %765 = vector.load %arg5[%c47_502, %c0_503, %c0_504] : memref<48x1x8xf32, #tpu.memory_space<vmem>>, vector<1x1x8xf32>
    %766 = vector.shape_cast %765 : vector<1x1x8xf32> to vector<1x8xf32>
    %767 = vector.broadcast %766 : vector<1x8xf32> to vector<16x8xf32>
    %768 = arith.addf %764, %767 : vector<16x8xf32>
    %cst_505 = arith.constant dense<0.000000e+00> : vector<8x16xf32>
    %769 = tpu.matmul %754, %761, %cst_505 {dimension_numbers = #tpu.dot_dimension_numbers<[1], [1], [0], [0], [0, 0, 1, 0], [], []>} : vector<8x8xf32>, vector<16x8xf32>, vector<8x16xf32> -> vector<8x16xf32>
    %cst_506 = arith.constant 0.353553385 : f32
    %770 = vector.broadcast %cst_506 : f32 to vector<8x16xf32>
    %771 = arith.mulf %769, %770 : vector<8x16xf32>
    %cst_507 = arith.constant dense<0xFF800000> : vector<8xf32>
    %772 = vector.multi_reduction <maximumf>, %771, %cst_507 [1] : vector<8x16xf32> to vector<8xf32>
    %773 = vector.shape_cast %772 : vector<8xf32> to vector<8x1xf32>
    %774 = vector.broadcast %773 : vector<8x1xf32> to vector<8x16xf32>
    %775 = arith.subf %771, %774 : vector<8x16xf32>
    %776 = math.exp %775 : vector<8x16xf32>
    %cst_508 = arith.constant dense<0.000000e+00> : vector<8xf32>
    %777 = vector.multi_reduction <add>, %776, %cst_508 [1] : vector<8x16xf32> to vector<8xf32>
    %778 = vector.shape_cast %777 : vector<8xf32> to vector<8x1xf32>
    %779 = tpu.reciprocal %778 {approx = true} : vector<8x1xf32> -> vector<8x1xf32>
    %780 = vector.broadcast %779 : vector<8x1xf32> to vector<8x16xf32>
    %781 = arith.mulf %776, %780 : vector<8x16xf32>
    %cst_509 = arith.constant dense<0.000000e+00> : vector<8x8xf32>
    %782 = tpu.matmul %781, %768, %cst_509 {dimension_numbers = #tpu.dot_dimension_numbers<[1], [0], [0], [1], [0, 0, 1, 1], [], []>} : vector<8x16xf32>, vector<16x8xf32>, vector<8x8xf32> -> vector<8x8xf32>
    %c15_510 = arith.constant 15 : index
    %c0_511 = arith.constant 0 : index
    %c0_512 = arith.constant 0 : index
    %783 = vector.load %arg6[%c15_510, %c0_511, %c0_512] : memref<16x8x32xf32, #tpu.memory_space<vmem>>, vector<1x8x32xf32>
    %784 = vector.shape_cast %783 : vector<1x8x32xf32> to vector<8x32xf32>
    %cst_513 = arith.constant dense<0.000000e+00> : vector<8x32xf32>
    %785 = tpu.matmul %782, %784, %cst_513 {dimension_numbers = #tpu.dot_dimension_numbers<[1], [0], [0], [1], [0, 0, 1, 1], [], []>} : vector<8x8xf32>, vector<8x32xf32>, vector<8x32xf32> -> vector<8x32xf32>
    %786 = arith.addf %747, %785 : vector<8x32xf32>
    %c3_514 = arith.constant 3 : index
    %c0_515 = arith.constant 0 : index
    %c0_516 = arith.constant 0 : index
    %787 = vector.load %arg7[%c3_514, %c0_515, %c0_516] : memref<4x1x32xf32, #tpu.memory_space<vmem>>, vector<1x1x32xf32>
    %788 = vector.shape_cast %787 : vector<1x1x32xf32> to vector<1x32xf32>
    %789 = vector.broadcast %788 : vector<1x32xf32> to vector<8x32xf32>
    %790 = arith.addf %786, %789 : vector<8x32xf32>
    %791 = arith.addf %629, %790 : vector<8x32xf32>
    %c4_517 = arith.constant 4 : index
    %c0_518 = arith.constant 0 : index
    %c0_519 = arith.constant 0 : index
    %792 = vector.load %arg12[%c4_517, %c0_518, %c0_519] : memref<6x1x32xf32, #tpu.memory_space<vmem>>, vector<1x1x32xf32>
    %793 = vector.shape_cast %792 : vector<1x1x32xf32> to vector<1x32xf32>
    %c4_520 = arith.constant 4 : index
    %c0_521 = arith.constant 0 : index
    %c0_522 = arith.constant 0 : index
    %794 = vector.load %arg13[%c4_520, %c0_521, %c0_522] : memref<6x1x32xf32, #tpu.memory_space<vmem>>, vector<1x1x32xf32>
    %795 = vector.shape_cast %794 : vector<1x1x32xf32> to vector<1x32xf32>
    %cst_523 = arith.constant dense<0.000000e+00> : vector<8xf32>
    %796 = vector.multi_reduction <add>, %791, %cst_523 [1] : vector<8x32xf32> to vector<8xf32>
    %797 = vector.shape_cast %796 : vector<8xf32> to vector<8x1xf32>
    %cst_524 = arith.constant 3.200000e+01 : f32
    %798 = vector.broadcast %cst_524 : f32 to vector<8x1xf32>
    %799 = arith.divf %797, %798 : vector<8x1xf32>
    %800 = vector.broadcast %799 : vector<8x1xf32> to vector<8x32xf32>
    %801 = arith.subf %791, %800 : vector<8x32xf32>
    %802 = arith.mulf %801, %801 : vector<8x32xf32>
    %cst_525 = arith.constant dense<0.000000e+00> : vector<8xf32>
    %803 = vector.multi_reduction <add>, %802, %cst_525 [1] : vector<8x32xf32> to vector<8xf32>
    %804 = vector.shape_cast %803 : vector<8xf32> to vector<8x1xf32>
    %cst_526 = arith.constant 3.200000e+01 : f32
    %805 = vector.broadcast %cst_526 : f32 to vector<8x1xf32>
    %806 = arith.divf %804, %805 : vector<8x1xf32>
    %807 = vector.broadcast %799 : vector<8x1xf32> to vector<8x32xf32>
    %808 = arith.subf %791, %807 : vector<8x32xf32>
    %cst_527 = arith.constant 9.99999974E-6 : f32
    %809 = vector.broadcast %cst_527 : f32 to vector<8x1xf32>
    %810 = arith.addf %806, %809 : vector<8x1xf32>
    %811 = math.rsqrt %810 : vector<8x1xf32>
    %812 = vector.broadcast %811 : vector<8x1xf32> to vector<8x32xf32>
    %813 = arith.mulf %808, %812 : vector<8x32xf32>
    %814 = vector.broadcast %793 : vector<1x32xf32> to vector<8x32xf32>
    %815 = arith.mulf %813, %814 : vector<8x32xf32>
    %816 = vector.broadcast %795 : vector<1x32xf32> to vector<8x32xf32>
    %817 = arith.addf %815, %816 : vector<8x32xf32>
    %c1_528 = arith.constant 1 : index
    %c0_529 = arith.constant 0 : index
    %c0_530 = arith.constant 0 : index
    %818 = vector.load %arg8[%c1_528, %c0_529, %c0_530] : memref<2x32x64xf32, #tpu.memory_space<vmem>>, vector<1x32x64xf32>
    %819 = vector.shape_cast %818 : vector<1x32x64xf32> to vector<32x64xf32>
    %cst_531 = arith.constant dense<0.000000e+00> : vector<8x64xf32>
    %820 = tpu.matmul %817, %819, %cst_531 {dimension_numbers = #tpu.dot_dimension_numbers<[1], [0], [0], [1], [0, 0, 1, 1], [], []>} : vector<8x32xf32>, vector<32x64xf32>, vector<8x64xf32> -> vector<8x64xf32>
    %c1_532 = arith.constant 1 : index
    %c0_533 = arith.constant 0 : index
    %c0_534 = arith.constant 0 : index
    %821 = vector.load %arg9[%c1_532, %c0_533, %c0_534] : memref<2x1x64xf32, #tpu.memory_space<vmem>>, vector<1x1x64xf32>
    %822 = vector.shape_cast %821 : vector<1x1x64xf32> to vector<1x64xf32>
    %823 = vector.broadcast %822 : vector<1x64xf32> to vector<8x64xf32>
    %824 = arith.addf %820, %823 : vector<8x64xf32>
    %cst_535 = arith.constant 0.000000e+00 : f32
    %825 = vector.broadcast %cst_535 : f32 to vector<8x64xf32>
    %826 = arith.cmpf ogt, %824, %825 : vector<8x64xf32>
    %cst_536 = arith.constant 0.00999999977 : f32
    %827 = vector.broadcast %cst_536 : f32 to vector<8x64xf32>
    %828 = arith.mulf %827, %824 : vector<8x64xf32>
    %829 = arith.select %826, %824, %828 : vector<8x64xi1>, vector<8x64xf32>
    %c1_537 = arith.constant 1 : index
    %c0_538 = arith.constant 0 : index
    %c0_539 = arith.constant 0 : index
    %830 = vector.load %arg10[%c1_537, %c0_538, %c0_539] : memref<2x64x32xf32, #tpu.memory_space<vmem>>, vector<1x64x32xf32>
    %831 = vector.shape_cast %830 : vector<1x64x32xf32> to vector<64x32xf32>
    %cst_540 = arith.constant dense<0.000000e+00> : vector<8x32xf32>
    %832 = tpu.matmul %829, %831, %cst_540 {dimension_numbers = #tpu.dot_dimension_numbers<[1], [0], [0], [1], [0, 0, 1, 1], [], []>} : vector<8x64xf32>, vector<64x32xf32>, vector<8x32xf32> -> vector<8x32xf32>
    %c1_541 = arith.constant 1 : index
    %c0_542 = arith.constant 0 : index
    %c0_543 = arith.constant 0 : index
    %833 = vector.load %arg11[%c1_541, %c0_542, %c0_543] : memref<2x1x32xf32, #tpu.memory_space<vmem>>, vector<1x1x32xf32>
    %834 = vector.shape_cast %833 : vector<1x1x32xf32> to vector<1x32xf32>
    %835 = vector.broadcast %834 : vector<1x32xf32> to vector<8x32xf32>
    %836 = arith.addf %832, %835 : vector<8x32xf32>
    %837 = arith.addf %817, %836 : vector<8x32xf32>
    %c5_544 = arith.constant 5 : index
    %c0_545 = arith.constant 0 : index
    %c0_546 = arith.constant 0 : index
    %838 = vector.load %arg12[%c5_544, %c0_545, %c0_546] : memref<6x1x32xf32, #tpu.memory_space<vmem>>, vector<1x1x32xf32>
    %839 = vector.shape_cast %838 : vector<1x1x32xf32> to vector<1x32xf32>
    %c5_547 = arith.constant 5 : index
    %c0_548 = arith.constant 0 : index
    %c0_549 = arith.constant 0 : index
    %840 = vector.load %arg13[%c5_547, %c0_548, %c0_549] : memref<6x1x32xf32, #tpu.memory_space<vmem>>, vector<1x1x32xf32>
    %841 = vector.shape_cast %840 : vector<1x1x32xf32> to vector<1x32xf32>
    %cst_550 = arith.constant dense<0.000000e+00> : vector<8xf32>
    %842 = vector.multi_reduction <add>, %837, %cst_550 [1] : vector<8x32xf32> to vector<8xf32>
    %843 = vector.shape_cast %842 : vector<8xf32> to vector<8x1xf32>
    %cst_551 = arith.constant 3.200000e+01 : f32
    %844 = vector.broadcast %cst_551 : f32 to vector<8x1xf32>
    %845 = arith.divf %843, %844 : vector<8x1xf32>
    %846 = vector.broadcast %845 : vector<8x1xf32> to vector<8x32xf32>
    %847 = arith.subf %837, %846 : vector<8x32xf32>
    %848 = arith.mulf %847, %847 : vector<8x32xf32>
    %cst_552 = arith.constant dense<0.000000e+00> : vector<8xf32>
    %849 = vector.multi_reduction <add>, %848, %cst_552 [1] : vector<8x32xf32> to vector<8xf32>
    %850 = vector.shape_cast %849 : vector<8xf32> to vector<8x1xf32>
    %cst_553 = arith.constant 3.200000e+01 : f32
    %851 = vector.broadcast %cst_553 : f32 to vector<8x1xf32>
    %852 = arith.divf %850, %851 : vector<8x1xf32>
    %853 = vector.broadcast %845 : vector<8x1xf32> to vector<8x32xf32>
    %854 = arith.subf %837, %853 : vector<8x32xf32>
    %cst_554 = arith.constant 9.99999974E-6 : f32
    %855 = vector.broadcast %cst_554 : f32 to vector<8x1xf32>
    %856 = arith.addf %852, %855 : vector<8x1xf32>
    %857 = math.rsqrt %856 : vector<8x1xf32>
    %858 = vector.broadcast %857 : vector<8x1xf32> to vector<8x32xf32>
    %859 = arith.mulf %854, %858 : vector<8x32xf32>
    %860 = vector.broadcast %839 : vector<1x32xf32> to vector<8x32xf32>
    %861 = arith.mulf %859, %860 : vector<8x32xf32>
    %862 = vector.broadcast %841 : vector<1x32xf32> to vector<8x32xf32>
    %863 = arith.addf %861, %862 : vector<8x32xf32>
    %c0_555 = arith.constant 0 : index
    %c0_556 = arith.constant 0 : index
    %864 = vector.load %arg14[%c0_555, %c0_556] : memref<32x64xf32, #tpu.memory_space<vmem>>, vector<32x64xf32>
    %cst_557 = arith.constant dense<0.000000e+00> : vector<8x64xf32>
    %865 = tpu.matmul %863, %864, %cst_557 {dimension_numbers = #tpu.dot_dimension_numbers<[1], [0], [0], [1], [0, 0, 1, 1], [], []>} : vector<8x32xf32>, vector<32x64xf32>, vector<8x64xf32> -> vector<8x64xf32>
    %c0_558 = arith.constant 0 : index
    %c0_559 = arith.constant 0 : index
    %866 = vector.load %arg15[%c0_558, %c0_559] : memref<1x64xf32, #tpu.memory_space<vmem>>, vector<1x64xf32>
    %867 = vector.broadcast %866 : vector<1x64xf32> to vector<8x64xf32>
    %868 = arith.addf %865, %867 : vector<8x64xf32>
    %c0_560 = arith.constant 0 : index
    %c0_561 = arith.constant 0 : index
    %c0_562 = arith.constant 0 : index
    %869 = vector.load %arg16[%c0_560, %c0_561, %c0_562] : memref<1x8x64xf32, #tpu.memory_space<vmem>>, vector<1x8x64xf32>
    %870 = vector.shape_cast %869 : vector<1x8x64xf32> to vector<8x64xf32>
    %871 = vector.shape_cast %868 : vector<8x64xf32> to vector<1x8x64xf32>
    tpu.vector_store %arg16[%c0_560, %c0_561, %c0_562], %871 {strides = array<i32>} : memref<1x8x64xf32, #tpu.memory_space<vmem>>, vector<1x8x64xf32>,
    return
  }
  func.func @transform_0(%arg0: i32) -> (i32, i32, i32) {
    %c0_i32 = arith.constant 0 : i32
    %c0_i32_0 = arith.constant 0 : i32
    %c0_i32_1 = arith.constant 0 : i32
    return %arg0, %c0_i32, %c0_i32_0 : i32, i32, i32
  }
  func.func @transform_1(%arg0: i32) -> (i32, i32, i32) {
    %c0_i32 = arith.constant 0 : i32
    %c0_i32_0 = arith.constant 0 : i32
    %c0_i32_1 = arith.constant 0 : i32
    return %arg0, %c0_i32, %c0_i32_0 : i32, i32, i32
  }
  func.func @transform_2(%arg0: i32) -> (i32, i32) {
    %c0_i32 = arith.constant 0 : i32
    %c0_i32_0 = arith.constant 0 : i32
    %c0_i32_1 = arith.constant 0 : i32
    return %c0_i32, %c0_i32_0 : i32, i32
  }
  func.func @transform_3(%arg0: i32) -> (i32, i32, i32) {
    %c0_i32 = arith.constant 0 : i32
    %c0_i32_0 = arith.constant 0 : i32
    %c0_i32_1 = arith.constant 0 : i32
    %c0_i32_2 = arith.constant 0 : i32
    return %c0_i32, %c0_i32_0, %c0_i32_1 : i32, i32, i32
  }
  func.func @transform_4(%arg0: i32) -> (i32, i32, i32) {
    %c0_i32 = arith.constant 0 : i32
    %c0_i32_0 = arith.constant 0 : i32
    %c0_i32_1 = arith.constant 0 : i32
    %c0_i32_2 = arith.constant 0 : i32
    return %c0_i32, %c0_i32_0, %c0_i32_1 : i32, i32, i32
  }
  func.func @transform_5(%arg0: i32) -> (i32, i32, i32) {
    %c0_i32 = arith.constant 0 : i32
    %c0_i32_0 = arith.constant 0 : i32
    %c0_i32_1 = arith.constant 0 : i32
    %c0_i32_2 = arith.constant 0 : i32
    return %c0_i32, %c0_i32_0, %c0_i32_1 : i32, i32, i32
  }
  func.func @transform_6(%arg0: i32) -> (i32, i32, i32) {
    %c0_i32 = arith.constant 0 : i32
    %c0_i32_0 = arith.constant 0 : i32
    %c0_i32_1 = arith.constant 0 : i32
    %c0_i32_2 = arith.constant 0 : i32
    return %c0_i32, %c0_i32_0, %c0_i32_1 : i32, i32, i32
  }
  func.func @transform_7(%arg0: i32) -> (i32, i32, i32) {
    %c0_i32 = arith.constant 0 : i32
    %c0_i32_0 = arith.constant 0 : i32
    %c0_i32_1 = arith.constant 0 : i32
    %c0_i32_2 = arith.constant 0 : i32
    return %c0_i32, %c0_i32_0, %c0_i32_1 : i32, i32, i32
  }
  func.func @transform_8(%arg0: i32) -> (i32, i32, i32) {
    %c0_i32 = arith.constant 0 : i32
    %c0_i32_0 = arith.constant 0 : i32
    %c0_i32_1 = arith.constant 0 : i32
    %c0_i32_2 = arith.constant 0 : i32
    return %c0_i32, %c0_i32_0, %c0_i32_1 : i32, i32, i32
  }
  func.func @transform_9(%arg0: i32) -> (i32, i32, i32) {
    %c0_i32 = arith.constant 0 : i32
    %c0_i32_0 = arith.constant 0 : i32
    %c0_i32_1 = arith.constant 0 : i32
    %c0_i32_2 = arith.constant 0 : i32
    return %c0_i32, %c0_i32_0, %c0_i32_1 : i32, i32, i32
  }
  func.func @transform_10(%arg0: i32) -> (i32, i32, i32) {
    %c0_i32 = arith.constant 0 : i32
    %c0_i32_0 = arith.constant 0 : i32
    %c0_i32_1 = arith.constant 0 : i32
    %c0_i32_2 = arith.constant 0 : i32
    return %c0_i32, %c0_i32_0, %c0_i32_1 : i32, i32, i32
  }
  func.func @transform_11(%arg0: i32) -> (i32, i32, i32) {
    %c0_i32 = arith.constant 0 : i32
    %c0_i32_0 = arith.constant 0 : i32
    %c0_i32_1 = arith.constant 0 : i32
    %c0_i32_2 = arith.constant 0 : i32
    return %c0_i32, %c0_i32_0, %c0_i32_1 : i32, i32, i32
  }
  func.func @transform_12(%arg0: i32) -> (i32, i32, i32) {
    %c0_i32 = arith.constant 0 : i32
    %c0_i32_0 = arith.constant 0 : i32
    %c0_i32_1 = arith.constant 0 : i32
    %c0_i32_2 = arith.constant 0 : i32
    return %c0_i32, %c0_i32_0, %c0_i32_1 : i32, i32, i32
  }
  func.func @transform_13(%arg0: i32) -> (i32, i32) {
    %c0_i32 = arith.constant 0 : i32
    %c0_i32_0 = arith.constant 0 : i32
    %c0_i32_1 = arith.constant 0 : i32
    return %c0_i32, %c0_i32_0 : i32, i32
  }
  func.func @transform_14(%arg0: i32) -> (i32, i32) {
    %c0_i32 = arith.constant 0 : i32
    %c0_i32_0 = arith.constant 0 : i32
    %c0_i32_1 = arith.constant 0 : i32
    return %c0_i32, %c0_i32_0 : i32, i32
  }
  func.func @transform_15(%arg0: i32) -> (i32, i32, i32) {
    %c0_i32 = arith.constant 0 : i32
    %c0_i32_0 = arith.constant 0 : i32
    %c0_i32_1 = arith.constant 0 : i32
    return %arg0, %c0_i32, %c0_i32_0 : i32, i32, i32
  }
}

</mosaic_0001>

<llo_original>
// kernel: tpu_custom_call.1
$region0: #{tpu_custom_call.1}
  #allocation0 [shape = 'u32[]', space=smem, size = 0x4, offset = 0x4, fixed_abs, tag = 'smem constant byte address 0x4 - core index']
  #allocation1 [shape = 'u32[144,128]{1,0:T(1,128)}', space=vmem, size = 0x12000, scoped, tag = 'internal scratch']
  %s0 = inlined_call_operand.vmem [shape: f32[2,8,32], index: 0, kind: input, shape index: {}]
  %s1 = inlined_call_operand.vmem [shape: f32[2,16,32], index: 1, kind: input, shape index: {}]
  %s2 = inlined_call_operand.vmem [shape: f32[8,32], index: 2, kind: input, shape index: {}]
  %s3 = inlined_call_operand.vmem [shape: f32[48,32,8], index: 3, kind: input, shape index: {}]
  %s4 = inlined_call_operand.vmem [shape: f32[48,1,8], index: 4, kind: input, shape index: {}]
  %s5 = inlined_call_operand.vmem [shape: f32[16,8,32], index: 5, kind: input, shape index: {}]
  %s6 = inlined_call_operand.vmem [shape: f32[4,1,32], index: 6, kind: input, shape index: {}]
  %s7 = inlined_call_operand.vmem [shape: f32[2,32,64], index: 7, kind: input, shape index: {}]
  %s8 = inlined_call_operand.vmem [shape: f32[2,1,64], index: 8, kind: input, shape index: {}]
  %s9 = inlined_call_operand.vmem [shape: f32[2,64,32], index: 9, kind: input, shape index: {}]
  %s10 = inlined_call_operand.vmem [shape: f32[2,1,32], index: 10, kind: input, shape index: {}]
  %s11 = inlined_call_operand.vmem [shape: f32[6,1,32], index: 11, kind: input, shape index: {}]
  %s12 = inlined_call_operand.vmem [shape: f32[6,1,32], index: 12, kind: input, shape index: {}]
  %s13 = inlined_call_operand.vmem [shape: f32[32,64], index: 13, kind: input, shape index: {}]
  %s14 = inlined_call_operand.vmem [shape: f32[1,64], index: 14, kind: input, shape index: {}]
  %s15 = inlined_call_operand.hbm [shape: f32[2,8,64], index: 15, kind: output, shape index: {}]
  %s16 = sld [smem:[#allocation0]]
  $region93: #{tpu_custom_call.1} parent=0
    _
  %s18 = ssub.s32 1, %s16
  %s19 = scalar_select 0, %s18, %s16
  $region1: #{tpu_custom_call.1} parent=0
    #allocation2 [shape = 'u8[8192]{0}', space=vmem, size = 0x2000, scoped, tag = 'output window, operand 0']
    #allocation3 [shape = 's32[2]{0}', space=sflag, size = 0x8, scoped, tag = 'scoped memory for tpu_custom_call.1']
    %20 = vsyncpa [#allocation3], 0
    %s21 = scalar_lea.sflag [#allocation3], 1
    %22 = vsyncpa %s21, 0
    loop: start=0, step=1, limit=4
    $region2: #{tpu_custom_call.1} parent=1 // loop_pre_header
      _
    $region3: #{tpu_custom_call.1} parent=1 // loop_header
      %s24 = sphi 0, %s28
      %p25 = scmp.ge.s32.totalorder %s24, 4
      %s34 = sphi 0, %s36
      %s37 = sphi 0, %s34
      %s38 = sphi 0, %s37
      %s54 = sphi 0, %s38
      %s60 = sphi 0, %s62
      %s63 = sphi 0, %s60
      %s64 = sphi 0, %s63
      %s80 = sphi 0, %s64
      %s84 = sphi 0, %s84
      %s86 = sphi 0, %s84
      %s87 = sphi 0, %s86
      %s101 = sphi 0, %s87
      %s105 = sphi 0, %s105
      %s107 = sphi 0, %s105
      %s108 = sphi 0, %s107
      %s122 = sphi 0, %s108
      %s126 = sphi 0, %s126
      %s128 = sphi 0, %s126
      %s129 = sphi 0, %s128
      %s143 = sphi 0, %s129
      %s147 = sphi 0, %s147
      %s149 = sphi 0, %s147
      %s150 = sphi 0, %s149
      %s164 = sphi 0, %s150
      %s168 = sphi 0, %s168
      %s170 = sphi 0, %s168
      %s171 = sphi 0, %s170
      %s185 = sphi 0, %s171
      %s189 = sphi 0, %s189
      %s191 = sphi 0, %s189
      %s192 = sphi 0, %s191
      %s206 = sphi 0, %s192
      %s210 = sphi 0, %s210
      %s212 = sphi 0, %s210
      %s213 = sphi 0, %s212
      %s227 = sphi 0, %s213
      %s231 = sphi 0, %s231
      %s233 = sphi 0, %s231
      %s234 = sphi 0, %s233
      %s248 = sphi 0, %s234
      %s252 = sphi 0, %s252
      %s254 = sphi 0, %s252
      %s255 = sphi 0, %s254
      %s269 = sphi 0, %s255
      %s273 = sphi 0, %s273
      %s275 = sphi 0, %s273
      %s276 = sphi 0, %s275
      %s290 = sphi 0, %s276
      %s294 = sphi 0, %s294
      %s296 = sphi 0, %s294
      %s297 = sphi 0, %s296
      %s311 = sphi 0, %s297
      %s315 = sphi 0, %s315
      %s317 = sphi 0, %s315
      %s318 = sphi 0, %s317
      %s332 = sphi 0, %s318
      %s336 = sphi 0, %s336
      %s338 = sphi 0, %s336
      %s339 = sphi 0, %s338
      %s353 = sphi 0, %s339
      %s359 = sphi 0, %s361
      %s362 = sphi 0, %s359
      %s363 = sphi 0, %s362
      %s379 = sphi 0, %s363
    $region4: #{tpu_custom_call.1} parent=1 // loop_header_branch
      %27 = sbr.rel (%p25) target = $region8
    $region5: #{tpu_custom_call.1} parent=1 // loop_body
      %s29 = ssub.s32 %s24, 1
      %s30 = ssub.s32 %s24, 2
      %s31 = sadd.s32 %s24, 1
      %s32 = ssub.s32 %s24, %s31
      %p33 = scmp.eq.s32.totalorder %s32, 0
      %s35 = sadd.s32 %s34, 1
      %s36 = scalar_select %p33, %s34, %s35
      %p39 = pneg %p33
      %p40 = scmp.eq.s32.totalorder %s24, 1
      %p41 = por %p39, %p40
      %p42 = scmp.ne.s32.totalorder %s34, %s37
      %p43 = scmp.eq.s32.totalorder %s24, 0
      %p44 = por %p42, %p43
      %p45 = scmp.ne.s32.totalorder %s34, %s37
      %p46 = scmp.eq.s32.totalorder %s29, 1
      %p47 = por %p45, %p46
      %p48 = scmp.ne.s32.totalorder %s37, %s38
      %p49 = scmp.eq.s32.totalorder %s29, 0
      %p50 = por %p48, %p49
      %p51 = scmp.ne.s32.totalorder %s37, %s38
      %p52 = scmp.eq.s32.totalorder %s30, 1
      %p53 = por %p51, %p52
      %p55 = scmp.ne.s32.totalorder %s38, %s54
      %p56 = scmp.eq.s32.totalorder %s30, 0
      %p57 = por %p55, %p56
      %s58 = ssub.s32 %s24, %s31
      %p59 = scmp.eq.s32.totalorder %s58, 0
      %s61 = sadd.s32 %s60, 1
      %s62 = scalar_select %p59, %s60, %s61
      %p65 = pneg %p59
      %p66 = scmp.eq.s32.totalorder %s24, 1
      %p67 = por %p65, %p66
      %p68 = scmp.ne.s32.totalorder %s60, %s63
      %p69 = scmp.eq.s32.totalorder %s24, 0
      %p70 = por %p68, %p69
      %p71 = scmp.ne.s32.totalorder %s60, %s63
      %p72 = scmp.eq.s32.totalorder %s29, 1
      %p73 = por %p71, %p72
      %p74 = scmp.ne.s32.totalorder %s63, %s64
      %p75 = scmp.eq.s32.totalorder %s29, 0
      %p76 = por %p74, %p75
      %p77 = scmp.ne.s32.totalorder %s63, %s64
      %p78 = scmp.eq.s32.totalorder %s30, 1
      %p79 = por %p77, %p78
      %p81 = scmp.ne.s32.totalorder %s64, %s80
      %p82 = scmp.eq.s32.totalorder %s30, 0
      %p83 = por %p81, %p82
      %s85 = sadd.s32 %s84, 1
      %p88 = scmp.eq.s32.totalorder %s24, 1
      %p89 = scmp.ne.s32.totalorder %s84, %s86
      %p90 = scmp.eq.s32.totalorder %s24, 0
      %p91 = por %p89, %p90
      %p92 = scmp.ne.s32.totalorder %s84, %s86
      %p93 = scmp.eq.s32.totalorder %s29, 1
      %p94 = por %p92, %p93
      %p95 = scmp.ne.s32.totalorder %s86, %s87
      %p96 = scmp.eq.s32.totalorder %s29, 0
      %p97 = por %p95, %p96
      %p98 = scmp.ne.s32.totalorder %s86, %s87
      %p99 = scmp.eq.s32.totalorder %s30, 1
      %p100 = por %p98, %p99
      %p102 = scmp.ne.s32.totalorder %s87, %s101
      %p103 = scmp.eq.s32.totalorder %s30, 0
      %p104 = por %p102, %p103
      %s106 = sadd.s32 %s105, 1
      %p109 = scmp.eq.s32.totalorder %s24, 1
      %p110 = scmp.ne.s32.totalorder %s105, %s107
      %p111 = scmp.eq.s32.totalorder %s24, 0
      %p112 = por %p110, %p111
      %p113 = scmp.ne.s32.totalorder %s105, %s107
      %p114 = scmp.eq.s32.totalorder %s29, 1
      %p115 = por %p113, %p114
      %p116 = scmp.ne.s32.totalorder %s107, %s108
      %p117 = scmp.eq.s32.totalorder %s29, 0
      %p118 = por %p116, %p117
      %p119 = scmp.ne.s32.totalorder %s107, %s108
      %p120 = scmp.eq.s32.totalorder %s30, 1
      %p121 = por %p119, %p120
      %p123 = scmp.ne.s32.totalorder %s108, %s122
      %p124 = scmp.eq.s32.totalorder %s30, 0
      %p125 = por %p123, %p124
      %s127 = sadd.s32 %s126, 1
      %p130 = scmp.eq.s32.totalorder %s24, 1
      %p131 = scmp.ne.s32.totalorder %s126, %s128
      %p132 = scmp.eq.s32.totalorder %s24, 0
      %p133 = por %p131, %p132
      %p134 = scmp.ne.s32.totalorder %s126, %s128
      %p135 = scmp.eq.s32.totalorder %s29, 1
      %p136 = por %p134, %p135
      %p137 = scmp.ne.s32.totalorder %s128, %s129
      %p138 = scmp.eq.s32.totalorder %s29, 0
      %p139 = por %p137, %p138
      %p140 = scmp.ne.s32.totalorder %s128, %s129
      %p141 = scmp.eq.s32.totalorder %s30, 1
      %p142 = por %p140, %p141
      %p144 = scmp.ne.s32.totalorder %s129, %s143
      %p145 = scmp.eq.s32.totalorder %s30, 0
      %p146 = por %p144, %p145
      %s148 = sadd.s32 %s147, 1
      %p151 = scmp.eq.s32.totalorder %s24, 1
      %p152 = scmp.ne.s32.totalorder %s147, %s149
      %p153 = scmp.eq.s32.totalorder %s24, 0
      %p154 = por %p152, %p153
      %p155 = scmp.ne.s32.totalorder %s147, %s149
      %p156 = scmp.eq.s32.totalorder %s29, 1
      %p157 = por %p155, %p156
      %p158 = scmp.ne.s32.totalorder %s149, %s150
      %p159 = scmp.eq.s32.totalorder %s29, 0
      %p160 = por %p158, %p159
      %p161 = scmp.ne.s32.totalorder %s149, %s150
      %p162 = scmp.eq.s32.totalorder %s30, 1
      %p163 = por %p161, %p162
      %p165 = scmp.ne.s32.totalorder %s150, %s164
      %p166 = scmp.eq.s32.totalorder %s30, 0
      %p167 = por %p165, %p166
      %s169 = sadd.s32 %s168, 1
      %p172 = scmp.eq.s32.totalorder %s24, 1
      %p173 = scmp.ne.s32.totalorder %s168, %s170
      %p174 = scmp.eq.s32.totalorder %s24, 0
      %p175 = por %p173, %p174
      %p176 = scmp.ne.s32.totalorder %s168, %s170
      %p177 = scmp.eq.s32.totalorder %s29, 1
      %p178 = por %p176, %p177
      %p179 = scmp.ne.s32.totalorder %s170, %s171
      %p180 = scmp.eq.s32.totalorder %s29, 0
      %p181 = por %p179, %p180
      %p182 = scmp.ne.s32.totalorder %s170, %s171
      %p183 = scmp.eq.s32.totalorder %s30, 1
      %p184 = por %p182, %p183
      %p186 = scmp.ne.s32.totalorder %s171, %s185
      %p187 = scmp.eq.s32.totalorder %s30, 0
      %p188 = por %p186, %p187
      %s190 = sadd.s32 %s189, 1
      %p193 = scmp.eq.s32.totalorder %s24, 1
      %p194 = scmp.ne.s32.totalorder %s189, %s191
      %p195 = scmp.eq.s32.totalorder %s24, 0
      %p196 = por %p194, %p195
      %p197 = scmp.ne.s32.totalorder %s189, %s191
      %p198 = scmp.eq.s32.totalorder %s29, 1
      %p199 = por %p197, %p198
      %p200 = scmp.ne.s32.totalorder %s191, %s192
      %p201 = scmp.eq.s32.totalorder %s29, 0
      %p202 = por %p200, %p201
      %p203 = scmp.ne.s32.totalorder %s191, %s192
      %p204 = scmp.eq.s32.totalorder %s30, 1
      %p205 = por %p203, %p204
      %p207 = scmp.ne.s32.totalorder %s192, %s206
      %p208 = scmp.eq.s32.totalorder %s30, 0
      %p209 = por %p207, %p208
      %s211 = sadd.s32 %s210, 1
      %p214 = scmp.eq.s32.totalorder %s24, 1
      %p215 = scmp.ne.s32.totalorder %s210, %s212
      %p216 = scmp.eq.s32.totalorder %s24, 0
      %p217 = por %p215, %p216
      %p218 = scmp.ne.s32.totalorder %s210, %s212
      %p219 = scmp.eq.s32.totalorder %s29, 1
      %p220 = por %p218, %p219
      %p221 = scmp.ne.s32.totalorder %s212, %s213
      %p222 = scmp.eq.s32.totalorder %s29, 0
      %p223 = por %p221, %p222
      %p224 = scmp.ne.s32.totalorder %s212, %s213
      %p225 = scmp.eq.s32.totalorder %s30, 1
      %p226 = por %p224, %p225
      %p228 = scmp.ne.s32.totalorder %s213, %s227
      %p229 = scmp.eq.s32.totalorder %s30, 0
      %p230 = por %p228, %p229
      %s232 = sadd.s32 %s231, 1
      %p235 = scmp.eq.s32.totalorder %s24, 1
      %p236 = scmp.ne.s32.totalorder %s231, %s233
      %p237 = scmp.eq.s32.totalorder %s24, 0
      %p238 = por %p236, %p237
      %p239 = scmp.ne.s32.totalorder %s231, %s233
      %p240 = scmp.eq.s32.totalorder %s29, 1
      %p241 = por %p239, %p240
      %p242 = scmp.ne.s32.totalorder %s233, %s234
      %p243 = scmp.eq.s32.totalorder %s29, 0
      %p244 = por %p242, %p243
      %p245 = scmp.ne.s32.totalorder %s233, %s234
      %p246 = scmp.eq.s32.totalorder %s30, 1
      %p247 = por %p245, %p246
      %p249 = scmp.ne.s32.totalorder %s234, %s248
      %p250 = scmp.eq.s32.totalorder %s30, 0
      %p251 = por %p249, %p250
      %s253 = sadd.s32 %s252, 1
      %p256 = scmp.eq.s32.totalorder %s24, 1
      %p257 = scmp.ne.s32.totalorder %s252, %s254
      %p258 = scmp.eq.s32.totalorder %s24, 0
      %p259 = por %p257, %p258
      %p260 = scmp.ne.s32.totalorder %s252, %s254
      %p261 = scmp.eq.s32.totalorder %s29, 1
      %p262 = por %p260, %p261
      %p263 = scmp.ne.s32.totalorder %s254, %s255
      %p264 = scmp.eq.s32.totalorder %s29, 0
      %p265 = por %p263, %p264
      %p266 = scmp.ne.s32.totalorder %s254, %s255
      %p267 = scmp.eq.s32.totalorder %s30, 1
      %p268 = por %p266, %p267
      %p270 = scmp.ne.s32.totalorder %s255, %s269
      %p271 = scmp.eq.s32.totalorder %s30, 0
      %p272 = por %p270, %p271
      %s274 = sadd.s32 %s273, 1
      %p277 = scmp.eq.s32.totalorder %s24, 1
      %p278 = scmp.ne.s32.totalorder %s273, %s275
      %p279 = scmp.eq.s32.totalorder %s24, 0
      %p280 = por %p278, %p279
      %p281 = scmp.ne.s32.totalorder %s273, %s275
      %p282 = scmp.eq.s32.totalorder %s29, 1
      %p283 = por %p281, %p282
      %p284 = scmp.ne.s32.totalorder %s275, %s276
      %p285 = scmp.eq.s32.totalorder %s29, 0
      %p286 = por %p284, %p285
      %p287 = scmp.ne.s32.totalorder %s275, %s276
      %p288 = scmp.eq.s32.totalorder %s30, 1
      %p289 = por %p287, %p288
      %p291 = scmp.ne.s32.totalorder %s276, %s290
      %p292 = scmp.eq.s32.totalorder %s30, 0
      %p293 = por %p291, %p292
      %s295 = sadd.s32 %s294, 1
      %p298 = scmp.eq.s32.totalorder %s24, 1
      %p299 = scmp.ne.s32.totalorder %s294, %s296
      %p300 = scmp.eq.s32.totalorder %s24, 0
      %p301 = por %p299, %p300
      %p302 = scmp.ne.s32.totalorder %s294, %s296
      %p303 = scmp.eq.s32.totalorder %s29, 1
      %p304 = por %p302, %p303
      %p305 = scmp.ne.s32.totalorder %s296, %s297
      %p306 = scmp.eq.s32.totalorder %s29, 0
      %p307 = por %p305, %p306
      %p308 = scmp.ne.s32.totalorder %s296, %s297
      %p309 = scmp.eq.s32.totalorder %s30, 1
      %p310 = por %p308, %p309
      %p312 = scmp.ne.s32.totalorder %s297, %s311
      %p313 = scmp.eq.s32.totalorder %s30, 0
      %p314 = por %p312, %p313
      %s316 = sadd.s32 %s315, 1
      %p319 = scmp.eq.s32.totalorder %s24, 1
      %p320 = scmp.ne.s32.totalorder %s315, %s317
      %p321 = scmp.eq.s32.totalorder %s24, 0
      %p322 = por %p320, %p321
      %p323 = scmp.ne.s32.totalorder %s315, %s317
      %p324 = scmp.eq.s32.totalorder %s29, 1
      %p325 = por %p323, %p324
      %p326 = scmp.ne.s32.totalorder %s317, %s318
      %p327 = scmp.eq.s32.totalorder %s29, 0
      %p328 = por %p326, %p327
      %p329 = scmp.ne.s32.totalorder %s317, %s318
      %p330 = scmp.eq.s32.totalorder %s30, 1
      %p331 = por %p329, %p330
      %p333 = scmp.ne.s32.totalorder %s318, %s332
      %p334 = scmp.eq.s32.totalorder %s30, 0
      %p335 = por %p333, %p334
      %s337 = sadd.s32 %s336, 1
      %p340 = scmp.eq.s32.totalorder %s24, 1
      %p341 = scmp.ne.s32.totalorder %s336, %s338
      %p342 = scmp.eq.s32.totalorder %s24, 0
      %p343 = por %p341, %p342
      %p344 = scmp.ne.s32.totalorder %s336, %s338
      %p345 = scmp.eq.s32.totalorder %s29, 1
      %p346 = por %p344, %p345
      %p347 = scmp.ne.s32.totalorder %s338, %s339
      %p348 = scmp.eq.s32.totalorder %s29, 0
      %p349 = por %p347, %p348
      %p350 = scmp.ne.s32.totalorder %s338, %s339
      %p351 = scmp.eq.s32.totalorder %s30, 1
      %p352 = por %p350, %p351
      %p354 = scmp.ne.s32.totalorder %s339, %s353
      %p355 = scmp.eq.s32.totalorder %s30, 0
      %p356 = por %p354, %p355
      %s357 = ssub.s32 %s24, %s31
      %p358 = scmp.eq.s32.totalorder %s357, 0
      %s360 = sadd.s32 %s359, 1
      %s361 = scalar_select %p358, %s359, %s360
      %p364 = pneg %p358
      %p365 = scmp.eq.s32.totalorder %s24, 1
      %p366 = por %p364, %p365
      %p367 = scmp.ne.s32.totalorder %s359, %s362
      %p368 = scmp.eq.s32.totalorder %s24, 0
      %p369 = por %p367, %p368
      %p370 = scmp.ne.s32.totalorder %s359, %s362
      %p371 = scmp.eq.s32.totalorder %s29, 1
      %p372 = por %p370, %p371
      %p373 = scmp.ne.s32.totalorder %s362, %s363
      %p374 = scmp.eq.s32.totalorder %s29, 0
      %p375 = por %p373, %p374
      %p376 = scmp.ne.s32.totalorder %s362, %s363
      %p377 = scmp.eq.s32.totalorder %s30, 1
      %p378 = por %p376, %p377
      %p380 = scmp.ne.s32.totalorder %s363, %s379
      %p381 = scmp.eq.s32.totalorder %s30, 0
      %p382 = por %p380, %p381
      %p383 = scmp.le.s32.totalorder 1, %s24
      %p384 = scmp.lt.s32.totalorder %s24, 3
      %p385 = pnand %p383, %p384
      %p386 = pneg %p385
      // Predicated region
      $region9: #{tpu_custom_call.1} parent=5 // pred_check
        _
      $region10: #{tpu_custom_call.1} parent=5 // pred_check_branch
        %388 = sbr.rel (%p385) target = $region12
      $region11: #{tpu_custom_call.1} parent=5 // pred_region
        %s389 = ssub.s32 %s24, 1
        // Predicated region
        $region13: #{tpu_custom_call.1} parent=11 // pred_check
          %p390 = pneg %p97
        $region14: #{tpu_custom_call.1} parent=11 // pred_check_branch
          %392 = sbr.rel (%p390) target = $region16
        $region15: #{tpu_custom_call.1} parent=11 // pred_region
          _
        $region16: #{tpu_custom_call.1} parent=11 // pred_fallthru
          _
        // Predicated region
        $region17: #{tpu_custom_call.1} parent=11 // pred_check
          %p393 = pneg %p118
        $region18: #{tpu_custom_call.1} parent=11 // pred_check_branch
          %395 = sbr.rel (%p393) target = $region20
        $region19: #{tpu_custom_call.1} parent=11 // pred_region
          _
        $region20: #{tpu_custom_call.1} parent=11 // pred_fallthru
          _
        // Predicated region
        $region21: #{tpu_custom_call.1} parent=11 // pred_check
          %p396 = pneg %p139
        $region22: #{tpu_custom_call.1} parent=11 // pred_check_branch
          %398 = sbr.rel (%p396) target = $region24
        $region23: #{tpu_custom_call.1} parent=11 // pred_region
          _
        $region24: #{tpu_custom_call.1} parent=11 // pred_fallthru
          _
        // Predicated region
        $region25: #{tpu_custom_call.1} parent=11 // pred_check
          %p399 = pneg %p160
        $region26: #{tpu_custom_call.1} parent=11 // pred_check_branch
          %401 = sbr.rel (%p399) target = $region28
        $region27: #{tpu_custom_call.1} parent=11 // pred_region
          _
        $region28: #{tpu_custom_call.1} parent=11 // pred_fallthru
          _
        // Predicated region
        $region29: #{tpu_custom_call.1} parent=11 // pred_check
          %p402 = pneg %p181
        $region30: #{tpu_custom_call.1} parent=11 // pred_check_branch
          %404 = sbr.rel (%p402) target = $region32
        $region31: #{tpu_custom_call.1} parent=11 // pred_region
          _
        $region32: #{tpu_custom_call.1} parent=11 // pred_fallthru
          _
        // Predicated region
        $region33: #{tpu_custom_call.1} parent=11 // pred_check
          %p405 = pneg %p202
        $region34: #{tpu_custom_call.1} parent=11 // pred_check_branch
          %407 = sbr.rel (%p405) target = $region36
        $region35: #{tpu_custom_call.1} parent=11 // pred_region
          _
        $region36: #{tpu_custom_call.1} parent=11 // pred_fallthru
          _
        // Predicated region
        $region37: #{tpu_custom_call.1} parent=11 // pred_check
          %p408 = pneg %p223
        $region38: #{tpu_custom_call.1} parent=11 // pred_check_branch
          %410 = sbr.rel (%p408) target = $region40
        $region39: #{tpu_custom_call.1} parent=11 // pred_region
          _
        $region40: #{tpu_custom_call.1} parent=11 // pred_fallthru
          _
        // Predicated region
        $region41: #{tpu_custom_call.1} parent=11 // pred_check
          %p411 = pneg %p244
        $region42: #{tpu_custom_call.1} parent=11 // pred_check_branch
          %413 = sbr.rel (%p411) target = $region44
        $region43: #{tpu_custom_call.1} parent=11 // pred_region
          _
        $region44: #{tpu_custom_call.1} parent=11 // pred_fallthru
          _
        // Predicated region
        $region45: #{tpu_custom_call.1} parent=11 // pred_check
          %p414 = pneg %p265
        $region46: #{tpu_custom_call.1} parent=11 // pred_check_branch
          %416 = sbr.rel (%p414) target = $region48
        $region47: #{tpu_custom_call.1} parent=11 // pred_region
          _
        $region48: #{tpu_custom_call.1} parent=11 // pred_fallthru
          _
        // Predicated region
        $region49: #{tpu_custom_call.1} parent=11 // pred_check
          %p417 = pneg %p286
        $region50: #{tpu_custom_call.1} parent=11 // pred_check_branch
          %419 = sbr.rel (%p417) target = $region52
        $region51: #{tpu_custom_call.1} parent=11 // pred_region
          _
        $region52: #{tpu_custom_call.1} parent=11 // pred_fallthru
          _
        // Predicated region
        $region53: #{tpu_custom_call.1} parent=11 // pred_check
          %p420 = pneg %p307
        $region54: #{tpu_custom_call.1} parent=11 // pred_check_branch
          %422 = sbr.rel (%p420) target = $region56
        $region55: #{tpu_custom_call.1} parent=11 // pred_region
          _
        $region56: #{tpu_custom_call.1} parent=11 // pred_fallthru
          _
        // Predicated region
        $region57: #{tpu_custom_call.1} parent=11 // pred_check
          %p423 = pneg %p328
        $region58: #{tpu_custom_call.1} parent=11 // pred_check_branch
          %425 = sbr.rel (%p423) target = $region60
        $region59: #{tpu_custom_call.1} parent=11 // pred_region
          _
        $region60: #{tpu_custom_call.1} parent=11 // pred_fallthru
          _
        // Predicated region
        $region61: #{tpu_custom_call.1} parent=11 // pred_check
          %p426 = pneg %p349
        $region62: #{tpu_custom_call.1} parent=11 // pred_check_branch
          %428 = sbr.rel (%p426) target = $region64
        $region63: #{tpu_custom_call.1} parent=11 // pred_region
          _
        $region64: #{tpu_custom_call.1} parent=11 // pred_fallthru
          _
      $region12: #{tpu_custom_call.1} parent=5 // pred_fallthru
        _
      %p429 = scmp.lt.s32.totalorder %s24, 2
      // Predicated region
      $region65: #{tpu_custom_call.1} parent=5 // pred_check
        %p430 = pneg %p429
      $region66: #{tpu_custom_call.1} parent=5 // pred_check_branch
        %432 = sbr.rel (%p430) target = $region68
      $region67: #{tpu_custom_call.1} parent=5 // pred_region
        // Predicated region
        $region69: #{tpu_custom_call.1} parent=67 // pred_check
          %p433 = pneg %p44
        $region70: #{tpu_custom_call.1} parent=67 // pred_check_branch
          %435 = sbr.rel (%p433) target = $region72
        $region71: #{tpu_custom_call.1} parent=67 // pred_region
          %p436 = scmp.lt.s32.totalorder %s24, 1
          %s437 = scalar_select %p436, %s24, 1
          %s438 = smul.addr %s437, 8
          %s439 = scalar_lea.vmem %s0, %s438
        $region72: #{tpu_custom_call.1} parent=67 // pred_fallthru
          _
        // Predicated region
        $region73: #{tpu_custom_call.1} parent=67 // pred_check
          %p440 = pneg %p70
        $region74: #{tpu_custom_call.1} parent=67 // pred_check_branch
          %442 = sbr.rel (%p440) target = $region76
        $region75: #{tpu_custom_call.1} parent=67 // pred_region
          %p443 = scmp.lt.s32.totalorder %s24, 1
          %s444 = scalar_select %p443, %s24, 1
          %s445 = smul.addr %s444, 2
          %s446 = smul.addr %s445, 8
          %s447 = scalar_lea.vmem %s1, %s446
        $region76: #{tpu_custom_call.1} parent=67 // pred_fallthru
          _
      $region68: #{tpu_custom_call.1} parent=5 // pred_fallthru
        _
      %p448 = scmp.le.s32.totalorder 1, %s24
      %p449 = scmp.lt.s32.totalorder %s24, 3
      %p450 = pnand %p448, %p449
      %p451 = pneg %p450
      // Predicated region
      $region77: #{tpu_custom_call.1} parent=5 // pred_check
        _
      $region78: #{tpu_custom_call.1} parent=5 // pred_check_branch
        %453 = sbr.rel (%p450) target = $region80
      $region79: #{tpu_custom_call.1} parent=5 // pred_region
        %s454 = ssub.s32 %s24, 1
        %p455 = scmp.lt.s32.totalorder %s29, 1
        %s456 = scalar_select %p455, %s29, 1
        %s457 = smul.addr %s456, 8
        %s458 = scalar_lea.vmem %s0, %s457
        %p459 = pneg %p50
        %p460 = pneg %p47
        %p461 = scmp.lt.s32.totalorder %s29, 1
        %s462 = scalar_select %p461, %s29, 1
        %s463 = smul.addr %s462, 2
        %s464 = smul.addr %s463, 8
        %s465 = scalar_lea.vmem %s1, %s464
        %p466 = pneg %p76
        %p467 = pneg %p73
        %p468 = pneg %p97
        %p469 = pneg %p94
        %p470 = pneg %p118
        %p471 = pneg %p115
        %p472 = pneg %p139
        %p473 = pneg %p136
        %p474 = pneg %p160
        %p475 = pneg %p157
        %p476 = pneg %p181
        %p477 = pneg %p178
        %p478 = pneg %p202
        %p479 = pneg %p199
        %p480 = pneg %p223
        %p481 = pneg %p220
        %p482 = pneg %p244
        %p483 = pneg %p241
        %p484 = pneg %p265
        %p485 = pneg %p262
        %p486 = pneg %p286
        %p487 = pneg %p283
        %p488 = pneg %p307
        %p489 = pneg %p304
        %p490 = pneg %p328
        %p491 = pneg %p325
        %p492 = pneg %p349
        %p493 = pneg %p346
        %p494 = pneg %p375
        %p495 = pneg %p372
        %s496 = sand.u32 %s362, 1
        %s497 = scalar_lea.sflag [#allocation3], %s496
        %s498 = sand.u32 %s362, 1
        %s499 = smul.addr %s498, 8
        %s500 = scalar_lea.vmem [#allocation2], %s499
        %p501 = scmp.lt.s32.totalorder %s29, 1
        %s502 = scalar_select %p501, %s29, 1
        %s503 = smul.addr %s502, 8
        %s504 = scalar_lea.vmem %s0, %s503
        %p505 = scmp.lt.s32.totalorder %s29, 1
        %s506 = scalar_select %p505, %s29, 1
        %s507 = smul.addr %s506, 2
        %s508 = smul.addr %s507, 8
        %s509 = scalar_lea.vmem %s1, %s508
        %v510 = vld [vmem:[%s504] sm:$0xff]
        %v511 = vld [vmem:[%s2] sm:$0xff]
        %v512 = vadd.f32 %v510, %v511
        %v513 = vld [vmem:[%s509] sm:$0xff]
        %v514 = vld [vmem:[%s509 + $0x8] sm:$0xff]
        %v515 = vlaneseq
        %v516 = vshrl.u32 %v515, 7
        %v517 = vlaneseq
        %v518 = vand.u32 %v517, 127
        %vm519 = vcmp.le.s32.totalorder %v518, %v516
        %v520 = vsel %vm519, 0.0, -1e+30
        %v521 = vld [vmem:[%s3] sm:$0xff]
        %v522 = vld [vmem:[%s3 + $0x8] sm:$0xff]
        %v523 = vld [vmem:[%s3 + $0x10] sm:$0xff]
        %v524 = vld [vmem:[%s3 + $0x18] sm:$0xff]
        %v525 = vld [vmem:[%s4] sm:$0x1]
        %v527 = vlaneseq
        %v528 = vshrl.u32 %v527, 7
        %v529 = vsub.s32 0, %v528
        %v530 = vrot.slane %v525, %v529
        %vm532 = vcmask 261120
        %v534 = vsel %vm532, %v512, 0
        %536 = vmatprep.subr.mxu0 0.0
        %537 = vmatpush1.msra.mxu0 %v521
        %538 = vmatprep.subr.mxu0 0.0
        %539 = vmatpush1.msra.mxu0 %v522
        %540 = vmatprep.subr.mxu0 0.0
        %541 = vmatpush1.msra.mxu0 %v523
        %542 = vmatprep.subr.mxu0 0.0
        %543 = vmatpush1.msra.mxu0 %v524
        %544 = vmatprep.subr.mxu0 0.0
        %545 = vmatpush1.msra.mxu0 0.0
        %546 = vmatprep.subr.mxu0 0.0
        %547 = vmatpush1.msra.mxu0 0.0
        %548 = vmatprep.subr.mxu0 0.0
        %549 = vmatpush1.msra.mxu0 0.0
        %550 = vmatprep.subr.mxu0 0.0
        %551 = vmatpush1.msra.mxu0 0.0
        %552 = vmatprep.subr.mxu0 0.0
        %553 = vmatpush1.msra.mxu0 0.0
        %554 = vmatprep.subr.mxu0 0.0
        %555 = vmatpush1.msra.mxu0 0.0
        %556 = vmatprep.subr.mxu0 0.0
        %557 = vmatpush1.msra.mxu0 0.0
        %558 = vmatprep.subr.mxu0 0.0
        %559 = vmatpush1.msra.mxu0 0.0
        %560 = vmatprep.subr.mxu0 0.0
        %561 = vmatpush1.msra.mxu0 0.0
        %562 = vmatprep.subr.mxu0 0.0
        %563 = vmatpush1.msra.mxu0 0.0
        %564 = vmatprep.subr.mxu0 0.0
        %565 = vmatpush1.msra.mxu0 0.0
        %566 = vmatprep.subr.mxu0 0.0
        %567 = vmatpush1.msra.mxu0 0.0
        %568 = vmatprep.subr.mxu0 0.0
        %569 = vmatpush1.msra.mxu0 0.0
        %570 = vmatprep.subr.mxu0 0.0
        %571 = vmatpush1.msra.mxu0 0.0
        %572 = vmatprep.subr.mxu0 0.0
        %573 = vmatpush1.msra.mxu0 0.0
        %574 = vmatprep.subr.mxu0 0.0
        %575 = vmatpush1.msra.mxu0 0.0
        %576 = vmatprep.subr.mxu0 0.0
        %577 = vmatpush1.msra.mxu0 0.0
        %578 = vmatprep.subr.mxu0 0.0
        %579 = vmatpush1.msra.mxu0 0.0
        %580 = vmatprep.subr.mxu0 0.0
        %581 = vmatpush1.msra.mxu0 0.0
        %582 = vmatprep.subr.mxu0 0.0
        %583 = vmatpush1.msra.mxu0 0.0
        %584 = vmatprep.subr.mxu0 0.0
        %585 = vmatpush1.msra.mxu0 0.0
        %586 = vmatprep.subr.mxu0 0.0
        %587 = vmatpush1.msra.mxu0 0.0
        %588 = vmatprep.subr.mxu0 0.0
        %589 = vmatpush1.msra.mxu0 0.0
        %590 = vmatprep.subr.mxu0 0.0
        %591 = vmatpush1.msra.mxu0 0.0
        %592 = vmatprep.subr.mxu0 0.0
        %593 = vmatpush1.msra.mxu0 0.0
        %594 = vmatprep.subr.mxu0 0.0
        %595 = vmatpush1.msra.mxu0 0.0
        %596 = vmatprep.subr.mxu0 0.0
        %597 = vmatpush1.msra.mxu0 0.0
        %598 = vmatprep.subr.mxu0 0.0
        %599 = vmatpush1.msra.mxu0 0.0
        %600 = vmatprep.mubr.f32.mxu0 0.0
        %601 = vmatmul.mubr.f32.gmra.mrb[0].mxu0 %v534
        %v602 = vpop.f32.mrb[0].mxu0
        %v603 = vadd.f32 %v530, %v602
        %v604 = vpop.f32.mrb[0].mxu0
        %605 = vdwg.mxu0
        %s606 = scalar_lea.vmem %s3, 128
        %v607 = vld [vmem:[%s606] sm:$0xff]
        %v608 = vld [vmem:[%s606 + $0x8] sm:$0xff]
        %v609 = vld [vmem:[%s606 + $0x10] sm:$0xff]
        %v610 = vld [vmem:[%s606 + $0x18] sm:$0xff]
        %s611 = scalar_lea.vmem %s4, 4
        %v612 = vld [vmem:[%s611] sm:$0x1]
        %v614 = vlaneseq
        %v615 = vshrl.u32 %v614, 7
        %v616 = vsub.s32 0, %v615
        %v617 = vrot.slane %v612, %v616
        %619 = vmatprep.subr.mxu0 0.0
        %620 = vmatpush1.msra.mxu0 %v607
        %621 = vmatprep.subr.mxu0 0.0
        %622 = vmatpush1.msra.mxu0 %v608
        %623 = vmatprep.subr.mxu0 0.0
        %624 = vmatpush1.msra.mxu0 %v609
        %625 = vmatprep.subr.mxu0 0.0
        %626 = vmatpush1.msra.mxu0 %v610
        %627 = vmatprep.subr.mxu0 0.0
        %628 = vmatpush1.msra.mxu0 0.0
        %629 = vmatprep.subr.mxu0 0.0
        %630 = vmatpush1.msra.mxu0 0.0
        %631 = vmatprep.subr.mxu0 0.0
        %632 = vmatpush1.msra.mxu0 0.0
        %633 = vmatprep.subr.mxu0 0.0
        %634 = vmatpush1.msra.mxu0 0.0
        %635 = vmatprep.subr.mxu0 0.0
        %636 = vmatpush1.msra.mxu0 0.0
        %637 = vmatprep.subr.mxu0 0.0
        %638 = vmatpush1.msra.mxu0 0.0
        %639 = vmatprep.subr.mxu0 0.0
        %640 = vmatpush1.msra.mxu0 0.0
        %641 = vmatprep.subr.mxu0 0.0
        %642 = vmatpush1.msra.mxu0 0.0
        %643 = vmatprep.subr.mxu0 0.0
        %644 = vmatpush1.msra.mxu0 0.0
        %645 = vmatprep.subr.mxu0 0.0
        %646 = vmatpush1.msra.mxu0 0.0
        %647 = vmatprep.subr.mxu0 0.0
        %648 = vmatpush1.msra.mxu0 0.0
        %649 = vmatprep.subr.mxu0 0.0
        %650 = vmatpush1.msra.mxu0 0.0
        %651 = vmatprep.subr.mxu0 0.0
        %652 = vmatpush1.msra.mxu0 0.0
        %653 = vmatprep.subr.mxu0 0.0
        %654 = vmatpush1.msra.mxu0 0.0
        %655 = vmatprep.subr.mxu0 0.0
        %656 = vmatpush1.msra.mxu0 0.0
        %657 = vmatprep.subr.mxu0 0.0
        %658 = vmatpush1.msra.mxu0 0.0
        %659 = vmatprep.subr.mxu0 0.0
        %660 = vmatpush1.msra.mxu0 0.0
        %661 = vmatprep.subr.mxu0 0.0
        %662 = vmatpush1.msra.mxu0 0.0
        %663 = vmatprep.subr.mxu0 0.0
        %664 = vmatpush1.msra.mxu0 0.0
        %665 = vmatprep.subr.mxu0 0.0
        %666 = vmatpush1.msra.mxu0 0.0
        %667 = vmatprep.subr.mxu0 0.0
        %668 = vmatpush1.msra.mxu0 0.0
        %669 = vmatprep.subr.mxu0 0.0
        %670 = vmatpush1.msra.mxu0 0.0
        %671 = vmatprep.subr.mxu0 0.0
        %672 = vmatpush1.msra.mxu0 0.0
        %673 = vmatprep.subr.mxu0 0.0
        %674 = vmatpush1.msra.mxu0 0.0
        %675 = vmatprep.subr.mxu0 0.0
        %676 = vmatpush1.msra.mxu0 0.0
        %677 = vmatprep.subr.mxu0 0.0
        %678 = vmatpush1.msra.mxu0 0.0
        %679 = vmatprep.subr.mxu0 0.0
        %680 = vmatpush1.msra.mxu0 0.0
        %681 = vmatprep.subr.mxu0 0.0
        %682 = vmatpush1.msra.mxu0 0.0
        %683 = vmatprep.mubr.f32.mxu0 0.0
        %684 = vmatmul.mubr.f32.gmra.mrb[0].mxu0 %v534
        %v685 = vpop.f32.mrb[0].mxu0
        %v686 = vadd.f32 %v617, %v685
        %v687 = vpop.f32.mrb[0].mxu0
        %688 = vdwg.mxu0
        %s689 = scalar_lea.vmem %s3, 256
        %v690 = vld [vmem:[%s689] sm:$0xff]
        %v691 = vld [vmem:[%s689 + $0x8] sm:$0xff]
        %v692 = vld [vmem:[%s689 + $0x10] sm:$0xff]
        %v693 = vld [vmem:[%s689 + $0x18] sm:$0xff]
        %s694 = scalar_lea.vmem %s4, 8
        %v695 = vld [vmem:[%s694] sm:$0x1]
        %v697 = vlaneseq
        %v698 = vshrl.u32 %v697, 7
        %v699 = vsub.s32 0, %v698
        %v700 = vrot.slane %v695, %v699
        %702 = vmatprep.subr.mxu0 0.0
        %703 = vmatpush1.msra.mxu0 %v690
        %704 = vmatprep.subr.mxu0 0.0
        %705 = vmatpush1.msra.mxu0 %v691
        %706 = vmatprep.subr.mxu0 0.0
        %707 = vmatpush1.msra.mxu0 %v692
        %708 = vmatprep.subr.mxu0 0.0
        %709 = vmatpush1.msra.mxu0 %v693
        %710 = vmatprep.subr.mxu0 0.0
        %711 = vmatpush1.msra.mxu0 0.0
        %712 = vmatprep.subr.mxu0 0.0
        %713 = vmatpush1.msra.mxu0 0.0
        %714 = vmatprep.subr.mxu0 0.0
        %715 = vmatpush1.msra.mxu0 0.0
        %716 = vmatprep.subr.mxu0 0.0
        %717 = vmatpush1.msra.mxu0 0.0
        %718 = vmatprep.subr.mxu0 0.0
        %719 = vmatpush1.msra.mxu0 0.0
        %720 = vmatprep.subr.mxu0 0.0
        %721 = vmatpush1.msra.mxu0 0.0
        %722 = vmatprep.subr.mxu0 0.0
        %723 = vmatpush1.msra.mxu0 0.0
        %724 = vmatprep.subr.mxu0 0.0
        %725 = vmatpush1.msra.mxu0 0.0
        %726 = vmatprep.subr.mxu0 0.0
        %727 = vmatpush1.msra.mxu0 0.0
        %728 = vmatprep.subr.mxu0 0.0
        %729 = vmatpush1.msra.mxu0 0.0
        %730 = vmatprep.subr.mxu0 0.0
        %731 = vmatpush1.msra.mxu0 0.0
        %732 = vmatprep.subr.mxu0 0.0
        %733 = vmatpush1.msra.mxu0 0.0
        %734 = vmatprep.subr.mxu0 0.0
        %735 = vmatpush1.msra.mxu0 0.0
        %736 = vmatprep.subr.mxu0 0.0
        %737 = vmatpush1.msra.mxu0 0.0
        %738 = vmatprep.subr.mxu0 0.0
        %739 = vmatpush1.msra.mxu0 0.0
        %740 = vmatprep.subr.mxu0 0.0
        %741 = vmatpush1.msra.mxu0 0.0
        %742 = vmatprep.subr.mxu0 0.0
        %743 = vmatpush1.msra.mxu0 0.0
        %744 = vmatprep.subr.mxu0 0.0
        %745 = vmatpush1.msra.mxu0 0.0
        %746 = vmatprep.subr.mxu0 0.0
        %747 = vmatpush1.msra.mxu0 0.0
        %748 = vmatprep.subr.mxu0 0.0
        %749 = vmatpush1.msra.mxu0 0.0
        %750 = vmatprep.subr.mxu0 0.0
        %751 = vmatpush1.msra.mxu0 0.0
        %752 = vmatprep.subr.mxu0 0.0
        %753 = vmatpush1.msra.mxu0 0.0
        %754 = vmatprep.subr.mxu0 0.0
        %755 = vmatpush1.msra.mxu0 0.0
        %756 = vmatprep.subr.mxu0 0.0
        %757 = vmatpush1.msra.mxu0 0.0
        %758 = vmatprep.subr.mxu0 0.0
        %759 = vmatpush1.msra.mxu0 0.0
        %760 = vmatprep.subr.mxu0 0.0
        %761 = vmatpush1.msra.mxu0 0.0
        %762 = vmatprep.subr.mxu0 0.0
        %763 = vmatpush1.msra.mxu0 0.0
        %764 = vmatprep.subr.mxu0 0.0
        %765 = vmatpush1.msra.mxu0 0.0
        %766 = vmatprep.mubr.f32.mxu0 0.0
        %767 = vmatmul.mubr.f32.gmra.mrb[0].mxu0 %v534
        %v768 = vpop.f32.mrb[0].mxu0
        %v769 = vadd.f32 %v700, %v768
        %v770 = vpop.f32.mrb[0].mxu0
        %771 = vdwg.mxu0
        %vm772 = vcmask 64512
        %v774 = vsel %vm772, %v603, 0
        %v777 = vsel %vm772, %v686, 0
        %779 = vmatprep.subr.mxu0 0.0
        %780 = vmatpush1.xpose.msra.mxu0 %v777
        %781 = vmatprep.subr.mxu0 0.0
        %782 = vmatpush1.xpose.msra.mxu0 0.0
        %783 = vmatprep.subr.mxu0 0.0
        %784 = vmatpush1.xpose.msra.mxu0 0.0
        %785 = vmatprep.subr.mxu0 0.0
        %786 = vmatpush1.xpose.msra.mxu0 0.0
        %787 = vmatprep.subr.mxu0 0.0
        %788 = vmatpush1.xpose.msra.mxu0 0.0
        %789 = vmatprep.subr.mxu0 0.0
        %790 = vmatpush1.xpose.msra.mxu0 0.0
        %791 = vmatprep.subr.mxu0 0.0
        %792 = vmatpush1.xpose.msra.mxu0 0.0
        %793 = vmatprep.subr.mxu0 0.0
        %794 = vmatpush1.xpose.msra.mxu0 0.0
        %795 = vmatprep.subr.mxu0 0.0
        %796 = vmatpush1.xpose.msra.mxu0 0.0
        %797 = vmatprep.subr.mxu0 0.0
        %798 = vmatpush1.xpose.msra.mxu0 0.0
        %799 = vmatprep.subr.mxu0 0.0
        %800 = vmatpush1.xpose.msra.mxu0 0.0
        %801 = vmatprep.subr.mxu0 0.0
        %802 = vmatpush1.xpose.msra.mxu0 0.0
        %803 = vmatprep.subr.mxu0 0.0
        %804 = vmatpush1.xpose.msra.mxu0 0.0
        %805 = vmatprep.subr.mxu0 0.0
        %806 = vmatpush1.xpose.msra.mxu0 0.0
        %807 = vmatprep.subr.mxu0 0.0
        %808 = vmatpush1.xpose.msra.mxu0 0.0
        %809 = vmatprep.subr.mxu0 0.0
        %810 = vmatpush1.xpose.msra.mxu0 0.0
        %811 = vmatprep.subr.mxu0 0.0
        %812 = vmatpush1.xpose.msra.mxu0 0.0
        %813 = vmatprep.subr.mxu0 0.0
        %814 = vmatpush1.xpose.msra.mxu0 0.0
        %815 = vmatprep.subr.mxu0 0.0
        %816 = vmatpush1.xpose.msra.mxu0 0.0
        %817 = vmatprep.subr.mxu0 0.0
        %818 = vmatpush1.xpose.msra.mxu0 0.0
        %819 = vmatprep.subr.mxu0 0.0
        %820 = vmatpush1.xpose.msra.mxu0 0.0
        %821 = vmatprep.subr.mxu0 0.0
        %822 = vmatpush1.xpose.msra.mxu0 0.0
        %823 = vmatprep.subr.mxu0 0.0
        %824 = vmatpush1.xpose.msra.mxu0 0.0
        %825 = vmatprep.subr.mxu0 0.0
        %826 = vmatpush1.xpose.msra.mxu0 0.0
        %827 = vmatprep.subr.mxu0 0.0
        %828 = vmatpush1.xpose.msra.mxu0 0.0
        %829 = vmatprep.subr.mxu0 0.0
        %830 = vmatpush1.xpose.msra.mxu0 0.0
        %831 = vmatprep.subr.mxu0 0.0
        %832 = vmatpush1.xpose.msra.mxu0 0.0
        %833 = vmatprep.subr.mxu0 0.0
        %834 = vmatpush1.xpose.msra.mxu0 0.0
        %835 = vmatprep.subr.mxu0 0.0
        %836 = vmatpush1.xpose.msra.mxu0 0.0
        %837 = vmatprep.subr.mxu0 0.0
        %838 = vmatpush1.xpose.msra.mxu0 0.0
        %839 = vmatprep.subr.mxu0 0.0
        %840 = vmatpush1.xpose.msra.mxu0 0.0
        %841 = vmatprep.subr.mxu0 0.0
        %842 = vmatpush1.xpose.msra.mxu0 0.0
        %843 = vmatprep.mubr.f32.mxu0 0.0
        %844 = vmatmul.mubr.f32.gmra.mrb[0].mxu0 %v774
        %v845 = vpop.f32.mrb[0].mxu0
        %v846 = vadd.f32 0.0, %v845
        %v847 = vpop.f32.mrb[0].mxu0
        %848 = vdwg.mxu0
        %v849 = vmul.f32 %v846, 0.35355338
        %v850 = vadd.f32 %v849, %v520
        %v851 = vsel %vm772, %v850, -inf
        %852 = vmax.xlane.f32.xlu0 %v851
        %v853 = vpop.xlane.xlu0 %852
        %v854 = vsub.f32 %v850, %v853
        %v855 = vmul.f32 %v854, 1.442695
        %v856 = vpow.pop %v855
        %v857 = vsel %vm772, %v856, 0.0
        %858 = vadd.xlane.f32.xlu0 %v857
        %v859 = vpop.xlane.xlu0 %858
        %v860 = vrcp.pop %v859
        %v861 = vmul.f32 %v856, %v860
        %v863 = vsel %vm772, %v861, 0
        %865 = vmatprep.subr.mxu0 0.0
        %866 = vmatpush1.msra.mxu0 %v769
        %867 = vmatprep.subr.mxu0 0.0
        %868 = vmatpush1.msra.mxu0 0.0
        %869 = vmatprep.subr.mxu0 0.0
        %870 = vmatpush1.msra.mxu0 0.0
        %871 = vmatprep.subr.mxu0 0.0
        %872 = vmatpush1.msra.mxu0 0.0
        %873 = vmatprep.subr.mxu0 0.0
        %874 = vmatpush1.msra.mxu0 0.0
        %875 = vmatprep.subr.mxu0 0.0
        %876 = vmatpush1.msra.mxu0 0.0
        %877 = vmatprep.subr.mxu0 0.0
        %878 = vmatpush1.msra.mxu0 0.0
        %879 = vmatprep.subr.mxu0 0.0
        %880 = vmatpush1.msra.mxu0 0.0
        %881 = vmatprep.subr.mxu0 0.0
        %882 = vmatpush1.msra.mxu0 0.0
        %883 = vmatprep.subr.mxu0 0.0
        %884 = vmatpush1.msra.mxu0 0.0
        %885 = vmatprep.subr.mxu0 0.0
        %886 = vmatpush1.msra.mxu0 0.0
        %887 = vmatprep.subr.mxu0 0.0
        %888 = vmatpush1.msra.mxu0 0.0
        %889 = vmatprep.subr.mxu0 0.0
        %890 = vmatpush1.msra.mxu0 0.0
        %891 = vmatprep.subr.mxu0 0.0
        %892 = vmatpush1.msra.mxu0 0.0
        %893 = vmatprep.subr.mxu0 0.0
        %894 = vmatpush1.msra.mxu0 0.0
        %895 = vmatprep.subr.mxu0 0.0
        %896 = vmatpush1.msra.mxu0 0.0
        %897 = vmatprep.subr.mxu0 0.0
        %898 = vmatpush1.msra.mxu0 0.0
        %899 = vmatprep.subr.mxu0 0.0
        %900 = vmatpush1.msra.mxu0 0.0
        %901 = vmatprep.subr.mxu0 0.0
        %902 = vmatpush1.msra.mxu0 0.0
        %903 = vmatprep.subr.mxu0 0.0
        %904 = vmatpush1.msra.mxu0 0.0
        %905 = vmatprep.subr.mxu0 0.0
        %906 = vmatpush1.msra.mxu0 0.0
        %907 = vmatprep.subr.mxu0 0.0
        %908 = vmatpush1.msra.mxu0 0.0
        %909 = vmatprep.subr.mxu0 0.0
        %910 = vmatpush1.msra.mxu0 0.0
        %911 = vmatprep.subr.mxu0 0.0
        %912 = vmatpush1.msra.mxu0 0.0
        %913 = vmatprep.subr.mxu0 0.0
        %914 = vmatpush1.msra.mxu0 0.0
        %915 = vmatprep.subr.mxu0 0.0
        %916 = vmatpush1.msra.mxu0 0.0
        %917 = vmatprep.subr.mxu0 0.0
        %918 = vmatpush1.msra.mxu0 0.0
        %919 = vmatprep.subr.mxu0 0.0
        %920 = vmatpush1.msra.mxu0 0.0
        %921 = vmatprep.subr.mxu0 0.0
        %922 = vmatpush1.msra.mxu0 0.0
        %923 = vmatprep.subr.mxu0 0.0
        %924 = vmatpush1.msra.mxu0 0.0
        %925 = vmatprep.subr.mxu0 0.0
        %926 = vmatpush1.msra.mxu0 0.0
        %927 = vmatprep.subr.mxu0 0.0
        %928 = vmatpush1.msra.mxu0 0.0
        %929 = vmatprep.mubr.f32.mxu0 0.0
        %930 = vmatmul.mubr.f32.gmra.mrb[0].mxu0 %v863
        %v931 = vpop.f32.mrb[0].mxu0
        %v932 = vadd.f32 0.0, %v931
        %v933 = vpop.f32.mrb[0].mxu0
        %934 = vdwg.mxu0
        %v935 = vld [vmem:[%s5] sm:$0xff]
        %s936 = scalar_lea.vmem %s3, 32
        %v937 = vld [vmem:[%s936] sm:$0xff]
        %v938 = vld [vmem:[%s936 + $0x8] sm:$0xff]
        %v939 = vld [vmem:[%s936 + $0x10] sm:$0xff]
        %v940 = vld [vmem:[%s936 + $0x18] sm:$0xff]
        %s941 = scalar_lea.vmem %s4, 1
        %v942 = vld [vmem:[%s941] sm:$0x1]
        %v944 = vlaneseq
        %v945 = vshrl.u32 %v944, 7
        %v946 = vsub.s32 0, %v945
        %v947 = vrot.slane %v942, %v946
        %949 = vmatprep.subr.mxu0 0.0
        %950 = vmatpush1.msra.mxu0 %v937
        %951 = vmatprep.subr.mxu0 0.0
        %952 = vmatpush1.msra.mxu0 %v938
        %953 = vmatprep.subr.mxu0 0.0
        %954 = vmatpush1.msra.mxu0 %v939
        %955 = vmatprep.subr.mxu0 0.0
        %956 = vmatpush1.msra.mxu0 %v940
        %957 = vmatprep.subr.mxu0 0.0
        %958 = vmatpush1.msra.mxu0 0.0
        %959 = vmatprep.subr.mxu0 0.0
        %960 = vmatpush1.msra.mxu0 0.0
        %961 = vmatprep.subr.mxu0 0.0
        %962 = vmatpush1.msra.mxu0 0.0
        %963 = vmatprep.subr.mxu0 0.0
        %964 = vmatpush1.msra.mxu0 0.0
        %965 = vmatprep.subr.mxu0 0.0
        %966 = vmatpush1.msra.mxu0 0.0
        %967 = vmatprep.subr.mxu0 0.0
        %968 = vmatpush1.msra.mxu0 0.0
        %969 = vmatprep.subr.mxu0 0.0
        %970 = vmatpush1.msra.mxu0 0.0
        %971 = vmatprep.subr.mxu0 0.0
        %972 = vmatpush1.msra.mxu0 0.0
        %973 = vmatprep.subr.mxu0 0.0
        %974 = vmatpush1.msra.mxu0 0.0
        %975 = vmatprep.subr.mxu0 0.0
        %976 = vmatpush1.msra.mxu0 0.0
        %977 = vmatprep.subr.mxu0 0.0
        %978 = vmatpush1.msra.mxu0 0.0
        %979 = vmatprep.subr.mxu0 0.0
        %980 = vmatpush1.msra.mxu0 0.0
        %981 = vmatprep.subr.mxu0 0.0
        %982 = vmatpush1.msra.mxu0 0.0
        %983 = vmatprep.subr.mxu0 0.0
        %984 = vmatpush1.msra.mxu0 0.0
        %985 = vmatprep.subr.mxu0 0.0
        %986 = vmatpush1.msra.mxu0 0.0
        %987 = vmatprep.subr.mxu0 0.0
        %988 = vmatpush1.msra.mxu0 0.0
        %989 = vmatprep.subr.mxu0 0.0
        %990 = vmatpush1.msra.mxu0 0.0
        %991 = vmatprep.subr.mxu0 0.0
        %992 = vmatpush1.msra.mxu0 0.0
        %993 = vmatprep.subr.mxu0 0.0
        %994 = vmatpush1.msra.mxu0 0.0
        %995 = vmatprep.subr.mxu0 0.0
        %996 = vmatpush1.msra.mxu0 0.0
        %997 = vmatprep.subr.mxu0 0.0
        %998 = vmatpush1.msra.mxu0 0.0
        %999 = vmatprep.subr.mxu0 0.0
        %1000 = vmatpush1.msra.mxu0 0.0
        %1001 = vmatprep.subr.mxu0 0.0
        %1002 = vmatpush1.msra.mxu0 0.0
        %1003 = vmatprep.subr.mxu0 0.0
        %1004 = vmatpush1.msra.mxu0 0.0
        %1005 = vmatprep.subr.mxu0 0.0
        %1006 = vmatpush1.msra.mxu0 0.0
        %1007 = vmatprep.subr.mxu0 0.0
        %1008 = vmatpush1.msra.mxu0 0.0
        %1009 = vmatprep.subr.mxu0 0.0
        %1010 = vmatpush1.msra.mxu0 0.0
        %1011 = vmatprep.subr.mxu0 0.0
        %1012 = vmatpush1.msra.mxu0 0.0
        %1013 = vmatprep.mubr.f32.mxu0 0.0
        %1014 = vmatmul.mubr.f32.gmra.mrb[0].mxu0 %v534
        %v1015 = vpop.f32.mrb[0].mxu0
        %v1016 = vadd.f32 %v947, %v1015
        %v1017 = vpop.f32.mrb[0].mxu0
        %1018 = vdwg.mxu0
        %s1019 = scalar_lea.vmem %s3, 160
        %v1020 = vld [vmem:[%s1019] sm:$0xff]
        %v1021 = vld [vmem:[%s1019 + $0x8] sm:$0xff]
        %v1022 = vld [vmem:[%s1019 + $0x10] sm:$0xff]
        %v1023 = vld [vmem:[%s1019 + $0x18] sm:$0xff]
        %s1024 = scalar_lea.vmem %s4, 5
        %v1025 = vld [vmem:[%s1024] sm:$0x1]
        %v1027 = vlaneseq
        %v1028 = vshrl.u32 %v1027, 7
        %v1029 = vsub.s32 0, %v1028
        %v1030 = vrot.slane %v1025, %v1029
        %1032 = vmatprep.subr.mxu0 0.0
        %1033 = vmatpush1.msra.mxu0 %v1020
        %1034 = vmatprep.subr.mxu0 0.0
        %1035 = vmatpush1.msra.mxu0 %v1021
        %1036 = vmatprep.subr.mxu0 0.0
        %1037 = vmatpush1.msra.mxu0 %v1022
        %1038 = vmatprep.subr.mxu0 0.0
        %1039 = vmatpush1.msra.mxu0 %v1023
        %1040 = vmatprep.subr.mxu0 0.0
        %1041 = vmatpush1.msra.mxu0 0.0
        %1042 = vmatprep.subr.mxu0 0.0
        %1043 = vmatpush1.msra.mxu0 0.0
        %1044 = vmatprep.subr.mxu0 0.0
        %1045 = vmatpush1.msra.mxu0 0.0
        %1046 = vmatprep.subr.mxu0 0.0
        %1047 = vmatpush1.msra.mxu0 0.0
        %1048 = vmatprep.subr.mxu0 0.0
        %1049 = vmatpush1.msra.mxu0 0.0
        %1050 = vmatprep.subr.mxu0 0.0
        %1051 = vmatpush1.msra.mxu0 0.0
        %1052 = vmatprep.subr.mxu0 0.0
        %1053 = vmatpush1.msra.mxu0 0.0
        %1054 = vmatprep.subr.mxu0 0.0
        %1055 = vmatpush1.msra.mxu0 0.0
        %1056 = vmatprep.subr.mxu0 0.0
        %1057 = vmatpush1.msra.mxu0 0.0
        %1058 = vmatprep.subr.mxu0 0.0
        %1059 = vmatpush1.msra.mxu0 0.0
        %1060 = vmatprep.subr.mxu0 0.0
        %1061 = vmatpush1.msra.mxu0 0.0
        %1062 = vmatprep.subr.mxu0 0.0
        %1063 = vmatpush1.msra.mxu0 0.0
        %1064 = vmatprep.subr.mxu0 0.0
        %1065 = vmatpush1.msra.mxu0 0.0
        %1066 = vmatprep.subr.mxu0 0.0
        %1067 = vmatpush1.msra.mxu0 0.0
        %1068 = vmatprep.subr.mxu0 0.0
        %1069 = vmatpush1.msra.mxu0 0.0
        %1070 = vmatprep.subr.mxu0 0.0
        %1071 = vmatpush1.msra.mxu0 0.0
        %1072 = vmatprep.subr.mxu0 0.0
        %1073 = vmatpush1.msra.mxu0 0.0
        %1074 = vmatprep.subr.mxu0 0.0
        %1075 = vmatpush1.msra.mxu0 0.0
        %1076 = vmatprep.subr.mxu0 0.0
        %1077 = vmatpush1.msra.mxu0 0.0
        %1078 = vmatprep.subr.mxu0 0.0
        %1079 = vmatpush1.msra.mxu0 0.0
        %1080 = vmatprep.subr.mxu0 0.0
        %1081 = vmatpush1.msra.mxu0 0.0
        %1082 = vmatprep.subr.mxu0 0.0
        %1083 = vmatpush1.msra.mxu0 0.0
        %1084 = vmatprep.subr.mxu0 0.0
        %1085 = vmatpush1.msra.mxu0 0.0
        %1086 = vmatprep.subr.mxu0 0.0
        %1087 = vmatpush1.msra.mxu0 0.0
        %1088 = vmatprep.subr.mxu0 0.0
        %1089 = vmatpush1.msra.mxu0 0.0
        %1090 = vmatprep.subr.mxu0 0.0
        %1091 = vmatpush1.msra.mxu0 0.0
        %1092 = vmatprep.subr.mxu0 0.0
        %1093 = vmatpush1.msra.mxu0 0.0
        %1094 = vmatprep.subr.mxu0 0.0
        %1095 = vmatpush1.msra.mxu0 0.0
        %1096 = vmatprep.mubr.f32.mxu0 0.0
        %1097 = vmatmul.mubr.f32.gmra.mrb[0].mxu0 %v534
        %v1098 = vpop.f32.mrb[0].mxu0
        %v1099 = vadd.f32 %v1030, %v1098
        %v1100 = vpop.f32.mrb[0].mxu0
        %1101 = vdwg.mxu0
        %s1102 = scalar_lea.vmem %s3, 288
        %v1103 = vld [vmem:[%s1102] sm:$0xff]
        %v1104 = vld [vmem:[%s1102 + $0x8] sm:$0xff]
        %v1105 = vld [vmem:[%s1102 + $0x10] sm:$0xff]
        %v1106 = vld [vmem:[%s1102 + $0x18] sm:$0xff]
        %s1107 = scalar_lea.vmem %s4, 9
        %v1108 = vld [vmem:[%s1107] sm:$0x1]
        %v1110 = vlaneseq
        %v1111 = vshrl.u32 %v1110, 7
        %v1112 = vsub.s32 0, %v1111
        %v1113 = vrot.slane %v1108, %v1112
        %1115 = vmatprep.subr.mxu0 0.0
        %1116 = vmatpush1.msra.mxu0 %v1103
        %1117 = vmatprep.subr.mxu0 0.0
        %1118 = vmatpush1.msra.mxu0 %v1104
        %1119 = vmatprep.subr.mxu0 0.0
        %1120 = vmatpush1.msra.mxu0 %v1105
        %1121 = vmatprep.subr.mxu0 0.0
        %1122 = vmatpush1.msra.mxu0 %v1106
        %1123 = vmatprep.subr.mxu0 0.0
        %1124 = vmatpush1.msra.mxu0 0.0
        %1125 = vmatprep.subr.mxu0 0.0
        %1126 = vmatpush1.msra.mxu0 0.0
        %1127 = vmatprep.subr.mxu0 0.0
        %1128 = vmatpush1.msra.mxu0 0.0
        %1129 = vmatprep.subr.mxu0 0.0
        %1130 = vmatpush1.msra.mxu0 0.0
        %1131 = vmatprep.subr.mxu0 0.0
        %1132 = vmatpush1.msra.mxu0 0.0
        %1133 = vmatprep.subr.mxu0 0.0
        %1134 = vmatpush1.msra.mxu0 0.0
        %1135 = vmatprep.subr.mxu0 0.0
        %1136 = vmatpush1.msra.mxu0 0.0
        %1137 = vmatprep.subr.mxu0 0.0
        %1138 = vmatpush1.msra.mxu0 0.0
        %1139 = vmatprep.subr.mxu0 0.0
        %1140 = vmatpush1.msra.mxu0 0.0
        %1141 = vmatprep.subr.mxu0 0.0
        %1142 = vmatpush1.msra.mxu0 0.0
        %1143 = vmatprep.subr.mxu0 0.0
        %1144 = vmatpush1.msra.mxu0 0.0
        %1145 = vmatprep.subr.mxu0 0.0
        %1146 = vmatpush1.msra.mxu0 0.0
        %1147 = vmatprep.subr.mxu0 0.0
        %1148 = vmatpush1.msra.mxu0 0.0
        %1149 = vmatprep.subr.mxu0 0.0
        %1150 = vmatpush1.msra.mxu0 0.0
        %1151 = vmatprep.subr.mxu0 0.0
        %1152 = vmatpush1.msra.mxu0 0.0
        %1153 = vmatprep.subr.mxu0 0.0
        %1154 = vmatpush1.msra.mxu0 0.0
        %1155 = vmatprep.subr.mxu0 0.0
        %1156 = vmatpush1.msra.mxu0 0.0
        %1157 = vmatprep.subr.mxu0 0.0
        %1158 = vmatpush1.msra.mxu0 0.0
        %1159 = vmatprep.subr.mxu0 0.0
        %1160 = vmatpush1.msra.mxu0 0.0
        %1161 = vmatprep.subr.mxu0 0.0
        %1162 = vmatpush1.msra.mxu0 0.0
        %1163 = vmatprep.subr.mxu0 0.0
        %1164 = vmatpush1.msra.mxu0 0.0
        %1165 = vmatprep.subr.mxu0 0.0
        %1166 = vmatpush1.msra.mxu0 0.0
        %1167 = vmatprep.subr.mxu0 0.0
        %1168 = vmatpush1.msra.mxu0 0.0
        %1169 = vmatprep.subr.mxu0 0.0
        %1170 = vmatpush1.msra.mxu0 0.0
        %1171 = vmatprep.subr.mxu0 0.0
        %1172 = vmatpush1.msra.mxu0 0.0
        %1173 = vmatprep.subr.mxu0 0.0
        %1174 = vmatpush1.msra.mxu0 0.0
        %1175 = vmatprep.subr.mxu0 0.0
        %1176 = vmatpush1.msra.mxu0 0.0
        %1177 = vmatprep.subr.mxu0 0.0
        %1178 = vmatpush1.msra.mxu0 0.0
        %1179 = vmatprep.mubr.f32.mxu0 0.0
        %1180 = vmatmul.mubr.f32.gmra.mrb[0].mxu0 %v534
        %v1181 = vpop.f32.mrb[0].mxu0
        %v1182 = vadd.f32 %v1113, %v1181
        %v1183 = vpop.f32.mrb[0].mxu0
        %1184 = vdwg.mxu0
        %v1186 = vsel %vm772, %v1016, 0
        %v1189 = vsel %vm772, %v1099, 0
        %1191 = vmatprep.subr.mxu0 0.0
        %1192 = vmatpush1.xpose.msra.mxu0 %v1189
        %1193 = vmatprep.subr.mxu0 0.0
        %1194 = vmatpush1.xpose.msra.mxu0 0.0
        %1195 = vmatprep.subr.mxu0 0.0
        %1196 = vmatpush1.xpose.msra.mxu0 0.0
        %1197 = vmatprep.subr.mxu0 0.0
        %1198 = vmatpush1.xpose.msra.mxu0 0.0
        %1199 = vmatprep.subr.mxu0 0.0
        %1200 = vmatpush1.xpose.msra.mxu0 0.0
        %1201 = vmatprep.subr.mxu0 0.0
        %1202 = vmatpush1.xpose.msra.mxu0 0.0
        %1203 = vmatprep.subr.mxu0 0.0
        %1204 = vmatpush1.xpose.msra.mxu0 0.0
        %1205 = vmatprep.subr.mxu0 0.0
        %1206 = vmatpush1.xpose.msra.mxu0 0.0
        %1207 = vmatprep.subr.mxu0 0.0
        %1208 = vmatpush1.xpose.msra.mxu0 0.0
        %1209 = vmatprep.subr.mxu0 0.0
        %1210 = vmatpush1.xpose.msra.mxu0 0.0
        %1211 = vmatprep.subr.mxu0 0.0
        %1212 = vmatpush1.xpose.msra.mxu0 0.0
        %1213 = vmatprep.subr.mxu0 0.0
        %1214 = vmatpush1.xpose.msra.mxu0 0.0
        %1215 = vmatprep.subr.mxu0 0.0
        %1216 = vmatpush1.xpose.msra.mxu0 0.0
        %1217 = vmatprep.subr.mxu0 0.0
        %1218 = vmatpush1.xpose.msra.mxu0 0.0
        %1219 = vmatprep.subr.mxu0 0.0
        %1220 = vmatpush1.xpose.msra.mxu0 0.0
        %1221 = vmatprep.subr.mxu0 0.0
        %1222 = vmatpush1.xpose.msra.mxu0 0.0
        %1223 = vmatprep.subr.mxu0 0.0
        %1224 = vmatpush1.xpose.msra.mxu0 0.0
        %1225 = vmatprep.subr.mxu0 0.0
        %1226 = vmatpush1.xpose.msra.mxu0 0.0
        %1227 = vmatprep.subr.mxu0 0.0
        %1228 = vmatpush1.xpose.msra.mxu0 0.0
        %1229 = vmatprep.subr.mxu0 0.0
        %1230 = vmatpush1.xpose.msra.mxu0 0.0
        %1231 = vmatprep.subr.mxu0 0.0
        %1232 = vmatpush1.xpose.msra.mxu0 0.0
        %1233 = vmatprep.subr.mxu0 0.0
        %1234 = vmatpush1.xpose.msra.mxu0 0.0
        %1235 = vmatprep.subr.mxu0 0.0
        %1236 = vmatpush1.xpose.msra.mxu0 0.0
        %1237 = vmatprep.subr.mxu0 0.0
        %1238 = vmatpush1.xpose.msra.mxu0 0.0
        %1239 = vmatprep.subr.mxu0 0.0
        %1240 = vmatpush1.xpose.msra.mxu0 0.0
        %1241 = vmatprep.subr.mxu0 0.0
        %1242 = vmatpush1.xpose.msra.mxu0 0.0
        %1243 = vmatprep.subr.mxu0 0.0
        %1244 = vmatpush1.xpose.msra.mxu0 0.0
        %1245 = vmatprep.subr.mxu0 0.0
        %1246 = vmatpush1.xpose.msra.mxu0 0.0
        %1247 = vmatprep.subr.mxu0 0.0
        %1248 = vmatpush1.xpose.msra.mxu0 0.0
        %1249 = vmatprep.subr.mxu0 0.0
        %1250 = vmatpush1.xpose.msra.mxu0 0.0
        %1251 = vmatprep.subr.mxu0 0.0
        %1252 = vmatpush1.xpose.msra.mxu0 0.0
        %1253 = vmatprep.subr.mxu0 0.0
        %1254 = vmatpush1.xpose.msra.mxu0 0.0
        %1255 = vmatprep.mubr.f32.mxu0 0.0
        %1256 = vmatmul.mubr.f32.gmra.mrb[0].mxu0 %v1186
        %v1257 = vpop.f32.mrb[0].mxu0
        %v1258 = vadd.f32 0.0, %v1257
        %v1259 = vpop.f32.mrb[0].mxu0
        %1260 = vdwg.mxu0
        %v1261 = vmul.f32 %v1258, 0.35355338
        %v1262 = vadd.f32 %v1261, %v520
        %v1263 = vsel %vm772, %v1262, -inf
        %1264 = vmax.xlane.f32.xlu0 %v1263
        %v1265 = vpop.xlane.xlu0 %1264
        %v1266 = vsub.f32 %v1262, %v1265
        %v1267 = vmul.f32 %v1266, 1.442695
        %v1268 = vpow.pop %v1267
        %v1269 = vsel %vm772, %v1268, 0.0
        %1270 = vadd.xlane.f32.xlu0 %v1269
        %v1271 = vpop.xlane.xlu0 %1270
        %v1272 = vrcp.pop %v1271
        %v1273 = vmul.f32 %v1268, %v1272
        %v1275 = vsel %vm772, %v1273, 0
        %1277 = vmatprep.subr.mxu0 0.0
        %1278 = vmatpush1.msra.mxu0 %v1182
        %1279 = vmatprep.subr.mxu0 0.0
        %1280 = vmatpush1.msra.mxu0 0.0
        %1281 = vmatprep.subr.mxu0 0.0
        %1282 = vmatpush1.msra.mxu0 0.0
        %1283 = vmatprep.subr.mxu0 0.0
        %1284 = vmatpush1.msra.mxu0 0.0
        %1285 = vmatprep.subr.mxu0 0.0
        %1286 = vmatpush1.msra.mxu0 0.0
        %1287 = vmatprep.subr.mxu0 0.0
        %1288 = vmatpush1.msra.mxu0 0.0
        %1289 = vmatprep.subr.mxu0 0.0
        %1290 = vmatpush1.msra.mxu0 0.0
        %1291 = vmatprep.subr.mxu0 0.0
        %1292 = vmatpush1.msra.mxu0 0.0
        %1293 = vmatprep.subr.mxu0 0.0
        %1294 = vmatpush1.msra.mxu0 0.0
        %1295 = vmatprep.subr.mxu0 0.0
        %1296 = vmatpush1.msra.mxu0 0.0
        %1297 = vmatprep.subr.mxu0 0.0
        %1298 = vmatpush1.msra.mxu0 0.0
        %1299 = vmatprep.subr.mxu0 0.0
        %1300 = vmatpush1.msra.mxu0 0.0
        %1301 = vmatprep.subr.mxu0 0.0
        %1302 = vmatpush1.msra.mxu0 0.0
        %1303 = vmatprep.subr.mxu0 0.0
        %1304 = vmatpush1.msra.mxu0 0.0
        %1305 = vmatprep.subr.mxu0 0.0
        %1306 = vmatpush1.msra.mxu0 0.0
        %1307 = vmatprep.subr.mxu0 0.0
        %1308 = vmatpush1.msra.mxu0 0.0
        %1309 = vmatprep.subr.mxu0 0.0
        %1310 = vmatpush1.msra.mxu0 0.0
        %1311 = vmatprep.subr.mxu0 0.0
        %1312 = vmatpush1.msra.mxu0 0.0
        %1313 = vmatprep.subr.mxu0 0.0
        %1314 = vmatpush1.msra.mxu0 0.0
        %1315 = vmatprep.subr.mxu0 0.0
        %1316 = vmatpush1.msra.mxu0 0.0
        %1317 = vmatprep.subr.mxu0 0.0
        %1318 = vmatpush1.msra.mxu0 0.0
        %1319 = vmatprep.subr.mxu0 0.0
        %1320 = vmatpush1.msra.mxu0 0.0
        %1321 = vmatprep.subr.mxu0 0.0
        %1322 = vmatpush1.msra.mxu0 0.0
        %1323 = vmatprep.subr.mxu0 0.0
        %1324 = vmatpush1.msra.mxu0 0.0
        %1325 = vmatprep.subr.mxu0 0.0
        %1326 = vmatpush1.msra.mxu0 0.0
        %1327 = vmatprep.subr.mxu0 0.0
        %1328 = vmatpush1.msra.mxu0 0.0
        %1329 = vmatprep.subr.mxu0 0.0
        %1330 = vmatpush1.msra.mxu0 0.0
        %1331 = vmatprep.subr.mxu0 0.0
        %1332 = vmatpush1.msra.mxu0 0.0
        %1333 = vmatprep.subr.mxu0 0.0
        %1334 = vmatpush1.msra.mxu0 0.0
        %1335 = vmatprep.subr.mxu0 0.0
        %1336 = vmatpush1.msra.mxu0 0.0
        %1337 = vmatprep.subr.mxu0 0.0
        %1338 = vmatpush1.msra.mxu0 0.0
        %1339 = vmatprep.subr.mxu0 0.0
        %1340 = vmatpush1.msra.mxu0 0.0
        %1341 = vmatprep.mubr.f32.mxu0 0.0
        %1342 = vmatmul.mubr.f32.gmra.mrb[0].mxu0 %v1275
        %v1343 = vpop.f32.mrb[0].mxu0
        %v1344 = vadd.f32 0.0, %v1343
        %v1345 = vpop.f32.mrb[0].mxu0
        %1346 = vdwg.mxu0
        %s1347 = scalar_lea.vmem %s5, 8
        %v1348 = vld [vmem:[%s1347] sm:$0xff]
        %v1350 = vsel %vm772, %v1344, 0
        %1352 = vmatprep.subr.mxu0 0.0
        %1353 = vmatpush1.msra.mxu0 %v1348
        %1354 = vmatprep.subr.mxu0 0.0
        %1355 = vmatpush1.msra.mxu0 0.0
        %1356 = vmatprep.subr.mxu0 0.0
        %1357 = vmatpush1.msra.mxu0 0.0
        %1358 = vmatprep.subr.mxu0 0.0
        %1359 = vmatpush1.msra.mxu0 0.0
        %1360 = vmatprep.subr.mxu0 0.0
        %1361 = vmatpush1.msra.mxu0 0.0
        %1362 = vmatprep.subr.mxu0 0.0
        %1363 = vmatpush1.msra.mxu0 0.0
        %1364 = vmatprep.subr.mxu0 0.0
        %1365 = vmatpush1.msra.mxu0 0.0
        %1366 = vmatprep.subr.mxu0 0.0
        %1367 = vmatpush1.msra.mxu0 0.0
        %1368 = vmatprep.subr.mxu0 0.0
        %1369 = vmatpush1.msra.mxu0 0.0
        %1370 = vmatprep.subr.mxu0 0.0
        %1371 = vmatpush1.msra.mxu0 0.0
        %1372 = vmatprep.subr.mxu0 0.0
        %1373 = vmatpush1.msra.mxu0 0.0
        %1374 = vmatprep.subr.mxu0 0.0
        %1375 = vmatpush1.msra.mxu0 0.0
        %1376 = vmatprep.subr.mxu0 0.0
        %1377 = vmatpush1.msra.mxu0 0.0
        %1378 = vmatprep.subr.mxu0 0.0
        %1379 = vmatpush1.msra.mxu0 0.0
        %1380 = vmatprep.subr.mxu0 0.0
        %1381 = vmatpush1.msra.mxu0 0.0
        %1382 = vmatprep.subr.mxu0 0.0
        %1383 = vmatpush1.msra.mxu0 0.0
        %1384 = vmatprep.subr.mxu0 0.0
        %1385 = vmatpush1.msra.mxu0 0.0
        %1386 = vmatprep.subr.mxu0 0.0
        %1387 = vmatpush1.msra.mxu0 0.0
        %1388 = vmatprep.subr.mxu0 0.0
        %1389 = vmatpush1.msra.mxu0 0.0
        %1390 = vmatprep.subr.mxu0 0.0
        %1391 = vmatpush1.msra.mxu0 0.0
        %1392 = vmatprep.subr.mxu0 0.0
        %1393 = vmatpush1.msra.mxu0 0.0
        %1394 = vmatprep.subr.mxu0 0.0
        %1395 = vmatpush1.msra.mxu0 0.0
        %1396 = vmatprep.subr.mxu0 0.0
        %1397 = vmatpush1.msra.mxu0 0.0
        %1398 = vmatprep.subr.mxu0 0.0
        %1399 = vmatpush1.msra.mxu0 0.0
        %1400 = vmatprep.subr.mxu0 0.0
        %1401 = vmatpush1.msra.mxu0 0.0
        %1402 = vmatprep.subr.mxu0 0.0
        %1403 = vmatpush1.msra.mxu0 0.0
        %1404 = vmatprep.subr.mxu0 0.0
        %1405 = vmatpush1.msra.mxu0 0.0
        %1406 = vmatprep.subr.mxu0 0.0
        %1407 = vmatpush1.msra.mxu0 0.0
        %1408 = vmatprep.subr.mxu0 0.0
        %1409 = vmatpush1.msra.mxu0 0.0
        %1410 = vmatprep.subr.mxu0 0.0
        %1411 = vmatpush1.msra.mxu0 0.0
        %1412 = vmatprep.subr.mxu0 0.0
        %1413 = vmatpush1.msra.mxu0 0.0
        %1414 = vmatprep.subr.mxu0 0.0
        %1415 = vmatpush1.msra.mxu0 0.0
        %1416 = vmatprep.mubr.f32.mxu0 0.0
        %1417 = vmatmul.mubr.f32.gmra.mrb[0].mxu0 %v1350
        %v1418 = vpop.f32.mrb[0].mxu0
        %v1419 = vadd.f32 0.0, %v1418
        %v1420 = vpop.f32.mrb[0].mxu0
        %1421 = vdwg.mxu0
        %v1423 = vsel %vm772, %v932, 0
        %1425 = vmatprep.subr.mxu0 0.0
        %1426 = vmatpush1.msra.mxu0 %v935
        %1427 = vmatprep.subr.mxu0 0.0
        %1428 = vmatpush1.msra.mxu0 0.0
        %1429 = vmatprep.subr.mxu0 0.0
        %1430 = vmatpush1.msra.mxu0 0.0
        %1431 = vmatprep.subr.mxu0 0.0
        %1432 = vmatpush1.msra.mxu0 0.0
        %1433 = vmatprep.subr.mxu0 0.0
        %1434 = vmatpush1.msra.mxu0 0.0
        %1435 = vmatprep.subr.mxu0 0.0
        %1436 = vmatpush1.msra.mxu0 0.0
        %1437 = vmatprep.subr.mxu0 0.0
        %1438 = vmatpush1.msra.mxu0 0.0
        %1439 = vmatprep.subr.mxu0 0.0
        %1440 = vmatpush1.msra.mxu0 0.0
        %1441 = vmatprep.subr.mxu0 0.0
        %1442 = vmatpush1.msra.mxu0 0.0
        %1443 = vmatprep.subr.mxu0 0.0
        %1444 = vmatpush1.msra.mxu0 0.0
        %1445 = vmatprep.subr.mxu0 0.0
        %1446 = vmatpush1.msra.mxu0 0.0
        %1447 = vmatprep.subr.mxu0 0.0
        %1448 = vmatpush1.msra.mxu0 0.0
        %1449 = vmatprep.subr.mxu0 0.0
        %1450 = vmatpush1.msra.mxu0 0.0
        %1451 = vmatprep.subr.mxu0 0.0
        %1452 = vmatpush1.msra.mxu0 0.0
        %1453 = vmatprep.subr.mxu0 0.0
        %1454 = vmatpush1.msra.mxu0 0.0
        %1455 = vmatprep.subr.mxu0 0.0
        %1456 = vmatpush1.msra.mxu0 0.0
        %1457 = vmatprep.subr.mxu0 0.0
        %1458 = vmatpush1.msra.mxu0 0.0
        %1459 = vmatprep.subr.mxu0 0.0
        %1460 = vmatpush1.msra.mxu0 0.0
        %1461 = vmatprep.subr.mxu0 0.0
        %1462 = vmatpush1.msra.mxu0 0.0
        %1463 = vmatprep.subr.mxu0 0.0
        %1464 = vmatpush1.msra.mxu0 0.0
        %1465 = vmatprep.subr.mxu0 0.0
        %1466 = vmatpush1.msra.mxu0 0.0
        %1467 = vmatprep.subr.mxu0 0.0
        %1468 = vmatpush1.msra.mxu0 0.0
        %1469 = vmatprep.subr.mxu0 0.0
        %1470 = vmatpush1.msra.mxu0 0.0
        %1471 = vmatprep.subr.mxu0 0.0
        %1472 = vmatpush1.msra.mxu0 0.0
        %1473 = vmatprep.subr.mxu0 0.0
        %1474 = vmatpush1.msra.mxu0 0.0
        %1475 = vmatprep.subr.mxu0 0.0
        %1476 = vmatpush1.msra.mxu0 0.0
        %1477 = vmatprep.subr.mxu0 0.0
        %1478 = vmatpush1.msra.mxu0 0.0
        %1479 = vmatprep.subr.mxu0 0.0
        %1480 = vmatpush1.msra.mxu0 0.0
        %1481 = vmatprep.subr.mxu0 0.0
        %1482 = vmatpush1.msra.mxu0 0.0
        %1483 = vmatprep.subr.mxu0 0.0
        %1484 = vmatpush1.msra.mxu0 0.0
        %1485 = vmatprep.subr.mxu0 0.0
        %1486 = vmatpush1.msra.mxu0 0.0
        %1487 = vmatprep.subr.mxu0 0.0
        %1488 = vmatpush1.msra.mxu0 0.0
        %1489 = vmatprep.mubr.f32.mxu0 0.0
        %1490 = vmatmul.mubr.f32.gmra.mrb[0].mxu0 %v1423
        %v1491 = vpop.f32.mrb[0].mxu0
        %v1492 = vadd.f32 %v1419, %v1491
        %v1493 = vpop.f32.mrb[0].mxu0
        %1494 = vdwg.mxu0
        %s1495 = scalar_lea.vmem %s3, 64
        %v1496 = vld [vmem:[%s1495] sm:$0xff]
        %v1497 = vld [vmem:[%s1495 + $0x8] sm:$0xff]
        %v1498 = vld [vmem:[%s1495 + $0x10] sm:$0xff]
        %v1499 = vld [vmem:[%s1495 + $0x18] sm:$0xff]
        %s1500 = scalar_lea.vmem %s4, 2
        %v1501 = vld [vmem:[%s1500] sm:$0x1]
        %v1503 = vlaneseq
        %v1504 = vshrl.u32 %v1503, 7
        %v1505 = vsub.s32 0, %v1504
        %v1506 = vrot.slane %v1501, %v1505
        %1508 = vmatprep.subr.mxu0 0.0
        %1509 = vmatpush1.msra.mxu0 %v1496
        %1510 = vmatprep.subr.mxu0 0.0
        %1511 = vmatpush1.msra.mxu0 %v1497
        %1512 = vmatprep.subr.mxu0 0.0
        %1513 = vmatpush1.msra.mxu0 %v1498
        %1514 = vmatprep.subr.mxu0 0.0
        %1515 = vmatpush1.msra.mxu0 %v1499
        %1516 = vmatprep.subr.mxu0 0.0
        %1517 = vmatpush1.msra.mxu0 0.0
        %1518 = vmatprep.subr.mxu0 0.0
        %1519 = vmatpush1.msra.mxu0 0.0
        %1520 = vmatprep.subr.mxu0 0.0
        %1521 = vmatpush1.msra.mxu0 0.0
        %1522 = vmatprep.subr.mxu0 0.0
        %1523 = vmatpush1.msra.mxu0 0.0
        %1524 = vmatprep.subr.mxu0 0.0
        %1525 = vmatpush1.msra.mxu0 0.0
        %1526 = vmatprep.subr.mxu0 0.0
        %1527 = vmatpush1.msra.mxu0 0.0
        %1528 = vmatprep.subr.mxu0 0.0
        %1529 = vmatpush1.msra.mxu0 0.0
        %1530 = vmatprep.subr.mxu0 0.0
        %1531 = vmatpush1.msra.mxu0 0.0
        %1532 = vmatprep.subr.mxu0 0.0
        %1533 = vmatpush1.msra.mxu0 0.0
        %1534 = vmatprep.subr.mxu0 0.0
        %1535 = vmatpush1.msra.mxu0 0.0
        %1536 = vmatprep.subr.mxu0 0.0
        %1537 = vmatpush1.msra.mxu0 0.0
        %1538 = vmatprep.subr.mxu0 0.0
        %1539 = vmatpush1.msra.mxu0 0.0
        %1540 = vmatprep.subr.mxu0 0.0
        %1541 = vmatpush1.msra.mxu0 0.0
        %1542 = vmatprep.subr.mxu0 0.0
        %1543 = vmatpush1.msra.mxu0 0.0
        %1544 = vmatprep.subr.mxu0 0.0
        %1545 = vmatpush1.msra.mxu0 0.0
        %1546 = vmatprep.subr.mxu0 0.0
        %1547 = vmatpush1.msra.mxu0 0.0
        %1548 = vmatprep.subr.mxu0 0.0
        %1549 = vmatpush1.msra.mxu0 0.0
        %1550 = vmatprep.subr.mxu0 0.0
        %1551 = vmatpush1.msra.mxu0 0.0
        %1552 = vmatprep.subr.mxu0 0.0
        %1553 = vmatpush1.msra.mxu0 0.0
        %1554 = vmatprep.subr.mxu0 0.0
        %1555 = vmatpush1.msra.mxu0 0.0
        %1556 = vmatprep.subr.mxu0 0.0
        %1557 = vmatpush1.msra.mxu0 0.0
        %1558 = vmatprep.subr.mxu0 0.0
        %1559 = vmatpush1.msra.mxu0 0.0
        %1560 = vmatprep.subr.mxu0 0.0
        %1561 = vmatpush1.msra.mxu0 0.0
        %1562 = vmatprep.subr.mxu0 0.0
        %1563 = vmatpush1.msra.mxu0 0.0
        %1564 = vmatprep.subr.mxu0 0.0
        %1565 = vmatpush1.msra.mxu0 0.0
        %1566 = vmatprep.subr.mxu0 0.0
        %1567 = vmatpush1.msra.mxu0 0.0
        %1568 = vmatprep.subr.mxu0 0.0
        %1569 = vmatpush1.msra.mxu0 0.0
        %1570 = vmatprep.subr.mxu0 0.0
        %1571 = vmatpush1.msra.mxu0 0.0
        %1572 = vmatprep.mubr.f32.mxu0 0.0
        %1573 = vmatmul.mubr.f32.gmra.mrb[0].mxu0 %v534
        %v1574 = vpop.f32.mrb[0].mxu0
        %v1575 = vadd.f32 %v1506, %v1574
        %v1576 = vpop.f32.mrb[0].mxu0
        %1577 = vdwg.mxu0
        %s1578 = scalar_lea.vmem %s3, 192
        %v1579 = vld [vmem:[%s1578] sm:$0xff]
        %v1580 = vld [vmem:[%s1578 + $0x8] sm:$0xff]
        %v1581 = vld [vmem:[%s1578 + $0x10] sm:$0xff]
        %v1582 = vld [vmem:[%s1578 + $0x18] sm:$0xff]
        %s1583 = scalar_lea.vmem %s4, 6
        %v1584 = vld [vmem:[%s1583] sm:$0x1]
        %v1586 = vlaneseq
        %v1587 = vshrl.u32 %v1586, 7
        %v1588 = vsub.s32 0, %v1587
        %v1589 = vrot.slane %v1584, %v1588
        %1591 = vmatprep.subr.mxu0 0.0
        %1592 = vmatpush1.msra.mxu0 %v1579
        %1593 = vmatprep.subr.mxu0 0.0
        %1594 = vmatpush1.msra.mxu0 %v1580
        %1595 = vmatprep.subr.mxu0 0.0
        %1596 = vmatpush1.msra.mxu0 %v1581
        %1597 = vmatprep.subr.mxu0 0.0
        %1598 = vmatpush1.msra.mxu0 %v1582
        %1599 = vmatprep.subr.mxu0 0.0
        %1600 = vmatpush1.msra.mxu0 0.0
        %1601 = vmatprep.subr.mxu0 0.0
        %1602 = vmatpush1.msra.mxu0 0.0
        %1603 = vmatprep.subr.mxu0 0.0
        %1604 = vmatpush1.msra.mxu0 0.0
        %1605 = vmatprep.subr.mxu0 0.0
        %1606 = vmatpush1.msra.mxu0 0.0
        %1607 = vmatprep.subr.mxu0 0.0
        %1608 = vmatpush1.msra.mxu0 0.0
        %1609 = vmatprep.subr.mxu0 0.0
        %1610 = vmatpush1.msra.mxu0 0.0
        %1611 = vmatprep.subr.mxu0 0.0
        %1612 = vmatpush1.msra.mxu0 0.0
        %1613 = vmatprep.subr.mxu0 0.0
        %1614 = vmatpush1.msra.mxu0 0.0
        %1615 = vmatprep.subr.mxu0 0.0
        %1616 = vmatpush1.msra.mxu0 0.0
        %1617 = vmatprep.subr.mxu0 0.0
        %1618 = vmatpush1.msra.mxu0 0.0
        %1619 = vmatprep.subr.mxu0 0.0
        %1620 = vmatpush1.msra.mxu0 0.0
        %1621 = vmatprep.subr.mxu0 0.0
        %1622 = vmatpush1.msra.mxu0 0.0
        %1623 = vmatprep.subr.mxu0 0.0
        %1624 = vmatpush1.msra.mxu0 0.0
        %1625 = vmatprep.subr.mxu0 0.0
        %1626 = vmatpush1.msra.mxu0 0.0
        %1627 = vmatprep.subr.mxu0 0.0
        %1628 = vmatpush1.msra.mxu0 0.0
        %1629 = vmatprep.subr.mxu0 0.0
        %1630 = vmatpush1.msra.mxu0 0.0
        %1631 = vmatprep.subr.mxu0 0.0
        %1632 = vmatpush1.msra.mxu0 0.0
        %1633 = vmatprep.subr.mxu0 0.0
        %1634 = vmatpush1.msra.mxu0 0.0
        %1635 = vmatprep.subr.mxu0 0.0
        %1636 = vmatpush1.msra.mxu0 0.0
        %1637 = vmatprep.subr.mxu0 0.0
        %1638 = vmatpush1.msra.mxu0 0.0
        %1639 = vmatprep.subr.mxu0 0.0
        %1640 = vmatpush1.msra.mxu0 0.0
        %1641 = vmatprep.subr.mxu0 0.0
        %1642 = vmatpush1.msra.mxu0 0.0
        %1643 = vmatprep.subr.mxu0 0.0
        %1644 = vmatpush1.msra.mxu0 0.0
        %1645 = vmatprep.subr.mxu0 0.0
        %1646 = vmatpush1.msra.mxu0 0.0
        %1647 = vmatprep.subr.mxu0 0.0
        %1648 = vmatpush1.msra.mxu0 0.0
        %1649 = vmatprep.subr.mxu0 0.0
        %1650 = vmatpush1.msra.mxu0 0.0
        %1651 = vmatprep.subr.mxu0 0.0
        %1652 = vmatpush1.msra.mxu0 0.0
        %1653 = vmatprep.subr.mxu0 0.0
        %1654 = vmatpush1.msra.mxu0 0.0
        %1655 = vmatprep.mubr.f32.mxu0 0.0
        %1656 = vmatmul.mubr.f32.gmra.mrb[0].mxu0 %v534
        %v1657 = vpop.f32.mrb[0].mxu0
        %v1658 = vadd.f32 %v1589, %v1657
        %v1659 = vpop.f32.mrb[0].mxu0
        %1660 = vdwg.mxu0
        %s1661 = scalar_lea.vmem %s3, 320
        %v1662 = vld [vmem:[%s1661] sm:$0xff]
        %v1663 = vld [vmem:[%s1661 + $0x8] sm:$0xff]
        %v1664 = vld [vmem:[%s1661 + $0x10] sm:$0xff]
        %v1665 = vld [vmem:[%s1661 + $0x18] sm:$0xff]
        %s1666 = scalar_lea.vmem %s4, 10
        %v1667 = vld [vmem:[%s1666] sm:$0x1]
        %v1669 = vlaneseq
        %v1670 = vshrl.u32 %v1669, 7
        %v1671 = vsub.s32 0, %v1670
        %v1672 = vrot.slane %v1667, %v1671
        %1674 = vmatprep.subr.mxu0 0.0
        %1675 = vmatpush1.msra.mxu0 %v1662
        %1676 = vmatprep.subr.mxu0 0.0
        %1677 = vmatpush1.msra.mxu0 %v1663
        %1678 = vmatprep.subr.mxu0 0.0
        %1679 = vmatpush1.msra.mxu0 %v1664
        %1680 = vmatprep.subr.mxu0 0.0
        %1681 = vmatpush1.msra.mxu0 %v1665
        %1682 = vmatprep.subr.mxu0 0.0
        %1683 = vmatpush1.msra.mxu0 0.0
        %1684 = vmatprep.subr.mxu0 0.0
        %1685 = vmatpush1.msra.mxu0 0.0
        %1686 = vmatprep.subr.mxu0 0.0
        %1687 = vmatpush1.msra.mxu0 0.0
        %1688 = vmatprep.subr.mxu0 0.0
        %1689 = vmatpush1.msra.mxu0 0.0
        %1690 = vmatprep.subr.mxu0 0.0
        %1691 = vmatpush1.msra.mxu0 0.0
        %1692 = vmatprep.subr.mxu0 0.0
        %1693 = vmatpush1.msra.mxu0 0.0
        %1694 = vmatprep.subr.mxu0 0.0
        %1695 = vmatpush1.msra.mxu0 0.0
        %1696 = vmatprep.subr.mxu0 0.0
        %1697 = vmatpush1.msra.mxu0 0.0
        %1698 = vmatprep.subr.mxu0 0.0
        %1699 = vmatpush1.msra.mxu0 0.0
        %1700 = vmatprep.subr.mxu0 0.0
        %1701 = vmatpush1.msra.mxu0 0.0
        %1702 = vmatprep.subr.mxu0 0.0
        %1703 = vmatpush1.msra.mxu0 0.0
        %1704 = vmatprep.subr.mxu0 0.0
        %1705 = vmatpush1.msra.mxu0 0.0
        %1706 = vmatprep.subr.mxu0 0.0
        %1707 = vmatpush1.msra.mxu0 0.0
        %1708 = vmatprep.subr.mxu0 0.0
        %1709 = vmatpush1.msra.mxu0 0.0
        %1710 = vmatprep.subr.mxu0 0.0
        %1711 = vmatpush1.msra.mxu0 0.0
        %1712 = vmatprep.subr.mxu0 0.0
        %1713 = vmatpush1.msra.mxu0 0.0
        %1714 = vmatprep.subr.mxu0 0.0
        %1715 = vmatpush1.msra.mxu0 0.0
        %1716 = vmatprep.subr.mxu0 0.0
        %1717 = vmatpush1.msra.mxu0 0.0
        %1718 = vmatprep.subr.mxu0 0.0
        %1719 = vmatpush1.msra.mxu0 0.0
        %1720 = vmatprep.subr.mxu0 0.0
        %1721 = vmatpush1.msra.mxu0 0.0
        %1722 = vmatprep.subr.mxu0 0.0
        %1723 = vmatpush1.msra.mxu0 0.0
        %1724 = vmatprep.subr.mxu0 0.0
        %1725 = vmatpush1.msra.mxu0 0.0
        %1726 = vmatprep.subr.mxu0 0.0
        %1727 = vmatpush1.msra.mxu0 0.0
        %1728 = vmatprep.subr.mxu0 0.0
        %1729 = vmatpush1.msra.mxu0 0.0
        %1730 = vmatprep.subr.mxu0 0.0
        %1731 = vmatpush1.msra.mxu0 0.0
        %1732 = vmatprep.subr.mxu0 0.0
        %1733 = vmatpush1.msra.mxu0 0.0
        %1734 = vmatprep.subr.mxu0 0.0
        %1735 = vmatpush1.msra.mxu0 0.0
        %1736 = vmatprep.subr.mxu0 0.0
        %1737 = vmatpush1.msra.mxu0 0.0
        %1738 = vmatprep.mubr.f32.mxu0 0.0
        %1739 = vmatmul.mubr.f32.gmra.mrb[0].mxu0 %v534
        %v1740 = vpop.f32.mrb[0].mxu0
        %v1741 = vadd.f32 %v1672, %v1740
        %v1742 = vpop.f32.mrb[0].mxu0
        %1743 = vdwg.mxu0
        %v1745 = vsel %vm772, %v1575, 0
        %v1748 = vsel %vm772, %v1658, 0
        %1750 = vmatprep.subr.mxu0 0.0
        %1751 = vmatpush1.xpose.msra.mxu0 %v1748
        %1752 = vmatprep.subr.mxu0 0.0
        %1753 = vmatpush1.xpose.msra.mxu0 0.0
        %1754 = vmatprep.subr.mxu0 0.0
        %1755 = vmatpush1.xpose.msra.mxu0 0.0
        %1756 = vmatprep.subr.mxu0 0.0
        %1757 = vmatpush1.xpose.msra.mxu0 0.0
        %1758 = vmatprep.subr.mxu0 0.0
        %1759 = vmatpush1.xpose.msra.mxu0 0.0
        %1760 = vmatprep.subr.mxu0 0.0
        %1761 = vmatpush1.xpose.msra.mxu0 0.0
        %1762 = vmatprep.subr.mxu0 0.0
        %1763 = vmatpush1.xpose.msra.mxu0 0.0
        %1764 = vmatprep.subr.mxu0 0.0
        %1765 = vmatpush1.xpose.msra.mxu0 0.0
        %1766 = vmatprep.subr.mxu0 0.0
        %1767 = vmatpush1.xpose.msra.mxu0 0.0
        %1768 = vmatprep.subr.mxu0 0.0
        %1769 = vmatpush1.xpose.msra.mxu0 0.0
        %1770 = vmatprep.subr.mxu0 0.0
        %1771 = vmatpush1.xpose.msra.mxu0 0.0
        %1772 = vmatprep.subr.mxu0 0.0
        %1773 = vmatpush1.xpose.msra.mxu0 0.0
        %1774 = vmatprep.subr.mxu0 0.0
        %1775 = vmatpush1.xpose.msra.mxu0 0.0
        %1776 = vmatprep.subr.mxu0 0.0
        %1777 = vmatpush1.xpose.msra.mxu0 0.0
        %1778 = vmatprep.subr.mxu0 0.0
        %1779 = vmatpush1.xpose.msra.mxu0 0.0
        %1780 = vmatprep.subr.mxu0 0.0
        %1781 = vmatpush1.xpose.msra.mxu0 0.0
        %1782 = vmatprep.subr.mxu0 0.0
        %1783 = vmatpush1.xpose.msra.mxu0 0.0
        %1784 = vmatprep.subr.mxu0 0.0
        %1785 = vmatpush1.xpose.msra.mxu0 0.0
        %1786 = vmatprep.subr.mxu0 0.0
        %1787 = vmatpush1.xpose.msra.mxu0 0.0
        %1788 = vmatprep.subr.mxu0 0.0
        %1789 = vmatpush1.xpose.msra.mxu0 0.0
        %1790 = vmatprep.subr.mxu0 0.0
        %1791 = vmatpush1.xpose.msra.mxu0 0.0
        %1792 = vmatprep.subr.mxu0 0.0
        %1793 = vmatpush1.xpose.msra.mxu0 0.0
        %1794 = vmatprep.subr.mxu0 0.0
        %1795 = vmatpush1.xpose.msra.mxu0 0.0
        %1796 = vmatprep.subr.mxu0 0.0
        %1797 = vmatpush1.xpose.msra.mxu0 0.0
        %1798 = vmatprep.subr.mxu0 0.0
        %1799 = vmatpush1.xpose.msra.mxu0 0.0
        %1800 = vmatprep.subr.mxu0 0.0
        %1801 = vmatpush1.xpose.msra.mxu0 0.0
        %1802 = vmatprep.subr.mxu0 0.0
        %1803 = vmatpush1.xpose.msra.mxu0 0.0
        %1804 = vmatprep.subr.mxu0 0.0
        %1805 = vmatpush1.xpose.msra.mxu0 0.0
        %1806 = vmatprep.subr.mxu0 0.0
        %1807 = vmatpush1.xpose.msra.mxu0 0.0
        %1808 = vmatprep.subr.mxu0 0.0
        %1809 = vmatpush1.xpose.msra.mxu0 0.0
        %1810 = vmatprep.subr.mxu0 0.0
        %1811 = vmatpush1.xpose.msra.mxu0 0.0
        %1812 = vmatprep.subr.mxu0 0.0
        %1813 = vmatpush1.xpose.msra.mxu0 0.0
        %1814 = vmatprep.mubr.f32.mxu0 0.0
        %1815 = vmatmul.mubr.f32.gmra.mrb[0].mxu0 %v1745
        %v1816 = vpop.f32.mrb[0].mxu0
        %v1817 = vadd.f32 0.0, %v1816
        %v1818 = vpop.f32.mrb[0].mxu0
        %1819 = vdwg.mxu0
        %v1820 = vmul.f32 %v1817, 0.35355338
        %v1821 = vadd.f32 %v1820, %v520
        %v1822 = vsel %vm772, %v1821, -inf
        %1823 = vmax.xlane.f32.xlu0 %v1822
        %v1824 = vpop.xlane.xlu0 %1823
        %v1825 = vsub.f32 %v1821, %v1824
        %v1826 = vmul.f32 %v1825, 1.442695
        %v1827 = vpow.pop %v1826
        %v1828 = vsel %vm772, %v1827, 0.0
        %1829 = vadd.xlane.f32.xlu0 %v1828
        %v1830 = vpop.xlane.xlu0 %1829
        %v1831 = vrcp.pop %v1830
        %v1832 = vmul.f32 %v1827, %v1831
        %v1834 = vsel %vm772, %v1832, 0
        %1836 = vmatprep.subr.mxu0 0.0
        %1837 = vmatpush1.msra.mxu0 %v1741
        %1838 = vmatprep.subr.mxu0 0.0
        %1839 = vmatpush1.msra.mxu0 0.0
        %1840 = vmatprep.subr.mxu0 0.0
        %1841 = vmatpush1.msra.mxu0 0.0
        %1842 = vmatprep.subr.mxu0 0.0
        %1843 = vmatpush1.msra.mxu0 0.0
        %1844 = vmatprep.subr.mxu0 0.0
        %1845 = vmatpush1.msra.mxu0 0.0
        %1846 = vmatprep.subr.mxu0 0.0
        %1847 = vmatpush1.msra.mxu0 0.0
        %1848 = vmatprep.subr.mxu0 0.0
        %1849 = vmatpush1.msra.mxu0 0.0
        %1850 = vmatprep.subr.mxu0 0.0
        %1851 = vmatpush1.msra.mxu0 0.0
        %1852 = vmatprep.subr.mxu0 0.0
        %1853 = vmatpush1.msra.mxu0 0.0
        %1854 = vmatprep.subr.mxu0 0.0
        %1855 = vmatpush1.msra.mxu0 0.0
        %1856 = vmatprep.subr.mxu0 0.0
        %1857 = vmatpush1.msra.mxu0 0.0
        %1858 = vmatprep.subr.mxu0 0.0
        %1859 = vmatpush1.msra.mxu0 0.0
        %1860 = vmatprep.subr.mxu0 0.0
        %1861 = vmatpush1.msra.mxu0 0.0
        %1862 = vmatprep.subr.mxu0 0.0
        %1863 = vmatpush1.msra.mxu0 0.0
        %1864 = vmatprep.subr.mxu0 0.0
        %1865 = vmatpush1.msra.mxu0 0.0
        %1866 = vmatprep.subr.mxu0 0.0
        %1867 = vmatpush1.msra.mxu0 0.0
        %1868 = vmatprep.subr.mxu0 0.0
        %1869 = vmatpush1.msra.mxu0 0.0
        %1870 = vmatprep.subr.mxu0 0.0
        %1871 = vmatpush1.msra.mxu0 0.0
        %1872 = vmatprep.subr.mxu0 0.0
        %1873 = vmatpush1.msra.mxu0 0.0
        %1874 = vmatprep.subr.mxu0 0.0
        %1875 = vmatpush1.msra.mxu0 0.0
        %1876 = vmatprep.subr.mxu0 0.0
        %1877 = vmatpush1.msra.mxu0 0.0
        %1878 = vmatprep.subr.mxu0 0.0
        %1879 = vmatpush1.msra.mxu0 0.0
        %1880 = vmatprep.subr.mxu0 0.0
        %1881 = vmatpush1.msra.mxu0 0.0
        %1882 = vmatprep.subr.mxu0 0.0
        %1883 = vmatpush1.msra.mxu0 0.0
        %1884 = vmatprep.subr.mxu0 0.0
        %1885 = vmatpush1.msra.mxu0 0.0
        %1886 = vmatprep.subr.mxu0 0.0
        %1887 = vmatpush1.msra.mxu0 0.0
        %1888 = vmatprep.subr.mxu0 0.0
        %1889 = vmatpush1.msra.mxu0 0.0
        %1890 = vmatprep.subr.mxu0 0.0
        %1891 = vmatpush1.msra.mxu0 0.0
        %1892 = vmatprep.subr.mxu0 0.0
        %1893 = vmatpush1.msra.mxu0 0.0
        %1894 = vmatprep.subr.mxu0 0.0
        %1895 = vmatpush1.msra.mxu0 0.0
        %1896 = vmatprep.subr.mxu0 0.0
        %1897 = vmatpush1.msra.mxu0 0.0
        %1898 = vmatprep.subr.mxu0 0.0
        %1899 = vmatpush1.msra.mxu0 0.0
        %1900 = vmatprep.mubr.f32.mxu0 0.0
        %1901 = vmatmul.mubr.f32.gmra.mrb[0].mxu0 %v1834
        %v1902 = vpop.f32.mrb[0].mxu0
        %v1903 = vadd.f32 0.0, %v1902
        %v1904 = vpop.f32.mrb[0].mxu0
        %1905 = vdwg.mxu0
        %s1906 = scalar_lea.vmem %s5, 16
        %v1907 = vld [vmem:[%s1906] sm:$0xff]
        %v1909 = vsel %vm772, %v1903, 0
        %1911 = vmatprep.subr.mxu0 0.0
        %1912 = vmatpush1.msra.mxu0 %v1907
        %1913 = vmatprep.subr.mxu0 0.0
        %1914 = vmatpush1.msra.mxu0 0.0
        %1915 = vmatprep.subr.mxu0 0.0
        %1916 = vmatpush1.msra.mxu0 0.0
        %1917 = vmatprep.subr.mxu0 0.0
        %1918 = vmatpush1.msra.mxu0 0.0
        %1919 = vmatprep.subr.mxu0 0.0
        %1920 = vmatpush1.msra.mxu0 0.0
        %1921 = vmatprep.subr.mxu0 0.0
        %1922 = vmatpush1.msra.mxu0 0.0
        %1923 = vmatprep.subr.mxu0 0.0
        %1924 = vmatpush1.msra.mxu0 0.0
        %1925 = vmatprep.subr.mxu0 0.0
        %1926 = vmatpush1.msra.mxu0 0.0
        %1927 = vmatprep.subr.mxu0 0.0
        %1928 = vmatpush1.msra.mxu0 0.0
        %1929 = vmatprep.subr.mxu0 0.0
        %1930 = vmatpush1.msra.mxu0 0.0
        %1931 = vmatprep.subr.mxu0 0.0
        %1932 = vmatpush1.msra.mxu0 0.0
        %1933 = vmatprep.subr.mxu0 0.0
        %1934 = vmatpush1.msra.mxu0 0.0
        %1935 = vmatprep.subr.mxu0 0.0
        %1936 = vmatpush1.msra.mxu0 0.0
        %1937 = vmatprep.subr.mxu0 0.0
        %1938 = vmatpush1.msra.mxu0 0.0
        %1939 = vmatprep.subr.mxu0 0.0
        %1940 = vmatpush1.msra.mxu0 0.0
        %1941 = vmatprep.subr.mxu0 0.0
        %1942 = vmatpush1.msra.mxu0 0.0
        %1943 = vmatprep.subr.mxu0 0.0
        %1944 = vmatpush1.msra.mxu0 0.0
        %1945 = vmatprep.subr.mxu0 0.0
        %1946 = vmatpush1.msra.mxu0 0.0
        %1947 = vmatprep.subr.mxu0 0.0
        %1948 = vmatpush1.msra.mxu0 0.0
        %1949 = vmatprep.subr.mxu0 0.0
        %1950 = vmatpush1.msra.mxu0 0.0
        %1951 = vmatprep.subr.mxu0 0.0
        %1952 = vmatpush1.msra.mxu0 0.0
        %1953 = vmatprep.subr.mxu0 0.0
        %1954 = vmatpush1.msra.mxu0 0.0
        %1955 = vmatprep.subr.mxu0 0.0
        %1956 = vmatpush1.msra.mxu0 0.0
        %1957 = vmatprep.subr.mxu0 0.0
        %1958 = vmatpush1.msra.mxu0 0.0
        %1959 = vmatprep.subr.mxu0 0.0
        %1960 = vmatpush1.msra.mxu0 0.0
        %1961 = vmatprep.subr.mxu0 0.0
        %1962 = vmatpush1.msra.mxu0 0.0
        %1963 = vmatprep.subr.mxu0 0.0
        %1964 = vmatpush1.msra.mxu0 0.0
        %1965 = vmatprep.subr.mxu0 0.0
        %1966 = vmatpush1.msra.mxu0 0.0
        %1967 = vmatprep.subr.mxu0 0.0
        %1968 = vmatpush1.msra.mxu0 0.0
        %1969 = vmatprep.subr.mxu0 0.0
        %1970 = vmatpush1.msra.mxu0 0.0
        %1971 = vmatprep.subr.mxu0 0.0
        %1972 = vmatpush1.msra.mxu0 0.0
        %1973 = vmatprep.subr.mxu0 0.0
        %1974 = vmatpush1.msra.mxu0 0.0
        %1975 = vmatprep.mubr.f32.mxu0 0.0
        %1976 = vmatmul.mubr.f32.gmra.mrb[0].mxu0 %v1909
        %v1977 = vpop.f32.mrb[0].mxu0
        %v1978 = vadd.f32 0.0, %v1977
        %v1979 = vpop.f32.mrb[0].mxu0
        %1980 = vdwg.mxu0
        %v1981 = vadd.f32 %v1492, %v1978
        %s1982 = scalar_lea.vmem %s3, 96
        %v1983 = vld [vmem:[%s1982] sm:$0xff]
        %v1984 = vld [vmem:[%s1982 + $0x8] sm:$0xff]
        %v1985 = vld [vmem:[%s1982 + $0x10] sm:$0xff]
        %v1986 = vld [vmem:[%s1982 + $0x18] sm:$0xff]
        %s1987 = scalar_lea.vmem %s4, 3
        %v1988 = vld [vmem:[%s1987] sm:$0x1]
        %v1990 = vlaneseq
        %v1991 = vshrl.u32 %v1990, 7
        %v1992 = vsub.s32 0, %v1991
        %v1993 = vrot.slane %v1988, %v1992
        %1995 = vmatprep.subr.mxu0 0.0
        %1996 = vmatpush1.msra.mxu0 %v1983
        %1997 = vmatprep.subr.mxu0 0.0
        %1998 = vmatpush1.msra.mxu0 %v1984
        %1999 = vmatprep.subr.mxu0 0.0
        %2000 = vmatpush1.msra.mxu0 %v1985
        %2001 = vmatprep.subr.mxu0 0.0
        %2002 = vmatpush1.msra.mxu0 %v1986
        %2003 = vmatprep.subr.mxu0 0.0
        %2004 = vmatpush1.msra.mxu0 0.0
        %2005 = vmatprep.subr.mxu0 0.0
        %2006 = vmatpush1.msra.mxu0 0.0
        %2007 = vmatprep.subr.mxu0 0.0
        %2008 = vmatpush1.msra.mxu0 0.0
        %2009 = vmatprep.subr.mxu0 0.0
        %2010 = vmatpush1.msra.mxu0 0.0
        %2011 = vmatprep.subr.mxu0 0.0
        %2012 = vmatpush1.msra.mxu0 0.0
        %2013 = vmatprep.subr.mxu0 0.0
        %2014 = vmatpush1.msra.mxu0 0.0
        %2015 = vmatprep.subr.mxu0 0.0
        %2016 = vmatpush1.msra.mxu0 0.0
        %2017 = vmatprep.subr.mxu0 0.0
        %2018 = vmatpush1.msra.mxu0 0.0
        %2019 = vmatprep.subr.mxu0 0.0
        %2020 = vmatpush1.msra.mxu0 0.0
        %2021 = vmatprep.subr.mxu0 0.0
        %2022 = vmatpush1.msra.mxu0 0.0
        %2023 = vmatprep.subr.mxu0 0.0
        %2024 = vmatpush1.msra.mxu0 0.0
        %2025 = vmatprep.subr.mxu0 0.0
        %2026 = vmatpush1.msra.mxu0 0.0
        %2027 = vmatprep.subr.mxu0 0.0
        %2028 = vmatpush1.msra.mxu0 0.0
        %2029 = vmatprep.subr.mxu0 0.0
        %2030 = vmatpush1.msra.mxu0 0.0
        %2031 = vmatprep.subr.mxu0 0.0
        %2032 = vmatpush1.msra.mxu0 0.0
        %2033 = vmatprep.subr.mxu0 0.0
        %2034 = vmatpush1.msra.mxu0 0.0
        %2035 = vmatprep.subr.mxu0 0.0
        %2036 = vmatpush1.msra.mxu0 0.0
        %2037 = vmatprep.subr.mxu0 0.0
        %2038 = vmatpush1.msra.mxu0 0.0
        %2039 = vmatprep.subr.mxu0 0.0
        %2040 = vmatpush1.msra.mxu0 0.0
        %2041 = vmatprep.subr.mxu0 0.0
        %2042 = vmatpush1.msra.mxu0 0.0
        %2043 = vmatprep.subr.mxu0 0.0
        %2044 = vmatpush1.msra.mxu0 0.0
        %2045 = vmatprep.subr.mxu0 0.0
        %2046 = vmatpush1.msra.mxu0 0.0
        %2047 = vmatprep.subr.mxu0 0.0
        %2048 = vmatpush1.msra.mxu0 0.0
        %2049 = vmatprep.subr.mxu0 0.0
        %2050 = vmatpush1.msra.mxu0 0.0
        %2051 = vmatprep.subr.mxu0 0.0
        %2052 = vmatpush1.msra.mxu0 0.0
        %2053 = vmatprep.subr.mxu0 0.0
        %2054 = vmatpush1.msra.mxu0 0.0
        %2055 = vmatprep.subr.mxu0 0.0
        %2056 = vmatpush1.msra.mxu0 0.0
        %2057 = vmatprep.subr.mxu0 0.0
        %2058 = vmatpush1.msra.mxu0 0.0
        %2059 = vmatprep.mubr.f32.mxu0 0.0
        %2060 = vmatmul.mubr.f32.gmra.mrb[0].mxu0 %v534
        %v2061 = vpop.f32.mrb[0].mxu0
        %v2062 = vadd.f32 %v1993, %v2061
        %v2063 = vpop.f32.mrb[0].mxu0
        %2064 = vdwg.mxu0
        %s2065 = scalar_lea.vmem %s3, 224
        %v2066 = vld [vmem:[%s2065] sm:$0xff]
        %v2067 = vld [vmem:[%s2065 + $0x8] sm:$0xff]
        %v2068 = vld [vmem:[%s2065 + $0x10] sm:$0xff]
        %v2069 = vld [vmem:[%s2065 + $0x18] sm:$0xff]
        %s2070 = scalar_lea.vmem %s4, 7
        %v2071 = vld [vmem:[%s2070] sm:$0x1]
        %v2073 = vlaneseq
        %v2074 = vshrl.u32 %v2073, 7
        %v2075 = vsub.s32 0, %v2074
        %v2076 = vrot.slane %v2071, %v2075
        %2078 = vmatprep.subr.mxu0 0.0
        %2079 = vmatpush1.msra.mxu0 %v2066
        %2080 = vmatprep.subr.mxu0 0.0
        %2081 = vmatpush1.msra.mxu0 %v2067
        %2082 = vmatprep.subr.mxu0 0.0
        %2083 = vmatpush1.msra.mxu0 %v2068
        %2084 = vmatprep.subr.mxu0 0.0
        %2085 = vmatpush1.msra.mxu0 %v2069
        %2086 = vmatprep.subr.mxu0 0.0
        %2087 = vmatpush1.msra.mxu0 0.0
        %2088 = vmatprep.subr.mxu0 0.0
        %2089 = vmatpush1.msra.mxu0 0.0
        %2090 = vmatprep.subr.mxu0 0.0
        %2091 = vmatpush1.msra.mxu0 0.0
        %2092 = vmatprep.subr.mxu0 0.0
        %2093 = vmatpush1.msra.mxu0 0.0
        %2094 = vmatprep.subr.mxu0 0.0
        %2095 = vmatpush1.msra.mxu0 0.0
        %2096 = vmatprep.subr.mxu0 0.0
        %2097 = vmatpush1.msra.mxu0 0.0
        %2098 = vmatprep.subr.mxu0 0.0
        %2099 = vmatpush1.msra.mxu0 0.0
        %2100 = vmatprep.subr.mxu0 0.0
        %2101 = vmatpush1.msra.mxu0 0.0
        %2102 = vmatprep.subr.mxu0 0.0
        %2103 = vmatpush1.msra.mxu0 0.0
        %2104 = vmatprep.subr.mxu0 0.0
        %2105 = vmatpush1.msra.mxu0 0.0
        %2106 = vmatprep.subr.mxu0 0.0
        %2107 = vmatpush1.msra.mxu0 0.0
        %2108 = vmatprep.subr.mxu0 0.0
        %2109 = vmatpush1.msra.mxu0 0.0
        %2110 = vmatprep.subr.mxu0 0.0
        %2111 = vmatpush1.msra.mxu0 0.0
        %2112 = vmatprep.subr.mxu0 0.0
        %2113 = vmatpush1.msra.mxu0 0.0
        %2114 = vmatprep.subr.mxu0 0.0
        %2115 = vmatpush1.msra.mxu0 0.0
        %2116 = vmatprep.subr.mxu0 0.0
        %2117 = vmatpush1.msra.mxu0 0.0
        %2118 = vmatprep.subr.mxu0 0.0
        %2119 = vmatpush1.msra.mxu0 0.0
        %2120 = vmatprep.subr.mxu0 0.0
        %2121 = vmatpush1.msra.mxu0 0.0
        %2122 = vmatprep.subr.mxu0 0.0
        %2123 = vmatpush1.msra.mxu0 0.0
        %2124 = vmatprep.subr.mxu0 0.0
        %2125 = vmatpush1.msra.mxu0 0.0
        %2126 = vmatprep.subr.mxu0 0.0
        %2127 = vmatpush1.msra.mxu0 0.0
        %2128 = vmatprep.subr.mxu0 0.0
        %2129 = vmatpush1.msra.mxu0 0.0
        %2130 = vmatprep.subr.mxu0 0.0
        %2131 = vmatpush1.msra.mxu0 0.0
        %2132 = vmatprep.subr.mxu0 0.0
        %2133 = vmatpush1.msra.mxu0 0.0
        %2134 = vmatprep.subr.mxu0 0.0
        %2135 = vmatpush1.msra.mxu0 0.0
        %2136 = vmatprep.subr.mxu0 0.0
        %2137 = vmatpush1.msra.mxu0 0.0
        %2138 = vmatprep.subr.mxu0 0.0
        %2139 = vmatpush1.msra.mxu0 0.0
        %2140 = vmatprep.subr.mxu0 0.0
        %2141 = vmatpush1.msra.mxu0 0.0
        %2142 = vmatprep.mubr.f32.mxu0 0.0
        %2143 = vmatmul.mubr.f32.gmra.mrb[0].mxu0 %v534
        %v2144 = vpop.f32.mrb[0].mxu0
        %v2145 = vadd.f32 %v2076, %v2144
        %v2146 = vpop.f32.mrb[0].mxu0
        %2147 = vdwg.mxu0
        %s2148 = scalar_lea.vmem %s3, 352
        %v2149 = vld [vmem:[%s2148] sm:$0xff]
        %v2150 = vld [vmem:[%s2148 + $0x8] sm:$0xff]
        %v2151 = vld [vmem:[%s2148 + $0x10] sm:$0xff]
        %v2152 = vld [vmem:[%s2148 + $0x18] sm:$0xff]
        %s2153 = scalar_lea.vmem %s4, 11
        %v2154 = vld [vmem:[%s2153] sm:$0x1]
        %v2156 = vlaneseq
        %v2157 = vshrl.u32 %v2156, 7
        %v2158 = vsub.s32 0, %v2157
        %v2159 = vrot.slane %v2154, %v2158
        %2161 = vmatprep.subr.mxu0 0.0
        %2162 = vmatpush1.msra.mxu0 %v2149
        %2163 = vmatprep.subr.mxu0 0.0
        %2164 = vmatpush1.msra.mxu0 %v2150
        %2165 = vmatprep.subr.mxu0 0.0
        %2166 = vmatpush1.msra.mxu0 %v2151
        %2167 = vmatprep.subr.mxu0 0.0
        %2168 = vmatpush1.msra.mxu0 %v2152
        %2169 = vmatprep.subr.mxu0 0.0
        %2170 = vmatpush1.msra.mxu0 0.0
        %2171 = vmatprep.subr.mxu0 0.0
        %2172 = vmatpush1.msra.mxu0 0.0
        %2173 = vmatprep.subr.mxu0 0.0
        %2174 = vmatpush1.msra.mxu0 0.0
        %2175 = vmatprep.subr.mxu0 0.0
        %2176 = vmatpush1.msra.mxu0 0.0
        %2177 = vmatprep.subr.mxu0 0.0
        %2178 = vmatpush1.msra.mxu0 0.0
        %2179 = vmatprep.subr.mxu0 0.0
        %2180 = vmatpush1.msra.mxu0 0.0
        %2181 = vmatprep.subr.mxu0 0.0
        %2182 = vmatpush1.msra.mxu0 0.0
        %2183 = vmatprep.subr.mxu0 0.0
        %2184 = vmatpush1.msra.mxu0 0.0
        %2185 = vmatprep.subr.mxu0 0.0
        %2186 = vmatpush1.msra.mxu0 0.0
        %2187 = vmatprep.subr.mxu0 0.0
        %2188 = vmatpush1.msra.mxu0 0.0
        %2189 = vmatprep.subr.mxu0 0.0
        %2190 = vmatpush1.msra.mxu0 0.0
        %2191 = vmatprep.subr.mxu0 0.0
        %2192 = vmatpush1.msra.mxu0 0.0
        %2193 = vmatprep.subr.mxu0 0.0
        %2194 = vmatpush1.msra.mxu0 0.0
        %2195 = vmatprep.subr.mxu0 0.0
        %2196 = vmatpush1.msra.mxu0 0.0
        %2197 = vmatprep.subr.mxu0 0.0
        %2198 = vmatpush1.msra.mxu0 0.0
        %2199 = vmatprep.subr.mxu0 0.0
        %2200 = vmatpush1.msra.mxu0 0.0
        %2201 = vmatprep.subr.mxu0 0.0
        %2202 = vmatpush1.msra.mxu0 0.0
        %2203 = vmatprep.subr.mxu0 0.0
        %2204 = vmatpush1.msra.mxu0 0.0
        %2205 = vmatprep.subr.mxu0 0.0
        %2206 = vmatpush1.msra.mxu0 0.0
        %2207 = vmatprep.subr.mxu0 0.0
        %2208 = vmatpush1.msra.mxu0 0.0
        %2209 = vmatprep.subr.mxu0 0.0
        %2210 = vmatpush1.msra.mxu0 0.0
        %2211 = vmatprep.subr.mxu0 0.0
        %2212 = vmatpush1.msra.mxu0 0.0
        %2213 = vmatprep.subr.mxu0 0.0
        %2214 = vmatpush1.msra.mxu0 0.0
        %2215 = vmatprep.subr.mxu0 0.0
        %2216 = vmatpush1.msra.mxu0 0.0
        %2217 = vmatprep.subr.mxu0 0.0
        %2218 = vmatpush1.msra.mxu0 0.0
        %2219 = vmatprep.subr.mxu0 0.0
        %2220 = vmatpush1.msra.mxu0 0.0
        %2221 = vmatprep.subr.mxu0 0.0
        %2222 = vmatpush1.msra.mxu0 0.0
        %2223 = vmatprep.subr.mxu0 0.0
        %2224 = vmatpush1.msra.mxu0 0.0
        %2225 = vmatprep.mubr.f32.mxu0 0.0
        %2226 = vmatmul.mubr.f32.gmra.mrb[0].mxu0 %v534
        %v2227 = vpop.f32.mrb[0].mxu0
        %v2228 = vadd.f32 %v2159, %v2227
        %v2229 = vpop.f32.mrb[0].mxu0
        %2230 = vdwg.mxu0
        %v2232 = vsel %vm772, %v2062, 0
        %v2235 = vsel %vm772, %v2145, 0
        %2237 = vmatprep.subr.mxu0 0.0
        %2238 = vmatpush1.xpose.msra.mxu0 %v2235
        %2239 = vmatprep.subr.mxu0 0.0
        %2240 = vmatpush1.xpose.msra.mxu0 0.0
        %2241 = vmatprep.subr.mxu0 0.0
        %2242 = vmatpush1.xpose.msra.mxu0 0.0
        %2243 = vmatprep.subr.mxu0 0.0
        %2244 = vmatpush1.xpose.msra.mxu0 0.0
        %2245 = vmatprep.subr.mxu0 0.0
        %2246 = vmatpush1.xpose.msra.mxu0 0.0
        %2247 = vmatprep.subr.mxu0 0.0
        %2248 = vmatpush1.xpose.msra.mxu0 0.0
        %2249 = vmatprep.subr.mxu0 0.0
        %2250 = vmatpush1.xpose.msra.mxu0 0.0
        %2251 = vmatprep.subr.mxu0 0.0
        %2252 = vmatpush1.xpose.msra.mxu0 0.0
        %2253 = vmatprep.subr.mxu0 0.0
        %2254 = vmatpush1.xpose.msra.mxu0 0.0
        %2255 = vmatprep.subr.mxu0 0.0
        %2256 = vmatpush1.xpose.msra.mxu0 0.0
        %2257 = vmatprep.subr.mxu0 0.0
        %2258 = vmatpush1.xpose.msra.mxu0 0.0
        %2259 = vmatprep.subr.mxu0 0.0
        %2260 = vmatpush1.xpose.msra.mxu0 0.0
        %2261 = vmatprep.subr.mxu0 0.0
        %2262 = vmatpush1.xpose.msra.mxu0 0.0
        %2263 = vmatprep.subr.mxu0 0.0
        %2264 = vmatpush1.xpose.msra.mxu0 0.0
        %2265 = vmatprep.subr.mxu0 0.0
        %2266 = vmatpush1.xpose.msra.mxu0 0.0
        %2267 = vmatprep.subr.mxu0 0.0
        %2268 = vmatpush1.xpose.msra.mxu0 0.0
        %2269 = vmatprep.subr.mxu0 0.0
        %2270 = vmatpush1.xpose.msra.mxu0 0.0
        %2271 = vmatprep.subr.mxu0 0.0
        %2272 = vmatpush1.xpose.msra.mxu0 0.0
        %2273 = vmatprep.subr.mxu0 0.0
        %2274 = vmatpush1.xpose.msra.mxu0 0.0
        %2275 = vmatprep.subr.mxu0 0.0
        %2276 = vmatpush1.xpose.msra.mxu0 0.0
        %2277 = vmatprep.subr.mxu0 0.0
        %2278 = vmatpush1.xpose.msra.mxu0 0.0
        %2279 = vmatprep.subr.mxu0 0.0
        %2280 = vmatpush1.xpose.msra.mxu0 0.0
        %2281 = vmatprep.subr.mxu0 0.0
        %2282 = vmatpush1.xpose.msra.mxu0 0.0
        %2283 = vmatprep.subr.mxu0 0.0
        %2284 = vmatpush1.xpose.msra.mxu0 0.0
        %2285 = vmatprep.subr.mxu0 0.0
        %2286 = vmatpush1.xpose.msra.mxu0 0.0
        %2287 = vmatprep.subr.mxu0 0.0
        %2288 = vmatpush1.xpose.msra.mxu0 0.0
        %2289 = vmatprep.subr.mxu0 0.0
        %2290 = vmatpush1.xpose.msra.mxu0 0.0
        %2291 = vmatprep.subr.mxu0 0.0
        %2292 = vmatpush1.xpose.msra.mxu0 0.0
        %2293 = vmatprep.subr.mxu0 0.0
        %2294 = vmatpush1.xpose.msra.mxu0 0.0
        %2295 = vmatprep.subr.mxu0 0.0
        %2296 = vmatpush1.xpose.msra.mxu0 0.0
        %2297 = vmatprep.subr.mxu0 0.0
        %2298 = vmatpush1.xpose.msra.mxu0 0.0
        %2299 = vmatprep.subr.mxu0 0.0
        %2300 = vmatpush1.xpose.msra.mxu0 0.0
        %2301 = vmatprep.mubr.f32.mxu0 0.0
        %2302 = vmatmul.mubr.f32.gmra.mrb[0].mxu0 %v2232
        %v2303 = vpop.f32.mrb[0].mxu0
        %v2304 = vadd.f32 0.0, %v2303
        %v2305 = vpop.f32.mrb[0].mxu0
        %2306 = vdwg.mxu0
        %v2307 = vmul.f32 %v2304, 0.35355338
        %v2308 = vadd.f32 %v2307, %v520
        %v2309 = vsel %vm772, %v2308, -inf
        %2310 = vmax.xlane.f32.xlu0 %v2309
        %v2311 = vpop.xlane.xlu0 %2310
        %v2312 = vsub.f32 %v2308, %v2311
        %v2313 = vmul.f32 %v2312, 1.442695
        %v2314 = vpow.pop %v2313
        %v2315 = vsel %vm772, %v2314, 0.0
        %2316 = vadd.xlane.f32.xlu0 %v2315
        %v2317 = vpop.xlane.xlu0 %2316
        %v2318 = vrcp.pop %v2317
        %v2319 = vmul.f32 %v2314, %v2318
        %v2321 = vsel %vm772, %v2319, 0
        %2323 = vmatprep.subr.mxu0 0.0
        %2324 = vmatpush1.msra.mxu0 %v2228
        %2325 = vmatprep.subr.mxu0 0.0
        %2326 = vmatpush1.msra.mxu0 0.0
        %2327 = vmatprep.subr.mxu0 0.0
        %2328 = vmatpush1.msra.mxu0 0.0
        %2329 = vmatprep.subr.mxu0 0.0
        %2330 = vmatpush1.msra.mxu0 0.0
        %2331 = vmatprep.subr.mxu0 0.0
        %2332 = vmatpush1.msra.mxu0 0.0
        %2333 = vmatprep.subr.mxu0 0.0
        %2334 = vmatpush1.msra.mxu0 0.0
        %2335 = vmatprep.subr.mxu0 0.0
        %2336 = vmatpush1.msra.mxu0 0.0
        %2337 = vmatprep.subr.mxu0 0.0
        %2338 = vmatpush1.msra.mxu0 0.0
        %2339 = vmatprep.subr.mxu0 0.0
        %2340 = vmatpush1.msra.mxu0 0.0
        %2341 = vmatprep.subr.mxu0 0.0
        %2342 = vmatpush1.msra.mxu0 0.0
        %2343 = vmatprep.subr.mxu0 0.0
        %2344 = vmatpush1.msra.mxu0 0.0
        %2345 = vmatprep.subr.mxu0 0.0
        %2346 = vmatpush1.msra.mxu0 0.0
        %2347 = vmatprep.subr.mxu0 0.0
        %2348 = vmatpush1.msra.mxu0 0.0
        %2349 = vmatprep.subr.mxu0 0.0
        %2350 = vmatpush1.msra.mxu0 0.0
        %2351 = vmatprep.subr.mxu0 0.0
        %2352 = vmatpush1.msra.mxu0 0.0
        %2353 = vmatprep.subr.mxu0 0.0
        %2354 = vmatpush1.msra.mxu0 0.0
        %2355 = vmatprep.subr.mxu0 0.0
        %2356 = vmatpush1.msra.mxu0 0.0
        %2357 = vmatprep.subr.mxu0 0.0
        %2358 = vmatpush1.msra.mxu0 0.0
        %2359 = vmatprep.subr.mxu0 0.0
        %2360 = vmatpush1.msra.mxu0 0.0
        %2361 = vmatprep.subr.mxu0 0.0
        %2362 = vmatpush1.msra.mxu0 0.0
        %2363 = vmatprep.subr.mxu0 0.0
        %2364 = vmatpush1.msra.mxu0 0.0
        %2365 = vmatprep.subr.mxu0 0.0
        %2366 = vmatpush1.msra.mxu0 0.0
        %2367 = vmatprep.subr.mxu0 0.0
        %2368 = vmatpush1.msra.mxu0 0.0
        %2369 = vmatprep.subr.mxu0 0.0
        %2370 = vmatpush1.msra.mxu0 0.0
        %2371 = vmatprep.subr.mxu0 0.0
        %2372 = vmatpush1.msra.mxu0 0.0
        %2373 = vmatprep.subr.mxu0 0.0
        %2374 = vmatpush1.msra.mxu0 0.0
        %2375 = vmatprep.subr.mxu0 0.0
        %2376 = vmatpush1.msra.mxu0 0.0
        %2377 = vmatprep.subr.mxu0 0.0
        %2378 = vmatpush1.msra.mxu0 0.0
        %2379 = vmatprep.subr.mxu0 0.0
        %2380 = vmatpush1.msra.mxu0 0.0
        %2381 = vmatprep.subr.mxu0 0.0
        %2382 = vmatpush1.msra.mxu0 0.0
        %2383 = vmatprep.subr.mxu0 0.0
        %2384 = vmatpush1.msra.mxu0 0.0
        %2385 = vmatprep.subr.mxu0 0.0
        %2386 = vmatpush1.msra.mxu0 0.0
        %2387 = vmatprep.mubr.f32.mxu0 0.0
        %2388 = vmatmul.mubr.f32.gmra.mrb[0].mxu0 %v2321
        %v2389 = vpop.f32.mrb[0].mxu0
        %v2390 = vadd.f32 0.0, %v2389
        %v2391 = vpop.f32.mrb[0].mxu0
        %2392 = vdwg.mxu0
        %s2393 = scalar_lea.vmem %s5, 24
        %v2394 = vld [vmem:[%s2393] sm:$0xff]
        %v2396 = vsel %vm772, %v2390, 0
        %2398 = vmatprep.subr.mxu0 0.0
        %2399 = vmatpush1.msra.mxu0 %v2394
        %2400 = vmatprep.subr.mxu0 0.0
        %2401 = vmatpush1.msra.mxu0 0.0
        %2402 = vmatprep.subr.mxu0 0.0
        %2403 = vmatpush1.msra.mxu0 0.0
        %2404 = vmatprep.subr.mxu0 0.0
        %2405 = vmatpush1.msra.mxu0 0.0
        %2406 = vmatprep.subr.mxu0 0.0
        %2407 = vmatpush1.msra.mxu0 0.0
        %2408 = vmatprep.subr.mxu0 0.0
        %2409 = vmatpush1.msra.mxu0 0.0
        %2410 = vmatprep.subr.mxu0 0.0
        %2411 = vmatpush1.msra.mxu0 0.0
        %2412 = vmatprep.subr.mxu0 0.0
        %2413 = vmatpush1.msra.mxu0 0.0
        %2414 = vmatprep.subr.mxu0 0.0
        %2415 = vmatpush1.msra.mxu0 0.0
        %2416 = vmatprep.subr.mxu0 0.0
        %2417 = vmatpush1.msra.mxu0 0.0
        %2418 = vmatprep.subr.mxu0 0.0
        %2419 = vmatpush1.msra.mxu0 0.0
        %2420 = vmatprep.subr.mxu0 0.0
        %2421 = vmatpush1.msra.mxu0 0.0
        %2422 = vmatprep.subr.mxu0 0.0
        %2423 = vmatpush1.msra.mxu0 0.0
        %2424 = vmatprep.subr.mxu0 0.0
        %2425 = vmatpush1.msra.mxu0 0.0
        %2426 = vmatprep.subr.mxu0 0.0
        %2427 = vmatpush1.msra.mxu0 0.0
        %2428 = vmatprep.subr.mxu0 0.0
        %2429 = vmatpush1.msra.mxu0 0.0
        %2430 = vmatprep.subr.mxu0 0.0
        %2431 = vmatpush1.msra.mxu0 0.0
        %2432 = vmatprep.subr.mxu0 0.0
        %2433 = vmatpush1.msra.mxu0 0.0
        %2434 = vmatprep.subr.mxu0 0.0
        %2435 = vmatpush1.msra.mxu0 0.0
        %2436 = vmatprep.subr.mxu0 0.0
        %2437 = vmatpush1.msra.mxu0 0.0
        %2438 = vmatprep.subr.mxu0 0.0
        %2439 = vmatpush1.msra.mxu0 0.0
        %2440 = vmatprep.subr.mxu0 0.0
        %2441 = vmatpush1.msra.mxu0 0.0
        %2442 = vmatprep.subr.mxu0 0.0
        %2443 = vmatpush1.msra.mxu0 0.0
        %2444 = vmatprep.subr.mxu0 0.0
        %2445 = vmatpush1.msra.mxu0 0.0
        %2446 = vmatprep.subr.mxu0 0.0
        %2447 = vmatpush1.msra.mxu0 0.0
        %2448 = vmatprep.subr.mxu0 0.0
        %2449 = vmatpush1.msra.mxu0 0.0
        %2450 = vmatprep.subr.mxu0 0.0
        %2451 = vmatpush1.msra.mxu0 0.0
        %2452 = vmatprep.subr.mxu0 0.0
        %2453 = vmatpush1.msra.mxu0 0.0
        %2454 = vmatprep.subr.mxu0 0.0
        %2455 = vmatpush1.msra.mxu0 0.0
        %2456 = vmatprep.subr.mxu0 0.0
        %2457 = vmatpush1.msra.mxu0 0.0
        %2458 = vmatprep.subr.mxu0 0.0
        %2459 = vmatpush1.msra.mxu0 0.0
        %2460 = vmatprep.subr.mxu0 0.0
        %2461 = vmatpush1.msra.mxu0 0.0
        %2462 = vmatprep.mubr.f32.mxu0 0.0
        %2463 = vmatmul.mubr.f32.gmra.mrb[0].mxu0 %v2396
        %v2464 = vpop.f32.mrb[0].mxu0
        %v2465 = vadd.f32 0.0, %v2464
        %v2466 = vpop.f32.mrb[0].mxu0
        %2467 = vdwg.mxu0
        %v2468 = vadd.f32 %v1981, %v2465
        %v2469 = vld [vmem:[%s6] sm:$0x1]
        %v2471 = vlaneseq
        %v2472 = vshrl.u32 %v2471, 7
        %v2473 = vsub.s32 0, %v2472
        %v2474 = vrot.slane %v2469, %v2473
        %v2476 = vadd.f32 %v2468, %v2474
        %v2477 = vadd.f32 %v512, %v2476
        %v2478 = vld [vmem:[%s11] sm:$0x1]
        %v2479 = vld [vmem:[%s12] sm:$0x1]
        %v2480 = vsel %vm532, %v2477, 0.0
        %2481 = vadd.xlane.f32.xlu0 %v2480
        %v2482 = vpop.xlane.xlu0 %2481
        %v2483 = vrcp.pop 32.0
        %v2484 = vmul.f32 %v2482, %v2483
        %v2485 = vsub.f32 %v2477, %v2484
        %v2486 = vmul.f32 %v2485, %v2485
        %v2487 = vsel %vm532, %v2486, 0.0
        %2488 = vadd.xlane.f32.xlu0 %v2487
        %v2489 = vpop.xlane.xlu0 %2488
        %v2490 = vmul.f32 %v2489, %v2483
        %v2491 = vadd.f32 %v2490, 1e-05
        %v2492 = vrsqrt.pop %v2491
        %v2493 = vmul.f32 %v2485, %v2492
        %v2495 = vlaneseq
        %v2496 = vshrl.u32 %v2495, 7
        %v2497 = vsub.s32 0, %v2496
        %v2498 = vrot.slane %v2478, %v2497
        %v2500 = vmul.f32 %v2493, %v2498
        %v2502 = vlaneseq
        %v2503 = vshrl.u32 %v2502, 7
        %v2504 = vsub.s32 0, %v2503
        %v2505 = vrot.slane %v2479, %v2504
        %v2507 = vadd.f32 %v2500, %v2505
        %s2508 = scalar_lea.vmem %s3, 384
        %v2509 = vld [vmem:[%s2508] sm:$0xff]
        %v2510 = vld [vmem:[%s2508 + $0x8] sm:$0xff]
        %v2511 = vld [vmem:[%s2508 + $0x10] sm:$0xff]
        %v2512 = vld [vmem:[%s2508 + $0x18] sm:$0xff]
        %s2513 = scalar_lea.vmem %s4, 12
        %v2514 = vld [vmem:[%s2513] sm:$0x1]
        %v2516 = vlaneseq
        %v2517 = vshrl.u32 %v2516, 7
        %v2518 = vsub.s32 0, %v2517
        %v2519 = vrot.slane %v2514, %v2518
        %v2522 = vsel %vm532, %v2507, 0
        %2524 = vmatprep.subr.mxu0 0.0
        %2525 = vmatpush1.msra.mxu0 %v2509
        %2526 = vmatprep.subr.mxu0 0.0
        %2527 = vmatpush1.msra.mxu0 %v2510
        %2528 = vmatprep.subr.mxu0 0.0
        %2529 = vmatpush1.msra.mxu0 %v2511
        %2530 = vmatprep.subr.mxu0 0.0
        %2531 = vmatpush1.msra.mxu0 %v2512
        %2532 = vmatprep.subr.mxu0 0.0
        %2533 = vmatpush1.msra.mxu0 0.0
        %2534 = vmatprep.subr.mxu0 0.0
        %2535 = vmatpush1.msra.mxu0 0.0
        %2536 = vmatprep.subr.mxu0 0.0
        %2537 = vmatpush1.msra.mxu0 0.0
        %2538 = vmatprep.subr.mxu0 0.0
        %2539 = vmatpush1.msra.mxu0 0.0
        %2540 = vmatprep.subr.mxu0 0.0
        %2541 = vmatpush1.msra.mxu0 0.0
        %2542 = vmatprep.subr.mxu0 0.0
        %2543 = vmatpush1.msra.mxu0 0.0
        %2544 = vmatprep.subr.mxu0 0.0
        %2545 = vmatpush1.msra.mxu0 0.0
        %2546 = vmatprep.subr.mxu0 0.0
        %2547 = vmatpush1.msra.mxu0 0.0
        %2548 = vmatprep.subr.mxu0 0.0
        %2549 = vmatpush1.msra.mxu0 0.0
        %2550 = vmatprep.subr.mxu0 0.0
        %2551 = vmatpush1.msra.mxu0 0.0
        %2552 = vmatprep.subr.mxu0 0.0
        %2553 = vmatpush1.msra.mxu0 0.0
        %2554 = vmatprep.subr.mxu0 0.0
        %2555 = vmatpush1.msra.mxu0 0.0
        %2556 = vmatprep.subr.mxu0 0.0
        %2557 = vmatpush1.msra.mxu0 0.0
        %2558 = vmatprep.subr.mxu0 0.0
        %2559 = vmatpush1.msra.mxu0 0.0
        %2560 = vmatprep.subr.mxu0 0.0
        %2561 = vmatpush1.msra.mxu0 0.0
        %2562 = vmatprep.subr.mxu0 0.0
        %2563 = vmatpush1.msra.mxu0 0.0
        %2564 = vmatprep.subr.mxu0 0.0
        %2565 = vmatpush1.msra.mxu0 0.0
        %2566 = vmatprep.subr.mxu0 0.0
        %2567 = vmatpush1.msra.mxu0 0.0
        %2568 = vmatprep.subr.mxu0 0.0
        %2569 = vmatpush1.msra.mxu0 0.0
        %2570 = vmatprep.subr.mxu0 0.0
        %2571 = vmatpush1.msra.mxu0 0.0
        %2572 = vmatprep.subr.mxu0 0.0
        %2573 = vmatpush1.msra.mxu0 0.0
        %2574 = vmatprep.subr.mxu0 0.0
        %2575 = vmatpush1.msra.mxu0 0.0
        %2576 = vmatprep.subr.mxu0 0.0
        %2577 = vmatpush1.msra.mxu0 0.0
        %2578 = vmatprep.subr.mxu0 0.0
        %2579 = vmatpush1.msra.mxu0 0.0
        %2580 = vmatprep.subr.mxu0 0.0
        %2581 = vmatpush1.msra.mxu0 0.0
        %2582 = vmatprep.subr.mxu0 0.0
        %2583 = vmatpush1.msra.mxu0 0.0
        %2584 = vmatprep.subr.mxu0 0.0
        %2585 = vmatpush1.msra.mxu0 0.0
        %2586 = vmatprep.subr.mxu0 0.0
        %2587 = vmatpush1.msra.mxu0 0.0
        %2588 = vmatprep.mubr.f32.mxu0 0.0
        %2589 = vmatmul.mubr.f32.gmra.mrb[0].mxu0 %v2522
        %v2590 = vpop.f32.mrb[0].mxu0
        %v2591 = vadd.f32 %v2519, %v2590
        %v2592 = vpop.f32.mrb[0].mxu0
        %2593 = vdwg.mxu0
        %s2594 = scalar_lea.vmem %s3, 512
        %v2595 = vld [vmem:[%s2594] sm:$0xff]
        %v2596 = vld [vmem:[%s2594 + $0x8] sm:$0xff]
        %v2597 = vld [vmem:[%s2594 + $0x10] sm:$0xff]
        %v2598 = vld [vmem:[%s2594 + $0x18] sm:$0xff]
        %s2599 = scalar_lea.vmem %s4, 16
        %v2600 = vld [vmem:[%s2599] sm:$0x1]
        %v2602 = vlaneseq
        %v2603 = vshrl.u32 %v2602, 7
        %v2604 = vsub.s32 0, %v2603
        %v2605 = vrot.slane %v2600, %v2604
        %v2608 = vsel %vm532, %v513, 0
        %v2611 = vsel %vm532, %v514, 0
        %2613 = vmatprep.subr.mxu0 0.0
        %2614 = vmatpush1.msra.mxu0 %v2595
        %2615 = vmatprep.subr.mxu0 0.0
        %2616 = vmatpush1.msra.mxu0 %v2596
        %2617 = vmatprep.subr.mxu0 0.0
        %2618 = vmatpush1.msra.mxu0 %v2597
        %2619 = vmatprep.subr.mxu0 0.0
        %2620 = vmatpush1.msra.mxu0 %v2598
        %2621 = vmatprep.subr.mxu0 0.0
        %2622 = vmatpush1.msra.mxu0 0.0
        %2623 = vmatprep.subr.mxu0 0.0
        %2624 = vmatpush1.msra.mxu0 0.0
        %2625 = vmatprep.subr.mxu0 0.0
        %2626 = vmatpush1.msra.mxu0 0.0
        %2627 = vmatprep.subr.mxu0 0.0
        %2628 = vmatpush1.msra.mxu0 0.0
        %2629 = vmatprep.subr.mxu0 0.0
        %2630 = vmatpush1.msra.mxu0 0.0
        %2631 = vmatprep.subr.mxu0 0.0
        %2632 = vmatpush1.msra.mxu0 0.0
        %2633 = vmatprep.subr.mxu0 0.0
        %2634 = vmatpush1.msra.mxu0 0.0
        %2635 = vmatprep.subr.mxu0 0.0
        %2636 = vmatpush1.msra.mxu0 0.0
        %2637 = vmatprep.subr.mxu0 0.0
        %2638 = vmatpush1.msra.mxu0 0.0
        %2639 = vmatprep.subr.mxu0 0.0
        %2640 = vmatpush1.msra.mxu0 0.0
        %2641 = vmatprep.subr.mxu0 0.0
        %2642 = vmatpush1.msra.mxu0 0.0
        %2643 = vmatprep.subr.mxu0 0.0
        %2644 = vmatpush1.msra.mxu0 0.0
        %2645 = vmatprep.subr.mxu0 0.0
        %2646 = vmatpush1.msra.mxu0 0.0
        %2647 = vmatprep.subr.mxu0 0.0
        %2648 = vmatpush1.msra.mxu0 0.0
        %2649 = vmatprep.subr.mxu0 0.0
        %2650 = vmatpush1.msra.mxu0 0.0
        %2651 = vmatprep.subr.mxu0 0.0
        %2652 = vmatpush1.msra.mxu0 0.0
        %2653 = vmatprep.subr.mxu0 0.0
        %2654 = vmatpush1.msra.mxu0 0.0
        %2655 = vmatprep.subr.mxu0 0.0
        %2656 = vmatpush1.msra.mxu0 0.0
        %2657 = vmatprep.subr.mxu0 0.0
        %2658 = vmatpush1.msra.mxu0 0.0
        %2659 = vmatprep.subr.mxu0 0.0
        %2660 = vmatpush1.msra.mxu0 0.0
        %2661 = vmatprep.subr.mxu0 0.0
        %2662 = vmatpush1.msra.mxu0 0.0
        %2663 = vmatprep.subr.mxu0 0.0
        %2664 = vmatpush1.msra.mxu0 0.0
        %2665 = vmatprep.subr.mxu0 0.0
        %2666 = vmatpush1.msra.mxu0 0.0
        %2667 = vmatprep.subr.mxu0 0.0
        %2668 = vmatpush1.msra.mxu0 0.0
        %2669 = vmatprep.subr.mxu0 0.0
        %2670 = vmatpush1.msra.mxu0 0.0
        %2671 = vmatprep.subr.mxu0 0.0
        %2672 = vmatpush1.msra.mxu0 0.0
        %2673 = vmatprep.subr.mxu0 0.0
        %2674 = vmatpush1.msra.mxu0 0.0
        %2675 = vmatprep.subr.mxu0 0.0
        %2676 = vmatpush1.msra.mxu0 0.0
        %2677 = vmatprep.mubr.f32.mxu0 0.0
        %2678 = vmatmul.mubr.f32.gmra.mrb[0].mxu0 %v2608
        %v2679 = vpop.f32.mrb[0].mxu0
        %v2680 = vadd.f32 %v2605, %v2679
        %v2681 = vpop.f32.mrb[0].mxu0
        %2682 = vmatprep.mubr.f32.mxu0 0.0
        %2683 = vmatmul.mubr.f32.gmra.mrb[0].mxu0 %v2611
        %v2684 = vpop.f32.mrb[0].mxu0
        %v2685 = vadd.f32 %v2605, %v2684
        %v2686 = vpop.f32.mrb[0].mxu0
        %2687 = vdwg.mxu0
        %s2688 = scalar_lea.vmem %s3, 640
        %v2689 = vld [vmem:[%s2688] sm:$0xff]
        %v2690 = vld [vmem:[%s2688 + $0x8] sm:$0xff]
        %v2691 = vld [vmem:[%s2688 + $0x10] sm:$0xff]
        %v2692 = vld [vmem:[%s2688 + $0x18] sm:$0xff]
        %s2693 = scalar_lea.vmem %s4, 20
        %v2694 = vld [vmem:[%s2693] sm:$0x1]
        %v2696 = vlaneseq
        %v2697 = vshrl.u32 %v2696, 7
        %v2698 = vsub.s32 0, %v2697
        %v2699 = vrot.slane %v2694, %v2698
        %2701 = vmatprep.subr.mxu0 0.0
        %2702 = vmatpush1.msra.mxu0 %v2689
        %2703 = vmatprep.subr.mxu0 0.0
        %2704 = vmatpush1.msra.mxu0 %v2690
        %2705 = vmatprep.subr.mxu0 0.0
        %2706 = vmatpush1.msra.mxu0 %v2691
        %2707 = vmatprep.subr.mxu0 0.0
        %2708 = vmatpush1.msra.mxu0 %v2692
        %2709 = vmatprep.subr.mxu0 0.0
        %2710 = vmatpush1.msra.mxu0 0.0
        %2711 = vmatprep.subr.mxu0 0.0
        %2712 = vmatpush1.msra.mxu0 0.0
        %2713 = vmatprep.subr.mxu0 0.0
        %2714 = vmatpush1.msra.mxu0 0.0
        %2715 = vmatprep.subr.mxu0 0.0
        %2716 = vmatpush1.msra.mxu0 0.0
        %2717 = vmatprep.subr.mxu0 0.0
        %2718 = vmatpush1.msra.mxu0 0.0
        %2719 = vmatprep.subr.mxu0 0.0
        %2720 = vmatpush1.msra.mxu0 0.0
        %2721 = vmatprep.subr.mxu0 0.0
        %2722 = vmatpush1.msra.mxu0 0.0
        %2723 = vmatprep.subr.mxu0 0.0
        %2724 = vmatpush1.msra.mxu0 0.0
        %2725 = vmatprep.subr.mxu0 0.0
        %2726 = vmatpush1.msra.mxu0 0.0
        %2727 = vmatprep.subr.mxu0 0.0
        %2728 = vmatpush1.msra.mxu0 0.0
        %2729 = vmatprep.subr.mxu0 0.0
        %2730 = vmatpush1.msra.mxu0 0.0
        %2731 = vmatprep.subr.mxu0 0.0
        %2732 = vmatpush1.msra.mxu0 0.0
        %2733 = vmatprep.subr.mxu0 0.0
        %2734 = vmatpush1.msra.mxu0 0.0
        %2735 = vmatprep.subr.mxu0 0.0
        %2736 = vmatpush1.msra.mxu0 0.0
        %2737 = vmatprep.subr.mxu0 0.0
        %2738 = vmatpush1.msra.mxu0 0.0
        %2739 = vmatprep.subr.mxu0 0.0
        %2740 = vmatpush1.msra.mxu0 0.0
        %2741 = vmatprep.subr.mxu0 0.0
        %2742 = vmatpush1.msra.mxu0 0.0
        %2743 = vmatprep.subr.mxu0 0.0
        %2744 = vmatpush1.msra.mxu0 0.0
        %2745 = vmatprep.subr.mxu0 0.0
        %2746 = vmatpush1.msra.mxu0 0.0
        %2747 = vmatprep.subr.mxu0 0.0
        %2748 = vmatpush1.msra.mxu0 0.0
        %2749 = vmatprep.subr.mxu0 0.0
        %2750 = vmatpush1.msra.mxu0 0.0
        %2751 = vmatprep.subr.mxu0 0.0
        %2752 = vmatpush1.msra.mxu0 0.0
        %2753 = vmatprep.subr.mxu0 0.0
        %2754 = vmatpush1.msra.mxu0 0.0
        %2755 = vmatprep.subr.mxu0 0.0
        %2756 = vmatpush1.msra.mxu0 0.0
        %2757 = vmatprep.subr.mxu0 0.0
        %2758 = vmatpush1.msra.mxu0 0.0
        %2759 = vmatprep.subr.mxu0 0.0
        %2760 = vmatpush1.msra.mxu0 0.0
        %2761 = vmatprep.subr.mxu0 0.0
        %2762 = vmatpush1.msra.mxu0 0.0
        %2763 = vmatprep.subr.mxu0 0.0
        %2764 = vmatpush1.msra.mxu0 0.0
        %2765 = vmatprep.mubr.f32.mxu0 0.0
        %2766 = vmatmul.mubr.f32.gmra.mrb[0].mxu0 %v2608
        %v2767 = vpop.f32.mrb[0].mxu0
        %v2768 = vadd.f32 %v2699, %v2767
        %v2769 = vpop.f32.mrb[0].mxu0
        %2770 = vmatprep.mubr.f32.mxu0 0.0
        %2771 = vmatmul.mubr.f32.gmra.mrb[0].mxu0 %v2611
        %v2772 = vpop.f32.mrb[0].mxu0
        %v2773 = vadd.f32 %v2699, %v2772
        %v2774 = vpop.f32.mrb[0].mxu0
        %2775 = vdwg.mxu0
        %v2777 = vsel %vm772, %v2591, 0
        %v2780 = vsel %vm772, %v2680, 0
        %v2783 = vsel %vm772, %v2685, 0
        %2785 = vmatprep.subr.mxu0 0.0
        %2786 = vmatpush1.xpose.msra.mxu0 %v2780
        %2787 = vmatprep.subr.mxu0 0.0
        %2788 = vmatpush1.xpose.msra.mxu0 %v2783
        %2789 = vmatprep.subr.mxu0 0.0
        %2790 = vmatpush1.xpose.msra.mxu0 0.0
        %2791 = vmatprep.subr.mxu0 0.0
        %2792 = vmatpush1.xpose.msra.mxu0 0.0
        %2793 = vmatprep.subr.mxu0 0.0
        %2794 = vmatpush1.xpose.msra.mxu0 0.0
        %2795 = vmatprep.subr.mxu0 0.0
        %2796 = vmatpush1.xpose.msra.mxu0 0.0
        %2797 = vmatprep.subr.mxu0 0.0
        %2798 = vmatpush1.xpose.msra.mxu0 0.0
        %2799 = vmatprep.subr.mxu0 0.0
        %2800 = vmatpush1.xpose.msra.mxu0 0.0
        %2801 = vmatprep.subr.mxu0 0.0
        %2802 = vmatpush1.xpose.msra.mxu0 0.0
        %2803 = vmatprep.subr.mxu0 0.0
        %2804 = vmatpush1.xpose.msra.mxu0 0.0
        %2805 = vmatprep.subr.mxu0 0.0
        %2806 = vmatpush1.xpose.msra.mxu0 0.0
        %2807 = vmatprep.subr.mxu0 0.0
        %2808 = vmatpush1.xpose.msra.mxu0 0.0
        %2809 = vmatprep.subr.mxu0 0.0
        %2810 = vmatpush1.xpose.msra.mxu0 0.0
        %2811 = vmatprep.subr.mxu0 0.0
        %2812 = vmatpush1.xpose.msra.mxu0 0.0
        %2813 = vmatprep.subr.mxu0 0.0
        %2814 = vmatpush1.xpose.msra.mxu0 0.0
        %2815 = vmatprep.subr.mxu0 0.0
        %2816 = vmatpush1.xpose.msra.mxu0 0.0
        %2817 = vmatprep.subr.mxu0 0.0
        %2818 = vmatpush1.xpose.msra.mxu0 0.0
        %2819 = vmatprep.subr.mxu0 0.0
        %2820 = vmatpush1.xpose.msra.mxu0 0.0
        %2821 = vmatprep.subr.mxu0 0.0
        %2822 = vmatpush1.xpose.msra.mxu0 0.0
        %2823 = vmatprep.subr.mxu0 0.0
        %2824 = vmatpush1.xpose.msra.mxu0 0.0
        %2825 = vmatprep.subr.mxu0 0.0
        %2826 = vmatpush1.xpose.msra.mxu0 0.0
        %2827 = vmatprep.subr.mxu0 0.0
        %2828 = vmatpush1.xpose.msra.mxu0 0.0
        %2829 = vmatprep.subr.mxu0 0.0
        %2830 = vmatpush1.xpose.msra.mxu0 0.0
        %2831 = vmatprep.subr.mxu0 0.0
        %2832 = vmatpush1.xpose.msra.mxu0 0.0
        %2833 = vmatprep.subr.mxu0 0.0
        %2834 = vmatpush1.xpose.msra.mxu0 0.0
        %2835 = vmatprep.subr.mxu0 0.0
        %2836 = vmatpush1.xpose.msra.mxu0 0.0
        %2837 = vmatprep.subr.mxu0 0.0
        %2838 = vmatpush1.xpose.msra.mxu0 0.0
        %2839 = vmatprep.subr.mxu0 0.0
        %2840 = vmatpush1.xpose.msra.mxu0 0.0
        %2841 = vmatprep.subr.mxu0 0.0
        %2842 = vmatpush1.xpose.msra.mxu0 0.0
        %2843 = vmatprep.subr.mxu0 0.0
        %2844 = vmatpush1.xpose.msra.mxu0 0.0
        %2845 = vmatprep.subr.mxu0 0.0
        %2846 = vmatpush1.xpose.msra.mxu0 0.0
        %2847 = vmatprep.subr.mxu0 0.0
        %2848 = vmatpush1.xpose.msra.mxu0 0.0
        %2849 = vmatprep.mubr.f32.mxu0 0.0
        %2850 = vmatmul.mubr.f32.gmra.mrb[0].mxu0 %v2777
        %v2851 = vpop.f32.mrb[0].mxu0
        %v2852 = vadd.f32 0.0, %v2851
        %v2853 = vpop.f32.mrb[0].mxu0
        %2854 = vdwg.mxu0
        %v2855 = vmul.f32 %v2852, 0.35355338
        %vm2856 = vcmask 130048
        %v2857 = vsel %vm2856, %v2855, -inf
        %2858 = vmax.xlane.f32.xlu0 %v2857
        %v2859 = vpop.xlane.xlu0 %2858
        %v2860 = vsub.f32 %v2855, %v2859
        %v2861 = vmul.f32 %v2860, 1.442695
        %v2862 = vpow.pop %v2861
        %v2863 = vsel %vm2856, %v2862, 0.0
        %2864 = vadd.xlane.f32.xlu0 %v2863
        %v2865 = vpop.xlane.xlu0 %2864
        %v2866 = vrcp.pop %v2865
        %v2867 = vmul.f32 %v2862, %v2866
        %v2869 = vsel %vm2856, %v2867, 0
        %2871 = vmatprep.subr.mxu0 0.0
        %2872 = vmatpush1.msra.mxu0 %v2768
        %2873 = vmatprep.subr.mxu0 0.0
        %2874 = vmatpush1.msra.mxu0 %v2773
        %2875 = vmatprep.subr.mxu0 0.0
        %2876 = vmatpush1.msra.mxu0 0.0
        %2877 = vmatprep.subr.mxu0 0.0
        %2878 = vmatpush1.msra.mxu0 0.0
        %2879 = vmatprep.subr.mxu0 0.0
        %2880 = vmatpush1.msra.mxu0 0.0
        %2881 = vmatprep.subr.mxu0 0.0
        %2882 = vmatpush1.msra.mxu0 0.0
        %2883 = vmatprep.subr.mxu0 0.0
        %2884 = vmatpush1.msra.mxu0 0.0
        %2885 = vmatprep.subr.mxu0 0.0
        %2886 = vmatpush1.msra.mxu0 0.0
        %2887 = vmatprep.subr.mxu0 0.0
        %2888 = vmatpush1.msra.mxu0 0.0
        %2889 = vmatprep.subr.mxu0 0.0
        %2890 = vmatpush1.msra.mxu0 0.0
        %2891 = vmatprep.subr.mxu0 0.0
        %2892 = vmatpush1.msra.mxu0 0.0
        %2893 = vmatprep.subr.mxu0 0.0
        %2894 = vmatpush1.msra.mxu0 0.0
        %2895 = vmatprep.subr.mxu0 0.0
        %2896 = vmatpush1.msra.mxu0 0.0
        %2897 = vmatprep.subr.mxu0 0.0
        %2898 = vmatpush1.msra.mxu0 0.0
        %2899 = vmatprep.subr.mxu0 0.0
        %2900 = vmatpush1.msra.mxu0 0.0
        %2901 = vmatprep.subr.mxu0 0.0
        %2902 = vmatpush1.msra.mxu0 0.0
        %2903 = vmatprep.subr.mxu0 0.0
        %2904 = vmatpush1.msra.mxu0 0.0
        %2905 = vmatprep.subr.mxu0 0.0
        %2906 = vmatpush1.msra.mxu0 0.0
        %2907 = vmatprep.subr.mxu0 0.0
        %2908 = vmatpush1.msra.mxu0 0.0
        %2909 = vmatprep.subr.mxu0 0.0
        %2910 = vmatpush1.msra.mxu0 0.0
        %2911 = vmatprep.subr.mxu0 0.0
        %2912 = vmatpush1.msra.mxu0 0.0
        %2913 = vmatprep.subr.mxu0 0.0
        %2914 = vmatpush1.msra.mxu0 0.0
        %2915 = vmatprep.subr.mxu0 0.0
        %2916 = vmatpush1.msra.mxu0 0.0
        %2917 = vmatprep.subr.mxu0 0.0
        %2918 = vmatpush1.msra.mxu0 0.0
        %2919 = vmatprep.subr.mxu0 0.0
        %2920 = vmatpush1.msra.mxu0 0.0
        %2921 = vmatprep.subr.mxu0 0.0
        %2922 = vmatpush1.msra.mxu0 0.0
        %2923 = vmatprep.subr.mxu0 0.0
        %2924 = vmatpush1.msra.mxu0 0.0
        %2925 = vmatprep.subr.mxu0 0.0
        %2926 = vmatpush1.msra.mxu0 0.0
        %2927 = vmatprep.subr.mxu0 0.0
        %2928 = vmatpush1.msra.mxu0 0.0
        %2929 = vmatprep.subr.mxu0 0.0
        %2930 = vmatpush1.msra.mxu0 0.0
        %2931 = vmatprep.subr.mxu0 0.0
        %2932 = vmatpush1.msra.mxu0 0.0
        %2933 = vmatprep.subr.mxu0 0.0
        %2934 = vmatpush1.msra.mxu0 0.0
        %2935 = vmatprep.mubr.f32.mxu0 0.0
        %2936 = vmatmul.mubr.f32.gmra.mrb[0].mxu0 %v2869
        %v2937 = vpop.f32.mrb[0].mxu0
        %v2938 = vadd.f32 0.0, %v2937
        %v2939 = vpop.f32.mrb[0].mxu0
        %2940 = vdwg.mxu0
        %s2941 = scalar_lea.vmem %s5, 32
        %v2942 = vld [vmem:[%s2941] sm:$0xff]
        %s2943 = scalar_lea.vmem %s3, 416
        %v2944 = vld [vmem:[%s2943] sm:$0xff]
        %v2945 = vld [vmem:[%s2943 + $0x8] sm:$0xff]
        %v2946 = vld [vmem:[%s2943 + $0x10] sm:$0xff]
        %v2947 = vld [vmem:[%s2943 + $0x18] sm:$0xff]
        %s2948 = scalar_lea.vmem %s4, 13
        %v2949 = vld [vmem:[%s2948] sm:$0x1]
        %v2951 = vlaneseq
        %v2952 = vshrl.u32 %v2951, 7
        %v2953 = vsub.s32 0, %v2952
        %v2954 = vrot.slane %v2949, %v2953
        %2956 = vmatprep.subr.mxu0 0.0
        %2957 = vmatpush1.msra.mxu0 %v2944
        %2958 = vmatprep.subr.mxu0 0.0
        %2959 = vmatpush1.msra.mxu0 %v2945
        %2960 = vmatprep.subr.mxu0 0.0
        %2961 = vmatpush1.msra.mxu0 %v2946
        %2962 = vmatprep.subr.mxu0 0.0
        %2963 = vmatpush1.msra.mxu0 %v2947
        %2964 = vmatprep.subr.mxu0 0.0
        %2965 = vmatpush1.msra.mxu0 0.0
        %2966 = vmatprep.subr.mxu0 0.0
        %2967 = vmatpush1.msra.mxu0 0.0
        %2968 = vmatprep.subr.mxu0 0.0
        %2969 = vmatpush1.msra.mxu0 0.0
        %2970 = vmatprep.subr.mxu0 0.0
        %2971 = vmatpush1.msra.mxu0 0.0
        %2972 = vmatprep.subr.mxu0 0.0
        %2973 = vmatpush1.msra.mxu0 0.0
        %2974 = vmatprep.subr.mxu0 0.0
        %2975 = vmatpush1.msra.mxu0 0.0
        %2976 = vmatprep.subr.mxu0 0.0
        %2977 = vmatpush1.msra.mxu0 0.0
        %2978 = vmatprep.subr.mxu0 0.0
        %2979 = vmatpush1.msra.mxu0 0.0
        %2980 = vmatprep.subr.mxu0 0.0
        %2981 = vmatpush1.msra.mxu0 0.0
        %2982 = vmatprep.subr.mxu0 0.0
        %2983 = vmatpush1.msra.mxu0 0.0
        %2984 = vmatprep.subr.mxu0 0.0
        %2985 = vmatpush1.msra.mxu0 0.0
        %2986 = vmatprep.subr.mxu0 0.0
        %2987 = vmatpush1.msra.mxu0 0.0
        %2988 = vmatprep.subr.mxu0 0.0
        %2989 = vmatpush1.msra.mxu0 0.0
        %2990 = vmatprep.subr.mxu0 0.0
        %2991 = vmatpush1.msra.mxu0 0.0
        %2992 = vmatprep.subr.mxu0 0.0
        %2993 = vmatpush1.msra.mxu0 0.0
        %2994 = vmatprep.subr.mxu0 0.0
        %2995 = vmatpush1.msra.mxu0 0.0
        %2996 = vmatprep.subr.mxu0 0.0
        %2997 = vmatpush1.msra.mxu0 0.0
        %2998 = vmatprep.subr.mxu0 0.0
        %2999 = vmatpush1.msra.mxu0 0.0
        %3000 = vmatprep.subr.mxu0 0.0
        %3001 = vmatpush1.msra.mxu0 0.0
        %3002 = vmatprep.subr.mxu0 0.0
        %3003 = vmatpush1.msra.mxu0 0.0
        %3004 = vmatprep.subr.mxu0 0.0
        %3005 = vmatpush1.msra.mxu0 0.0
        %3006 = vmatprep.subr.mxu0 0.0
        %3007 = vmatpush1.msra.mxu0 0.0
        %3008 = vmatprep.subr.mxu0 0.0
        %3009 = vmatpush1.msra.mxu0 0.0
        %3010 = vmatprep.subr.mxu0 0.0
        %3011 = vmatpush1.msra.mxu0 0.0
        %3012 = vmatprep.subr.mxu0 0.0
        %3013 = vmatpush1.msra.mxu0 0.0
        %3014 = vmatprep.subr.mxu0 0.0
        %3015 = vmatpush1.msra.mxu0 0.0
        %3016 = vmatprep.subr.mxu0 0.0
        %3017 = vmatpush1.msra.mxu0 0.0
        %3018 = vmatprep.subr.mxu0 0.0
        %3019 = vmatpush1.msra.mxu0 0.0
        %3020 = vmatprep.mubr.f32.mxu0 0.0
        %3021 = vmatmul.mubr.f32.gmra.mrb[0].mxu0 %v2522
        %v3022 = vpop.f32.mrb[0].mxu0
        %v3023 = vadd.f32 %v2954, %v3022
        %v3024 = vpop.f32.mrb[0].mxu0
        %3025 = vdwg.mxu0
        %s3026 = scalar_lea.vmem %s3, 544
        %v3027 = vld [vmem:[%s3026] sm:$0xff]
        %v3028 = vld [vmem:[%s3026 + $0x8] sm:$0xff]
        %v3029 = vld [vmem:[%s3026 + $0x10] sm:$0xff]
        %v3030 = vld [vmem:[%s3026 + $0x18] sm:$0xff]
        %s3031 = scalar_lea.vmem %s4, 17
        %v3032 = vld [vmem:[%s3031] sm:$0x1]
        %v3034 = vlaneseq
        %v3035 = vshrl.u32 %v3034, 7
        %v3036 = vsub.s32 0, %v3035
        %v3037 = vrot.slane %v3032, %v3036
        %3039 = vmatprep.subr.mxu0 0.0
        %3040 = vmatpush1.msra.mxu0 %v3027
        %3041 = vmatprep.subr.mxu0 0.0
        %3042 = vmatpush1.msra.mxu0 %v3028
        %3043 = vmatprep.subr.mxu0 0.0
        %3044 = vmatpush1.msra.mxu0 %v3029
        %3045 = vmatprep.subr.mxu0 0.0
        %3046 = vmatpush1.msra.mxu0 %v3030
        %3047 = vmatprep.subr.mxu0 0.0
        %3048 = vmatpush1.msra.mxu0 0.0
        %3049 = vmatprep.subr.mxu0 0.0
        %3050 = vmatpush1.msra.mxu0 0.0
        %3051 = vmatprep.subr.mxu0 0.0
        %3052 = vmatpush1.msra.mxu0 0.0
        %3053 = vmatprep.subr.mxu0 0.0
        %3054 = vmatpush1.msra.mxu0 0.0
        %3055 = vmatprep.subr.mxu0 0.0
        %3056 = vmatpush1.msra.mxu0 0.0
        %3057 = vmatprep.subr.mxu0 0.0
        %3058 = vmatpush1.msra.mxu0 0.0
        %3059 = vmatprep.subr.mxu0 0.0
        %3060 = vmatpush1.msra.mxu0 0.0
        %3061 = vmatprep.subr.mxu0 0.0
        %3062 = vmatpush1.msra.mxu0 0.0
        %3063 = vmatprep.subr.mxu0 0.0
        %3064 = vmatpush1.msra.mxu0 0.0
        %3065 = vmatprep.subr.mxu0 0.0
        %3066 = vmatpush1.msra.mxu0 0.0
        %3067 = vmatprep.subr.mxu0 0.0
        %3068 = vmatpush1.msra.mxu0 0.0
        %3069 = vmatprep.subr.mxu0 0.0
        %3070 = vmatpush1.msra.mxu0 0.0
        %3071 = vmatprep.subr.mxu0 0.0
        %3072 = vmatpush1.msra.mxu0 0.0
        %3073 = vmatprep.subr.mxu0 0.0
        %3074 = vmatpush1.msra.mxu0 0.0
        %3075 = vmatprep.subr.mxu0 0.0
        %3076 = vmatpush1.msra.mxu0 0.0
        %3077 = vmatprep.subr.mxu0 0.0
        %3078 = vmatpush1.msra.mxu0 0.0
        %3079 = vmatprep.subr.mxu0 0.0
        %3080 = vmatpush1.msra.mxu0 0.0
        %3081 = vmatprep.subr.mxu0 0.0
        %3082 = vmatpush1.msra.mxu0 0.0
        %3083 = vmatprep.subr.mxu0 0.0
        %3084 = vmatpush1.msra.mxu0 0.0
        %3085 = vmatprep.subr.mxu0 0.0
        %3086 = vmatpush1.msra.mxu0 0.0
        %3087 = vmatprep.subr.mxu0 0.0
        %3088 = vmatpush1.msra.mxu0 0.0
        %3089 = vmatprep.subr.mxu0 0.0
        %3090 = vmatpush1.msra.mxu0 0.0
        %3091 = vmatprep.subr.mxu0 0.0
        %3092 = vmatpush1.msra.mxu0 0.0
        %3093 = vmatprep.subr.mxu0 0.0
        %3094 = vmatpush1.msra.mxu0 0.0
        %3095 = vmatprep.subr.mxu0 0.0
        %3096 = vmatpush1.msra.mxu0 0.0
        %3097 = vmatprep.subr.mxu0 0.0
        %3098 = vmatpush1.msra.mxu0 0.0
        %3099 = vmatprep.subr.mxu0 0.0
        %3100 = vmatpush1.msra.mxu0 0.0
        %3101 = vmatprep.subr.mxu0 0.0
        %3102 = vmatpush1.msra.mxu0 0.0
        %3103 = vmatprep.mubr.f32.mxu0 0.0
        %3104 = vmatmul.mubr.f32.gmra.mrb[0].mxu0 %v2608
        %v3105 = vpop.f32.mrb[0].mxu0
        %v3106 = vadd.f32 %v3037, %v3105
        %v3107 = vpop.f32.mrb[0].mxu0
        %3108 = vmatprep.mubr.f32.mxu0 0.0
        %3109 = vmatmul.mubr.f32.gmra.mrb[0].mxu0 %v2611
        %v3110 = vpop.f32.mrb[0].mxu0
        %v3111 = vadd.f32 %v3037, %v3110
        %v3112 = vpop.f32.mrb[0].mxu0
        %3113 = vdwg.mxu0
        %s3114 = scalar_lea.vmem %s3, 672
        %v3115 = vld [vmem:[%s3114] sm:$0xff]
        %v3116 = vld [vmem:[%s3114 + $0x8] sm:$0xff]
        %v3117 = vld [vmem:[%s3114 + $0x10] sm:$0xff]
        %v3118 = vld [vmem:[%s3114 + $0x18] sm:$0xff]
        %s3119 = scalar_lea.vmem %s4, 21
        %v3120 = vld [vmem:[%s3119] sm:$0x1]
        %v3122 = vlaneseq
        %v3123 = vshrl.u32 %v3122, 7
        %v3124 = vsub.s32 0, %v3123
        %v3125 = vrot.slane %v3120, %v3124
        %3127 = vmatprep.subr.mxu0 0.0
        %3128 = vmatpush1.msra.mxu0 %v3115
        %3129 = vmatprep.subr.mxu0 0.0
        %3130 = vmatpush1.msra.mxu0 %v3116
        %3131 = vmatprep.subr.mxu0 0.0
        %3132 = vmatpush1.msra.mxu0 %v3117
        %3133 = vmatprep.subr.mxu0 0.0
        %3134 = vmatpush1.msra.mxu0 %v3118
        %3135 = vmatprep.subr.mxu0 0.0
        %3136 = vmatpush1.msra.mxu0 0.0
        %3137 = vmatprep.subr.mxu0 0.0
        %3138 = vmatpush1.msra.mxu0 0.0
        %3139 = vmatprep.subr.mxu0 0.0
        %3140 = vmatpush1.msra.mxu0 0.0
        %3141 = vmatprep.subr.mxu0 0.0
        %3142 = vmatpush1.msra.mxu0 0.0
        %3143 = vmatprep.subr.mxu0 0.0
        %3144 = vmatpush1.msra.mxu0 0.0
        %3145 = vmatprep.subr.mxu0 0.0
        %3146 = vmatpush1.msra.mxu0 0.0
        %3147 = vmatprep.subr.mxu0 0.0
        %3148 = vmatpush1.msra.mxu0 0.0
        %3149 = vmatprep.subr.mxu0 0.0
        %3150 = vmatpush1.msra.mxu0 0.0
        %3151 = vmatprep.subr.mxu0 0.0
        %3152 = vmatpush1.msra.mxu0 0.0
        %3153 = vmatprep.subr.mxu0 0.0
        %3154 = vmatpush1.msra.mxu0 0.0
        %3155 = vmatprep.subr.mxu0 0.0
        %3156 = vmatpush1.msra.mxu0 0.0
        %3157 = vmatprep.subr.mxu0 0.0
        %3158 = vmatpush1.msra.mxu0 0.0
        %3159 = vmatprep.subr.mxu0 0.0
        %3160 = vmatpush1.msra.mxu0 0.0
        %3161 = vmatprep.subr.mxu0 0.0
        %3162 = vmatpush1.msra.mxu0 0.0
        %3163 = vmatprep.subr.mxu0 0.0
        %3164 = vmatpush1.msra.mxu0 0.0
        %3165 = vmatprep.subr.mxu0 0.0
        %3166 = vmatpush1.msra.mxu0 0.0
        %3167 = vmatprep.subr.mxu0 0.0
        %3168 = vmatpush1.msra.mxu0 0.0
        %3169 = vmatprep.subr.mxu0 0.0
        %3170 = vmatpush1.msra.mxu0 0.0
        %3171 = vmatprep.subr.mxu0 0.0
        %3172 = vmatpush1.msra.mxu0 0.0
        %3173 = vmatprep.subr.mxu0 0.0
        %3174 = vmatpush1.msra.mxu0 0.0
        %3175 = vmatprep.subr.mxu0 0.0
        %3176 = vmatpush1.msra.mxu0 0.0
        %3177 = vmatprep.subr.mxu0 0.0
        %3178 = vmatpush1.msra.mxu0 0.0
        %3179 = vmatprep.subr.mxu0 0.0
        %3180 = vmatpush1.msra.mxu0 0.0
        %3181 = vmatprep.subr.mxu0 0.0
        %3182 = vmatpush1.msra.mxu0 0.0
        %3183 = vmatprep.subr.mxu0 0.0
        %3184 = vmatpush1.msra.mxu0 0.0
        %3185 = vmatprep.subr.mxu0 0.0
        %3186 = vmatpush1.msra.mxu0 0.0
        %3187 = vmatprep.subr.mxu0 0.0
        %3188 = vmatpush1.msra.mxu0 0.0
        %3189 = vmatprep.subr.mxu0 0.0
        %3190 = vmatpush1.msra.mxu0 0.0
        %3191 = vmatprep.mubr.f32.mxu0 0.0
        %3192 = vmatmul.mubr.f32.gmra.mrb[0].mxu0 %v2608
        %v3193 = vpop.f32.mrb[0].mxu0
        %v3194 = vadd.f32 %v3125, %v3193
        %v3195 = vpop.f32.mrb[0].mxu0
        %3196 = vmatprep.mubr.f32.mxu0 0.0
        %3197 = vmatmul.mubr.f32.gmra.mrb[0].mxu0 %v2611
        %v3198 = vpop.f32.mrb[0].mxu0
        %v3199 = vadd.f32 %v3125, %v3198
        %v3200 = vpop.f32.mrb[0].mxu0
        %3201 = vdwg.mxu0
        %v3203 = vsel %vm772, %v3023, 0
        %v3206 = vsel %vm772, %v3106, 0
        %v3209 = vsel %vm772, %v3111, 0
        %3211 = vmatprep.subr.mxu0 0.0
        %3212 = vmatpush1.xpose.msra.mxu0 %v3206
        %3213 = vmatprep.subr.mxu0 0.0
        %3214 = vmatpush1.xpose.msra.mxu0 %v3209
        %3215 = vmatprep.subr.mxu0 0.0
        %3216 = vmatpush1.xpose.msra.mxu0 0.0
        %3217 = vmatprep.subr.mxu0 0.0
        %3218 = vmatpush1.xpose.msra.mxu0 0.0
        %3219 = vmatprep.subr.mxu0 0.0
        %3220 = vmatpush1.xpose.msra.mxu0 0.0
        %3221 = vmatprep.subr.mxu0 0.0
        %3222 = vmatpush1.xpose.msra.mxu0 0.0
        %3223 = vmatprep.subr.mxu0 0.0
        %3224 = vmatpush1.xpose.msra.mxu0 0.0
        %3225 = vmatprep.subr.mxu0 0.0
        %3226 = vmatpush1.xpose.msra.mxu0 0.0
        %3227 = vmatprep.subr.mxu0 0.0
        %3228 = vmatpush1.xpose.msra.mxu0 0.0
        %3229 = vmatprep.subr.mxu0 0.0
        %3230 = vmatpush1.xpose.msra.mxu0 0.0
        %3231 = vmatprep.subr.mxu0 0.0
        %3232 = vmatpush1.xpose.msra.mxu0 0.0
        %3233 = vmatprep.subr.mxu0 0.0
        %3234 = vmatpush1.xpose.msra.mxu0 0.0
        %3235 = vmatprep.subr.mxu0 0.0
        %3236 = vmatpush1.xpose.msra.mxu0 0.0
        %3237 = vmatprep.subr.mxu0 0.0
        %3238 = vmatpush1.xpose.msra.mxu0 0.0
        %3239 = vmatprep.subr.mxu0 0.0
        %3240 = vmatpush1.xpose.msra.mxu0 0.0
        %3241 = vmatprep.subr.mxu0 0.0
        %3242 = vmatpush1.xpose.msra.mxu0 0.0
        %3243 = vmatprep.subr.mxu0 0.0
        %3244 = vmatpush1.xpose.msra.mxu0 0.0
        %3245 = vmatprep.subr.mxu0 0.0
        %3246 = vmatpush1.xpose.msra.mxu0 0.0
        %3247 = vmatprep.subr.mxu0 0.0
        %3248 = vmatpush1.xpose.msra.mxu0 0.0
        %3249 = vmatprep.subr.mxu0 0.0
        %3250 = vmatpush1.xpose.msra.mxu0 0.0
        %3251 = vmatprep.subr.mxu0 0.0
        %3252 = vmatpush1.xpose.msra.mxu0 0.0
        %3253 = vmatprep.subr.mxu0 0.0
        %3254 = vmatpush1.xpose.msra.mxu0 0.0
        %3255 = vmatprep.subr.mxu0 0.0
        %3256 = vmatpush1.xpose.msra.mxu0 0.0
        %3257 = vmatprep.subr.mxu0 0.0
        %3258 = vmatpush1.xpose.msra.mxu0 0.0
        %3259 = vmatprep.subr.mxu0 0.0
        %3260 = vmatpush1.xpose.msra.mxu0 0.0
        %3261 = vmatprep.subr.mxu0 0.0
        %3262 = vmatpush1.xpose.msra.mxu0 0.0
        %3263 = vmatprep.subr.mxu0 0.0
        %3264 = vmatpush1.xpose.msra.mxu0 0.0
        %3265 = vmatprep.subr.mxu0 0.0
        %3266 = vmatpush1.xpose.msra.mxu0 0.0
        %3267 = vmatprep.subr.mxu0 0.0
        %3268 = vmatpush1.xpose.msra.mxu0 0.0
        %3269 = vmatprep.subr.mxu0 0.0
        %3270 = vmatpush1.xpose.msra.mxu0 0.0
        %3271 = vmatprep.subr.mxu0 0.0
        %3272 = vmatpush1.xpose.msra.mxu0 0.0
        %3273 = vmatprep.subr.mxu0 0.0
        %3274 = vmatpush1.xpose.msra.mxu0 0.0
        %3275 = vmatprep.mubr.f32.mxu0 0.0
        %3276 = vmatmul.mubr.f32.gmra.mrb[0].mxu0 %v3203
        %v3277 = vpop.f32.mrb[0].mxu0
        %v3278 = vadd.f32 0.0, %v3277
        %v3279 = vpop.f32.mrb[0].mxu0
        %3280 = vdwg.mxu0
        %v3281 = vmul.f32 %v3278, 0.35355338
        %v3282 = vsel %vm2856, %v3281, -inf
        %3283 = vmax.xlane.f32.xlu0 %v3282
        %v3284 = vpop.xlane.xlu0 %3283
        %v3285 = vsub.f32 %v3281, %v3284
        %v3286 = vmul.f32 %v3285, 1.442695
        %v3287 = vpow.pop %v3286
        %v3288 = vsel %vm2856, %v3287, 0.0
        %3289 = vadd.xlane.f32.xlu0 %v3288
        %v3290 = vpop.xlane.xlu0 %3289
        %v3291 = vrcp.pop %v3290
        %v3292 = vmul.f32 %v3287, %v3291
        %v3294 = vsel %vm2856, %v3292, 0
        %3296 = vmatprep.subr.mxu0 0.0
        %3297 = vmatpush1.msra.mxu0 %v3194
        %3298 = vmatprep.subr.mxu0 0.0
        %3299 = vmatpush1.msra.mxu0 %v3199
        %3300 = vmatprep.subr.mxu0 0.0
        %3301 = vmatpush1.msra.mxu0 0.0
        %3302 = vmatprep.subr.mxu0 0.0
        %3303 = vmatpush1.msra.mxu0 0.0
        %3304 = vmatprep.subr.mxu0 0.0
        %3305 = vmatpush1.msra.mxu0 0.0
        %3306 = vmatprep.subr.mxu0 0.0
        %3307 = vmatpush1.msra.mxu0 0.0
        %3308 = vmatprep.subr.mxu0 0.0
        %3309 = vmatpush1.msra.mxu0 0.0
        %3310 = vmatprep.subr.mxu0 0.0
        %3311 = vmatpush1.msra.mxu0 0.0
        %3312 = vmatprep.subr.mxu0 0.0
        %3313 = vmatpush1.msra.mxu0 0.0
        %3314 = vmatprep.subr.mxu0 0.0
        %3315 = vmatpush1.msra.mxu0 0.0
        %3316 = vmatprep.subr.mxu0 0.0
        %3317 = vmatpush1.msra.mxu0 0.0
        %3318 = vmatprep.subr.mxu0 0.0
        %3319 = vmatpush1.msra.mxu0 0.0
        %3320 = vmatprep.subr.mxu0 0.0
        %3321 = vmatpush1.msra.mxu0 0.0
        %3322 = vmatprep.subr.mxu0 0.0
        %3323 = vmatpush1.msra.mxu0 0.0
        %3324 = vmatprep.subr.mxu0 0.0
        %3325 = vmatpush1.msra.mxu0 0.0
        %3326 = vmatprep.subr.mxu0 0.0
        %3327 = vmatpush1.msra.mxu0 0.0
        %3328 = vmatprep.subr.mxu0 0.0
        %3329 = vmatpush1.msra.mxu0 0.0
        %3330 = vmatprep.subr.mxu0 0.0
        %3331 = vmatpush1.msra.mxu0 0.0
        %3332 = vmatprep.subr.mxu0 0.0
        %3333 = vmatpush1.msra.mxu0 0.0
        %3334 = vmatprep.subr.mxu0 0.0
        %3335 = vmatpush1.msra.mxu0 0.0
        %3336 = vmatprep.subr.mxu0 0.0
        %3337 = vmatpush1.msra.mxu0 0.0
        %3338 = vmatprep.subr.mxu0 0.0
        %3339 = vmatpush1.msra.mxu0 0.0
        %3340 = vmatprep.subr.mxu0 0.0
        %3341 = vmatpush1.msra.mxu0 0.0
        %3342 = vmatprep.subr.mxu0 0.0
        %3343 = vmatpush1.msra.mxu0 0.0
        %3344 = vmatprep.subr.mxu0 0.0
        %3345 = vmatpush1.msra.mxu0 0.0
        %3346 = vmatprep.subr.mxu0 0.0
        %3347 = vmatpush1.msra.mxu0 0.0
        %3348 = vmatprep.subr.mxu0 0.0
        %3349 = vmatpush1.msra.mxu0 0.0
        %3350 = vmatprep.subr.mxu0 0.0
        %3351 = vmatpush1.msra.mxu0 0.0
        %3352 = vmatprep.subr.mxu0 0.0
        %3353 = vmatpush1.msra.mxu0 0.0
        %3354 = vmatprep.subr.mxu0 0.0
        %3355 = vmatpush1.msra.mxu0 0.0
        %3356 = vmatprep.subr.mxu0 0.0
        %3357 = vmatpush1.msra.mxu0 0.0
        %3358 = vmatprep.subr.mxu0 0.0
        %3359 = vmatpush1.msra.mxu0 0.0
        %3360 = vmatprep.mubr.f32.mxu0 0.0
        %3361 = vmatmul.mubr.f32.gmra.mrb[0].mxu0 %v3294
        %v3362 = vpop.f32.mrb[0].mxu0
        %v3363 = vadd.f32 0.0, %v3362
        %v3364 = vpop.f32.mrb[0].mxu0
        %3365 = vdwg.mxu0
        %s3366 = scalar_lea.vmem %s5, 40
        %v3367 = vld [vmem:[%s3366] sm:$0xff]
        %v3369 = vsel %vm772, %v3363, 0
        %3371 = vmatprep.subr.mxu0 0.0
        %3372 = vmatpush1.msra.mxu0 %v3367
        %3373 = vmatprep.subr.mxu0 0.0
        %3374 = vmatpush1.msra.mxu0 0.0
        %3375 = vmatprep.subr.mxu0 0.0
        %3376 = vmatpush1.msra.mxu0 0.0
        %3377 = vmatprep.subr.mxu0 0.0
        %3378 = vmatpush1.msra.mxu0 0.0
        %3379 = vmatprep.subr.mxu0 0.0
        %3380 = vmatpush1.msra.mxu0 0.0
        %3381 = vmatprep.subr.mxu0 0.0
        %3382 = vmatpush1.msra.mxu0 0.0
        %3383 = vmatprep.subr.mxu0 0.0
        %3384 = vmatpush1.msra.mxu0 0.0
        %3385 = vmatprep.subr.mxu0 0.0
        %3386 = vmatpush1.msra.mxu0 0.0
        %3387 = vmatprep.subr.mxu0 0.0
        %3388 = vmatpush1.msra.mxu0 0.0
        %3389 = vmatprep.subr.mxu0 0.0
        %3390 = vmatpush1.msra.mxu0 0.0
        %3391 = vmatprep.subr.mxu0 0.0
        %3392 = vmatpush1.msra.mxu0 0.0
        %3393 = vmatprep.subr.mxu0 0.0
        %3394 = vmatpush1.msra.mxu0 0.0
        %3395 = vmatprep.subr.mxu0 0.0
        %3396 = vmatpush1.msra.mxu0 0.0
        %3397 = vmatprep.subr.mxu0 0.0
        %3398 = vmatpush1.msra.mxu0 0.0
        %3399 = vmatprep.subr.mxu0 0.0
        %3400 = vmatpush1.msra.mxu0 0.0
        %3401 = vmatprep.subr.mxu0 0.0
        %3402 = vmatpush1.msra.mxu0 0.0
        %3403 = vmatprep.subr.mxu0 0.0
        %3404 = vmatpush1.msra.mxu0 0.0
        %3405 = vmatprep.subr.mxu0 0.0
        %3406 = vmatpush1.msra.mxu0 0.0
        %3407 = vmatprep.subr.mxu0 0.0
        %3408 = vmatpush1.msra.mxu0 0.0
        %3409 = vmatprep.subr.mxu0 0.0
        %3410 = vmatpush1.msra.mxu0 0.0
        %3411 = vmatprep.subr.mxu0 0.0
        %3412 = vmatpush1.msra.mxu0 0.0
        %3413 = vmatprep.subr.mxu0 0.0
        %3414 = vmatpush1.msra.mxu0 0.0
        %3415 = vmatprep.subr.mxu0 0.0
        %3416 = vmatpush1.msra.mxu0 0.0
        %3417 = vmatprep.subr.mxu0 0.0
        %3418 = vmatpush1.msra.mxu0 0.0
        %3419 = vmatprep.subr.mxu0 0.0
        %3420 = vmatpush1.msra.mxu0 0.0
        %3421 = vmatprep.subr.mxu0 0.0
        %3422 = vmatpush1.msra.mxu0 0.0
        %3423 = vmatprep.subr.mxu0 0.0
        %3424 = vmatpush1.msra.mxu0 0.0
        %3425 = vmatprep.subr.mxu0 0.0
        %3426 = vmatpush1.msra.mxu0 0.0
        %3427 = vmatprep.subr.mxu0 0.0
        %3428 = vmatpush1.msra.mxu0 0.0
        %3429 = vmatprep.subr.mxu0 0.0
        %3430 = vmatpush1.msra.mxu0 0.0
        %3431 = vmatprep.subr.mxu0 0.0
        %3432 = vmatpush1.msra.mxu0 0.0
        %3433 = vmatprep.subr.mxu0 0.0
        %3434 = vmatpush1.msra.mxu0 0.0
        %3435 = vmatprep.mubr.f32.mxu0 0.0
        %3436 = vmatmul.mubr.f32.gmra.mrb[0].mxu0 %v3369
        %v3437 = vpop.f32.mrb[0].mxu0
        %v3438 = vadd.f32 0.0, %v3437
        %v3439 = vpop.f32.mrb[0].mxu0
        %3440 = vdwg.mxu0
        %v3442 = vsel %vm772, %v2938, 0
        %3444 = vmatprep.subr.mxu0 0.0
        %3445 = vmatpush1.msra.mxu0 %v2942
        %3446 = vmatprep.subr.mxu0 0.0
        %3447 = vmatpush1.msra.mxu0 0.0
        %3448 = vmatprep.subr.mxu0 0.0
        %3449 = vmatpush1.msra.mxu0 0.0
        %3450 = vmatprep.subr.mxu0 0.0
        %3451 = vmatpush1.msra.mxu0 0.0
        %3452 = vmatprep.subr.mxu0 0.0
        %3453 = vmatpush1.msra.mxu0 0.0
        %3454 = vmatprep.subr.mxu0 0.0
        %3455 = vmatpush1.msra.mxu0 0.0
        %3456 = vmatprep.subr.mxu0 0.0
        %3457 = vmatpush1.msra.mxu0 0.0
        %3458 = vmatprep.subr.mxu0 0.0
        %3459 = vmatpush1.msra.mxu0 0.0
        %3460 = vmatprep.subr.mxu0 0.0
        %3461 = vmatpush1.msra.mxu0 0.0
        %3462 = vmatprep.subr.mxu0 0.0
        %3463 = vmatpush1.msra.mxu0 0.0
        %3464 = vmatprep.subr.mxu0 0.0
        %3465 = vmatpush1.msra.mxu0 0.0
        %3466 = vmatprep.subr.mxu0 0.0
        %3467 = vmatpush1.msra.mxu0 0.0
        %3468 = vmatprep.subr.mxu0 0.0
        %3469 = vmatpush1.msra.mxu0 0.0
        %3470 = vmatprep.subr.mxu0 0.0
        %3471 = vmatpush1.msra.mxu0 0.0
        %3472 = vmatprep.subr.mxu0 0.0
        %3473 = vmatpush1.msra.mxu0 0.0
        %3474 = vmatprep.subr.mxu0 0.0
        %3475 = vmatpush1.msra.mxu0 0.0
        %3476 = vmatprep.subr.mxu0 0.0
        %3477 = vmatpush1.msra.mxu0 0.0
        %3478 = vmatprep.subr.mxu0 0.0
        %3479 = vmatpush1.msra.mxu0 0.0
        %3480 = vmatprep.subr.mxu0 0.0
        %3481 = vmatpush1.msra.mxu0 0.0
        %3482 = vmatprep.subr.mxu0 0.0
        %3483 = vmatpush1.msra.mxu0 0.0
        %3484 = vmatprep.subr.mxu0 0.0
        %3485 = vmatpush1.msra.mxu0 0.0
        %3486 = vmatprep.subr.mxu0 0.0
        %3487 = vmatpush1.msra.mxu0 0.0
        %3488 = vmatprep.subr.mxu0 0.0
        %3489 = vmatpush1.msra.mxu0 0.0
        %3490 = vmatprep.subr.mxu0 0.0
        %3491 = vmatpush1.msra.mxu0 0.0
        %3492 = vmatprep.subr.mxu0 0.0
        %3493 = vmatpush1.msra.mxu0 0.0
        %3494 = vmatprep.subr.mxu0 0.0
        %3495 = vmatpush1.msra.mxu0 0.0
        %3496 = vmatprep.subr.mxu0 0.0
        %3497 = vmatpush1.msra.mxu0 0.0
        %3498 = vmatprep.subr.mxu0 0.0
        %3499 = vmatpush1.msra.mxu0 0.0
        %3500 = vmatprep.subr.mxu0 0.0
        %3501 = vmatpush1.msra.mxu0 0.0
        %3502 = vmatprep.subr.mxu0 0.0
        %3503 = vmatpush1.msra.mxu0 0.0
        %3504 = vmatprep.subr.mxu0 0.0
        %3505 = vmatpush1.msra.mxu0 0.0
        %3506 = vmatprep.subr.mxu0 0.0
        %3507 = vmatpush1.msra.mxu0 0.0
        %3508 = vmatprep.mubr.f32.mxu0 0.0
        %3509 = vmatmul.mubr.f32.gmra.mrb[0].mxu0 %v3442
        %v3510 = vpop.f32.mrb[0].mxu0
        %v3511 = vadd.f32 %v3438, %v3510
        %v3512 = vpop.f32.mrb[0].mxu0
        %3513 = vdwg.mxu0
        %s3514 = scalar_lea.vmem %s3, 448
        %v3515 = vld [vmem:[%s3514] sm:$0xff]
        %v3516 = vld [vmem:[%s3514 + $0x8] sm:$0xff]
        %v3517 = vld [vmem:[%s3514 + $0x10] sm:$0xff]
        %v3518 = vld [vmem:[%s3514 + $0x18] sm:$0xff]
        %s3519 = scalar_lea.vmem %s4, 14
        %v3520 = vld [vmem:[%s3519] sm:$0x1]
        %v3522 = vlaneseq
        %v3523 = vshrl.u32 %v3522, 7
        %v3524 = vsub.s32 0, %v3523
        %v3525 = vrot.slane %v3520, %v3524
        %3527 = vmatprep.subr.mxu0 0.0
        %3528 = vmatpush1.msra.mxu0 %v3515
        %3529 = vmatprep.subr.mxu0 0.0
        %3530 = vmatpush1.msra.mxu0 %v3516
        %3531 = vmatprep.subr.mxu0 0.0
        %3532 = vmatpush1.msra.mxu0 %v3517
        %3533 = vmatprep.subr.mxu0 0.0
        %3534 = vmatpush1.msra.mxu0 %v3518
        %3535 = vmatprep.subr.mxu0 0.0
        %3536 = vmatpush1.msra.mxu0 0.0
        %3537 = vmatprep.subr.mxu0 0.0
        %3538 = vmatpush1.msra.mxu0 0.0
        %3539 = vmatprep.subr.mxu0 0.0
        %3540 = vmatpush1.msra.mxu0 0.0
        %3541 = vmatprep.subr.mxu0 0.0
        %3542 = vmatpush1.msra.mxu0 0.0
        %3543 = vmatprep.subr.mxu0 0.0
        %3544 = vmatpush1.msra.mxu0 0.0
        %3545 = vmatprep.subr.mxu0 0.0
        %3546 = vmatpush1.msra.mxu0 0.0
        %3547 = vmatprep.subr.mxu0 0.0
        %3548 = vmatpush1.msra.mxu0 0.0
        %3549 = vmatprep.subr.mxu0 0.0
        %3550 = vmatpush1.msra.mxu0 0.0
        %3551 = vmatprep.subr.mxu0 0.0
        %3552 = vmatpush1.msra.mxu0 0.0
        %3553 = vmatprep.subr.mxu0 0.0
        %3554 = vmatpush1.msra.mxu0 0.0
        %3555 = vmatprep.subr.mxu0 0.0
        %3556 = vmatpush1.msra.mxu0 0.0
        %3557 = vmatprep.subr.mxu0 0.0
        %3558 = vmatpush1.msra.mxu0 0.0
        %3559 = vmatprep.subr.mxu0 0.0
        %3560 = vmatpush1.msra.mxu0 0.0
        %3561 = vmatprep.subr.mxu0 0.0
        %3562 = vmatpush1.msra.mxu0 0.0
        %3563 = vmatprep.subr.mxu0 0.0
        %3564 = vmatpush1.msra.mxu0 0.0
        %3565 = vmatprep.subr.mxu0 0.0
        %3566 = vmatpush1.msra.mxu0 0.0
        %3567 = vmatprep.subr.mxu0 0.0
        %3568 = vmatpush1.msra.mxu0 0.0
        %3569 = vmatprep.subr.mxu0 0.0
        %3570 = vmatpush1.msra.mxu0 0.0
        %3571 = vmatprep.subr.mxu0 0.0
        %3572 = vmatpush1.msra.mxu0 0.0
        %3573 = vmatprep.subr.mxu0 0.0
        %3574 = vmatpush1.msra.mxu0 0.0
        %3575 = vmatprep.subr.mxu0 0.0
        %3576 = vmatpush1.msra.mxu0 0.0
        %3577 = vmatprep.subr.mxu0 0.0
        %3578 = vmatpush1.msra.mxu0 0.0
        %3579 = vmatprep.subr.mxu0 0.0
        %3580 = vmatpush1.msra.mxu0 0.0
        %3581 = vmatprep.subr.mxu0 0.0
        %3582 = vmatpush1.msra.mxu0 0.0
        %3583 = vmatprep.subr.mxu0 0.0
        %3584 = vmatpush1.msra.mxu0 0.0
        %3585 = vmatprep.subr.mxu0 0.0
        %3586 = vmatpush1.msra.mxu0 0.0
        %3587 = vmatprep.subr.mxu0 0.0
        %3588 = vmatpush1.msra.mxu0 0.0
        %3589 = vmatprep.subr.mxu0 0.0
        %3590 = vmatpush1.msra.mxu0 0.0
        %3591 = vmatprep.mubr.f32.mxu0 0.0
        %3592 = vmatmul.mubr.f32.gmra.mrb[0].mxu0 %v2522
        %v3593 = vpop.f32.mrb[0].mxu0
        %v3594 = vadd.f32 %v3525, %v3593
        %v3595 = vpop.f32.mrb[0].mxu0
        %3596 = vdwg.mxu0
        %s3597 = scalar_lea.vmem %s3, 576
        %v3598 = vld [vmem:[%s3597] sm:$0xff]
        %v3599 = vld [vmem:[%s3597 + $0x8] sm:$0xff]
        %v3600 = vld [vmem:[%s3597 + $0x10] sm:$0xff]
        %v3601 = vld [vmem:[%s3597 + $0x18] sm:$0xff]
        %s3602 = scalar_lea.vmem %s4, 18
        %v3603 = vld [vmem:[%s3602] sm:$0x1]
        %v3605 = vlaneseq
        %v3606 = vshrl.u32 %v3605, 7
        %v3607 = vsub.s32 0, %v3606
        %v3608 = vrot.slane %v3603, %v3607
        %3610 = vmatprep.subr.mxu0 0.0
        %3611 = vmatpush1.msra.mxu0 %v3598
        %3612 = vmatprep.subr.mxu0 0.0
        %3613 = vmatpush1.msra.mxu0 %v3599
        %3614 = vmatprep.subr.mxu0 0.0
        %3615 = vmatpush1.msra.mxu0 %v3600
        %3616 = vmatprep.subr.mxu0 0.0
        %3617 = vmatpush1.msra.mxu0 %v3601
        %3618 = vmatprep.subr.mxu0 0.0
        %3619 = vmatpush1.msra.mxu0 0.0
        %3620 = vmatprep.subr.mxu0 0.0
        %3621 = vmatpush1.msra.mxu0 0.0
        %3622 = vmatprep.subr.mxu0 0.0
        %3623 = vmatpush1.msra.mxu0 0.0
        %3624 = vmatprep.subr.mxu0 0.0
        %3625 = vmatpush1.msra.mxu0 0.0
        %3626 = vmatprep.subr.mxu0 0.0
        %3627 = vmatpush1.msra.mxu0 0.0
        %3628 = vmatprep.subr.mxu0 0.0
        %3629 = vmatpush1.msra.mxu0 0.0
        %3630 = vmatprep.subr.mxu0 0.0
        %3631 = vmatpush1.msra.mxu0 0.0
        %3632 = vmatprep.subr.mxu0 0.0
        %3633 = vmatpush1.msra.mxu0 0.0
        %3634 = vmatprep.subr.mxu0 0.0
        %3635 = vmatpush1.msra.mxu0 0.0
        %3636 = vmatprep.subr.mxu0 0.0
        %3637 = vmatpush1.msra.mxu0 0.0
        %3638 = vmatprep.subr.mxu0 0.0
        %3639 = vmatpush1.msra.mxu0 0.0
        %3640 = vmatprep.subr.mxu0 0.0
        %3641 = vmatpush1.msra.mxu0 0.0
        %3642 = vmatprep.subr.mxu0 0.0
        %3643 = vmatpush1.msra.mxu0 0.0
        %3644 = vmatprep.subr.mxu0 0.0
        %3645 = vmatpush1.msra.mxu0 0.0
        %3646 = vmatprep.subr.mxu0 0.0
        %3647 = vmatpush1.msra.mxu0 0.0
        %3648 = vmatprep.subr.mxu0 0.0
        %3649 = vmatpush1.msra.mxu0 0.0
        %3650 = vmatprep.subr.mxu0 0.0
        %3651 = vmatpush1.msra.mxu0 0.0
        %3652 = vmatprep.subr.mxu0 0.0
        %3653 = vmatpush1.msra.mxu0 0.0
        %3654 = vmatprep.subr.mxu0 0.0
        %3655 = vmatpush1.msra.mxu0 0.0
        %3656 = vmatprep.subr.mxu0 0.0
        %3657 = vmatpush1.msra.mxu0 0.0
        %3658 = vmatprep.subr.mxu0 0.0
        %3659 = vmatpush1.msra.mxu0 0.0
        %3660 = vmatprep.subr.mxu0 0.0
        %3661 = vmatpush1.msra.mxu0 0.0
        %3662 = vmatprep.subr.mxu0 0.0
        %3663 = vmatpush1.msra.mxu0 0.0
        %3664 = vmatprep.subr.mxu0 0.0
        %3665 = vmatpush1.msra.mxu0 0.0
        %3666 = vmatprep.subr.mxu0 0.0
        %3667 = vmatpush1.msra.mxu0 0.0
        %3668 = vmatprep.subr.mxu0 0.0
        %3669 = vmatpush1.msra.mxu0 0.0
        %3670 = vmatprep.subr.mxu0 0.0
        %3671 = vmatpush1.msra.mxu0 0.0
        %3672 = vmatprep.subr.mxu0 0.0
        %3673 = vmatpush1.msra.mxu0 0.0
        %3674 = vmatprep.mubr.f32.mxu0 0.0
        %3675 = vmatmul.mubr.f32.gmra.mrb[0].mxu0 %v2608
        %v3676 = vpop.f32.mrb[0].mxu0
        %v3677 = vadd.f32 %v3608, %v3676
        %v3678 = vpop.f32.mrb[0].mxu0
        %3679 = vmatprep.mubr.f32.mxu0 0.0
        %3680 = vmatmul.mubr.f32.gmra.mrb[0].mxu0 %v2611
        %v3681 = vpop.f32.mrb[0].mxu0
        %v3682 = vadd.f32 %v3608, %v3681
        %v3683 = vpop.f32.mrb[0].mxu0
        %3684 = vdwg.mxu0
        %s3685 = scalar_lea.vmem %s3, 704
        %v3686 = vld [vmem:[%s3685] sm:$0xff]
        %v3687 = vld [vmem:[%s3685 + $0x8] sm:$0xff]
        %v3688 = vld [vmem:[%s3685 + $0x10] sm:$0xff]
        %v3689 = vld [vmem:[%s3685 + $0x18] sm:$0xff]
        %s3690 = scalar_lea.vmem %s4, 22
        %v3691 = vld [vmem:[%s3690] sm:$0x1]
        %v3693 = vlaneseq
        %v3694 = vshrl.u32 %v3693, 7
        %v3695 = vsub.s32 0, %v3694
        %v3696 = vrot.slane %v3691, %v3695
        %3698 = vmatprep.subr.mxu0 0.0
        %3699 = vmatpush1.msra.mxu0 %v3686
        %3700 = vmatprep.subr.mxu0 0.0
        %3701 = vmatpush1.msra.mxu0 %v3687
        %3702 = vmatprep.subr.mxu0 0.0
        %3703 = vmatpush1.msra.mxu0 %v3688
        %3704 = vmatprep.subr.mxu0 0.0
        %3705 = vmatpush1.msra.mxu0 %v3689
        %3706 = vmatprep.subr.mxu0 0.0
        %3707 = vmatpush1.msra.mxu0 0.0
        %3708 = vmatprep.subr.mxu0 0.0
        %3709 = vmatpush1.msra.mxu0 0.0
        %3710 = vmatprep.subr.mxu0 0.0
        %3711 = vmatpush1.msra.mxu0 0.0
        %3712 = vmatprep.subr.mxu0 0.0
        %3713 = vmatpush1.msra.mxu0 0.0
        %3714 = vmatprep.subr.mxu0 0.0
        %3715 = vmatpush1.msra.mxu0 0.0
        %3716 = vmatprep.subr.mxu0 0.0
        %3717 = vmatpush1.msra.mxu0 0.0
        %3718 = vmatprep.subr.mxu0 0.0
        %3719 = vmatpush1.msra.mxu0 0.0
        %3720 = vmatprep.subr.mxu0 0.0
        %3721 = vmatpush1.msra.mxu0 0.0
        %3722 = vmatprep.subr.mxu0 0.0
        %3723 = vmatpush1.msra.mxu0 0.0
        %3724 = vmatprep.subr.mxu0 0.0
        %3725 = vmatpush1.msra.mxu0 0.0
        %3726 = vmatprep.subr.mxu0 0.0
        %3727 = vmatpush1.msra.mxu0 0.0
        %3728 = vmatprep.subr.mxu0 0.0
        %3729 = vmatpush1.msra.mxu0 0.0
        %3730 = vmatprep.subr.mxu0 0.0
        %3731 = vmatpush1.msra.mxu0 0.0
        %3732 = vmatprep.subr.mxu0 0.0
        %3733 = vmatpush1.msra.mxu0 0.0
        %3734 = vmatprep.subr.mxu0 0.0
        %3735 = vmatpush1.msra.mxu0 0.0
        %3736 = vmatprep.subr.mxu0 0.0
        %3737 = vmatpush1.msra.mxu0 0.0
        %3738 = vmatprep.subr.mxu0 0.0
        %3739 = vmatpush1.msra.mxu0 0.0
        %3740 = vmatprep.subr.mxu0 0.0
        %3741 = vmatpush1.msra.mxu0 0.0
        %3742 = vmatprep.subr.mxu0 0.0
        %3743 = vmatpush1.msra.mxu0 0.0
        %3744 = vmatprep.subr.mxu0 0.0
        %3745 = vmatpush1.msra.mxu0 0.0
        %3746 = vmatprep.subr.mxu0 0.0
        %3747 = vmatpush1.msra.mxu0 0.0
        %3748 = vmatprep.subr.mxu0 0.0
        %3749 = vmatpush1.msra.mxu0 0.0
        %3750 = vmatprep.subr.mxu0 0.0
        %3751 = vmatpush1.msra.mxu0 0.0
        %3752 = vmatprep.subr.mxu0 0.0
        %3753 = vmatpush1.msra.mxu0 0.0
        %3754 = vmatprep.subr.mxu0 0.0
        %3755 = vmatpush1.msra.mxu0 0.0
        %3756 = vmatprep.subr.mxu0 0.0
        %3757 = vmatpush1.msra.mxu0 0.0
        %3758 = vmatprep.subr.mxu0 0.0
        %3759 = vmatpush1.msra.mxu0 0.0
        %3760 = vmatprep.subr.mxu0 0.0
        %3761 = vmatpush1.msra.mxu0 0.0
        %3762 = vmatprep.mubr.f32.mxu0 0.0
        %3763 = vmatmul.mubr.f32.gmra.mrb[0].mxu0 %v2608
        %v3764 = vpop.f32.mrb[0].mxu0
        %v3765 = vadd.f32 %v3696, %v3764
        %v3766 = vpop.f32.mrb[0].mxu0
        %3767 = vmatprep.mubr.f32.mxu0 0.0
        %3768 = vmatmul.mubr.f32.gmra.mrb[0].mxu0 %v2611
        %v3769 = vpop.f32.mrb[0].mxu0
        %v3770 = vadd.f32 %v3696, %v3769
        %v3771 = vpop.f32.mrb[0].mxu0
        %3772 = vdwg.mxu0
        %v3774 = vsel %vm772, %v3594, 0
        %v3777 = vsel %vm772, %v3677, 0
        %v3780 = vsel %vm772, %v3682, 0
        %3782 = vmatprep.subr.mxu0 0.0
        %3783 = vmatpush1.xpose.msra.mxu0 %v3777
        %3784 = vmatprep.subr.mxu0 0.0
        %3785 = vmatpush1.xpose.msra.mxu0 %v3780
        %3786 = vmatprep.subr.mxu0 0.0
        %3787 = vmatpush1.xpose.msra.mxu0 0.0
        %3788 = vmatprep.subr.mxu0 0.0
        %3789 = vmatpush1.xpose.msra.mxu0 0.0
        %3790 = vmatprep.subr.mxu0 0.0
        %3791 = vmatpush1.xpose.msra.mxu0 0.0
        %3792 = vmatprep.subr.mxu0 0.0
        %3793 = vmatpush1.xpose.msra.mxu0 0.0
        %3794 = vmatprep.subr.mxu0 0.0
        %3795 = vmatpush1.xpose.msra.mxu0 0.0
        %3796 = vmatprep.subr.mxu0 0.0
        %3797 = vmatpush1.xpose.msra.mxu0 0.0
        %3798 = vmatprep.subr.mxu0 0.0
        %3799 = vmatpush1.xpose.msra.mxu0 0.0
        %3800 = vmatprep.subr.mxu0 0.0
        %3801 = vmatpush1.xpose.msra.mxu0 0.0
        %3802 = vmatprep.subr.mxu0 0.0
        %3803 = vmatpush1.xpose.msra.mxu0 0.0
        %3804 = vmatprep.subr.mxu0 0.0
        %3805 = vmatpush1.xpose.msra.mxu0 0.0
        %3806 = vmatprep.subr.mxu0 0.0
        %3807 = vmatpush1.xpose.msra.mxu0 0.0
        %3808 = vmatprep.subr.mxu0 0.0
        %3809 = vmatpush1.xpose.msra.mxu0 0.0
        %3810 = vmatprep.subr.mxu0 0.0
        %3811 = vmatpush1.xpose.msra.mxu0 0.0
        %3812 = vmatprep.subr.mxu0 0.0
        %3813 = vmatpush1.xpose.msra.mxu0 0.0
        %3814 = vmatprep.subr.mxu0 0.0
        %3815 = vmatpush1.xpose.msra.mxu0 0.0
        %3816 = vmatprep.subr.mxu0 0.0
        %3817 = vmatpush1.xpose.msra.mxu0 0.0
        %3818 = vmatprep.subr.mxu0 0.0
        %3819 = vmatpush1.xpose.msra.mxu0 0.0
        %3820 = vmatprep.subr.mxu0 0.0
        %3821 = vmatpush1.xpose.msra.mxu0 0.0
        %3822 = vmatprep.subr.mxu0 0.0
        %3823 = vmatpush1.xpose.msra.mxu0 0.0
        %3824 = vmatprep.subr.mxu0 0.0
        %3825 = vmatpush1.xpose.msra.mxu0 0.0
        %3826 = vmatprep.subr.mxu0 0.0
        %3827 = vmatpush1.xpose.msra.mxu0 0.0
        %3828 = vmatprep.subr.mxu0 0.0
        %3829 = vmatpush1.xpose.msra.mxu0 0.0
        %3830 = vmatprep.subr.mxu0 0.0
        %3831 = vmatpush1.xpose.msra.mxu0 0.0
        %3832 = vmatprep.subr.mxu0 0.0
        %3833 = vmatpush1.xpose.msra.mxu0 0.0
        %3834 = vmatprep.subr.mxu0 0.0
        %3835 = vmatpush1.xpose.msra.mxu0 0.0
        %3836 = vmatprep.subr.mxu0 0.0
        %3837 = vmatpush1.xpose.msra.mxu0 0.0
        %3838 = vmatprep.subr.mxu0 0.0
        %3839 = vmatpush1.xpose.msra.mxu0 0.0
        %3840 = vmatprep.subr.mxu0 0.0
        %3841 = vmatpush1.xpose.msra.mxu0 0.0
        %3842 = vmatprep.subr.mxu0 0.0
        %3843 = vmatpush1.xpose.msra.mxu0 0.0
        %3844 = vmatprep.subr.mxu0 0.0
        %3845 = vmatpush1.xpose.msra.mxu0 0.0
        %3846 = vmatprep.mubr.f32.mxu0 0.0
        %3847 = vmatmul.mubr.f32.gmra.mrb[0].mxu0 %v3774
        %v3848 = vpop.f32.mrb[0].mxu0
        %v3849 = vadd.f32 0.0, %v3848
        %v3850 = vpop.f32.mrb[0].mxu0
        %3851 = vdwg.mxu0
        %v3852 = vmul.f32 %v3849, 0.35355338
        %v3853 = vsel %vm2856, %v3852, -inf
        %3854 = vmax.xlane.f32.xlu0 %v3853
        %v3855 = vpop.xlane.xlu0 %3854
        %v3856 = vsub.f32 %v3852, %v3855
        %v3857 = vmul.f32 %v3856, 1.442695
        %v3858 = vpow.pop %v3857
        %v3859 = vsel %vm2856, %v3858, 0.0
        %3860 = vadd.xlane.f32.xlu0 %v3859
        %v3861 = vpop.xlane.xlu0 %3860
        %v3862 = vrcp.pop %v3861
        %v3863 = vmul.f32 %v3858, %v3862
        %v3865 = vsel %vm2856, %v3863, 0
        %3867 = vmatprep.subr.mxu0 0.0
        %3868 = vmatpush1.msra.mxu0 %v3765
        %3869 = vmatprep.subr.mxu0 0.0
        %3870 = vmatpush1.msra.mxu0 %v3770
        %3871 = vmatprep.subr.mxu0 0.0
        %3872 = vmatpush1.msra.mxu0 0.0
        %3873 = vmatprep.subr.mxu0 0.0
        %3874 = vmatpush1.msra.mxu0 0.0
        %3875 = vmatprep.subr.mxu0 0.0
        %3876 = vmatpush1.msra.mxu0 0.0
        %3877 = vmatprep.subr.mxu0 0.0
        %3878 = vmatpush1.msra.mxu0 0.0
        %3879 = vmatprep.subr.mxu0 0.0
        %3880 = vmatpush1.msra.mxu0 0.0
        %3881 = vmatprep.subr.mxu0 0.0
        %3882 = vmatpush1.msra.mxu0 0.0
        %3883 = vmatprep.subr.mxu0 0.0
        %3884 = vmatpush1.msra.mxu0 0.0
        %3885 = vmatprep.subr.mxu0 0.0
        %3886 = vmatpush1.msra.mxu0 0.0
        %3887 = vmatprep.subr.mxu0 0.0
        %3888 = vmatpush1.msra.mxu0 0.0
        %3889 = vmatprep.subr.mxu0 0.0
        %3890 = vmatpush1.msra.mxu0 0.0
        %3891 = vmatprep.subr.mxu0 0.0
        %3892 = vmatpush1.msra.mxu0 0.0
        %3893 = vmatprep.subr.mxu0 0.0
        %3894 = vmatpush1.msra.mxu0 0.0
        %3895 = vmatprep.subr.mxu0 0.0
        %3896 = vmatpush1.msra.mxu0 0.0
        %3897 = vmatprep.subr.mxu0 0.0
        %3898 = vmatpush1.msra.mxu0 0.0
        %3899 = vmatprep.subr.mxu0 0.0
        %3900 = vmatpush1.msra.mxu0 0.0
        %3901 = vmatprep.subr.mxu0 0.0
        %3902 = vmatpush1.msra.mxu0 0.0
        %3903 = vmatprep.subr.mxu0 0.0
        %3904 = vmatpush1.msra.mxu0 0.0
        %3905 = vmatprep.subr.mxu0 0.0
        %3906 = vmatpush1.msra.mxu0 0.0
        %3907 = vmatprep.subr.mxu0 0.0
        %3908 = vmatpush1.msra.mxu0 0.0
        %3909 = vmatprep.subr.mxu0 0.0
        %3910 = vmatpush1.msra.mxu0 0.0
        %3911 = vmatprep.subr.mxu0 0.0
        %3912 = vmatpush1.msra.mxu0 0.0
        %3913 = vmatprep.subr.mxu0 0.0
        %3914 = vmatpush1.msra.mxu0 0.0
        %3915 = vmatprep.subr.mxu0 0.0
        %3916 = vmatpush1.msra.mxu0 0.0
        %3917 = vmatprep.subr.mxu0 0.0
        %3918 = vmatpush1.msra.mxu0 0.0
        %3919 = vmatprep.subr.mxu0 0.0
        %3920 = vmatpush1.msra.mxu0 0.0
        %3921 = vmatprep.subr.mxu0 0.0
        %3922 = vmatpush1.msra.mxu0 0.0
        %3923 = vmatprep.subr.mxu0 0.0
        %3924 = vmatpush1.msra.mxu0 0.0
        %3925 = vmatprep.subr.mxu0 0.0
        %3926 = vmatpush1.msra.mxu0 0.0
        %3927 = vmatprep.subr.mxu0 0.0
        %3928 = vmatpush1.msra.mxu0 0.0
        %3929 = vmatprep.subr.mxu0 0.0
        %3930 = vmatpush1.msra.mxu0 0.0
        %3931 = vmatprep.mubr.f32.mxu0 0.0
        %3932 = vmatmul.mubr.f32.gmra.mrb[0].mxu0 %v3865
        %v3933 = vpop.f32.mrb[0].mxu0
        %v3934 = vadd.f32 0.0, %v3933
        %v3935 = vpop.f32.mrb[0].mxu0
        %3936 = vdwg.mxu0
        %s3937 = scalar_lea.vmem %s5, 48
        %v3938 = vld [vmem:[%s3937] sm:$0xff]
        %v3940 = vsel %vm772, %v3934, 0
        %3942 = vmatprep.subr.mxu0 0.0
        %3943 = vmatpush1.msra.mxu0 %v3938
        %3944 = vmatprep.subr.mxu0 0.0
        %3945 = vmatpush1.msra.mxu0 0.0
        %3946 = vmatprep.subr.mxu0 0.0
        %3947 = vmatpush1.msra.mxu0 0.0
        %3948 = vmatprep.subr.mxu0 0.0
        %3949 = vmatpush1.msra.mxu0 0.0
        %3950 = vmatprep.subr.mxu0 0.0
        %3951 = vmatpush1.msra.mxu0 0.0
        %3952 = vmatprep.subr.mxu0 0.0
        %3953 = vmatpush1.msra.mxu0 0.0
        %3954 = vmatprep.subr.mxu0 0.0
        %3955 = vmatpush1.msra.mxu0 0.0
        %3956 = vmatprep.subr.mxu0 0.0
        %3957 = vmatpush1.msra.mxu0 0.0
        %3958 = vmatprep.subr.mxu0 0.0
        %3959 = vmatpush1.msra.mxu0 0.0
        %3960 = vmatprep.subr.mxu0 0.0
        %3961 = vmatpush1.msra.mxu0 0.0
        %3962 = vmatprep.subr.mxu0 0.0
        %3963 = vmatpush1.msra.mxu0 0.0
        %3964 = vmatprep.subr.mxu0 0.0
        %3965 = vmatpush1.msra.mxu0 0.0
        %3966 = vmatprep.subr.mxu0 0.0
        %3967 = vmatpush1.msra.mxu0 0.0
        %3968 = vmatprep.subr.mxu0 0.0
        %3969 = vmatpush1.msra.mxu0 0.0
        %3970 = vmatprep.subr.mxu0 0.0
        %3971 = vmatpush1.msra.mxu0 0.0
        %3972 = vmatprep.subr.mxu0 0.0
        %3973 = vmatpush1.msra.mxu0 0.0
        %3974 = vmatprep.subr.mxu0 0.0
        %3975 = vmatpush1.msra.mxu0 0.0
        %3976 = vmatprep.subr.mxu0 0.0
        %3977 = vmatpush1.msra.mxu0 0.0
        %3978 = vmatprep.subr.mxu0 0.0
        %3979 = vmatpush1.msra.mxu0 0.0
        %3980 = vmatprep.subr.mxu0 0.0
        %3981 = vmatpush1.msra.mxu0 0.0
        %3982 = vmatprep.subr.mxu0 0.0
        %3983 = vmatpush1.msra.mxu0 0.0
        %3984 = vmatprep.subr.mxu0 0.0
        %3985 = vmatpush1.msra.mxu0 0.0
        %3986 = vmatprep.subr.mxu0 0.0
        %3987 = vmatpush1.msra.mxu0 0.0
        %3988 = vmatprep.subr.mxu0 0.0
        %3989 = vmatpush1.msra.mxu0 0.0
        %3990 = vmatprep.subr.mxu0 0.0
        %3991 = vmatpush1.msra.mxu0 0.0
        %3992 = vmatprep.subr.mxu0 0.0
        %3993 = vmatpush1.msra.mxu0 0.0
        %3994 = vmatprep.subr.mxu0 0.0
        %3995 = vmatpush1.msra.mxu0 0.0
        %3996 = vmatprep.subr.mxu0 0.0
        %3997 = vmatpush1.msra.mxu0 0.0
        %3998 = vmatprep.subr.mxu0 0.0
        %3999 = vmatpush1.msra.mxu0 0.0
        %4000 = vmatprep.subr.mxu0 0.0
        %4001 = vmatpush1.msra.mxu0 0.0
        %4002 = vmatprep.subr.mxu0 0.0
        %4003 = vmatpush1.msra.mxu0 0.0
        %4004 = vmatprep.subr.mxu0 0.0
        %4005 = vmatpush1.msra.mxu0 0.0
        %4006 = vmatprep.mubr.f32.mxu0 0.0
        %4007 = vmatmul.mubr.f32.gmra.mrb[0].mxu0 %v3940
        %v4008 = vpop.f32.mrb[0].mxu0
        %v4009 = vadd.f32 0.0, %v4008
        %v4010 = vpop.f32.mrb[0].mxu0
        %4011 = vdwg.mxu0
        %v4012 = vadd.f32 %v3511, %v4009
        %s4013 = scalar_lea.vmem %s3, 480
        %v4014 = vld [vmem:[%s4013] sm:$0xff]
        %v4015 = vld [vmem:[%s4013 + $0x8] sm:$0xff]
        %v4016 = vld [vmem:[%s4013 + $0x10] sm:$0xff]
        %v4017 = vld [vmem:[%s4013 + $0x18] sm:$0xff]
        %s4018 = scalar_lea.vmem %s4, 15
        %v4019 = vld [vmem:[%s4018] sm:$0x1]
        %v4021 = vlaneseq
        %v4022 = vshrl.u32 %v4021, 7
        %v4023 = vsub.s32 0, %v4022
        %v4024 = vrot.slane %v4019, %v4023
        %4026 = vmatprep.subr.mxu0 0.0
        %4027 = vmatpush1.msra.mxu0 %v4014
        %4028 = vmatprep.subr.mxu0 0.0
        %4029 = vmatpush1.msra.mxu0 %v4015
        %4030 = vmatprep.subr.mxu0 0.0
        %4031 = vmatpush1.msra.mxu0 %v4016
        %4032 = vmatprep.subr.mxu0 0.0
        %4033 = vmatpush1.msra.mxu0 %v4017
        %4034 = vmatprep.subr.mxu0 0.0
        %4035 = vmatpush1.msra.mxu0 0.0
        %4036 = vmatprep.subr.mxu0 0.0
        %4037 = vmatpush1.msra.mxu0 0.0
        %4038 = vmatprep.subr.mxu0 0.0
        %4039 = vmatpush1.msra.mxu0 0.0
        %4040 = vmatprep.subr.mxu0 0.0
        %4041 = vmatpush1.msra.mxu0 0.0
        %4042 = vmatprep.subr.mxu0 0.0
        %4043 = vmatpush1.msra.mxu0 0.0
        %4044 = vmatprep.subr.mxu0 0.0
        %4045 = vmatpush1.msra.mxu0 0.0
        %4046 = vmatprep.subr.mxu0 0.0
        %4047 = vmatpush1.msra.mxu0 0.0
        %4048 = vmatprep.subr.mxu0 0.0
        %4049 = vmatpush1.msra.mxu0 0.0
        %4050 = vmatprep.subr.mxu0 0.0
        %4051 = vmatpush1.msra.mxu0 0.0
        %4052 = vmatprep.subr.mxu0 0.0
        %4053 = vmatpush1.msra.mxu0 0.0
        %4054 = vmatprep.subr.mxu0 0.0
        %4055 = vmatpush1.msra.mxu0 0.0
        %4056 = vmatprep.subr.mxu0 0.0
        %4057 = vmatpush1.msra.mxu0 0.0
        %4058 = vmatprep.subr.mxu0 0.0
        %4059 = vmatpush1.msra.mxu0 0.0
        %4060 = vmatprep.subr.mxu0 0.0
        %4061 = vmatpush1.msra.mxu0 0.0
        %4062 = vmatprep.subr.mxu0 0.0
        %4063 = vmatpush1.msra.mxu0 0.0
        %4064 = vmatprep.subr.mxu0 0.0
        %4065 = vmatpush1.msra.mxu0 0.0
        %4066 = vmatprep.subr.mxu0 0.0
        %4067 = vmatpush1.msra.mxu0 0.0
        %4068 = vmatprep.subr.mxu0 0.0
        %4069 = vmatpush1.msra.mxu0 0.0
        %4070 = vmatprep.subr.mxu0 0.0
        %4071 = vmatpush1.msra.mxu0 0.0
        %4072 = vmatprep.subr.mxu0 0.0
        %4073 = vmatpush1.msra.mxu0 0.0
        %4074 = vmatprep.subr.mxu0 0.0
        %4075 = vmatpush1.msra.mxu0 0.0
        %4076 = vmatprep.subr.mxu0 0.0
        %4077 = vmatpush1.msra.mxu0 0.0
        %4078 = vmatprep.subr.mxu0 0.0
        %4079 = vmatpush1.msra.mxu0 0.0
        %4080 = vmatprep.subr.mxu0 0.0
        %4081 = vmatpush1.msra.mxu0 0.0
        %4082 = vmatprep.subr.mxu0 0.0
        %4083 = vmatpush1.msra.mxu0 0.0
        %4084 = vmatprep.subr.mxu0 0.0
        %4085 = vmatpush1.msra.mxu0 0.0
        %4086 = vmatprep.subr.mxu0 0.0
        %4087 = vmatpush1.msra.mxu0 0.0
        %4088 = vmatprep.subr.mxu0 0.0
        %4089 = vmatpush1.msra.mxu0 0.0
        %4090 = vmatprep.mubr.f32.mxu0 0.0
        %4091 = vmatmul.mubr.f32.gmra.mrb[0].mxu0 %v2522
        %v4092 = vpop.f32.mrb[0].mxu0
        %v4093 = vadd.f32 %v4024, %v4092
        %v4094 = vpop.f32.mrb[0].mxu0
        %4095 = vdwg.mxu0
        %s4096 = scalar_lea.vmem %s3, 608
        %v4097 = vld [vmem:[%s4096] sm:$0xff]
        %v4098 = vld [vmem:[%s4096 + $0x8] sm:$0xff]
        %v4099 = vld [vmem:[%s4096 + $0x10] sm:$0xff]
        %v4100 = vld [vmem:[%s4096 + $0x18] sm:$0xff]
        %s4101 = scalar_lea.vmem %s4, 19
        %v4102 = vld [vmem:[%s4101] sm:$0x1]
        %v4104 = vlaneseq
        %v4105 = vshrl.u32 %v4104, 7
        %v4106 = vsub.s32 0, %v4105
        %v4107 = vrot.slane %v4102, %v4106
        %4109 = vmatprep.subr.mxu0 0.0
        %4110 = vmatpush1.msra.mxu0 %v4097
        %4111 = vmatprep.subr.mxu0 0.0
        %4112 = vmatpush1.msra.mxu0 %v4098
        %4113 = vmatprep.subr.mxu0 0.0
        %4114 = vmatpush1.msra.mxu0 %v4099
        %4115 = vmatprep.subr.mxu0 0.0
        %4116 = vmatpush1.msra.mxu0 %v4100
        %4117 = vmatprep.subr.mxu0 0.0
        %4118 = vmatpush1.msra.mxu0 0.0
        %4119 = vmatprep.subr.mxu0 0.0
        %4120 = vmatpush1.msra.mxu0 0.0
        %4121 = vmatprep.subr.mxu0 0.0
        %4122 = vmatpush1.msra.mxu0 0.0
        %4123 = vmatprep.subr.mxu0 0.0
        %4124 = vmatpush1.msra.mxu0 0.0
        %4125 = vmatprep.subr.mxu0 0.0
        %4126 = vmatpush1.msra.mxu0 0.0
        %4127 = vmatprep.subr.mxu0 0.0
        %4128 = vmatpush1.msra.mxu0 0.0
        %4129 = vmatprep.subr.mxu0 0.0
        %4130 = vmatpush1.msra.mxu0 0.0
        %4131 = vmatprep.subr.mxu0 0.0
        %4132 = vmatpush1.msra.mxu0 0.0
        %4133 = vmatprep.subr.mxu0 0.0
        %4134 = vmatpush1.msra.mxu0 0.0
        %4135 = vmatprep.subr.mxu0 0.0
        %4136 = vmatpush1.msra.mxu0 0.0
        %4137 = vmatprep.subr.mxu0 0.0
        %4138 = vmatpush1.msra.mxu0 0.0
        %4139 = vmatprep.subr.mxu0 0.0
        %4140 = vmatpush1.msra.mxu0 0.0
        %4141 = vmatprep.subr.mxu0 0.0
        %4142 = vmatpush1.msra.mxu0 0.0
        %4143 = vmatprep.subr.mxu0 0.0
        %4144 = vmatpush1.msra.mxu0 0.0
        %4145 = vmatprep.subr.mxu0 0.0
        %4146 = vmatpush1.msra.mxu0 0.0
        %4147 = vmatprep.subr.mxu0 0.0
        %4148 = vmatpush1.msra.mxu0 0.0
        %4149 = vmatprep.subr.mxu0 0.0
        %4150 = vmatpush1.msra.mxu0 0.0
        %4151 = vmatprep.subr.mxu0 0.0
        %4152 = vmatpush1.msra.mxu0 0.0
        %4153 = vmatprep.subr.mxu0 0.0
        %4154 = vmatpush1.msra.mxu0 0.0
        %4155 = vmatprep.subr.mxu0 0.0
        %4156 = vmatpush1.msra.mxu0 0.0
        %4157 = vmatprep.subr.mxu0 0.0
        %4158 = vmatpush1.msra.mxu0 0.0
        %4159 = vmatprep.subr.mxu0 0.0
        %4160 = vmatpush1.msra.mxu0 0.0
        %4161 = vmatprep.subr.mxu0 0.0
        %4162 = vmatpush1.msra.mxu0 0.0
        %4163 = vmatprep.subr.mxu0 0.0
        %4164 = vmatpush1.msra.mxu0 0.0
        %4165 = vmatprep.subr.mxu0 0.0
        %4166 = vmatpush1.msra.mxu0 0.0
        %4167 = vmatprep.subr.mxu0 0.0
        %4168 = vmatpush1.msra.mxu0 0.0
        %4169 = vmatprep.subr.mxu0 0.0
        %4170 = vmatpush1.msra.mxu0 0.0
        %4171 = vmatprep.subr.mxu0 0.0
        %4172 = vmatpush1.msra.mxu0 0.0
        %4173 = vmatprep.mubr.f32.mxu0 0.0
        %4174 = vmatmul.mubr.f32.gmra.mrb[0].mxu0 %v2608
        %v4175 = vpop.f32.mrb[0].mxu0
        %v4176 = vadd.f32 %v4107, %v4175
        %v4177 = vpop.f32.mrb[0].mxu0
        %4178 = vmatprep.mubr.f32.mxu0 0.0
        %4179 = vmatmul.mubr.f32.gmra.mrb[0].mxu0 %v2611
        %v4180 = vpop.f32.mrb[0].mxu0
        %v4181 = vadd.f32 %v4107, %v4180
        %v4182 = vpop.f32.mrb[0].mxu0
        %4183 = vdwg.mxu0
        %s4184 = scalar_lea.vmem %s3, 736
        %v4185 = vld [vmem:[%s4184] sm:$0xff]
        %v4186 = vld [vmem:[%s4184 + $0x8] sm:$0xff]
        %v4187 = vld [vmem:[%s4184 + $0x10] sm:$0xff]
        %v4188 = vld [vmem:[%s4184 + $0x18] sm:$0xff]
        %s4189 = scalar_lea.vmem %s4, 23
        %v4190 = vld [vmem:[%s4189] sm:$0x1]
        %v4192 = vlaneseq
        %v4193 = vshrl.u32 %v4192, 7
        %v4194 = vsub.s32 0, %v4193
        %v4195 = vrot.slane %v4190, %v4194
        %4197 = vmatprep.subr.mxu0 0.0
        %4198 = vmatpush1.msra.mxu0 %v4185
        %4199 = vmatprep.subr.mxu0 0.0
        %4200 = vmatpush1.msra.mxu0 %v4186
        %4201 = vmatprep.subr.mxu0 0.0
        %4202 = vmatpush1.msra.mxu0 %v4187
        %4203 = vmatprep.subr.mxu0 0.0
        %4204 = vmatpush1.msra.mxu0 %v4188
        %4205 = vmatprep.subr.mxu0 0.0
        %4206 = vmatpush1.msra.mxu0 0.0
        %4207 = vmatprep.subr.mxu0 0.0
        %4208 = vmatpush1.msra.mxu0 0.0
        %4209 = vmatprep.subr.mxu0 0.0
        %4210 = vmatpush1.msra.mxu0 0.0
        %4211 = vmatprep.subr.mxu0 0.0
        %4212 = vmatpush1.msra.mxu0 0.0
        %4213 = vmatprep.subr.mxu0 0.0
        %4214 = vmatpush1.msra.mxu0 0.0
        %4215 = vmatprep.subr.mxu0 0.0
        %4216 = vmatpush1.msra.mxu0 0.0
        %4217 = vmatprep.subr.mxu0 0.0
        %4218 = vmatpush1.msra.mxu0 0.0
        %4219 = vmatprep.subr.mxu0 0.0
        %4220 = vmatpush1.msra.mxu0 0.0
        %4221 = vmatprep.subr.mxu0 0.0
        %4222 = vmatpush1.msra.mxu0 0.0
        %4223 = vmatprep.subr.mxu0 0.0
        %4224 = vmatpush1.msra.mxu0 0.0
        %4225 = vmatprep.subr.mxu0 0.0
        %4226 = vmatpush1.msra.mxu0 0.0
        %4227 = vmatprep.subr.mxu0 0.0
        %4228 = vmatpush1.msra.mxu0 0.0
        %4229 = vmatprep.subr.mxu0 0.0
        %4230 = vmatpush1.msra.mxu0 0.0
        %4231 = vmatprep.subr.mxu0 0.0
        %4232 = vmatpush1.msra.mxu0 0.0
        %4233 = vmatprep.subr.mxu0 0.0
        %4234 = vmatpush1.msra.mxu0 0.0
        %4235 = vmatprep.subr.mxu0 0.0
        %4236 = vmatpush1.msra.mxu0 0.0
        %4237 = vmatprep.subr.mxu0 0.0
        %4238 = vmatpush1.msra.mxu0 0.0
        %4239 = vmatprep.subr.mxu0 0.0
        %4240 = vmatpush1.msra.mxu0 0.0
        %4241 = vmatprep.subr.mxu0 0.0
        %4242 = vmatpush1.msra.mxu0 0.0
        %4243 = vmatprep.subr.mxu0 0.0
        %4244 = vmatpush1.msra.mxu0 0.0
        %4245 = vmatprep.subr.mxu0 0.0
        %4246 = vmatpush1.msra.mxu0 0.0
        %4247 = vmatprep.subr.mxu0 0.0
        %4248 = vmatpush1.msra.mxu0 0.0
        %4249 = vmatprep.subr.mxu0 0.0
        %4250 = vmatpush1.msra.mxu0 0.0
        %4251 = vmatprep.subr.mxu0 0.0
        %4252 = vmatpush1.msra.mxu0 0.0
        %4253 = vmatprep.subr.mxu0 0.0
        %4254 = vmatpush1.msra.mxu0 0.0
        %4255 = vmatprep.subr.mxu0 0.0
        %4256 = vmatpush1.msra.mxu0 0.0
        %4257 = vmatprep.subr.mxu0 0.0
        %4258 = vmatpush1.msra.mxu0 0.0
        %4259 = vmatprep.subr.mxu0 0.0
        %4260 = vmatpush1.msra.mxu0 0.0
        %4261 = vmatprep.mubr.f32.mxu0 0.0
        %4262 = vmatmul.mubr.f32.gmra.mrb[0].mxu0 %v2608
        %v4263 = vpop.f32.mrb[0].mxu0
        %v4264 = vadd.f32 %v4195, %v4263
        %v4265 = vpop.f32.mrb[0].mxu0
        %4266 = vmatprep.mubr.f32.mxu0 0.0
        %4267 = vmatmul.mubr.f32.gmra.mrb[0].mxu0 %v2611
        %v4268 = vpop.f32.mrb[0].mxu0
        %v4269 = vadd.f32 %v4195, %v4268
        %v4270 = vpop.f32.mrb[0].mxu0
        %4271 = vdwg.mxu0
        %v4273 = vsel %vm772, %v4093, 0
        %v4276 = vsel %vm772, %v4176, 0
        %v4279 = vsel %vm772, %v4181, 0
        %4281 = vmatprep.subr.mxu0 0.0
        %4282 = vmatpush1.xpose.msra.mxu0 %v4276
        %4283 = vmatprep.subr.mxu0 0.0
        %4284 = vmatpush1.xpose.msra.mxu0 %v4279
        %4285 = vmatprep.subr.mxu0 0.0
        %4286 = vmatpush1.xpose.msra.mxu0 0.0
        %4287 = vmatprep.subr.mxu0 0.0
        %4288 = vmatpush1.xpose.msra.mxu0 0.0
        %4289 = vmatprep.subr.mxu0 0.0
        %4290 = vmatpush1.xpose.msra.mxu0 0.0
        %4291 = vmatprep.subr.mxu0 0.0
        %4292 = vmatpush1.xpose.msra.mxu0 0.0
        %4293 = vmatprep.subr.mxu0 0.0
        %4294 = vmatpush1.xpose.msra.mxu0 0.0
        %4295 = vmatprep.subr.mxu0 0.0
        %4296 = vmatpush1.xpose.msra.mxu0 0.0
        %4297 = vmatprep.subr.mxu0 0.0
        %4298 = vmatpush1.xpose.msra.mxu0 0.0
        %4299 = vmatprep.subr.mxu0 0.0
        %4300 = vmatpush1.xpose.msra.mxu0 0.0
        %4301 = vmatprep.subr.mxu0 0.0
        %4302 = vmatpush1.xpose.msra.mxu0 0.0
        %4303 = vmatprep.subr.mxu0 0.0
        %4304 = vmatpush1.xpose.msra.mxu0 0.0
        %4305 = vmatprep.subr.mxu0 0.0
        %4306 = vmatpush1.xpose.msra.mxu0 0.0
        %4307 = vmatprep.subr.mxu0 0.0
        %4308 = vmatpush1.xpose.msra.mxu0 0.0
        %4309 = vmatprep.subr.mxu0 0.0
        %4310 = vmatpush1.xpose.msra.mxu0 0.0
        %4311 = vmatprep.subr.mxu0 0.0
        %4312 = vmatpush1.xpose.msra.mxu0 0.0
        %4313 = vmatprep.subr.mxu0 0.0
        %4314 = vmatpush1.xpose.msra.mxu0 0.0
        %4315 = vmatprep.subr.mxu0 0.0
        %4316 = vmatpush1.xpose.msra.mxu0 0.0
        %4317 = vmatprep.subr.mxu0 0.0
        %4318 = vmatpush1.xpose.msra.mxu0 0.0
        %4319 = vmatprep.subr.mxu0 0.0
        %4320 = vmatpush1.xpose.msra.mxu0 0.0
        %4321 = vmatprep.subr.mxu0 0.0
        %4322 = vmatpush1.xpose.msra.mxu0 0.0
        %4323 = vmatprep.subr.mxu0 0.0
        %4324 = vmatpush1.xpose.msra.mxu0 0.0
        %4325 = vmatprep.subr.mxu0 0.0
        %4326 = vmatpush1.xpose.msra.mxu0 0.0
        %4327 = vmatprep.subr.mxu0 0.0
        %4328 = vmatpush1.xpose.msra.mxu0 0.0
        %4329 = vmatprep.subr.mxu0 0.0
        %4330 = vmatpush1.xpose.msra.mxu0 0.0
        %4331 = vmatprep.subr.mxu0 0.0
        %4332 = vmatpush1.xpose.msra.mxu0 0.0
        %4333 = vmatprep.subr.mxu0 0.0
        %4334 = vmatpush1.xpose.msra.mxu0 0.0
        %4335 = vmatprep.subr.mxu0 0.0
        %4336 = vmatpush1.xpose.msra.mxu0 0.0
        %4337 = vmatprep.subr.mxu0 0.0
        %4338 = vmatpush1.xpose.msra.mxu0 0.0
        %4339 = vmatprep.subr.mxu0 0.0
        %4340 = vmatpush1.xpose.msra.mxu0 0.0
        %4341 = vmatprep.subr.mxu0 0.0
        %4342 = vmatpush1.xpose.msra.mxu0 0.0
        %4343 = vmatprep.subr.mxu0 0.0
        %4344 = vmatpush1.xpose.msra.mxu0 0.0
        %4345 = vmatprep.mubr.f32.mxu0 0.0
        %4346 = vmatmul.mubr.f32.gmra.mrb[0].mxu0 %v4273
        %v4347 = vpop.f32.mrb[0].mxu0
        %v4348 = vadd.f32 0.0, %v4347
        %v4349 = vpop.f32.mrb[0].mxu0
        %4350 = vdwg.mxu0
        %v4351 = vmul.f32 %v4348, 0.35355338
        %v4352 = vsel %vm2856, %v4351, -inf
        %4353 = vmax.xlane.f32.xlu0 %v4352
        %v4354 = vpop.xlane.xlu0 %4353
        %v4355 = vsub.f32 %v4351, %v4354
        %v4356 = vmul.f32 %v4355, 1.442695
        %v4357 = vpow.pop %v4356
        %v4358 = vsel %vm2856, %v4357, 0.0
        %4359 = vadd.xlane.f32.xlu0 %v4358
        %v4360 = vpop.xlane.xlu0 %4359
        %v4361 = vrcp.pop %v4360
        %v4362 = vmul.f32 %v4357, %v4361
        %v4364 = vsel %vm2856, %v4362, 0
        %4366 = vmatprep.subr.mxu0 0.0
        %4367 = vmatpush1.msra.mxu0 %v4264
        %4368 = vmatprep.subr.mxu0 0.0
        %4369 = vmatpush1.msra.mxu0 %v4269
        %4370 = vmatprep.subr.mxu0 0.0
        %4371 = vmatpush1.msra.mxu0 0.0
        %4372 = vmatprep.subr.mxu0 0.0
        %4373 = vmatpush1.msra.mxu0 0.0
        %4374 = vmatprep.subr.mxu0 0.0
        %4375 = vmatpush1.msra.mxu0 0.0
        %4376 = vmatprep.subr.mxu0 0.0
        %4377 = vmatpush1.msra.mxu0 0.0
        %4378 = vmatprep.subr.mxu0 0.0
        %4379 = vmatpush1.msra.mxu0 0.0
        %4380 = vmatprep.subr.mxu0 0.0
        %4381 = vmatpush1.msra.mxu0 0.0
        %4382 = vmatprep.subr.mxu0 0.0
        %4383 = vmatpush1.msra.mxu0 0.0
        %4384 = vmatprep.subr.mxu0 0.0
        %4385 = vmatpush1.msra.mxu0 0.0
        %4386 = vmatprep.subr.mxu0 0.0
        %4387 = vmatpush1.msra.mxu0 0.0
        %4388 = vmatprep.subr.mxu0 0.0
        %4389 = vmatpush1.msra.mxu0 0.0
        %4390 = vmatprep.subr.mxu0 0.0
        %4391 = vmatpush1.msra.mxu0 0.0
        %4392 = vmatprep.subr.mxu0 0.0
        %4393 = vmatpush1.msra.mxu0 0.0
        %4394 = vmatprep.subr.mxu0 0.0
        %4395 = vmatpush1.msra.mxu0 0.0
        %4396 = vmatprep.subr.mxu0 0.0
        %4397 = vmatpush1.msra.mxu0 0.0
        %4398 = vmatprep.subr.mxu0 0.0
        %4399 = vmatpush1.msra.mxu0 0.0
        %4400 = vmatprep.subr.mxu0 0.0
        %4401 = vmatpush1.msra.mxu0 0.0
        %4402 = vmatprep.subr.mxu0 0.0
        %4403 = vmatpush1.msra.mxu0 0.0
        %4404 = vmatprep.subr.mxu0 0.0
        %4405 = vmatpush1.msra.mxu0 0.0
        %4406 = vmatprep.subr.mxu0 0.0
        %4407 = vmatpush1.msra.mxu0 0.0
        %4408 = vmatprep.subr.mxu0 0.0
        %4409 = vmatpush1.msra.mxu0 0.0
        %4410 = vmatprep.subr.mxu0 0.0
        %4411 = vmatpush1.msra.mxu0 0.0
        %4412 = vmatprep.subr.mxu0 0.0
        %4413 = vmatpush1.msra.mxu0 0.0
        %4414 = vmatprep.subr.mxu0 0.0
        %4415 = vmatpush1.msra.mxu0 0.0
        %4416 = vmatprep.subr.mxu0 0.0
        %4417 = vmatpush1.msra.mxu0 0.0
        %4418 = vmatprep.subr.mxu0 0.0
        %4419 = vmatpush1.msra.mxu0 0.0
        %4420 = vmatprep.subr.mxu0 0.0
        %4421 = vmatpush1.msra.mxu0 0.0
        %4422 = vmatprep.subr.mxu0 0.0
        %4423 = vmatpush1.msra.mxu0 0.0
        %4424 = vmatprep.subr.mxu0 0.0
        %4425 = vmatpush1.msra.mxu0 0.0
        %4426 = vmatprep.subr.mxu0 0.0
        %4427 = vmatpush1.msra.mxu0 0.0
        %4428 = vmatprep.subr.mxu0 0.0
        %4429 = vmatpush1.msra.mxu0 0.0
        %4430 = vmatprep.mubr.f32.mxu0 0.0
        %4431 = vmatmul.mubr.f32.gmra.mrb[0].mxu0 %v4364
        %v4432 = vpop.f32.mrb[0].mxu0
        %v4433 = vadd.f32 0.0, %v4432
        %v4434 = vpop.f32.mrb[0].mxu0
        %4435 = vdwg.mxu0
        %s4436 = scalar_lea.vmem %s5, 56
        %v4437 = vld [vmem:[%s4436] sm:$0xff]
        %v4439 = vsel %vm772, %v4433, 0
        %4441 = vmatprep.subr.mxu0 0.0
        %4442 = vmatpush1.msra.mxu0 %v4437
        %4443 = vmatprep.subr.mxu0 0.0
        %4444 = vmatpush1.msra.mxu0 0.0
        %4445 = vmatprep.subr.mxu0 0.0
        %4446 = vmatpush1.msra.mxu0 0.0
        %4447 = vmatprep.subr.mxu0 0.0
        %4448 = vmatpush1.msra.mxu0 0.0
        %4449 = vmatprep.subr.mxu0 0.0
        %4450 = vmatpush1.msra.mxu0 0.0
        %4451 = vmatprep.subr.mxu0 0.0
        %4452 = vmatpush1.msra.mxu0 0.0
        %4453 = vmatprep.subr.mxu0 0.0
        %4454 = vmatpush1.msra.mxu0 0.0
        %4455 = vmatprep.subr.mxu0 0.0
        %4456 = vmatpush1.msra.mxu0 0.0
        %4457 = vmatprep.subr.mxu0 0.0
        %4458 = vmatpush1.msra.mxu0 0.0
        %4459 = vmatprep.subr.mxu0 0.0
        %4460 = vmatpush1.msra.mxu0 0.0
        %4461 = vmatprep.subr.mxu0 0.0
        %4462 = vmatpush1.msra.mxu0 0.0
        %4463 = vmatprep.subr.mxu0 0.0
        %4464 = vmatpush1.msra.mxu0 0.0
        %4465 = vmatprep.subr.mxu0 0.0
        %4466 = vmatpush1.msra.mxu0 0.0
        %4467 = vmatprep.subr.mxu0 0.0
        %4468 = vmatpush1.msra.mxu0 0.0
        %4469 = vmatprep.subr.mxu0 0.0
        %4470 = vmatpush1.msra.mxu0 0.0
        %4471 = vmatprep.subr.mxu0 0.0
        %4472 = vmatpush1.msra.mxu0 0.0
        %4473 = vmatprep.subr.mxu0 0.0
        %4474 = vmatpush1.msra.mxu0 0.0
        %4475 = vmatprep.subr.mxu0 0.0
        %4476 = vmatpush1.msra.mxu0 0.0
        %4477 = vmatprep.subr.mxu0 0.0
        %4478 = vmatpush1.msra.mxu0 0.0
        %4479 = vmatprep.subr.mxu0 0.0
        %4480 = vmatpush1.msra.mxu0 0.0
        %4481 = vmatprep.subr.mxu0 0.0
        %4482 = vmatpush1.msra.mxu0 0.0
        %4483 = vmatprep.subr.mxu0 0.0
        %4484 = vmatpush1.msra.mxu0 0.0
        %4485 = vmatprep.subr.mxu0 0.0
        %4486 = vmatpush1.msra.mxu0 0.0
        %4487 = vmatprep.subr.mxu0 0.0
        %4488 = vmatpush1.msra.mxu0 0.0
        %4489 = vmatprep.subr.mxu0 0.0
        %4490 = vmatpush1.msra.mxu0 0.0
        %4491 = vmatprep.subr.mxu0 0.0
        %4492 = vmatpush1.msra.mxu0 0.0
        %4493 = vmatprep.subr.mxu0 0.0
        %4494 = vmatpush1.msra.mxu0 0.0
        %4495 = vmatprep.subr.mxu0 0.0
        %4496 = vmatpush1.msra.mxu0 0.0
        %4497 = vmatprep.subr.mxu0 0.0
        %4498 = vmatpush1.msra.mxu0 0.0
        %4499 = vmatprep.subr.mxu0 0.0
        %4500 = vmatpush1.msra.mxu0 0.0
        %4501 = vmatprep.subr.mxu0 0.0
        %4502 = vmatpush1.msra.mxu0 0.0
        %4503 = vmatprep.subr.mxu0 0.0
        %4504 = vmatpush1.msra.mxu0 0.0
        %4505 = vmatprep.mubr.f32.mxu0 0.0
        %4506 = vmatmul.mubr.f32.gmra.mrb[0].mxu0 %v4439
        %v4507 = vpop.f32.mrb[0].mxu0
        %v4508 = vadd.f32 0.0, %v4507
        %v4509 = vpop.f32.mrb[0].mxu0
        %4510 = vdwg.mxu0
        %v4511 = vadd.f32 %v4012, %v4508
        %s4512 = scalar_lea.vmem %s6, 1
        %v4513 = vld [vmem:[%s4512] sm:$0x1]
        %v4515 = vlaneseq
        %v4516 = vshrl.u32 %v4515, 7
        %v4517 = vsub.s32 0, %v4516
        %v4518 = vrot.slane %v4513, %v4517
        %v4520 = vadd.f32 %v4511, %v4518
        %v4521 = vadd.f32 %v2507, %v4520
        %s4522 = scalar_lea.vmem %s11, 1
        %v4523 = vld [vmem:[%s4522] sm:$0x1]
        %s4524 = scalar_lea.vmem %s12, 1
        %v4525 = vld [vmem:[%s4524] sm:$0x1]
        %v4526 = vsel %vm532, %v4521, 0.0
        %4527 = vadd.xlane.f32.xlu0 %v4526
        %v4528 = vpop.xlane.xlu0 %4527
        %v4529 = vmul.f32 %v4528, %v2483
        %v4530 = vsub.f32 %v4521, %v4529
        %v4531 = vmul.f32 %v4530, %v4530
        %v4532 = vsel %vm532, %v4531, 0.0
        %4533 = vadd.xlane.f32.xlu0 %v4532
        %v4534 = vpop.xlane.xlu0 %4533
        %v4535 = vmul.f32 %v4534, %v2483
        %v4536 = vadd.f32 %v4535, 1e-05
        %v4537 = vrsqrt.pop %v4536
        %v4538 = vmul.f32 %v4530, %v4537
        %v4540 = vlaneseq
        %v4541 = vshrl.u32 %v4540, 7
        %v4542 = vsub.s32 0, %v4541
        %v4543 = vrot.slane %v4523, %v4542
        %v4545 = vmul.f32 %v4538, %v4543
        %v4547 = vlaneseq
        %v4548 = vshrl.u32 %v4547, 7
        %v4549 = vsub.s32 0, %v4548
        %v4550 = vrot.slane %v4525, %v4549
        %v4552 = vadd.f32 %v4545, %v4550
        %v4553 = vld [vmem:[%s7] sm:$0xff]
        %v4554 = vld [vmem:[%s7 + $0x8] sm:$0xff]
        %v4555 = vld [vmem:[%s7 + $0x10] sm:$0xff]
        %v4556 = vld [vmem:[%s7 + $0x18] sm:$0xff]
        %v4557 = vld [vmem:[%s8] sm:$0x1]
        %v4559 = vlaneseq
        %v4560 = vshrl.u32 %v4559, 7
        %v4561 = vsub.s32 0, %v4560
        %v4562 = vrot.slane %v4557, %v4561
        %v4565 = vsel %vm532, %v4552, 0
        %4567 = vmatprep.subr.mxu0 0.0
        %4568 = vmatpush1.msra.mxu0 %v4553
        %4569 = vmatprep.subr.mxu0 0.0
        %4570 = vmatpush1.msra.mxu0 %v4554
        %4571 = vmatprep.subr.mxu0 0.0
        %4572 = vmatpush1.msra.mxu0 %v4555
        %4573 = vmatprep.subr.mxu0 0.0
        %4574 = vmatpush1.msra.mxu0 %v4556
        %4575 = vmatprep.subr.mxu0 0.0
        %4576 = vmatpush1.msra.mxu0 0.0
        %4577 = vmatprep.subr.mxu0 0.0
        %4578 = vmatpush1.msra.mxu0 0.0
        %4579 = vmatprep.subr.mxu0 0.0
        %4580 = vmatpush1.msra.mxu0 0.0
        %4581 = vmatprep.subr.mxu0 0.0
        %4582 = vmatpush1.msra.mxu0 0.0
        %4583 = vmatprep.subr.mxu0 0.0
        %4584 = vmatpush1.msra.mxu0 0.0
        %4585 = vmatprep.subr.mxu0 0.0
        %4586 = vmatpush1.msra.mxu0 0.0
        %4587 = vmatprep.subr.mxu0 0.0
        %4588 = vmatpush1.msra.mxu0 0.0
        %4589 = vmatprep.subr.mxu0 0.0
        %4590 = vmatpush1.msra.mxu0 0.0
        %4591 = vmatprep.subr.mxu0 0.0
        %4592 = vmatpush1.msra.mxu0 0.0
        %4593 = vmatprep.subr.mxu0 0.0
        %4594 = vmatpush1.msra.mxu0 0.0
        %4595 = vmatprep.subr.mxu0 0.0
        %4596 = vmatpush1.msra.mxu0 0.0
        %4597 = vmatprep.subr.mxu0 0.0
        %4598 = vmatpush1.msra.mxu0 0.0
        %4599 = vmatprep.subr.mxu0 0.0
        %4600 = vmatpush1.msra.mxu0 0.0
        %4601 = vmatprep.subr.mxu0 0.0
        %4602 = vmatpush1.msra.mxu0 0.0
        %4603 = vmatprep.subr.mxu0 0.0
        %4604 = vmatpush1.msra.mxu0 0.0
        %4605 = vmatprep.subr.mxu0 0.0
        %4606 = vmatpush1.msra.mxu0 0.0
        %4607 = vmatprep.subr.mxu0 0.0
        %4608 = vmatpush1.msra.mxu0 0.0
        %4609 = vmatprep.subr.mxu0 0.0
        %4610 = vmatpush1.msra.mxu0 0.0
        %4611 = vmatprep.subr.mxu0 0.0
        %4612 = vmatpush1.msra.mxu0 0.0
        %4613 = vmatprep.subr.mxu0 0.0
        %4614 = vmatpush1.msra.mxu0 0.0
        %4615 = vmatprep.subr.mxu0 0.0
        %4616 = vmatpush1.msra.mxu0 0.0
        %4617 = vmatprep.subr.mxu0 0.0
        %4618 = vmatpush1.msra.mxu0 0.0
        %4619 = vmatprep.subr.mxu0 0.0
        %4620 = vmatpush1.msra.mxu0 0.0
        %4621 = vmatprep.subr.mxu0 0.0
        %4622 = vmatpush1.msra.mxu0 0.0
        %4623 = vmatprep.subr.mxu0 0.0
        %4624 = vmatpush1.msra.mxu0 0.0
        %4625 = vmatprep.subr.mxu0 0.0
        %4626 = vmatpush1.msra.mxu0 0.0
        %4627 = vmatprep.subr.mxu0 0.0
        %4628 = vmatpush1.msra.mxu0 0.0
        %4629 = vmatprep.subr.mxu0 0.0
        %4630 = vmatpush1.msra.mxu0 0.0
        %4631 = vmatprep.mubr.f32.mxu0 0.0
        %4632 = vmatmul.mubr.f32.gmra.mrb[0].mxu0 %v4565
        %v4633 = vpop.f32.mrb[0].mxu0
        %v4634 = vadd.f32 %v4562, %v4633
        %v4635 = vpop.f32.mrb[0].mxu0
        %4636 = vdwg.mxu0
        %vm4637 = vcmp.gt.f32.partialorder %v4634, 0.0
        %v4638 = vmul.f32 %v4634, 0.01
        %v4639 = vsel %vm4637, %v4634, %v4638
        %v4640 = vld [vmem:[%s9] sm:$0xff]
        %v4641 = vld [vmem:[%s9 + $0x8] sm:$0xff]
        %v4642 = vld [vmem:[%s9 + $0x10] sm:$0xff]
        %v4643 = vld [vmem:[%s9 + $0x18] sm:$0xff]
        %v4644 = vld [vmem:[%s9 + $0x20] sm:$0xff]
        %v4645 = vld [vmem:[%s9 + $0x28] sm:$0xff]
        %v4646 = vld [vmem:[%s9 + $0x30] sm:$0xff]
        %v4647 = vld [vmem:[%s9 + $0x38] sm:$0xff]
        %v4648 = vld [vmem:[%s10] sm:$0x1]
        %v4650 = vlaneseq
        %v4651 = vshrl.u32 %v4650, 7
        %v4652 = vsub.s32 0, %v4651
        %v4653 = vrot.slane %v4648, %v4652
        %vm4655 = vcmask 523264
        %v4657 = vsel %vm4655, %v4639, 0
        %4659 = vmatprep.subr.mxu0 0.0
        %4660 = vmatpush1.msra.mxu0 %v4640
        %4661 = vmatprep.subr.mxu0 0.0
        %4662 = vmatpush1.msra.mxu0 %v4641
        %4663 = vmatprep.subr.mxu0 0.0
        %4664 = vmatpush1.msra.mxu0 %v4642
        %4665 = vmatprep.subr.mxu0 0.0
        %4666 = vmatpush1.msra.mxu0 %v4643
        %4667 = vmatprep.subr.mxu0 0.0
        %4668 = vmatpush1.msra.mxu0 %v4644
        %4669 = vmatprep.subr.mxu0 0.0
        %4670 = vmatpush1.msra.mxu0 %v4645
        %4671 = vmatprep.subr.mxu0 0.0
        %4672 = vmatpush1.msra.mxu0 %v4646
        %4673 = vmatprep.subr.mxu0 0.0
        %4674 = vmatpush1.msra.mxu0 %v4647
        %4675 = vmatprep.subr.mxu0 0.0
        %4676 = vmatpush1.msra.mxu0 0.0
        %4677 = vmatprep.subr.mxu0 0.0
        %4678 = vmatpush1.msra.mxu0 0.0
        %4679 = vmatprep.subr.mxu0 0.0
        %4680 = vmatpush1.msra.mxu0 0.0
        %4681 = vmatprep.subr.mxu0 0.0
        %4682 = vmatpush1.msra.mxu0 0.0
        %4683 = vmatprep.subr.mxu0 0.0
        %4684 = vmatpush1.msra.mxu0 0.0
        %4685 = vmatprep.subr.mxu0 0.0
        %4686 = vmatpush1.msra.mxu0 0.0
        %4687 = vmatprep.subr.mxu0 0.0
        %4688 = vmatpush1.msra.mxu0 0.0
        %4689 = vmatprep.subr.mxu0 0.0
        %4690 = vmatpush1.msra.mxu0 0.0
        %4691 = vmatprep.subr.mxu0 0.0
        %4692 = vmatpush1.msra.mxu0 0.0
        %4693 = vmatprep.subr.mxu0 0.0
        %4694 = vmatpush1.msra.mxu0 0.0
        %4695 = vmatprep.subr.mxu0 0.0
        %4696 = vmatpush1.msra.mxu0 0.0
        %4697 = vmatprep.subr.mxu0 0.0
        %4698 = vmatpush1.msra.mxu0 0.0
        %4699 = vmatprep.subr.mxu0 0.0
        %4700 = vmatpush1.msra.mxu0 0.0
        %4701 = vmatprep.subr.mxu0 0.0
        %4702 = vmatpush1.msra.mxu0 0.0
        %4703 = vmatprep.subr.mxu0 0.0
        %4704 = vmatpush1.msra.mxu0 0.0
        %4705 = vmatprep.subr.mxu0 0.0
        %4706 = vmatpush1.msra.mxu0 0.0
        %4707 = vmatprep.subr.mxu0 0.0
        %4708 = vmatpush1.msra.mxu0 0.0
        %4709 = vmatprep.subr.mxu0 0.0
        %4710 = vmatpush1.msra.mxu0 0.0
        %4711 = vmatprep.subr.mxu0 0.0
        %4712 = vmatpush1.msra.mxu0 0.0
        %4713 = vmatprep.subr.mxu0 0.0
        %4714 = vmatpush1.msra.mxu0 0.0
        %4715 = vmatprep.subr.mxu0 0.0
        %4716 = vmatpush1.msra.mxu0 0.0
        %4717 = vmatprep.subr.mxu0 0.0
        %4718 = vmatpush1.msra.mxu0 0.0
        %4719 = vmatprep.subr.mxu0 0.0
        %4720 = vmatpush1.msra.mxu0 0.0
        %4721 = vmatprep.subr.mxu0 0.0
        %4722 = vmatpush1.msra.mxu0 0.0
        %4723 = vmatprep.mubr.f32.mxu0 0.0
        %4724 = vmatmul.mubr.f32.gmra.mrb[0].mxu0 %v4657
        %v4725 = vpop.f32.mrb[0].mxu0
        %v4726 = vadd.f32 %v4653, %v4725
        %v4727 = vpop.f32.mrb[0].mxu0
        %4728 = vdwg.mxu0
        %v4729 = vadd.f32 %v4552, %v4726
        %s4730 = scalar_lea.vmem %s11, 2
        %v4731 = vld [vmem:[%s4730] sm:$0x1]
        %s4732 = scalar_lea.vmem %s12, 2
        %v4733 = vld [vmem:[%s4732] sm:$0x1]
        %v4734 = vsel %vm532, %v4729, 0.0
        %4735 = vadd.xlane.f32.xlu0 %v4734
        %v4736 = vpop.xlane.xlu0 %4735
        %v4737 = vmul.f32 %v4736, %v2483
        %v4738 = vsub.f32 %v4729, %v4737
        %v4739 = vmul.f32 %v4738, %v4738
        %v4740 = vsel %vm532, %v4739, 0.0
        %4741 = vadd.xlane.f32.xlu0 %v4740
        %v4742 = vpop.xlane.xlu0 %4741
        %v4743 = vmul.f32 %v4742, %v2483
        %v4744 = vadd.f32 %v4743, 1e-05
        %v4745 = vrsqrt.pop %v4744
        %v4746 = vmul.f32 %v4738, %v4745
        %v4748 = vlaneseq
        %v4749 = vshrl.u32 %v4748, 7
        %v4750 = vsub.s32 0, %v4749
        %v4751 = vrot.slane %v4731, %v4750
        %v4753 = vmul.f32 %v4746, %v4751
        %v4755 = vlaneseq
        %v4756 = vshrl.u32 %v4755, 7
        %v4757 = vsub.s32 0, %v4756
        %v4758 = vrot.slane %v4733, %v4757
        %v4760 = vadd.f32 %v4753, %v4758
        %s4761 = scalar_lea.vmem %s3, 768
        %v4762 = vld [vmem:[%s4761] sm:$0xff]
        %v4763 = vld [vmem:[%s4761 + $0x8] sm:$0xff]
        %v4764 = vld [vmem:[%s4761 + $0x10] sm:$0xff]
        %v4765 = vld [vmem:[%s4761 + $0x18] sm:$0xff]
        %s4766 = scalar_lea.vmem %s4, 24
        %v4767 = vld [vmem:[%s4766] sm:$0x1]
        %v4769 = vlaneseq
        %v4770 = vshrl.u32 %v4769, 7
        %v4771 = vsub.s32 0, %v4770
        %v4772 = vrot.slane %v4767, %v4771
        %v4775 = vsel %vm532, %v4760, 0
        %4777 = vmatprep.subr.mxu0 0.0
        %4778 = vmatpush1.msra.mxu0 %v4762
        %4779 = vmatprep.subr.mxu0 0.0
        %4780 = vmatpush1.msra.mxu0 %v4763
        %4781 = vmatprep.subr.mxu0 0.0
        %4782 = vmatpush1.msra.mxu0 %v4764
        %4783 = vmatprep.subr.mxu0 0.0
        %4784 = vmatpush1.msra.mxu0 %v4765
        %4785 = vmatprep.subr.mxu0 0.0
        %4786 = vmatpush1.msra.mxu0 0.0
        %4787 = vmatprep.subr.mxu0 0.0
        %4788 = vmatpush1.msra.mxu0 0.0
        %4789 = vmatprep.subr.mxu0 0.0
        %4790 = vmatpush1.msra.mxu0 0.0
        %4791 = vmatprep.subr.mxu0 0.0
        %4792 = vmatpush1.msra.mxu0 0.0
        %4793 = vmatprep.subr.mxu0 0.0
        %4794 = vmatpush1.msra.mxu0 0.0
        %4795 = vmatprep.subr.mxu0 0.0
        %4796 = vmatpush1.msra.mxu0 0.0
        %4797 = vmatprep.subr.mxu0 0.0
        %4798 = vmatpush1.msra.mxu0 0.0
        %4799 = vmatprep.subr.mxu0 0.0
        %4800 = vmatpush1.msra.mxu0 0.0
        %4801 = vmatprep.subr.mxu0 0.0
        %4802 = vmatpush1.msra.mxu0 0.0
        %4803 = vmatprep.subr.mxu0 0.0
        %4804 = vmatpush1.msra.mxu0 0.0
        %4805 = vmatprep.subr.mxu0 0.0
        %4806 = vmatpush1.msra.mxu0 0.0
        %4807 = vmatprep.subr.mxu0 0.0
        %4808 = vmatpush1.msra.mxu0 0.0
        %4809 = vmatprep.subr.mxu0 0.0
        %4810 = vmatpush1.msra.mxu0 0.0
        %4811 = vmatprep.subr.mxu0 0.0
        %4812 = vmatpush1.msra.mxu0 0.0
        %4813 = vmatprep.subr.mxu0 0.0
        %4814 = vmatpush1.msra.mxu0 0.0
        %4815 = vmatprep.subr.mxu0 0.0
        %4816 = vmatpush1.msra.mxu0 0.0
        %4817 = vmatprep.subr.mxu0 0.0
        %4818 = vmatpush1.msra.mxu0 0.0
        %4819 = vmatprep.subr.mxu0 0.0
        %4820 = vmatpush1.msra.mxu0 0.0
        %4821 = vmatprep.subr.mxu0 0.0
        %4822 = vmatpush1.msra.mxu0 0.0
        %4823 = vmatprep.subr.mxu0 0.0
        %4824 = vmatpush1.msra.mxu0 0.0
        %4825 = vmatprep.subr.mxu0 0.0
        %4826 = vmatpush1.msra.mxu0 0.0
        %4827 = vmatprep.subr.mxu0 0.0
        %4828 = vmatpush1.msra.mxu0 0.0
        %4829 = vmatprep.subr.mxu0 0.0
        %4830 = vmatpush1.msra.mxu0 0.0
        %4831 = vmatprep.subr.mxu0 0.0
        %4832 = vmatpush1.msra.mxu0 0.0
        %4833 = vmatprep.subr.mxu0 0.0
        %4834 = vmatpush1.msra.mxu0 0.0
        %4835 = vmatprep.subr.mxu0 0.0
        %4836 = vmatpush1.msra.mxu0 0.0
        %4837 = vmatprep.subr.mxu0 0.0
        %4838 = vmatpush1.msra.mxu0 0.0
        %4839 = vmatprep.subr.mxu0 0.0
        %4840 = vmatpush1.msra.mxu0 0.0
        %4841 = vmatprep.mubr.f32.mxu0 0.0
        %4842 = vmatmul.mubr.f32.gmra.mrb[0].mxu0 %v4775
        %v4843 = vpop.f32.mrb[0].mxu0
        %v4844 = vadd.f32 %v4772, %v4843
        %v4845 = vpop.f32.mrb[0].mxu0
        %4846 = vdwg.mxu0
        %s4847 = scalar_lea.vmem %s3, 896
        %v4848 = vld [vmem:[%s4847] sm:$0xff]
        %v4849 = vld [vmem:[%s4847 + $0x8] sm:$0xff]
        %v4850 = vld [vmem:[%s4847 + $0x10] sm:$0xff]
        %v4851 = vld [vmem:[%s4847 + $0x18] sm:$0xff]
        %s4852 = scalar_lea.vmem %s4, 28
        %v4853 = vld [vmem:[%s4852] sm:$0x1]
        %v4855 = vlaneseq
        %v4856 = vshrl.u32 %v4855, 7
        %v4857 = vsub.s32 0, %v4856
        %v4858 = vrot.slane %v4853, %v4857
        %4860 = vmatprep.subr.mxu0 0.0
        %4861 = vmatpush1.msra.mxu0 %v4848
        %4862 = vmatprep.subr.mxu0 0.0
        %4863 = vmatpush1.msra.mxu0 %v4849
        %4864 = vmatprep.subr.mxu0 0.0
        %4865 = vmatpush1.msra.mxu0 %v4850
        %4866 = vmatprep.subr.mxu0 0.0
        %4867 = vmatpush1.msra.mxu0 %v4851
        %4868 = vmatprep.subr.mxu0 0.0
        %4869 = vmatpush1.msra.mxu0 0.0
        %4870 = vmatprep.subr.mxu0 0.0
        %4871 = vmatpush1.msra.mxu0 0.0
        %4872 = vmatprep.subr.mxu0 0.0
        %4873 = vmatpush1.msra.mxu0 0.0
        %4874 = vmatprep.subr.mxu0 0.0
        %4875 = vmatpush1.msra.mxu0 0.0
        %4876 = vmatprep.subr.mxu0 0.0
        %4877 = vmatpush1.msra.mxu0 0.0
        %4878 = vmatprep.subr.mxu0 0.0
        %4879 = vmatpush1.msra.mxu0 0.0
        %4880 = vmatprep.subr.mxu0 0.0
        %4881 = vmatpush1.msra.mxu0 0.0
        %4882 = vmatprep.subr.mxu0 0.0
        %4883 = vmatpush1.msra.mxu0 0.0
        %4884 = vmatprep.subr.mxu0 0.0
        %4885 = vmatpush1.msra.mxu0 0.0
        %4886 = vmatprep.subr.mxu0 0.0
        %4887 = vmatpush1.msra.mxu0 0.0
        %4888 = vmatprep.subr.mxu0 0.0
        %4889 = vmatpush1.msra.mxu0 0.0
        %4890 = vmatprep.subr.mxu0 0.0
        %4891 = vmatpush1.msra.mxu0 0.0
        %4892 = vmatprep.subr.mxu0 0.0
        %4893 = vmatpush1.msra.mxu0 0.0
        %4894 = vmatprep.subr.mxu0 0.0
        %4895 = vmatpush1.msra.mxu0 0.0
        %4896 = vmatprep.subr.mxu0 0.0
        %4897 = vmatpush1.msra.mxu0 0.0
        %4898 = vmatprep.subr.mxu0 0.0
        %4899 = vmatpush1.msra.mxu0 0.0
        %4900 = vmatprep.subr.mxu0 0.0
        %4901 = vmatpush1.msra.mxu0 0.0
        %4902 = vmatprep.subr.mxu0 0.0
        %4903 = vmatpush1.msra.mxu0 0.0
        %4904 = vmatprep.subr.mxu0 0.0
        %4905 = vmatpush1.msra.mxu0 0.0
        %4906 = vmatprep.subr.mxu0 0.0
        %4907 = vmatpush1.msra.mxu0 0.0
        %4908 = vmatprep.subr.mxu0 0.0
        %4909 = vmatpush1.msra.mxu0 0.0
        %4910 = vmatprep.subr.mxu0 0.0
        %4911 = vmatpush1.msra.mxu0 0.0
        %4912 = vmatprep.subr.mxu0 0.0
        %4913 = vmatpush1.msra.mxu0 0.0
        %4914 = vmatprep.subr.mxu0 0.0
        %4915 = vmatpush1.msra.mxu0 0.0
        %4916 = vmatprep.subr.mxu0 0.0
        %4917 = vmatpush1.msra.mxu0 0.0
        %4918 = vmatprep.subr.mxu0 0.0
        %4919 = vmatpush1.msra.mxu0 0.0
        %4920 = vmatprep.subr.mxu0 0.0
        %4921 = vmatpush1.msra.mxu0 0.0
        %4922 = vmatprep.subr.mxu0 0.0
        %4923 = vmatpush1.msra.mxu0 0.0
        %4924 = vmatprep.mubr.f32.mxu0 0.0
        %4925 = vmatmul.mubr.f32.gmra.mrb[0].mxu0 %v4775
        %v4926 = vpop.f32.mrb[0].mxu0
        %v4927 = vadd.f32 %v4858, %v4926
        %v4928 = vpop.f32.mrb[0].mxu0
        %4929 = vdwg.mxu0
        %s4930 = scalar_lea.vmem %s3, 1024
        %v4931 = vld [vmem:[%s4930] sm:$0xff]
        %v4932 = vld [vmem:[%s4930 + $0x8] sm:$0xff]
        %v4933 = vld [vmem:[%s4930 + $0x10] sm:$0xff]
        %v4934 = vld [vmem:[%s4930 + $0x18] sm:$0xff]
        %s4935 = scalar_lea.vmem %s4, 32
        %v4936 = vld [vmem:[%s4935] sm:$0x1]
        %v4938 = vlaneseq
        %v4939 = vshrl.u32 %v4938, 7
        %v4940 = vsub.s32 0, %v4939
        %v4941 = vrot.slane %v4936, %v4940
        %4943 = vmatprep.subr.mxu0 0.0
        %4944 = vmatpush1.msra.mxu0 %v4931
        %4945 = vmatprep.subr.mxu0 0.0
        %4946 = vmatpush1.msra.mxu0 %v4932
        %4947 = vmatprep.subr.mxu0 0.0
        %4948 = vmatpush1.msra.mxu0 %v4933
        %4949 = vmatprep.subr.mxu0 0.0
        %4950 = vmatpush1.msra.mxu0 %v4934
        %4951 = vmatprep.subr.mxu0 0.0
        %4952 = vmatpush1.msra.mxu0 0.0
        %4953 = vmatprep.subr.mxu0 0.0
        %4954 = vmatpush1.msra.mxu0 0.0
        %4955 = vmatprep.subr.mxu0 0.0
        %4956 = vmatpush1.msra.mxu0 0.0
        %4957 = vmatprep.subr.mxu0 0.0
        %4958 = vmatpush1.msra.mxu0 0.0
        %4959 = vmatprep.subr.mxu0 0.0
        %4960 = vmatpush1.msra.mxu0 0.0
        %4961 = vmatprep.subr.mxu0 0.0
        %4962 = vmatpush1.msra.mxu0 0.0
        %4963 = vmatprep.subr.mxu0 0.0
        %4964 = vmatpush1.msra.mxu0 0.0
        %4965 = vmatprep.subr.mxu0 0.0
        %4966 = vmatpush1.msra.mxu0 0.0
        %4967 = vmatprep.subr.mxu0 0.0
        %4968 = vmatpush1.msra.mxu0 0.0
        %4969 = vmatprep.subr.mxu0 0.0
        %4970 = vmatpush1.msra.mxu0 0.0
        %4971 = vmatprep.subr.mxu0 0.0
        %4972 = vmatpush1.msra.mxu0 0.0
        %4973 = vmatprep.subr.mxu0 0.0
        %4974 = vmatpush1.msra.mxu0 0.0
        %4975 = vmatprep.subr.mxu0 0.0
        %4976 = vmatpush1.msra.mxu0 0.0
        %4977 = vmatprep.subr.mxu0 0.0
        %4978 = vmatpush1.msra.mxu0 0.0
        %4979 = vmatprep.subr.mxu0 0.0
        %4980 = vmatpush1.msra.mxu0 0.0
        %4981 = vmatprep.subr.mxu0 0.0
        %4982 = vmatpush1.msra.mxu0 0.0
        %4983 = vmatprep.subr.mxu0 0.0
        %4984 = vmatpush1.msra.mxu0 0.0
        %4985 = vmatprep.subr.mxu0 0.0
        %4986 = vmatpush1.msra.mxu0 0.0
        %4987 = vmatprep.subr.mxu0 0.0
        %4988 = vmatpush1.msra.mxu0 0.0
        %4989 = vmatprep.subr.mxu0 0.0
        %4990 = vmatpush1.msra.mxu0 0.0
        %4991 = vmatprep.subr.mxu0 0.0
        %4992 = vmatpush1.msra.mxu0 0.0
        %4993 = vmatprep.subr.mxu0 0.0
        %4994 = vmatpush1.msra.mxu0 0.0
        %4995 = vmatprep.subr.mxu0 0.0
        %4996 = vmatpush1.msra.mxu0 0.0
        %4997 = vmatprep.subr.mxu0 0.0
        %4998 = vmatpush1.msra.mxu0 0.0
        %4999 = vmatprep.subr.mxu0 0.0
        %5000 = vmatpush1.msra.mxu0 0.0
        %5001 = vmatprep.subr.mxu0 0.0
        %5002 = vmatpush1.msra.mxu0 0.0
        %5003 = vmatprep.subr.mxu0 0.0
        %5004 = vmatpush1.msra.mxu0 0.0
        %5005 = vmatprep.subr.mxu0 0.0
        %5006 = vmatpush1.msra.mxu0 0.0
        %5007 = vmatprep.mubr.f32.mxu0 0.0
        %5008 = vmatmul.mubr.f32.gmra.mrb[0].mxu0 %v4775
        %v5009 = vpop.f32.mrb[0].mxu0
        %v5010 = vadd.f32 %v4941, %v5009
        %v5011 = vpop.f32.mrb[0].mxu0
        %5012 = vdwg.mxu0
        %v5014 = vsel %vm772, %v4844, 0
        %v5017 = vsel %vm772, %v4927, 0
        %5019 = vmatprep.subr.mxu0 0.0
        %5020 = vmatpush1.xpose.msra.mxu0 %v5017
        %5021 = vmatprep.subr.mxu0 0.0
        %5022 = vmatpush1.xpose.msra.mxu0 0.0
        %5023 = vmatprep.subr.mxu0 0.0
        %5024 = vmatpush1.xpose.msra.mxu0 0.0
        %5025 = vmatprep.subr.mxu0 0.0
        %5026 = vmatpush1.xpose.msra.mxu0 0.0
        %5027 = vmatprep.subr.mxu0 0.0
        %5028 = vmatpush1.xpose.msra.mxu0 0.0
        %5029 = vmatprep.subr.mxu0 0.0
        %5030 = vmatpush1.xpose.msra.mxu0 0.0
        %5031 = vmatprep.subr.mxu0 0.0
        %5032 = vmatpush1.xpose.msra.mxu0 0.0
        %5033 = vmatprep.subr.mxu0 0.0
        %5034 = vmatpush1.xpose.msra.mxu0 0.0
        %5035 = vmatprep.subr.mxu0 0.0
        %5036 = vmatpush1.xpose.msra.mxu0 0.0
        %5037 = vmatprep.subr.mxu0 0.0
        %5038 = vmatpush1.xpose.msra.mxu0 0.0
        %5039 = vmatprep.subr.mxu0 0.0
        %5040 = vmatpush1.xpose.msra.mxu0 0.0
        %5041 = vmatprep.subr.mxu0 0.0
        %5042 = vmatpush1.xpose.msra.mxu0 0.0
        %5043 = vmatprep.subr.mxu0 0.0
        %5044 = vmatpush1.xpose.msra.mxu0 0.0
        %5045 = vmatprep.subr.mxu0 0.0
        %5046 = vmatpush1.xpose.msra.mxu0 0.0
        %5047 = vmatprep.subr.mxu0 0.0
        %5048 = vmatpush1.xpose.msra.mxu0 0.0
        %5049 = vmatprep.subr.mxu0 0.0
        %5050 = vmatpush1.xpose.msra.mxu0 0.0
        %5051 = vmatprep.subr.mxu0 0.0
        %5052 = vmatpush1.xpose.msra.mxu0 0.0
        %5053 = vmatprep.subr.mxu0 0.0
        %5054 = vmatpush1.xpose.msra.mxu0 0.0
        %5055 = vmatprep.subr.mxu0 0.0
        %5056 = vmatpush1.xpose.msra.mxu0 0.0
        %5057 = vmatprep.subr.mxu0 0.0
        %5058 = vmatpush1.xpose.msra.mxu0 0.0
        %5059 = vmatprep.subr.mxu0 0.0
        %5060 = vmatpush1.xpose.msra.mxu0 0.0
        %5061 = vmatprep.subr.mxu0 0.0
        %5062 = vmatpush1.xpose.msra.mxu0 0.0
        %5063 = vmatprep.subr.mxu0 0.0
        %5064 = vmatpush1.xpose.msra.mxu0 0.0
        %5065 = vmatprep.subr.mxu0 0.0
        %5066 = vmatpush1.xpose.msra.mxu0 0.0
        %5067 = vmatprep.subr.mxu0 0.0
        %5068 = vmatpush1.xpose.msra.mxu0 0.0
        %5069 = vmatprep.subr.mxu0 0.0
        %5070 = vmatpush1.xpose.msra.mxu0 0.0
        %5071 = vmatprep.subr.mxu0 0.0
        %5072 = vmatpush1.xpose.msra.mxu0 0.0
        %5073 = vmatprep.subr.mxu0 0.0
        %5074 = vmatpush1.xpose.msra.mxu0 0.0
        %5075 = vmatprep.subr.mxu0 0.0
        %5076 = vmatpush1.xpose.msra.mxu0 0.0
        %5077 = vmatprep.subr.mxu0 0.0
        %5078 = vmatpush1.xpose.msra.mxu0 0.0
        %5079 = vmatprep.subr.mxu0 0.0
        %5080 = vmatpush1.xpose.msra.mxu0 0.0
        %5081 = vmatprep.subr.mxu0 0.0
        %5082 = vmatpush1.xpose.msra.mxu0 0.0
        %5083 = vmatprep.mubr.f32.mxu0 0.0
        %5084 = vmatmul.mubr.f32.gmra.mrb[0].mxu0 %v5014
        %v5085 = vpop.f32.mrb[0].mxu0
        %v5086 = vadd.f32 0.0, %v5085
        %v5087 = vpop.f32.mrb[0].mxu0
        %5088 = vdwg.mxu0
        %v5089 = vmul.f32 %v5086, 0.35355338
        %v5090 = vadd.f32 %v5089, %v520
        %v5091 = vsel %vm772, %v5090, -inf
        %5092 = vmax.xlane.f32.xlu0 %v5091
        %v5093 = vpop.xlane.xlu0 %5092
        %v5094 = vsub.f32 %v5090, %v5093
        %v5095 = vmul.f32 %v5094, 1.442695
        %v5096 = vpow.pop %v5095
        %v5097 = vsel %vm772, %v5096, 0.0
        %5098 = vadd.xlane.f32.xlu0 %v5097
        %v5099 = vpop.xlane.xlu0 %5098
        %v5100 = vrcp.pop %v5099
        %v5101 = vmul.f32 %v5096, %v5100
        %v5103 = vsel %vm772, %v5101, 0
        %5105 = vmatprep.subr.mxu0 0.0
        %5106 = vmatpush1.msra.mxu0 %v5010
        %5107 = vmatprep.subr.mxu0 0.0
        %5108 = vmatpush1.msra.mxu0 0.0
        %5109 = vmatprep.subr.mxu0 0.0
        %5110 = vmatpush1.msra.mxu0 0.0
        %5111 = vmatprep.subr.mxu0 0.0
        %5112 = vmatpush1.msra.mxu0 0.0
        %5113 = vmatprep.subr.mxu0 0.0
        %5114 = vmatpush1.msra.mxu0 0.0
        %5115 = vmatprep.subr.mxu0 0.0
        %5116 = vmatpush1.msra.mxu0 0.0
        %5117 = vmatprep.subr.mxu0 0.0
        %5118 = vmatpush1.msra.mxu0 0.0
        %5119 = vmatprep.subr.mxu0 0.0
        %5120 = vmatpush1.msra.mxu0 0.0
        %5121 = vmatprep.subr.mxu0 0.0
        %5122 = vmatpush1.msra.mxu0 0.0
        %5123 = vmatprep.subr.mxu0 0.0
        %5124 = vmatpush1.msra.mxu0 0.0
        %5125 = vmatprep.subr.mxu0 0.0
        %5126 = vmatpush1.msra.mxu0 0.0
        %5127 = vmatprep.subr.mxu0 0.0
        %5128 = vmatpush1.msra.mxu0 0.0
        %5129 = vmatprep.subr.mxu0 0.0
        %5130 = vmatpush1.msra.mxu0 0.0
        %5131 = vmatprep.subr.mxu0 0.0
        %5132 = vmatpush1.msra.mxu0 0.0
        %5133 = vmatprep.subr.mxu0 0.0
        %5134 = vmatpush1.msra.mxu0 0.0
        %5135 = vmatprep.subr.mxu0 0.0
        %5136 = vmatpush1.msra.mxu0 0.0
        %5137 = vmatprep.subr.mxu0 0.0
        %5138 = vmatpush1.msra.mxu0 0.0
        %5139 = vmatprep.subr.mxu0 0.0
        %5140 = vmatpush1.msra.mxu0 0.0
        %5141 = vmatprep.subr.mxu0 0.0
        %5142 = vmatpush1.msra.mxu0 0.0
        %5143 = vmatprep.subr.mxu0 0.0
        %5144 = vmatpush1.msra.mxu0 0.0
        %5145 = vmatprep.subr.mxu0 0.0
        %5146 = vmatpush1.msra.mxu0 0.0
        %5147 = vmatprep.subr.mxu0 0.0
        %5148 = vmatpush1.msra.mxu0 0.0
        %5149 = vmatprep.subr.mxu0 0.0
        %5150 = vmatpush1.msra.mxu0 0.0
        %5151 = vmatprep.subr.mxu0 0.0
        %5152 = vmatpush1.msra.mxu0 0.0
        %5153 = vmatprep.subr.mxu0 0.0
        %5154 = vmatpush1.msra.mxu0 0.0
        %5155 = vmatprep.subr.mxu0 0.0
        %5156 = vmatpush1.msra.mxu0 0.0
        %5157 = vmatprep.subr.mxu0 0.0
        %5158 = vmatpush1.msra.mxu0 0.0
        %5159 = vmatprep.subr.mxu0 0.0
        %5160 = vmatpush1.msra.mxu0 0.0
        %5161 = vmatprep.subr.mxu0 0.0
        %5162 = vmatpush1.msra.mxu0 0.0
        %5163 = vmatprep.subr.mxu0 0.0
        %5164 = vmatpush1.msra.mxu0 0.0
        %5165 = vmatprep.subr.mxu0 0.0
        %5166 = vmatpush1.msra.mxu0 0.0
        %5167 = vmatprep.subr.mxu0 0.0
        %5168 = vmatpush1.msra.mxu0 0.0
        %5169 = vmatprep.mubr.f32.mxu0 0.0
        %5170 = vmatmul.mubr.f32.gmra.mrb[0].mxu0 %v5103
        %v5171 = vpop.f32.mrb[0].mxu0
        %v5172 = vadd.f32 0.0, %v5171
        %v5173 = vpop.f32.mrb[0].mxu0
        %5174 = vdwg.mxu0
        %s5175 = scalar_lea.vmem %s5, 64
        %v5176 = vld [vmem:[%s5175] sm:$0xff]
        %s5177 = scalar_lea.vmem %s3, 800
        %v5178 = vld [vmem:[%s5177] sm:$0xff]
        %v5179 = vld [vmem:[%s5177 + $0x8] sm:$0xff]
        %v5180 = vld [vmem:[%s5177 + $0x10] sm:$0xff]
        %v5181 = vld [vmem:[%s5177 + $0x18] sm:$0xff]
        %s5182 = scalar_lea.vmem %s4, 25
        %v5183 = vld [vmem:[%s5182] sm:$0x1]
        %v5185 = vlaneseq
        %v5186 = vshrl.u32 %v5185, 7
        %v5187 = vsub.s32 0, %v5186
        %v5188 = vrot.slane %v5183, %v5187
        %5190 = vmatprep.subr.mxu0 0.0
        %5191 = vmatpush1.msra.mxu0 %v5178
        %5192 = vmatprep.subr.mxu0 0.0
        %5193 = vmatpush1.msra.mxu0 %v5179
        %5194 = vmatprep.subr.mxu0 0.0
        %5195 = vmatpush1.msra.mxu0 %v5180
        %5196 = vmatprep.subr.mxu0 0.0
        %5197 = vmatpush1.msra.mxu0 %v5181
        %5198 = vmatprep.subr.mxu0 0.0
        %5199 = vmatpush1.msra.mxu0 0.0
        %5200 = vmatprep.subr.mxu0 0.0
        %5201 = vmatpush1.msra.mxu0 0.0
        %5202 = vmatprep.subr.mxu0 0.0
        %5203 = vmatpush1.msra.mxu0 0.0
        %5204 = vmatprep.subr.mxu0 0.0
        %5205 = vmatpush1.msra.mxu0 0.0
        %5206 = vmatprep.subr.mxu0 0.0
        %5207 = vmatpush1.msra.mxu0 0.0
        %5208 = vmatprep.subr.mxu0 0.0
        %5209 = vmatpush1.msra.mxu0 0.0
        %5210 = vmatprep.subr.mxu0 0.0
        %5211 = vmatpush1.msra.mxu0 0.0
        %5212 = vmatprep.subr.mxu0 0.0
        %5213 = vmatpush1.msra.mxu0 0.0
        %5214 = vmatprep.subr.mxu0 0.0
        %5215 = vmatpush1.msra.mxu0 0.0
        %5216 = vmatprep.subr.mxu0 0.0
        %5217 = vmatpush1.msra.mxu0 0.0
        %5218 = vmatprep.subr.mxu0 0.0
        %5219 = vmatpush1.msra.mxu0 0.0
        %5220 = vmatprep.subr.mxu0 0.0
        %5221 = vmatpush1.msra.mxu0 0.0
        %5222 = vmatprep.subr.mxu0 0.0
        %5223 = vmatpush1.msra.mxu0 0.0
        %5224 = vmatprep.subr.mxu0 0.0
        %5225 = vmatpush1.msra.mxu0 0.0
        %5226 = vmatprep.subr.mxu0 0.0
        %5227 = vmatpush1.msra.mxu0 0.0
        %5228 = vmatprep.subr.mxu0 0.0
        %5229 = vmatpush1.msra.mxu0 0.0
        %5230 = vmatprep.subr.mxu0 0.0
        %5231 = vmatpush1.msra.mxu0 0.0
        %5232 = vmatprep.subr.mxu0 0.0
        %5233 = vmatpush1.msra.mxu0 0.0
        %5234 = vmatprep.subr.mxu0 0.0
        %5235 = vmatpush1.msra.mxu0 0.0
        %5236 = vmatprep.subr.mxu0 0.0
        %5237 = vmatpush1.msra.mxu0 0.0
        %5238 = vmatprep.subr.mxu0 0.0
        %5239 = vmatpush1.msra.mxu0 0.0
        %5240 = vmatprep.subr.mxu0 0.0
        %5241 = vmatpush1.msra.mxu0 0.0
        %5242 = vmatprep.subr.mxu0 0.0
        %5243 = vmatpush1.msra.mxu0 0.0
        %5244 = vmatprep.subr.mxu0 0.0
        %5245 = vmatpush1.msra.mxu0 0.0
        %5246 = vmatprep.subr.mxu0 0.0
        %5247 = vmatpush1.msra.mxu0 0.0
        %5248 = vmatprep.subr.mxu0 0.0
        %5249 = vmatpush1.msra.mxu0 0.0
        %5250 = vmatprep.subr.mxu0 0.0
        %5251 = vmatpush1.msra.mxu0 0.0
        %5252 = vmatprep.subr.mxu0 0.0
        %5253 = vmatpush1.msra.mxu0 0.0
        %5254 = vmatprep.mubr.f32.mxu0 0.0
        %5255 = vmatmul.mubr.f32.gmra.mrb[0].mxu0 %v4775
        %v5256 = vpop.f32.mrb[0].mxu0
        %v5257 = vadd.f32 %v5188, %v5256
        %v5258 = vpop.f32.mrb[0].mxu0
        %5259 = vdwg.mxu0
        %s5260 = scalar_lea.vmem %s3, 928
        %v5261 = vld [vmem:[%s5260] sm:$0xff]
        %v5262 = vld [vmem:[%s5260 + $0x8] sm:$0xff]
        %v5263 = vld [vmem:[%s5260 + $0x10] sm:$0xff]
        %v5264 = vld [vmem:[%s5260 + $0x18] sm:$0xff]
        %s5265 = scalar_lea.vmem %s4, 29
        %v5266 = vld [vmem:[%s5265] sm:$0x1]
        %v5268 = vlaneseq
        %v5269 = vshrl.u32 %v5268, 7
        %v5270 = vsub.s32 0, %v5269
        %v5271 = vrot.slane %v5266, %v5270
        %5273 = vmatprep.subr.mxu0 0.0
        %5274 = vmatpush1.msra.mxu0 %v5261
        %5275 = vmatprep.subr.mxu0 0.0
        %5276 = vmatpush1.msra.mxu0 %v5262
        %5277 = vmatprep.subr.mxu0 0.0
        %5278 = vmatpush1.msra.mxu0 %v5263
        %5279 = vmatprep.subr.mxu0 0.0
        %5280 = vmatpush1.msra.mxu0 %v5264
        %5281 = vmatprep.subr.mxu0 0.0
        %5282 = vmatpush1.msra.mxu0 0.0
        %5283 = vmatprep.subr.mxu0 0.0
        %5284 = vmatpush1.msra.mxu0 0.0
        %5285 = vmatprep.subr.mxu0 0.0
        %5286 = vmatpush1.msra.mxu0 0.0
        %5287 = vmatprep.subr.mxu0 0.0
        %5288 = vmatpush1.msra.mxu0 0.0
        %5289 = vmatprep.subr.mxu0 0.0
        %5290 = vmatpush1.msra.mxu0 0.0
        %5291 = vmatprep.subr.mxu0 0.0
        %5292 = vmatpush1.msra.mxu0 0.0
        %5293 = vmatprep.subr.mxu0 0.0
        %5294 = vmatpush1.msra.mxu0 0.0
        %5295 = vmatprep.subr.mxu0 0.0
        %5296 = vmatpush1.msra.mxu0 0.0
        %5297 = vmatprep.subr.mxu0 0.0
        %5298 = vmatpush1.msra.mxu0 0.0
        %5299 = vmatprep.subr.mxu0 0.0
        %5300 = vmatpush1.msra.mxu0 0.0
        %5301 = vmatprep.subr.mxu0 0.0
        %5302 = vmatpush1.msra.mxu0 0.0
        %5303 = vmatprep.subr.mxu0 0.0
        %5304 = vmatpush1.msra.mxu0 0.0
        %5305 = vmatprep.subr.mxu0 0.0
        %5306 = vmatpush1.msra.mxu0 0.0
        %5307 = vmatprep.subr.mxu0 0.0
        %5308 = vmatpush1.msra.mxu0 0.0
        %5309 = vmatprep.subr.mxu0 0.0
        %5310 = vmatpush1.msra.mxu0 0.0
        %5311 = vmatprep.subr.mxu0 0.0
        %5312 = vmatpush1.msra.mxu0 0.0
        %5313 = vmatprep.subr.mxu0 0.0
        %5314 = vmatpush1.msra.mxu0 0.0
        %5315 = vmatprep.subr.mxu0 0.0
        %5316 = vmatpush1.msra.mxu0 0.0
        %5317 = vmatprep.subr.mxu0 0.0
        %5318 = vmatpush1.msra.mxu0 0.0
        %5319 = vmatprep.subr.mxu0 0.0
        %5320 = vmatpush1.msra.mxu0 0.0
        %5321 = vmatprep.subr.mxu0 0.0
        %5322 = vmatpush1.msra.mxu0 0.0
        %5323 = vmatprep.subr.mxu0 0.0
        %5324 = vmatpush1.msra.mxu0 0.0
        %5325 = vmatprep.subr.mxu0 0.0
        %5326 = vmatpush1.msra.mxu0 0.0
        %5327 = vmatprep.subr.mxu0 0.0
        %5328 = vmatpush1.msra.mxu0 0.0
        %5329 = vmatprep.subr.mxu0 0.0
        %5330 = vmatpush1.msra.mxu0 0.0
        %5331 = vmatprep.subr.mxu0 0.0
        %5332 = vmatpush1.msra.mxu0 0.0
        %5333 = vmatprep.subr.mxu0 0.0
        %5334 = vmatpush1.msra.mxu0 0.0
        %5335 = vmatprep.subr.mxu0 0.0
        %5336 = vmatpush1.msra.mxu0 0.0
        %5337 = vmatprep.mubr.f32.mxu0 0.0
        %5338 = vmatmul.mubr.f32.gmra.mrb[0].mxu0 %v4775
        %v5339 = vpop.f32.mrb[0].mxu0
        %v5340 = vadd.f32 %v5271, %v5339
        %v5341 = vpop.f32.mrb[0].mxu0
        %5342 = vdwg.mxu0
        %s5343 = scalar_lea.vmem %s3, 1056
        %v5344 = vld [vmem:[%s5343] sm:$0xff]
        %v5345 = vld [vmem:[%s5343 + $0x8] sm:$0xff]
        %v5346 = vld [vmem:[%s5343 + $0x10] sm:$0xff]
        %v5347 = vld [vmem:[%s5343 + $0x18] sm:$0xff]
        %s5348 = scalar_lea.vmem %s4, 33
        %v5349 = vld [vmem:[%s5348] sm:$0x1]
        %v5351 = vlaneseq
        %v5352 = vshrl.u32 %v5351, 7
        %v5353 = vsub.s32 0, %v5352
        %v5354 = vrot.slane %v5349, %v5353
        %5356 = vmatprep.subr.mxu0 0.0
        %5357 = vmatpush1.msra.mxu0 %v5344
        %5358 = vmatprep.subr.mxu0 0.0
        %5359 = vmatpush1.msra.mxu0 %v5345
        %5360 = vmatprep.subr.mxu0 0.0
        %5361 = vmatpush1.msra.mxu0 %v5346
        %5362 = vmatprep.subr.mxu0 0.0
        %5363 = vmatpush1.msra.mxu0 %v5347
        %5364 = vmatprep.subr.mxu0 0.0
        %5365 = vmatpush1.msra.mxu0 0.0
        %5366 = vmatprep.subr.mxu0 0.0
        %5367 = vmatpush1.msra.mxu0 0.0
        %5368 = vmatprep.subr.mxu0 0.0
        %5369 = vmatpush1.msra.mxu0 0.0
        %5370 = vmatprep.subr.mxu0 0.0
        %5371 = vmatpush1.msra.mxu0 0.0
        %5372 = vmatprep.subr.mxu0 0.0
        %5373 = vmatpush1.msra.mxu0 0.0
        %5374 = vmatprep.subr.mxu0 0.0
        %5375 = vmatpush1.msra.mxu0 0.0
        %5376 = vmatprep.subr.mxu0 0.0
        %5377 = vmatpush1.msra.mxu0 0.0
        %5378 = vmatprep.subr.mxu0 0.0
        %5379 = vmatpush1.msra.mxu0 0.0
        %5380 = vmatprep.subr.mxu0 0.0
        %5381 = vmatpush1.msra.mxu0 0.0
        %5382 = vmatprep.subr.mxu0 0.0
        %5383 = vmatpush1.msra.mxu0 0.0
        %5384 = vmatprep.subr.mxu0 0.0
        %5385 = vmatpush1.msra.mxu0 0.0
        %5386 = vmatprep.subr.mxu0 0.0
        %5387 = vmatpush1.msra.mxu0 0.0
        %5388 = vmatprep.subr.mxu0 0.0
        %5389 = vmatpush1.msra.mxu0 0.0
        %5390 = vmatprep.subr.mxu0 0.0
        %5391 = vmatpush1.msra.mxu0 0.0
        %5392 = vmatprep.subr.mxu0 0.0
        %5393 = vmatpush1.msra.mxu0 0.0
        %5394 = vmatprep.subr.mxu0 0.0
        %5395 = vmatpush1.msra.mxu0 0.0
        %5396 = vmatprep.subr.mxu0 0.0
        %5397 = vmatpush1.msra.mxu0 0.0
        %5398 = vmatprep.subr.mxu0 0.0
        %5399 = vmatpush1.msra.mxu0 0.0
        %5400 = vmatprep.subr.mxu0 0.0
        %5401 = vmatpush1.msra.mxu0 0.0
        %5402 = vmatprep.subr.mxu0 0.0
        %5403 = vmatpush1.msra.mxu0 0.0
        %5404 = vmatprep.subr.mxu0 0.0
        %5405 = vmatpush1.msra.mxu0 0.0
        %5406 = vmatprep.subr.mxu0 0.0
        %5407 = vmatpush1.msra.mxu0 0.0
        %5408 = vmatprep.subr.mxu0 0.0
        %5409 = vmatpush1.msra.mxu0 0.0
        %5410 = vmatprep.subr.mxu0 0.0
        %5411 = vmatpush1.msra.mxu0 0.0
        %5412 = vmatprep.subr.mxu0 0.0
        %5413 = vmatpush1.msra.mxu0 0.0
        %5414 = vmatprep.subr.mxu0 0.0
        %5415 = vmatpush1.msra.mxu0 0.0
        %5416 = vmatprep.subr.mxu0 0.0
        %5417 = vmatpush1.msra.mxu0 0.0
        %5418 = vmatprep.subr.mxu0 0.0
        %5419 = vmatpush1.msra.mxu0 0.0
        %5420 = vmatprep.mubr.f32.mxu0 0.0
        %5421 = vmatmul.mubr.f32.gmra.mrb[0].mxu0 %v4775
        %v5422 = vpop.f32.mrb[0].mxu0
        %v5423 = vadd.f32 %v5354, %v5422
        %v5424 = vpop.f32.mrb[0].mxu0
        %5425 = vdwg.mxu0
        %v5427 = vsel %vm772, %v5257, 0
        %v5430 = vsel %vm772, %v5340, 0
        %5432 = vmatprep.subr.mxu0 0.0
        %5433 = vmatpush1.xpose.msra.mxu0 %v5430
        %5434 = vmatprep.subr.mxu0 0.0
        %5435 = vmatpush1.xpose.msra.mxu0 0.0
        %5436 = vmatprep.subr.mxu0 0.0
        %5437 = vmatpush1.xpose.msra.mxu0 0.0
        %5438 = vmatprep.subr.mxu0 0.0
        %5439 = vmatpush1.xpose.msra.mxu0 0.0
        %5440 = vmatprep.subr.mxu0 0.0
        %5441 = vmatpush1.xpose.msra.mxu0 0.0
        %5442 = vmatprep.subr.mxu0 0.0
        %5443 = vmatpush1.xpose.msra.mxu0 0.0
        %5444 = vmatprep.subr.mxu0 0.0
        %5445 = vmatpush1.xpose.msra.mxu0 0.0
        %5446 = vmatprep.subr.mxu0 0.0
        %5447 = vmatpush1.xpose.msra.mxu0 0.0
        %5448 = vmatprep.subr.mxu0 0.0
        %5449 = vmatpush1.xpose.msra.mxu0 0.0
        %5450 = vmatprep.subr.mxu0 0.0
        %5451 = vmatpush1.xpose.msra.mxu0 0.0
        %5452 = vmatprep.subr.mxu0 0.0
        %5453 = vmatpush1.xpose.msra.mxu0 0.0
        %5454 = vmatprep.subr.mxu0 0.0
        %5455 = vmatpush1.xpose.msra.mxu0 0.0
        %5456 = vmatprep.subr.mxu0 0.0
        %5457 = vmatpush1.xpose.msra.mxu0 0.0
        %5458 = vmatprep.subr.mxu0 0.0
        %5459 = vmatpush1.xpose.msra.mxu0 0.0
        %5460 = vmatprep.subr.mxu0 0.0
        %5461 = vmatpush1.xpose.msra.mxu0 0.0
        %5462 = vmatprep.subr.mxu0 0.0
        %5463 = vmatpush1.xpose.msra.mxu0 0.0
        %5464 = vmatprep.subr.mxu0 0.0
        %5465 = vmatpush1.xpose.msra.mxu0 0.0
        %5466 = vmatprep.subr.mxu0 0.0
        %5467 = vmatpush1.xpose.msra.mxu0 0.0
        %5468 = vmatprep.subr.mxu0 0.0
        %5469 = vmatpush1.xpose.msra.mxu0 0.0
        %5470 = vmatprep.subr.mxu0 0.0
        %5471 = vmatpush1.xpose.msra.mxu0 0.0
        %5472 = vmatprep.subr.mxu0 0.0
        %5473 = vmatpush1.xpose.msra.mxu0 0.0
        %5474 = vmatprep.subr.mxu0 0.0
        %5475 = vmatpush1.xpose.msra.mxu0 0.0
        %5476 = vmatprep.subr.mxu0 0.0
        %5477 = vmatpush1.xpose.msra.mxu0 0.0
        %5478 = vmatprep.subr.mxu0 0.0
        %5479 = vmatpush1.xpose.msra.mxu0 0.0
        %5480 = vmatprep.subr.mxu0 0.0
        %5481 = vmatpush1.xpose.msra.mxu0 0.0
        %5482 = vmatprep.subr.mxu0 0.0
        %5483 = vmatpush1.xpose.msra.mxu0 0.0
        %5484 = vmatprep.subr.mxu0 0.0
        %5485 = vmatpush1.xpose.msra.mxu0 0.0
        %5486 = vmatprep.subr.mxu0 0.0
        %5487 = vmatpush1.xpose.msra.mxu0 0.0
        %5488 = vmatprep.subr.mxu0 0.0
        %5489 = vmatpush1.xpose.msra.mxu0 0.0
        %5490 = vmatprep.subr.mxu0 0.0
        %5491 = vmatpush1.xpose.msra.mxu0 0.0
        %5492 = vmatprep.subr.mxu0 0.0
        %5493 = vmatpush1.xpose.msra.mxu0 0.0
        %5494 = vmatprep.subr.mxu0 0.0
        %5495 = vmatpush1.xpose.msra.mxu0 0.0
        %5496 = vmatprep.mubr.f32.mxu0 0.0
        %5497 = vmatmul.mubr.f32.gmra.mrb[0].mxu0 %v5427
        %v5498 = vpop.f32.mrb[0].mxu0
        %v5499 = vadd.f32 0.0, %v5498
        %v5500 = vpop.f32.mrb[0].mxu0
        %5501 = vdwg.mxu0
        %v5502 = vmul.f32 %v5499, 0.35355338
        %v5503 = vadd.f32 %v5502, %v520
        %v5504 = vsel %vm772, %v5503, -inf
        %5505 = vmax.xlane.f32.xlu0 %v5504
        %v5506 = vpop.xlane.xlu0 %5505
        %v5507 = vsub.f32 %v5503, %v5506
        %v5508 = vmul.f32 %v5507, 1.442695
        %v5509 = vpow.pop %v5508
        %v5510 = vsel %vm772, %v5509, 0.0
        %5511 = vadd.xlane.f32.xlu0 %v5510
        %v5512 = vpop.xlane.xlu0 %5511
        %v5513 = vrcp.pop %v5512
        %v5514 = vmul.f32 %v5509, %v5513
        %v5516 = vsel %vm772, %v5514, 0
        %5518 = vmatprep.subr.mxu0 0.0
        %5519 = vmatpush1.msra.mxu0 %v5423
        %5520 = vmatprep.subr.mxu0 0.0
        %5521 = vmatpush1.msra.mxu0 0.0
        %5522 = vmatprep.subr.mxu0 0.0
        %5523 = vmatpush1.msra.mxu0 0.0
        %5524 = vmatprep.subr.mxu0 0.0
        %5525 = vmatpush1.msra.mxu0 0.0
        %5526 = vmatprep.subr.mxu0 0.0
        %5527 = vmatpush1.msra.mxu0 0.0
        %5528 = vmatprep.subr.mxu0 0.0
        %5529 = vmatpush1.msra.mxu0 0.0
        %5530 = vmatprep.subr.mxu0 0.0
        %5531 = vmatpush1.msra.mxu0 0.0
        %5532 = vmatprep.subr.mxu0 0.0
        %5533 = vmatpush1.msra.mxu0 0.0
        %5534 = vmatprep.subr.mxu0 0.0
        %5535 = vmatpush1.msra.mxu0 0.0
        %5536 = vmatprep.subr.mxu0 0.0
        %5537 = vmatpush1.msra.mxu0 0.0
        %5538 = vmatprep.subr.mxu0 0.0
        %5539 = vmatpush1.msra.mxu0 0.0
        %5540 = vmatprep.subr.mxu0 0.0
        %5541 = vmatpush1.msra.mxu0 0.0
        %5542 = vmatprep.subr.mxu0 0.0
        %5543 = vmatpush1.msra.mxu0 0.0
        %5544 = vmatprep.subr.mxu0 0.0
        %5545 = vmatpush1.msra.mxu0 0.0
        %5546 = vmatprep.subr.mxu0 0.0
        %5547 = vmatpush1.msra.mxu0 0.0
        %5548 = vmatprep.subr.mxu0 0.0
        %5549 = vmatpush1.msra.mxu0 0.0
        %5550 = vmatprep.subr.mxu0 0.0
        %5551 = vmatpush1.msra.mxu0 0.0
        %5552 = vmatprep.subr.mxu0 0.0
        %5553 = vmatpush1.msra.mxu0 0.0
        %5554 = vmatprep.subr.mxu0 0.0
        %5555 = vmatpush1.msra.mxu0 0.0
        %5556 = vmatprep.subr.mxu0 0.0
        %5557 = vmatpush1.msra.mxu0 0.0
        %5558 = vmatprep.subr.mxu0 0.0
        %5559 = vmatpush1.msra.mxu0 0.0
        %5560 = vmatprep.subr.mxu0 0.0
        %5561 = vmatpush1.msra.mxu0 0.0
        %5562 = vmatprep.subr.mxu0 0.0
        %5563 = vmatpush1.msra.mxu0 0.0
        %5564 = vmatprep.subr.mxu0 0.0
        %5565 = vmatpush1.msra.mxu0 0.0
        %5566 = vmatprep.subr.mxu0 0.0
        %5567 = vmatpush1.msra.mxu0 0.0
        %5568 = vmatprep.subr.mxu0 0.0
        %5569 = vmatpush1.msra.mxu0 0.0
        %5570 = vmatprep.subr.mxu0 0.0
        %5571 = vmatpush1.msra.mxu0 0.0
        %5572 = vmatprep.subr.mxu0 0.0
        %5573 = vmatpush1.msra.mxu0 0.0
        %5574 = vmatprep.subr.mxu0 0.0
        %5575 = vmatpush1.msra.mxu0 0.0
        %5576 = vmatprep.subr.mxu0 0.0
        %5577 = vmatpush1.msra.mxu0 0.0
        %5578 = vmatprep.subr.mxu0 0.0
        %5579 = vmatpush1.msra.mxu0 0.0
        %5580 = vmatprep.subr.mxu0 0.0
        %5581 = vmatpush1.msra.mxu0 0.0
        %5582 = vmatprep.mubr.f32.mxu0 0.0
        %5583 = vmatmul.mubr.f32.gmra.mrb[0].mxu0 %v5516
        %v5584 = vpop.f32.mrb[0].mxu0
        %v5585 = vadd.f32 0.0, %v5584
        %v5586 = vpop.f32.mrb[0].mxu0
        %5587 = vdwg.mxu0
        %s5588 = scalar_lea.vmem %s5, 72
        %v5589 = vld [vmem:[%s5588] sm:$0xff]
        %v5591 = vsel %vm772, %v5585, 0
        %5593 = vmatprep.subr.mxu0 0.0
        %5594 = vmatpush1.msra.mxu0 %v5589
        %5595 = vmatprep.subr.mxu0 0.0
        %5596 = vmatpush1.msra.mxu0 0.0
        %5597 = vmatprep.subr.mxu0 0.0
        %5598 = vmatpush1.msra.mxu0 0.0
        %5599 = vmatprep.subr.mxu0 0.0
        %5600 = vmatpush1.msra.mxu0 0.0
        %5601 = vmatprep.subr.mxu0 0.0
        %5602 = vmatpush1.msra.mxu0 0.0
        %5603 = vmatprep.subr.mxu0 0.0
        %5604 = vmatpush1.msra.mxu0 0.0
        %5605 = vmatprep.subr.mxu0 0.0
        %5606 = vmatpush1.msra.mxu0 0.0
        %5607 = vmatprep.subr.mxu0 0.0
        %5608 = vmatpush1.msra.mxu0 0.0
        %5609 = vmatprep.subr.mxu0 0.0
        %5610 = vmatpush1.msra.mxu0 0.0
        %5611 = vmatprep.subr.mxu0 0.0
        %5612 = vmatpush1.msra.mxu0 0.0
        %5613 = vmatprep.subr.mxu0 0.0
        %5614 = vmatpush1.msra.mxu0 0.0
        %5615 = vmatprep.subr.mxu0 0.0
        %5616 = vmatpush1.msra.mxu0 0.0
        %5617 = vmatprep.subr.mxu0 0.0
        %5618 = vmatpush1.msra.mxu0 0.0
        %5619 = vmatprep.subr.mxu0 0.0
        %5620 = vmatpush1.msra.mxu0 0.0
        %5621 = vmatprep.subr.mxu0 0.0
        %5622 = vmatpush1.msra.mxu0 0.0
        %5623 = vmatprep.subr.mxu0 0.0
        %5624 = vmatpush1.msra.mxu0 0.0
        %5625 = vmatprep.subr.mxu0 0.0
        %5626 = vmatpush1.msra.mxu0 0.0
        %5627 = vmatprep.subr.mxu0 0.0
        %5628 = vmatpush1.msra.mxu0 0.0
        %5629 = vmatprep.subr.mxu0 0.0
        %5630 = vmatpush1.msra.mxu0 0.0
        %5631 = vmatprep.subr.mxu0 0.0
        %5632 = vmatpush1.msra.mxu0 0.0
        %5633 = vmatprep.subr.mxu0 0.0
        %5634 = vmatpush1.msra.mxu0 0.0
        %5635 = vmatprep.subr.mxu0 0.0
        %5636 = vmatpush1.msra.mxu0 0.0
        %5637 = vmatprep.subr.mxu0 0.0
        %5638 = vmatpush1.msra.mxu0 0.0
        %5639 = vmatprep.subr.mxu0 0.0
        %5640 = vmatpush1.msra.mxu0 0.0
        %5641 = vmatprep.subr.mxu0 0.0
        %5642 = vmatpush1.msra.mxu0 0.0
        %5643 = vmatprep.subr.mxu0 0.0
        %5644 = vmatpush1.msra.mxu0 0.0
        %5645 = vmatprep.subr.mxu0 0.0
        %5646 = vmatpush1.msra.mxu0 0.0
        %5647 = vmatprep.subr.mxu0 0.0
        %5648 = vmatpush1.msra.mxu0 0.0
        %5649 = vmatprep.subr.mxu0 0.0
        %5650 = vmatpush1.msra.mxu0 0.0
        %5651 = vmatprep.subr.mxu0 0.0
        %5652 = vmatpush1.msra.mxu0 0.0
        %5653 = vmatprep.subr.mxu0 0.0
        %5654 = vmatpush1.msra.mxu0 0.0
        %5655 = vmatprep.subr.mxu0 0.0
        %5656 = vmatpush1.msra.mxu0 0.0
        %5657 = vmatprep.mubr.f32.mxu0 0.0
        %5658 = vmatmul.mubr.f32.gmra.mrb[0].mxu0 %v5591
        %v5659 = vpop.f32.mrb[0].mxu0
        %v5660 = vadd.f32 0.0, %v5659
        %v5661 = vpop.f32.mrb[0].mxu0
        %5662 = vdwg.mxu0
        %v5664 = vsel %vm772, %v5172, 0
        %5666 = vmatprep.subr.mxu0 0.0
        %5667 = vmatpush1.msra.mxu0 %v5176
        %5668 = vmatprep.subr.mxu0 0.0
        %5669 = vmatpush1.msra.mxu0 0.0
        %5670 = vmatprep.subr.mxu0 0.0
        %5671 = vmatpush1.msra.mxu0 0.0
        %5672 = vmatprep.subr.mxu0 0.0
        %5673 = vmatpush1.msra.mxu0 0.0
        %5674 = vmatprep.subr.mxu0 0.0
        %5675 = vmatpush1.msra.mxu0 0.0
        %5676 = vmatprep.subr.mxu0 0.0
        %5677 = vmatpush1.msra.mxu0 0.0
        %5678 = vmatprep.subr.mxu0 0.0
        %5679 = vmatpush1.msra.mxu0 0.0
        %5680 = vmatprep.subr.mxu0 0.0
        %5681 = vmatpush1.msra.mxu0 0.0
        %5682 = vmatprep.subr.mxu0 0.0
        %5683 = vmatpush1.msra.mxu0 0.0
        %5684 = vmatprep.subr.mxu0 0.0
        %5685 = vmatpush1.msra.mxu0 0.0
        %5686 = vmatprep.subr.mxu0 0.0
        %5687 = vmatpush1.msra.mxu0 0.0
        %5688 = vmatprep.subr.mxu0 0.0
        %5689 = vmatpush1.msra.mxu0 0.0
        %5690 = vmatprep.subr.mxu0 0.0
        %5691 = vmatpush1.msra.mxu0 0.0
        %5692 = vmatprep.subr.mxu0 0.0
        %5693 = vmatpush1.msra.mxu0 0.0
        %5694 = vmatprep.subr.mxu0 0.0
        %5695 = vmatpush1.msra.mxu0 0.0
        %5696 = vmatprep.subr.mxu0 0.0
        %5697 = vmatpush1.msra.mxu0 0.0
        %5698 = vmatprep.subr.mxu0 0.0
        %5699 = vmatpush1.msra.mxu0 0.0
        %5700 = vmatprep.subr.mxu0 0.0
        %5701 = vmatpush1.msra.mxu0 0.0
        %5702 = vmatprep.subr.mxu0 0.0
        %5703 = vmatpush1.msra.mxu0 0.0
        %5704 = vmatprep.subr.mxu0 0.0
        %5705 = vmatpush1.msra.mxu0 0.0
        %5706 = vmatprep.subr.mxu0 0.0
        %5707 = vmatpush1.msra.mxu0 0.0
        %5708 = vmatprep.subr.mxu0 0.0
        %5709 = vmatpush1.msra.mxu0 0.0
        %5710 = vmatprep.subr.mxu0 0.0
        %5711 = vmatpush1.msra.mxu0 0.0
        %5712 = vmatprep.subr.mxu0 0.0
        %5713 = vmatpush1.msra.mxu0 0.0
        %5714 = vmatprep.subr.mxu0 0.0
        %5715 = vmatpush1.msra.mxu0 0.0
        %5716 = vmatprep.subr.mxu0 0.0
        %5717 = vmatpush1.msra.mxu0 0.0
        %5718 = vmatprep.subr.mxu0 0.0
        %5719 = vmatpush1.msra.mxu0 0.0
        %5720 = vmatprep.subr.mxu0 0.0
        %5721 = vmatpush1.msra.mxu0 0.0
        %5722 = vmatprep.subr.mxu0 0.0
        %5723 = vmatpush1.msra.mxu0 0.0
        %5724 = vmatprep.subr.mxu0 0.0
        %5725 = vmatpush1.msra.mxu0 0.0
        %5726 = vmatprep.subr.mxu0 0.0
        %5727 = vmatpush1.msra.mxu0 0.0
        %5728 = vmatprep.subr.mxu0 0.0
        %5729 = vmatpush1.msra.mxu0 0.0
        %5730 = vmatprep.mubr.f32.mxu0 0.0
        %5731 = vmatmul.mubr.f32.gmra.mrb[0].mxu0 %v5664
        %v5732 = vpop.f32.mrb[0].mxu0
        %v5733 = vadd.f32 %v5660, %v5732
        %v5734 = vpop.f32.mrb[0].mxu0
        %5735 = vdwg.mxu0
        %s5736 = scalar_lea.vmem %s3, 832
        %v5737 = vld [vmem:[%s5736] sm:$0xff]
        %v5738 = vld [vmem:[%s5736 + $0x8] sm:$0xff]
        %v5739 = vld [vmem:[%s5736 + $0x10] sm:$0xff]
        %v5740 = vld [vmem:[%s5736 + $0x18] sm:$0xff]
        %s5741 = scalar_lea.vmem %s4, 26
        %v5742 = vld [vmem:[%s5741] sm:$0x1]
        %v5744 = vlaneseq
        %v5745 = vshrl.u32 %v5744, 7
        %v5746 = vsub.s32 0, %v5745
        %v5747 = vrot.slane %v5742, %v5746
        %5749 = vmatprep.subr.mxu0 0.0
        %5750 = vmatpush1.msra.mxu0 %v5737
        %5751 = vmatprep.subr.mxu0 0.0
        %5752 = vmatpush1.msra.mxu0 %v5738
        %5753 = vmatprep.subr.mxu0 0.0
        %5754 = vmatpush1.msra.mxu0 %v5739
        %5755 = vmatprep.subr.mxu0 0.0
        %5756 = vmatpush1.msra.mxu0 %v5740
        %5757 = vmatprep.subr.mxu0 0.0
        %5758 = vmatpush1.msra.mxu0 0.0
        %5759 = vmatprep.subr.mxu0 0.0
        %5760 = vmatpush1.msra.mxu0 0.0
        %5761 = vmatprep.subr.mxu0 0.0
        %5762 = vmatpush1.msra.mxu0 0.0
        %5763 = vmatprep.subr.mxu0 0.0
        %5764 = vmatpush1.msra.mxu0 0.0
        %5765 = vmatprep.subr.mxu0 0.0
        %5766 = vmatpush1.msra.mxu0 0.0
        %5767 = vmatprep.subr.mxu0 0.0
        %5768 = vmatpush1.msra.mxu0 0.0
        %5769 = vmatprep.subr.mxu0 0.0
        %5770 = vmatpush1.msra.mxu0 0.0
        %5771 = vmatprep.subr.mxu0 0.0
        %5772 = vmatpush1.msra.mxu0 0.0
        %5773 = vmatprep.subr.mxu0 0.0
        %5774 = vmatpush1.msra.mxu0 0.0
        %5775 = vmatprep.subr.mxu0 0.0
        %5776 = vmatpush1.msra.mxu0 0.0
        %5777 = vmatprep.subr.mxu0 0.0
        %5778 = vmatpush1.msra.mxu0 0.0
        %5779 = vmatprep.subr.mxu0 0.0
        %5780 = vmatpush1.msra.mxu0 0.0
        %5781 = vmatprep.subr.mxu0 0.0
        %5782 = vmatpush1.msra.mxu0 0.0
        %5783 = vmatprep.subr.mxu0 0.0
        %5784 = vmatpush1.msra.mxu0 0.0
        %5785 = vmatprep.subr.mxu0 0.0
        %5786 = vmatpush1.msra.mxu0 0.0
        %5787 = vmatprep.subr.mxu0 0.0
        %5788 = vmatpush1.msra.mxu0 0.0
        %5789 = vmatprep.subr.mxu0 0.0
        %5790 = vmatpush1.msra.mxu0 0.0
        %5791 = vmatprep.subr.mxu0 0.0
        %5792 = vmatpush1.msra.mxu0 0.0
        %5793 = vmatprep.subr.mxu0 0.0
        %5794 = vmatpush1.msra.mxu0 0.0
        %5795 = vmatprep.subr.mxu0 0.0
        %5796 = vmatpush1.msra.mxu0 0.0
        %5797 = vmatprep.subr.mxu0 0.0
        %5798 = vmatpush1.msra.mxu0 0.0
        %5799 = vmatprep.subr.mxu0 0.0
        %5800 = vmatpush1.msra.mxu0 0.0
        %5801 = vmatprep.subr.mxu0 0.0
        %5802 = vmatpush1.msra.mxu0 0.0
        %5803 = vmatprep.subr.mxu0 0.0
        %5804 = vmatpush1.msra.mxu0 0.0
        %5805 = vmatprep.subr.mxu0 0.0
        %5806 = vmatpush1.msra.mxu0 0.0
        %5807 = vmatprep.subr.mxu0 0.0
        %5808 = vmatpush1.msra.mxu0 0.0
        %5809 = vmatprep.subr.mxu0 0.0
        %5810 = vmatpush1.msra.mxu0 0.0
        %5811 = vmatprep.subr.mxu0 0.0
        %5812 = vmatpush1.msra.mxu0 0.0
        %5813 = vmatprep.mubr.f32.mxu0 0.0
        %5814 = vmatmul.mubr.f32.gmra.mrb[0].mxu0 %v4775
        %v5815 = vpop.f32.mrb[0].mxu0
        %v5816 = vadd.f32 %v5747, %v5815
        %v5817 = vpop.f32.mrb[0].mxu0
        %5818 = vdwg.mxu0
        %s5819 = scalar_lea.vmem %s3, 960
        %v5820 = vld [vmem:[%s5819] sm:$0xff]
        %v5821 = vld [vmem:[%s5819 + $0x8] sm:$0xff]
        %v5822 = vld [vmem:[%s5819 + $0x10] sm:$0xff]
        %v5823 = vld [vmem:[%s5819 + $0x18] sm:$0xff]
        %s5824 = scalar_lea.vmem %s4, 30
        %v5825 = vld [vmem:[%s5824] sm:$0x1]
        %v5827 = vlaneseq
        %v5828 = vshrl.u32 %v5827, 7
        %v5829 = vsub.s32 0, %v5828
        %v5830 = vrot.slane %v5825, %v5829
        %5832 = vmatprep.subr.mxu0 0.0
        %5833 = vmatpush1.msra.mxu0 %v5820
        %5834 = vmatprep.subr.mxu0 0.0
        %5835 = vmatpush1.msra.mxu0 %v5821
        %5836 = vmatprep.subr.mxu0 0.0
        %5837 = vmatpush1.msra.mxu0 %v5822
        %5838 = vmatprep.subr.mxu0 0.0
        %5839 = vmatpush1.msra.mxu0 %v5823
        %5840 = vmatprep.subr.mxu0 0.0
        %5841 = vmatpush1.msra.mxu0 0.0
        %5842 = vmatprep.subr.mxu0 0.0
        %5843 = vmatpush1.msra.mxu0 0.0
        %5844 = vmatprep.subr.mxu0 0.0
        %5845 = vmatpush1.msra.mxu0 0.0
        %5846 = vmatprep.subr.mxu0 0.0
        %5847 = vmatpush1.msra.mxu0 0.0
        %5848 = vmatprep.subr.mxu0 0.0
        %5849 = vmatpush1.msra.mxu0 0.0
        %5850 = vmatprep.subr.mxu0 0.0
        %5851 = vmatpush1.msra.mxu0 0.0
        %5852 = vmatprep.subr.mxu0 0.0
        %5853 = vmatpush1.msra.mxu0 0.0
        %5854 = vmatprep.subr.mxu0 0.0
        %5855 = vmatpush1.msra.mxu0 0.0
        %5856 = vmatprep.subr.mxu0 0.0
        %5857 = vmatpush1.msra.mxu0 0.0
        %5858 = vmatprep.subr.mxu0 0.0
        %5859 = vmatpush1.msra.mxu0 0.0
        %5860 = vmatprep.subr.mxu0 0.0
        %5861 = vmatpush1.msra.mxu0 0.0
        %5862 = vmatprep.subr.mxu0 0.0
        %5863 = vmatpush1.msra.mxu0 0.0
        %5864 = vmatprep.subr.mxu0 0.0
        %5865 = vmatpush1.msra.mxu0 0.0
        %5866 = vmatprep.subr.mxu0 0.0
        %5867 = vmatpush1.msra.mxu0 0.0
        %5868 = vmatprep.subr.mxu0 0.0
        %5869 = vmatpush1.msra.mxu0 0.0
        %5870 = vmatprep.subr.mxu0 0.0
        %5871 = vmatpush1.msra.mxu0 0.0
        %5872 = vmatprep.subr.mxu0 0.0
        %5873 = vmatpush1.msra.mxu0 0.0
        %5874 = vmatprep.subr.mxu0 0.0
        %5875 = vmatpush1.msra.mxu0 0.0
        %5876 = vmatprep.subr.mxu0 0.0
        %5877 = vmatpush1.msra.mxu0 0.0
        %5878 = vmatprep.subr.mxu0 0.0
        %5879 = vmatpush1.msra.mxu0 0.0
        %5880 = vmatprep.subr.mxu0 0.0
        %5881 = vmatpush1.msra.mxu0 0.0
        %5882 = vmatprep.subr.mxu0 0.0
        %5883 = vmatpush1.msra.mxu0 0.0
        %5884 = vmatprep.subr.mxu0 0.0
        %5885 = vmatpush1.msra.mxu0 0.0
        %5886 = vmatprep.subr.mxu0 0.0
        %5887 = vmatpush1.msra.mxu0 0.0
        %5888 = vmatprep.subr.mxu0 0.0
        %5889 = vmatpush1.msra.mxu0 0.0
        %5890 = vmatprep.subr.mxu0 0.0
        %5891 = vmatpush1.msra.mxu0 0.0
        %5892 = vmatprep.subr.mxu0 0.0
        %5893 = vmatpush1.msra.mxu0 0.0
        %5894 = vmatprep.subr.mxu0 0.0
        %5895 = vmatpush1.msra.mxu0 0.0
        %5896 = vmatprep.mubr.f32.mxu0 0.0
        %5897 = vmatmul.mubr.f32.gmra.mrb[0].mxu0 %v4775
        %v5898 = vpop.f32.mrb[0].mxu0
        %v5899 = vadd.f32 %v5830, %v5898
        %v5900 = vpop.f32.mrb[0].mxu0
        %5901 = vdwg.mxu0
        %s5902 = scalar_lea.vmem %s3, 1088
        %v5903 = vld [vmem:[%s5902] sm:$0xff]
        %v5904 = vld [vmem:[%s5902 + $0x8] sm:$0xff]
        %v5905 = vld [vmem:[%s5902 + $0x10] sm:$0xff]
        %v5906 = vld [vmem:[%s5902 + $0x18] sm:$0xff]
        %s5907 = scalar_lea.vmem %s4, 34
        %v5908 = vld [vmem:[%s5907] sm:$0x1]
        %v5910 = vlaneseq
        %v5911 = vshrl.u32 %v5910, 7
        %v5912 = vsub.s32 0, %v5911
        %v5913 = vrot.slane %v5908, %v5912
        %5915 = vmatprep.subr.mxu0 0.0
        %5916 = vmatpush1.msra.mxu0 %v5903
        %5917 = vmatprep.subr.mxu0 0.0
        %5918 = vmatpush1.msra.mxu0 %v5904
        %5919 = vmatprep.subr.mxu0 0.0
        %5920 = vmatpush1.msra.mxu0 %v5905
        %5921 = vmatprep.subr.mxu0 0.0
        %5922 = vmatpush1.msra.mxu0 %v5906
        %5923 = vmatprep.subr.mxu0 0.0
        %5924 = vmatpush1.msra.mxu0 0.0
        %5925 = vmatprep.subr.mxu0 0.0
        %5926 = vmatpush1.msra.mxu0 0.0
        %5927 = vmatprep.subr.mxu0 0.0
        %5928 = vmatpush1.msra.mxu0 0.0
        %5929 = vmatprep.subr.mxu0 0.0
        %5930 = vmatpush1.msra.mxu0 0.0
        %5931 = vmatprep.subr.mxu0 0.0
        %5932 = vmatpush1.msra.mxu0 0.0
        %5933 = vmatprep.subr.mxu0 0.0
        %5934 = vmatpush1.msra.mxu0 0.0
        %5935 = vmatprep.subr.mxu0 0.0
        %5936 = vmatpush1.msra.mxu0 0.0
        %5937 = vmatprep.subr.mxu0 0.0
        %5938 = vmatpush1.msra.mxu0 0.0
        %5939 = vmatprep.subr.mxu0 0.0
        %5940 = vmatpush1.msra.mxu0 0.0
        %5941 = vmatprep.subr.mxu0 0.0
        %5942 = vmatpush1.msra.mxu0 0.0
        %5943 = vmatprep.subr.mxu0 0.0
        %5944 = vmatpush1.msra.mxu0 0.0
        %5945 = vmatprep.subr.mxu0 0.0
        %5946 = vmatpush1.msra.mxu0 0.0
        %5947 = vmatprep.subr.mxu0 0.0
        %5948 = vmatpush1.msra.mxu0 0.0
        %5949 = vmatprep.subr.mxu0 0.0
        %5950 = vmatpush1.msra.mxu0 0.0
        %5951 = vmatprep.subr.mxu0 0.0
        %5952 = vmatpush1.msra.mxu0 0.0
        %5953 = vmatprep.subr.mxu0 0.0
        %5954 = vmatpush1.msra.mxu0 0.0
        %5955 = vmatprep.subr.mxu0 0.0
        %5956 = vmatpush1.msra.mxu0 0.0
        %5957 = vmatprep.subr.mxu0 0.0
        %5958 = vmatpush1.msra.mxu0 0.0
        %5959 = vmatprep.subr.mxu0 0.0
        %5960 = vmatpush1.msra.mxu0 0.0
        %5961 = vmatprep.subr.mxu0 0.0
        %5962 = vmatpush1.msra.mxu0 0.0
        %5963 = vmatprep.subr.mxu0 0.0
        %5964 = vmatpush1.msra.mxu0 0.0
        %5965 = vmatprep.subr.mxu0 0.0
        %5966 = vmatpush1.msra.mxu0 0.0
        %5967 = vmatprep.subr.mxu0 0.0
        %5968 = vmatpush1.msra.mxu0 0.0
        %5969 = vmatprep.subr.mxu0 0.0
        %5970 = vmatpush1.msra.mxu0 0.0
        %5971 = vmatprep.subr.mxu0 0.0
        %5972 = vmatpush1.msra.mxu0 0.0
        %5973 = vmatprep.subr.mxu0 0.0
        %5974 = vmatpush1.msra.mxu0 0.0
        %5975 = vmatprep.subr.mxu0 0.0
        %5976 = vmatpush1.msra.mxu0 0.0
        %5977 = vmatprep.subr.mxu0 0.0
        %5978 = vmatpush1.msra.mxu0 0.0
        %5979 = vmatprep.mubr.f32.mxu0 0.0
        %5980 = vmatmul.mubr.f32.gmra.mrb[0].mxu0 %v4775
        %v5981 = vpop.f32.mrb[0].mxu0
        %v5982 = vadd.f32 %v5913, %v5981
        %v5983 = vpop.f32.mrb[0].mxu0
        %5984 = vdwg.mxu0
        %v5986 = vsel %vm772, %v5816, 0
        %v5989 = vsel %vm772, %v5899, 0
        %5991 = vmatprep.subr.mxu0 0.0
        %5992 = vmatpush1.xpose.msra.mxu0 %v5989
        %5993 = vmatprep.subr.mxu0 0.0
        %5994 = vmatpush1.xpose.msra.mxu0 0.0
        %5995 = vmatprep.subr.mxu0 0.0
        %5996 = vmatpush1.xpose.msra.mxu0 0.0
        %5997 = vmatprep.subr.mxu0 0.0
        %5998 = vmatpush1.xpose.msra.mxu0 0.0
        %5999 = vmatprep.subr.mxu0 0.0
        %6000 = vmatpush1.xpose.msra.mxu0 0.0
        %6001 = vmatprep.subr.mxu0 0.0
        %6002 = vmatpush1.xpose.msra.mxu0 0.0
        %6003 = vmatprep.subr.mxu0 0.0
        %6004 = vmatpush1.xpose.msra.mxu0 0.0
        %6005 = vmatprep.subr.mxu0 0.0
        %6006 = vmatpush1.xpose.msra.mxu0 0.0
        %6007 = vmatprep.subr.mxu0 0.0
        %6008 = vmatpush1.xpose.msra.mxu0 0.0
        %6009 = vmatprep.subr.mxu0 0.0
        %6010 = vmatpush1.xpose.msra.mxu0 0.0
        %6011 = vmatprep.subr.mxu0 0.0
        %6012 = vmatpush1.xpose.msra.mxu0 0.0
        %6013 = vmatprep.subr.mxu0 0.0
        %6014 = vmatpush1.xpose.msra.mxu0 0.0
        %6015 = vmatprep.subr.mxu0 0.0
        %6016 = vmatpush1.xpose.msra.mxu0 0.0
        %6017 = vmatprep.subr.mxu0 0.0
        %6018 = vmatpush1.xpose.msra.mxu0 0.0
        %6019 = vmatprep.subr.mxu0 0.0
        %6020 = vmatpush1.xpose.msra.mxu0 0.0
        %6021 = vmatprep.subr.mxu0 0.0
        %6022 = vmatpush1.xpose.msra.mxu0 0.0
        %6023 = vmatprep.subr.mxu0 0.0
        %6024 = vmatpush1.xpose.msra.mxu0 0.0
        %6025 = vmatprep.subr.mxu0 0.0
        %6026 = vmatpush1.xpose.msra.mxu0 0.0
        %6027 = vmatprep.subr.mxu0 0.0
        %6028 = vmatpush1.xpose.msra.mxu0 0.0
        %6029 = vmatprep.subr.mxu0 0.0
        %6030 = vmatpush1.xpose.msra.mxu0 0.0
        %6031 = vmatprep.subr.mxu0 0.0
        %6032 = vmatpush1.xpose.msra.mxu0 0.0
        %6033 = vmatprep.subr.mxu0 0.0
        %6034 = vmatpush1.xpose.msra.mxu0 0.0
        %6035 = vmatprep.subr.mxu0 0.0
        %6036 = vmatpush1.xpose.msra.mxu0 0.0
        %6037 = vmatprep.subr.mxu0 0.0
        %6038 = vmatpush1.xpose.msra.mxu0 0.0
        %6039 = vmatprep.subr.mxu0 0.0
        %6040 = vmatpush1.xpose.msra.mxu0 0.0
        %6041 = vmatprep.subr.mxu0 0.0
        %6042 = vmatpush1.xpose.msra.mxu0 0.0
        %6043 = vmatprep.subr.mxu0 0.0
        %6044 = vmatpush1.xpose.msra.mxu0 0.0
        %6045 = vmatprep.subr.mxu0 0.0
        %6046 = vmatpush1.xpose.msra.mxu0 0.0
        %6047 = vmatprep.subr.mxu0 0.0
        %6048 = vmatpush1.xpose.msra.mxu0 0.0
        %6049 = vmatprep.subr.mxu0 0.0
        %6050 = vmatpush1.xpose.msra.mxu0 0.0
        %6051 = vmatprep.subr.mxu0 0.0
        %6052 = vmatpush1.xpose.msra.mxu0 0.0
        %6053 = vmatprep.subr.mxu0 0.0
        %6054 = vmatpush1.xpose.msra.mxu0 0.0
        %6055 = vmatprep.mubr.f32.mxu0 0.0
        %6056 = vmatmul.mubr.f32.gmra.mrb[0].mxu0 %v5986
        %v6057 = vpop.f32.mrb[0].mxu0
        %v6058 = vadd.f32 0.0, %v6057
        %v6059 = vpop.f32.mrb[0].mxu0
        %6060 = vdwg.mxu0
        %v6061 = vmul.f32 %v6058, 0.35355338
        %v6062 = vadd.f32 %v6061, %v520
        %v6063 = vsel %vm772, %v6062, -inf
        %6064 = vmax.xlane.f32.xlu0 %v6063
        %v6065 = vpop.xlane.xlu0 %6064
        %v6066 = vsub.f32 %v6062, %v6065
        %v6067 = vmul.f32 %v6066, 1.442695
        %v6068 = vpow.pop %v6067
        %v6069 = vsel %vm772, %v6068, 0.0
        %6070 = vadd.xlane.f32.xlu0 %v6069
        %v6071 = vpop.xlane.xlu0 %6070
        %v6072 = vrcp.pop %v6071
        %v6073 = vmul.f32 %v6068, %v6072
        %v6075 = vsel %vm772, %v6073, 0
        %6077 = vmatprep.subr.mxu0 0.0
        %6078 = vmatpush1.msra.mxu0 %v5982
        %6079 = vmatprep.subr.mxu0 0.0
        %6080 = vmatpush1.msra.mxu0 0.0
        %6081 = vmatprep.subr.mxu0 0.0
        %6082 = vmatpush1.msra.mxu0 0.0
        %6083 = vmatprep.subr.mxu0 0.0
        %6084 = vmatpush1.msra.mxu0 0.0
        %6085 = vmatprep.subr.mxu0 0.0
        %6086 = vmatpush1.msra.mxu0 0.0
        %6087 = vmatprep.subr.mxu0 0.0
        %6088 = vmatpush1.msra.mxu0 0.0
        %6089 = vmatprep.subr.mxu0 0.0
        %6090 = vmatpush1.msra.mxu0 0.0
        %6091 = vmatprep.subr.mxu0 0.0
        %6092 = vmatpush1.msra.mxu0 0.0
        %6093 = vmatprep.subr.mxu0 0.0
        %6094 = vmatpush1.msra.mxu0 0.0
        %6095 = vmatprep.subr.mxu0 0.0
        %6096 = vmatpush1.msra.mxu0 0.0
        %6097 = vmatprep.subr.mxu0 0.0
        %6098 = vmatpush1.msra.mxu0 0.0
        %6099 = vmatprep.subr.mxu0 0.0
        %6100 = vmatpush1.msra.mxu0 0.0
        %6101 = vmatprep.subr.mxu0 0.0
        %6102 = vmatpush1.msra.mxu0 0.0
        %6103 = vmatprep.subr.mxu0 0.0
        %6104 = vmatpush1.msra.mxu0 0.0
        %6105 = vmatprep.subr.mxu0 0.0
        %6106 = vmatpush1.msra.mxu0 0.0
        %6107 = vmatprep.subr.mxu0 0.0
        %6108 = vmatpush1.msra.mxu0 0.0
        %6109 = vmatprep.subr.mxu0 0.0
        %6110 = vmatpush1.msra.mxu0 0.0
        %6111 = vmatprep.subr.mxu0 0.0
        %6112 = vmatpush1.msra.mxu0 0.0
        %6113 = vmatprep.subr.mxu0 0.0
        %6114 = vmatpush1.msra.mxu0 0.0
        %6115 = vmatprep.subr.mxu0 0.0
        %6116 = vmatpush1.msra.mxu0 0.0
        %6117 = vmatprep.subr.mxu0 0.0
        %6118 = vmatpush1.msra.mxu0 0.0
        %6119 = vmatprep.subr.mxu0 0.0
        %6120 = vmatpush1.msra.mxu0 0.0
        %6121 = vmatprep.subr.mxu0 0.0
        %6122 = vmatpush1.msra.mxu0 0.0
        %6123 = vmatprep.subr.mxu0 0.0
        %6124 = vmatpush1.msra.mxu0 0.0
        %6125 = vmatprep.subr.mxu0 0.0
        %6126 = vmatpush1.msra.mxu0 0.0
        %6127 = vmatprep.subr.mxu0 0.0
        %6128 = vmatpush1.msra.mxu0 0.0
        %6129 = vmatprep.subr.mxu0 0.0
        %6130 = vmatpush1.msra.mxu0 0.0
        %6131 = vmatprep.subr.mxu0 0.0
        %6132 = vmatpush1.msra.mxu0 0.0
        %6133 = vmatprep.subr.mxu0 0.0
        %6134 = vmatpush1.msra.mxu0 0.0
        %6135 = vmatprep.subr.mxu0 0.0
        %6136 = vmatpush1.msra.mxu0 0.0
        %6137 = vmatprep.subr.mxu0 0.0
        %6138 = vmatpush1.msra.mxu0 0.0
        %6139 = vmatprep.subr.mxu0 0.0
        %6140 = vmatpush1.msra.mxu0 0.0
        %6141 = vmatprep.mubr.f32.mxu0 0.0
        %6142 = vmatmul.mubr.f32.gmra.mrb[0].mxu0 %v6075
        %v6143 = vpop.f32.mrb[0].mxu0
        %v6144 = vadd.f32 0.0, %v6143
        %v6145 = vpop.f32.mrb[0].mxu0
        %6146 = vdwg.mxu0
        %s6147 = scalar_lea.vmem %s5, 80
        %v6148 = vld [vmem:[%s6147] sm:$0xff]
        %v6150 = vsel %vm772, %v6144, 0
        %6152 = vmatprep.subr.mxu0 0.0
        %6153 = vmatpush1.msra.mxu0 %v6148
        %6154 = vmatprep.subr.mxu0 0.0
        %6155 = vmatpush1.msra.mxu0 0.0
        %6156 = vmatprep.subr.mxu0 0.0
        %6157 = vmatpush1.msra.mxu0 0.0
        %6158 = vmatprep.subr.mxu0 0.0
        %6159 = vmatpush1.msra.mxu0 0.0
        %6160 = vmatprep.subr.mxu0 0.0
        %6161 = vmatpush1.msra.mxu0 0.0
        %6162 = vmatprep.subr.mxu0 0.0
        %6163 = vmatpush1.msra.mxu0 0.0
        %6164 = vmatprep.subr.mxu0 0.0
        %6165 = vmatpush1.msra.mxu0 0.0
        %6166 = vmatprep.subr.mxu0 0.0
        %6167 = vmatpush1.msra.mxu0 0.0
        %6168 = vmatprep.subr.mxu0 0.0
        %6169 = vmatpush1.msra.mxu0 0.0
        %6170 = vmatprep.subr.mxu0 0.0
        %6171 = vmatpush1.msra.mxu0 0.0
        %6172 = vmatprep.subr.mxu0 0.0
        %6173 = vmatpush1.msra.mxu0 0.0
        %6174 = vmatprep.subr.mxu0 0.0
        %6175 = vmatpush1.msra.mxu0 0.0
        %6176 = vmatprep.subr.mxu0 0.0
        %6177 = vmatpush1.msra.mxu0 0.0
        %6178 = vmatprep.subr.mxu0 0.0
        %6179 = vmatpush1.msra.mxu0 0.0
        %6180 = vmatprep.subr.mxu0 0.0
        %6181 = vmatpush1.msra.mxu0 0.0
        %6182 = vmatprep.subr.mxu0 0.0
        %6183 = vmatpush1.msra.mxu0 0.0
        %6184 = vmatprep.subr.mxu0 0.0
        %6185 = vmatpush1.msra.mxu0 0.0
        %6186 = vmatprep.subr.mxu0 0.0
        %6187 = vmatpush1.msra.mxu0 0.0
        %6188 = vmatprep.subr.mxu0 0.0
        %6189 = vmatpush1.msra.mxu0 0.0
        %6190 = vmatprep.subr.mxu0 0.0
        %6191 = vmatpush1.msra.mxu0 0.0
        %6192 = vmatprep.subr.mxu0 0.0
        %6193 = vmatpush1.msra.mxu0 0.0
        %6194 = vmatprep.subr.mxu0 0.0
        %6195 = vmatpush1.msra.mxu0 0.0
        %6196 = vmatprep.subr.mxu0 0.0
        %6197 = vmatpush1.msra.mxu0 0.0
        %6198 = vmatprep.subr.mxu0 0.0
        %6199 = vmatpush1.msra.mxu0 0.0
        %6200 = vmatprep.subr.mxu0 0.0
        %6201 = vmatpush1.msra.mxu0 0.0
        %6202 = vmatprep.subr.mxu0 0.0
        %6203 = vmatpush1.msra.mxu0 0.0
        %6204 = vmatprep.subr.mxu0 0.0
        %6205 = vmatpush1.msra.mxu0 0.0
        %6206 = vmatprep.subr.mxu0 0.0
        %6207 = vmatpush1.msra.mxu0 0.0
        %6208 = vmatprep.subr.mxu0 0.0
        %6209 = vmatpush1.msra.mxu0 0.0
        %6210 = vmatprep.subr.mxu0 0.0
        %6211 = vmatpush1.msra.mxu0 0.0
        %6212 = vmatprep.subr.mxu0 0.0
        %6213 = vmatpush1.msra.mxu0 0.0
        %6214 = vmatprep.subr.mxu0 0.0
        %6215 = vmatpush1.msra.mxu0 0.0
        %6216 = vmatprep.mubr.f32.mxu0 0.0
        %6217 = vmatmul.mubr.f32.gmra.mrb[0].mxu0 %v6150
        %v6218 = vpop.f32.mrb[0].mxu0
        %v6219 = vadd.f32 0.0, %v6218
        %v6220 = vpop.f32.mrb[0].mxu0
        %6221 = vdwg.mxu0
        %v6222 = vadd.f32 %v5733, %v6219
        %s6223 = scalar_lea.vmem %s3, 864
        %v6224 = vld [vmem:[%s6223] sm:$0xff]
        %v6225 = vld [vmem:[%s6223 + $0x8] sm:$0xff]
        %v6226 = vld [vmem:[%s6223 + $0x10] sm:$0xff]
        %v6227 = vld [vmem:[%s6223 + $0x18] sm:$0xff]
        %s6228 = scalar_lea.vmem %s4, 27
        %v6229 = vld [vmem:[%s6228] sm:$0x1]
        %v6231 = vlaneseq
        %v6232 = vshrl.u32 %v6231, 7
        %v6233 = vsub.s32 0, %v6232
        %v6234 = vrot.slane %v6229, %v6233
        %6236 = vmatprep.subr.mxu0 0.0
        %6237 = vmatpush1.msra.mxu0 %v6224
        %6238 = vmatprep.subr.mxu0 0.0
        %6239 = vmatpush1.msra.mxu0 %v6225
        %6240 = vmatprep.subr.mxu0 0.0
        %6241 = vmatpush1.msra.mxu0 %v6226
        %6242 = vmatprep.subr.mxu0 0.0
        %6243 = vmatpush1.msra.mxu0 %v6227
        %6244 = vmatprep.subr.mxu0 0.0
        %6245 = vmatpush1.msra.mxu0 0.0
        %6246 = vmatprep.subr.mxu0 0.0
        %6247 = vmatpush1.msra.mxu0 0.0
        %6248 = vmatprep.subr.mxu0 0.0
        %6249 = vmatpush1.msra.mxu0 0.0
        %6250 = vmatprep.subr.mxu0 0.0
        %6251 = vmatpush1.msra.mxu0 0.0
        %6252 = vmatprep.subr.mxu0 0.0
        %6253 = vmatpush1.msra.mxu0 0.0
        %6254 = vmatprep.subr.mxu0 0.0
        %6255 = vmatpush1.msra.mxu0 0.0
        %6256 = vmatprep.subr.mxu0 0.0
        %6257 = vmatpush1.msra.mxu0 0.0
        %6258 = vmatprep.subr.mxu0 0.0
        %6259 = vmatpush1.msra.mxu0 0.0
        %6260 = vmatprep.subr.mxu0 0.0
        %6261 = vmatpush1.msra.mxu0 0.0
        %6262 = vmatprep.subr.mxu0 0.0
        %6263 = vmatpush1.msra.mxu0 0.0
        %6264 = vmatprep.subr.mxu0 0.0
        %6265 = vmatpush1.msra.mxu0 0.0
        %6266 = vmatprep.subr.mxu0 0.0
        %6267 = vmatpush1.msra.mxu0 0.0
        %6268 = vmatprep.subr.mxu0 0.0
        %6269 = vmatpush1.msra.mxu0 0.0
        %6270 = vmatprep.subr.mxu0 0.0
        %6271 = vmatpush1.msra.mxu0 0.0
        %6272 = vmatprep.subr.mxu0 0.0
        %6273 = vmatpush1.msra.mxu0 0.0
        %6274 = vmatprep.subr.mxu0 0.0
        %6275 = vmatpush1.msra.mxu0 0.0
        %6276 = vmatprep.subr.mxu0 0.0
        %6277 = vmatpush1.msra.mxu0 0.0
        %6278 = vmatprep.subr.mxu0 0.0
        %6279 = vmatpush1.msra.mxu0 0.0
        %6280 = vmatprep.subr.mxu0 0.0
        %6281 = vmatpush1.msra.mxu0 0.0
        %6282 = vmatprep.subr.mxu0 0.0
        %6283 = vmatpush1.msra.mxu0 0.0
        %6284 = vmatprep.subr.mxu0 0.0
        %6285 = vmatpush1.msra.mxu0 0.0
        %6286 = vmatprep.subr.mxu0 0.0
        %6287 = vmatpush1.msra.mxu0 0.0
        %6288 = vmatprep.subr.mxu0 0.0
        %6289 = vmatpush1.msra.mxu0 0.0
        %6290 = vmatprep.subr.mxu0 0.0
        %6291 = vmatpush1.msra.mxu0 0.0
        %6292 = vmatprep.subr.mxu0 0.0
        %6293 = vmatpush1.msra.mxu0 0.0
        %6294 = vmatprep.subr.mxu0 0.0
        %6295 = vmatpush1.msra.mxu0 0.0
        %6296 = vmatprep.subr.mxu0 0.0
        %6297 = vmatpush1.msra.mxu0 0.0
        %6298 = vmatprep.subr.mxu0 0.0
        %6299 = vmatpush1.msra.mxu0 0.0
        %6300 = vmatprep.mubr.f32.mxu0 0.0
        %6301 = vmatmul.mubr.f32.gmra.mrb[0].mxu0 %v4775
        %v6302 = vpop.f32.mrb[0].mxu0
        %v6303 = vadd.f32 %v6234, %v6302
        %v6304 = vpop.f32.mrb[0].mxu0
        %6305 = vdwg.mxu0
        %s6306 = scalar_lea.vmem %s3, 992
        %v6307 = vld [vmem:[%s6306] sm:$0xff]
        %v6308 = vld [vmem:[%s6306 + $0x8] sm:$0xff]
        %v6309 = vld [vmem:[%s6306 + $0x10] sm:$0xff]
        %v6310 = vld [vmem:[%s6306 + $0x18] sm:$0xff]
        %s6311 = scalar_lea.vmem %s4, 31
        %v6312 = vld [vmem:[%s6311] sm:$0x1]
        %v6314 = vlaneseq
        %v6315 = vshrl.u32 %v6314, 7
        %v6316 = vsub.s32 0, %v6315
        %v6317 = vrot.slane %v6312, %v6316
        %6319 = vmatprep.subr.mxu0 0.0
        %6320 = vmatpush1.msra.mxu0 %v6307
        %6321 = vmatprep.subr.mxu0 0.0
        %6322 = vmatpush1.msra.mxu0 %v6308
        %6323 = vmatprep.subr.mxu0 0.0
        %6324 = vmatpush1.msra.mxu0 %v6309
        %6325 = vmatprep.subr.mxu0 0.0
        %6326 = vmatpush1.msra.mxu0 %v6310
        %6327 = vmatprep.subr.mxu0 0.0
        %6328 = vmatpush1.msra.mxu0 0.0
        %6329 = vmatprep.subr.mxu0 0.0
        %6330 = vmatpush1.msra.mxu0 0.0
        %6331 = vmatprep.subr.mxu0 0.0
        %6332 = vmatpush1.msra.mxu0 0.0
        %6333 = vmatprep.subr.mxu0 0.0
        %6334 = vmatpush1.msra.mxu0 0.0
        %6335 = vmatprep.subr.mxu0 0.0
        %6336 = vmatpush1.msra.mxu0 0.0
        %6337 = vmatprep.subr.mxu0 0.0
        %6338 = vmatpush1.msra.mxu0 0.0
        %6339 = vmatprep.subr.mxu0 0.0
        %6340 = vmatpush1.msra.mxu0 0.0
        %6341 = vmatprep.subr.mxu0 0.0
        %6342 = vmatpush1.msra.mxu0 0.0
        %6343 = vmatprep.subr.mxu0 0.0
        %6344 = vmatpush1.msra.mxu0 0.0
        %6345 = vmatprep.subr.mxu0 0.0
        %6346 = vmatpush1.msra.mxu0 0.0
        %6347 = vmatprep.subr.mxu0 0.0
        %6348 = vmatpush1.msra.mxu0 0.0
        %6349 = vmatprep.subr.mxu0 0.0
        %6350 = vmatpush1.msra.mxu0 0.0
        %6351 = vmatprep.subr.mxu0 0.0
        %6352 = vmatpush1.msra.mxu0 0.0
        %6353 = vmatprep.subr.mxu0 0.0
        %6354 = vmatpush1.msra.mxu0 0.0
        %6355 = vmatprep.subr.mxu0 0.0
        %6356 = vmatpush1.msra.mxu0 0.0
        %6357 = vmatprep.subr.mxu0 0.0
        %6358 = vmatpush1.msra.mxu0 0.0
        %6359 = vmatprep.subr.mxu0 0.0
        %6360 = vmatpush1.msra.mxu0 0.0
        %6361 = vmatprep.subr.mxu0 0.0
        %6362 = vmatpush1.msra.mxu0 0.0
        %6363 = vmatprep.subr.mxu0 0.0
        %6364 = vmatpush1.msra.mxu0 0.0
        %6365 = vmatprep.subr.mxu0 0.0
        %6366 = vmatpush1.msra.mxu0 0.0
        %6367 = vmatprep.subr.mxu0 0.0
        %6368 = vmatpush1.msra.mxu0 0.0
        %6369 = vmatprep.subr.mxu0 0.0
        %6370 = vmatpush1.msra.mxu0 0.0
        %6371 = vmatprep.subr.mxu0 0.0
        %6372 = vmatpush1.msra.mxu0 0.0
        %6373 = vmatprep.subr.mxu0 0.0
        %6374 = vmatpush1.msra.mxu0 0.0
        %6375 = vmatprep.subr.mxu0 0.0
        %6376 = vmatpush1.msra.mxu0 0.0
        %6377 = vmatprep.subr.mxu0 0.0
        %6378 = vmatpush1.msra.mxu0 0.0
        %6379 = vmatprep.subr.mxu0 0.0
        %6380 = vmatpush1.msra.mxu0 0.0
        %6381 = vmatprep.subr.mxu0 0.0
        %6382 = vmatpush1.msra.mxu0 0.0
        %6383 = vmatprep.mubr.f32.mxu0 0.0
        %6384 = vmatmul.mubr.f32.gmra.mrb[0].mxu0 %v4775
        %v6385 = vpop.f32.mrb[0].mxu0
        %v6386 = vadd.f32 %v6317, %v6385
        %v6387 = vpop.f32.mrb[0].mxu0
        %6388 = vdwg.mxu0
        %s6389 = scalar_lea.vmem %s3, 1120
        %v6390 = vld [vmem:[%s6389] sm:$0xff]
        %v6391 = vld [vmem:[%s6389 + $0x8] sm:$0xff]
        %v6392 = vld [vmem:[%s6389 + $0x10] sm:$0xff]
        %v6393 = vld [vmem:[%s6389 + $0x18] sm:$0xff]
        %s6394 = scalar_lea.vmem %s4, 35
        %v6395 = vld [vmem:[%s6394] sm:$0x1]
        %v6397 = vlaneseq
        %v6398 = vshrl.u32 %v6397, 7
        %v6399 = vsub.s32 0, %v6398
        %v6400 = vrot.slane %v6395, %v6399
        %6402 = vmatprep.subr.mxu0 0.0
        %6403 = vmatpush1.msra.mxu0 %v6390
        %6404 = vmatprep.subr.mxu0 0.0
        %6405 = vmatpush1.msra.mxu0 %v6391
        %6406 = vmatprep.subr.mxu0 0.0
        %6407 = vmatpush1.msra.mxu0 %v6392
        %6408 = vmatprep.subr.mxu0 0.0
        %6409 = vmatpush1.msra.mxu0 %v6393
        %6410 = vmatprep.subr.mxu0 0.0
        %6411 = vmatpush1.msra.mxu0 0.0
        %6412 = vmatprep.subr.mxu0 0.0
        %6413 = vmatpush1.msra.mxu0 0.0
        %6414 = vmatprep.subr.mxu0 0.0
        %6415 = vmatpush1.msra.mxu0 0.0
        %6416 = vmatprep.subr.mxu0 0.0
        %6417 = vmatpush1.msra.mxu0 0.0
        %6418 = vmatprep.subr.mxu0 0.0
        %6419 = vmatpush1.msra.mxu0 0.0
        %6420 = vmatprep.subr.mxu0 0.0
        %6421 = vmatpush1.msra.mxu0 0.0
        %6422 = vmatprep.subr.mxu0 0.0
        %6423 = vmatpush1.msra.mxu0 0.0
        %6424 = vmatprep.subr.mxu0 0.0
        %6425 = vmatpush1.msra.mxu0 0.0
        %6426 = vmatprep.subr.mxu0 0.0
        %6427 = vmatpush1.msra.mxu0 0.0
        %6428 = vmatprep.subr.mxu0 0.0
        %6429 = vmatpush1.msra.mxu0 0.0
        %6430 = vmatprep.subr.mxu0 0.0
        %6431 = vmatpush1.msra.mxu0 0.0
        %6432 = vmatprep.subr.mxu0 0.0
        %6433 = vmatpush1.msra.mxu0 0.0
        %6434 = vmatprep.subr.mxu0 0.0
        %6435 = vmatpush1.msra.mxu0 0.0
        %6436 = vmatprep.subr.mxu0 0.0
        %6437 = vmatpush1.msra.mxu0 0.0
        %6438 = vmatprep.subr.mxu0 0.0
        %6439 = vmatpush1.msra.mxu0 0.0
        %6440 = vmatprep.subr.mxu0 0.0
        %6441 = vmatpush1.msra.mxu0 0.0
        %6442 = vmatprep.subr.mxu0 0.0
        %6443 = vmatpush1.msra.mxu0 0.0
        %6444 = vmatprep.subr.mxu0 0.0
        %6445 = vmatpush1.msra.mxu0 0.0
        %6446 = vmatprep.subr.mxu0 0.0
        %6447 = vmatpush1.msra.mxu0 0.0
        %6448 = vmatprep.subr.mxu0 0.0
        %6449 = vmatpush1.msra.mxu0 0.0
        %6450 = vmatprep.subr.mxu0 0.0
        %6451 = vmatpush1.msra.mxu0 0.0
        %6452 = vmatprep.subr.mxu0 0.0
        %6453 = vmatpush1.msra.mxu0 0.0
        %6454 = vmatprep.subr.mxu0 0.0
        %6455 = vmatpush1.msra.mxu0 0.0
        %6456 = vmatprep.subr.mxu0 0.0
        %6457 = vmatpush1.msra.mxu0 0.0
        %6458 = vmatprep.subr.mxu0 0.0
        %6459 = vmatpush1.msra.mxu0 0.0
        %6460 = vmatprep.subr.mxu0 0.0
        %6461 = vmatpush1.msra.mxu0 0.0
        %6462 = vmatprep.subr.mxu0 0.0
        %6463 = vmatpush1.msra.mxu0 0.0
        %6464 = vmatprep.subr.mxu0 0.0
        %6465 = vmatpush1.msra.mxu0 0.0
        %6466 = vmatprep.mubr.f32.mxu0 0.0
        %6467 = vmatmul.mubr.f32.gmra.mrb[0].mxu0 %v4775
        %v6468 = vpop.f32.mrb[0].mxu0
        %v6469 = vadd.f32 %v6400, %v6468
        %v6470 = vpop.f32.mrb[0].mxu0
        %6471 = vdwg.mxu0
        %v6473 = vsel %vm772, %v6303, 0
        %v6476 = vsel %vm772, %v6386, 0
        %6478 = vmatprep.subr.mxu0 0.0
        %6479 = vmatpush1.xpose.msra.mxu0 %v6476
        %6480 = vmatprep.subr.mxu0 0.0
        %6481 = vmatpush1.xpose.msra.mxu0 0.0
        %6482 = vmatprep.subr.mxu0 0.0
        %6483 = vmatpush1.xpose.msra.mxu0 0.0
        %6484 = vmatprep.subr.mxu0 0.0
        %6485 = vmatpush1.xpose.msra.mxu0 0.0
        %6486 = vmatprep.subr.mxu0 0.0
        %6487 = vmatpush1.xpose.msra.mxu0 0.0
        %6488 = vmatprep.subr.mxu0 0.0
        %6489 = vmatpush1.xpose.msra.mxu0 0.0
        %6490 = vmatprep.subr.mxu0 0.0
        %6491 = vmatpush1.xpose.msra.mxu0 0.0
        %6492 = vmatprep.subr.mxu0 0.0
        %6493 = vmatpush1.xpose.msra.mxu0 0.0
        %6494 = vmatprep.subr.mxu0 0.0
        %6495 = vmatpush1.xpose.msra.mxu0 0.0
        %6496 = vmatprep.subr.mxu0 0.0
        %6497 = vmatpush1.xpose.msra.mxu0 0.0
        %6498 = vmatprep.subr.mxu0 0.0
        %6499 = vmatpush1.xpose.msra.mxu0 0.0
        %6500 = vmatprep.subr.mxu0 0.0
        %6501 = vmatpush1.xpose.msra.mxu0 0.0
        %6502 = vmatprep.subr.mxu0 0.0
        %6503 = vmatpush1.xpose.msra.mxu0 0.0
        %6504 = vmatprep.subr.mxu0 0.0
        %6505 = vmatpush1.xpose.msra.mxu0 0.0
        %6506 = vmatprep.subr.mxu0 0.0
        %6507 = vmatpush1.xpose.msra.mxu0 0.0
        %6508 = vmatprep.subr.mxu0 0.0
        %6509 = vmatpush1.xpose.msra.mxu0 0.0
        %6510 = vmatprep.subr.mxu0 0.0
        %6511 = vmatpush1.xpose.msra.mxu0 0.0
        %6512 = vmatprep.subr.mxu0 0.0
        %6513 = vmatpush1.xpose.msra.mxu0 0.0
        %6514 = vmatprep.subr.mxu0 0.0
        %6515 = vmatpush1.xpose.msra.mxu0 0.0
        %6516 = vmatprep.subr.mxu0 0.0
        %6517 = vmatpush1.xpose.msra.mxu0 0.0
        %6518 = vmatprep.subr.mxu0 0.0
        %6519 = vmatpush1.xpose.msra.mxu0 0.0
        %6520 = vmatprep.subr.mxu0 0.0
        %6521 = vmatpush1.xpose.msra.mxu0 0.0
        %6522 = vmatprep.subr.mxu0 0.0
        %6523 = vmatpush1.xpose.msra.mxu0 0.0
        %6524 = vmatprep.subr.mxu0 0.0
        %6525 = vmatpush1.xpose.msra.mxu0 0.0
        %6526 = vmatprep.subr.mxu0 0.0
        %6527 = vmatpush1.xpose.msra.mxu0 0.0
        %6528 = vmatprep.subr.mxu0 0.0
        %6529 = vmatpush1.xpose.msra.mxu0 0.0
        %6530 = vmatprep.subr.mxu0 0.0
        %6531 = vmatpush1.xpose.msra.mxu0 0.0
        %6532 = vmatprep.subr.mxu0 0.0
        %6533 = vmatpush1.xpose.msra.mxu0 0.0
        %6534 = vmatprep.subr.mxu0 0.0
        %6535 = vmatpush1.xpose.msra.mxu0 0.0
        %6536 = vmatprep.subr.mxu0 0.0
        %6537 = vmatpush1.xpose.msra.mxu0 0.0
        %6538 = vmatprep.subr.mxu0 0.0
        %6539 = vmatpush1.xpose.msra.mxu0 0.0
        %6540 = vmatprep.subr.mxu0 0.0
        %6541 = vmatpush1.xpose.msra.mxu0 0.0
        %6542 = vmatprep.mubr.f32.mxu0 0.0
        %6543 = vmatmul.mubr.f32.gmra.mrb[0].mxu0 %v6473
        %v6544 = vpop.f32.mrb[0].mxu0
        %v6545 = vadd.f32 0.0, %v6544
        %v6546 = vpop.f32.mrb[0].mxu0
        %6547 = vdwg.mxu0
        %v6548 = vmul.f32 %v6545, 0.35355338
        %v6549 = vadd.f32 %v6548, %v520
        %v6550 = vsel %vm772, %v6549, -inf
        %6551 = vmax.xlane.f32.xlu0 %v6550
        %v6552 = vpop.xlane.xlu0 %6551
        %v6553 = vsub.f32 %v6549, %v6552
        %v6554 = vmul.f32 %v6553, 1.442695
        %v6555 = vpow.pop %v6554
        %v6556 = vsel %vm772, %v6555, 0.0
        %6557 = vadd.xlane.f32.xlu0 %v6556
        %v6558 = vpop.xlane.xlu0 %6557
        %v6559 = vrcp.pop %v6558
        %v6560 = vmul.f32 %v6555, %v6559
        %v6562 = vsel %vm772, %v6560, 0
        %6564 = vmatprep.subr.mxu0 0.0
        %6565 = vmatpush1.msra.mxu0 %v6469
        %6566 = vmatprep.subr.mxu0 0.0
        %6567 = vmatpush1.msra.mxu0 0.0
        %6568 = vmatprep.subr.mxu0 0.0
        %6569 = vmatpush1.msra.mxu0 0.0
        %6570 = vmatprep.subr.mxu0 0.0
        %6571 = vmatpush1.msra.mxu0 0.0
        %6572 = vmatprep.subr.mxu0 0.0
        %6573 = vmatpush1.msra.mxu0 0.0
        %6574 = vmatprep.subr.mxu0 0.0
        %6575 = vmatpush1.msra.mxu0 0.0
        %6576 = vmatprep.subr.mxu0 0.0
        %6577 = vmatpush1.msra.mxu0 0.0
        %6578 = vmatprep.subr.mxu0 0.0
        %6579 = vmatpush1.msra.mxu0 0.0
        %6580 = vmatprep.subr.mxu0 0.0
        %6581 = vmatpush1.msra.mxu0 0.0
        %6582 = vmatprep.subr.mxu0 0.0
        %6583 = vmatpush1.msra.mxu0 0.0
        %6584 = vmatprep.subr.mxu0 0.0
        %6585 = vmatpush1.msra.mxu0 0.0
        %6586 = vmatprep.subr.mxu0 0.0
        %6587 = vmatpush1.msra.mxu0 0.0
        %6588 = vmatprep.subr.mxu0 0.0
        %6589 = vmatpush1.msra.mxu0 0.0
        %6590 = vmatprep.subr.mxu0 0.0
        %6591 = vmatpush1.msra.mxu0 0.0
        %6592 = vmatprep.subr.mxu0 0.0
        %6593 = vmatpush1.msra.mxu0 0.0
        %6594 = vmatprep.subr.mxu0 0.0
        %6595 = vmatpush1.msra.mxu0 0.0
        %6596 = vmatprep.subr.mxu0 0.0
        %6597 = vmatpush1.msra.mxu0 0.0
        %6598 = vmatprep.subr.mxu0 0.0
        %6599 = vmatpush1.msra.mxu0 0.0
        %6600 = vmatprep.subr.mxu0 0.0
        %6601 = vmatpush1.msra.mxu0 0.0
        %6602 = vmatprep.subr.mxu0 0.0
        %6603 = vmatpush1.msra.mxu0 0.0
        %6604 = vmatprep.subr.mxu0 0.0
        %6605 = vmatpush1.msra.mxu0 0.0
        %6606 = vmatprep.subr.mxu0 0.0
        %6607 = vmatpush1.msra.mxu0 0.0
        %6608 = vmatprep.subr.mxu0 0.0
        %6609 = vmatpush1.msra.mxu0 0.0
        %6610 = vmatprep.subr.mxu0 0.0
        %6611 = vmatpush1.msra.mxu0 0.0
        %6612 = vmatprep.subr.mxu0 0.0
        %6613 = vmatpush1.msra.mxu0 0.0
        %6614 = vmatprep.subr.mxu0 0.0
        %6615 = vmatpush1.msra.mxu0 0.0
        %6616 = vmatprep.subr.mxu0 0.0
        %6617 = vmatpush1.msra.mxu0 0.0
        %6618 = vmatprep.subr.mxu0 0.0
        %6619 = vmatpush1.msra.mxu0 0.0
        %6620 = vmatprep.subr.mxu0 0.0
        %6621 = vmatpush1.msra.mxu0 0.0
        %6622 = vmatprep.subr.mxu0 0.0
        %6623 = vmatpush1.msra.mxu0 0.0
        %6624 = vmatprep.subr.mxu0 0.0
        %6625 = vmatpush1.msra.mxu0 0.0
        %6626 = vmatprep.subr.mxu0 0.0
        %6627 = vmatpush1.msra.mxu0 0.0
        %6628 = vmatprep.mubr.f32.mxu0 0.0
        %6629 = vmatmul.mubr.f32.gmra.mrb[0].mxu0 %v6562
        %v6630 = vpop.f32.mrb[0].mxu0
        %v6631 = vadd.f32 0.0, %v6630
        %v6632 = vpop.f32.mrb[0].mxu0
        %6633 = vdwg.mxu0
        %s6634 = scalar_lea.vmem %s5, 88
        %v6635 = vld [vmem:[%s6634] sm:$0xff]
        %v6637 = vsel %vm772, %v6631, 0
        %6639 = vmatprep.subr.mxu0 0.0
        %6640 = vmatpush1.msra.mxu0 %v6635
        %6641 = vmatprep.subr.mxu0 0.0
        %6642 = vmatpush1.msra.mxu0 0.0
        %6643 = vmatprep.subr.mxu0 0.0
        %6644 = vmatpush1.msra.mxu0 0.0
        %6645 = vmatprep.subr.mxu0 0.0
        %6646 = vmatpush1.msra.mxu0 0.0
        %6647 = vmatprep.subr.mxu0 0.0
        %6648 = vmatpush1.msra.mxu0 0.0
        %6649 = vmatprep.subr.mxu0 0.0
        %6650 = vmatpush1.msra.mxu0 0.0
        %6651 = vmatprep.subr.mxu0 0.0
        %6652 = vmatpush1.msra.mxu0 0.0
        %6653 = vmatprep.subr.mxu0 0.0
        %6654 = vmatpush1.msra.mxu0 0.0
        %6655 = vmatprep.subr.mxu0 0.0
        %6656 = vmatpush1.msra.mxu0 0.0
        %6657 = vmatprep.subr.mxu0 0.0
        %6658 = vmatpush1.msra.mxu0 0.0
        %6659 = vmatprep.subr.mxu0 0.0
        %6660 = vmatpush1.msra.mxu0 0.0
        %6661 = vmatprep.subr.mxu0 0.0
        %6662 = vmatpush1.msra.mxu0 0.0
        %6663 = vmatprep.subr.mxu0 0.0
        %6664 = vmatpush1.msra.mxu0 0.0
        %6665 = vmatprep.subr.mxu0 0.0
        %6666 = vmatpush1.msra.mxu0 0.0
        %6667 = vmatprep.subr.mxu0 0.0
        %6668 = vmatpush1.msra.mxu0 0.0
        %6669 = vmatprep.subr.mxu0 0.0
        %6670 = vmatpush1.msra.mxu0 0.0
        %6671 = vmatprep.subr.mxu0 0.0
        %6672 = vmatpush1.msra.mxu0 0.0
        %6673 = vmatprep.subr.mxu0 0.0
        %6674 = vmatpush1.msra.mxu0 0.0
        %6675 = vmatprep.subr.mxu0 0.0
        %6676 = vmatpush1.msra.mxu0 0.0
        %6677 = vmatprep.subr.mxu0 0.0
        %6678 = vmatpush1.msra.mxu0 0.0
        %6679 = vmatprep.subr.mxu0 0.0
        %6680 = vmatpush1.msra.mxu0 0.0
        %6681 = vmatprep.subr.mxu0 0.0
        %6682 = vmatpush1.msra.mxu0 0.0
        %6683 = vmatprep.subr.mxu0 0.0
        %6684 = vmatpush1.msra.mxu0 0.0
        %6685 = vmatprep.subr.mxu0 0.0
        %6686 = vmatpush1.msra.mxu0 0.0
        %6687 = vmatprep.subr.mxu0 0.0
        %6688 = vmatpush1.msra.mxu0 0.0
        %6689 = vmatprep.subr.mxu0 0.0
        %6690 = vmatpush1.msra.mxu0 0.0
        %6691 = vmatprep.subr.mxu0 0.0
        %6692 = vmatpush1.msra.mxu0 0.0
        %6693 = vmatprep.subr.mxu0 0.0
        %6694 = vmatpush1.msra.mxu0 0.0
        %6695 = vmatprep.subr.mxu0 0.0
        %6696 = vmatpush1.msra.mxu0 0.0
        %6697 = vmatprep.subr.mxu0 0.0
        %6698 = vmatpush1.msra.mxu0 0.0
        %6699 = vmatprep.subr.mxu0 0.0
        %6700 = vmatpush1.msra.mxu0 0.0
        %6701 = vmatprep.subr.mxu0 0.0
        %6702 = vmatpush1.msra.mxu0 0.0
        %6703 = vmatprep.mubr.f32.mxu0 0.0
        %6704 = vmatmul.mubr.f32.gmra.mrb[0].mxu0 %v6637
        %v6705 = vpop.f32.mrb[0].mxu0
        %v6706 = vadd.f32 0.0, %v6705
        %v6707 = vpop.f32.mrb[0].mxu0
        %6708 = vdwg.mxu0
        %v6709 = vadd.f32 %v6222, %v6706
        %s6710 = scalar_lea.vmem %s6, 2
        %v6711 = vld [vmem:[%s6710] sm:$0x1]
        %v6713 = vlaneseq
        %v6714 = vshrl.u32 %v6713, 7
        %v6715 = vsub.s32 0, %v6714
        %v6716 = vrot.slane %v6711, %v6715
        %v6718 = vadd.f32 %v6709, %v6716
        %v6719 = vadd.f32 %v4760, %v6718
        %s6720 = scalar_lea.vmem %s11, 3
        %v6721 = vld [vmem:[%s6720] sm:$0x1]
        %s6722 = scalar_lea.vmem %s12, 3
        %v6723 = vld [vmem:[%s6722] sm:$0x1]
        %v6724 = vsel %vm532, %v6719, 0.0
        %6725 = vadd.xlane.f32.xlu0 %v6724
        %v6726 = vpop.xlane.xlu0 %6725
        %v6727 = vmul.f32 %v6726, %v2483
        %v6728 = vsub.f32 %v6719, %v6727
        %v6729 = vmul.f32 %v6728, %v6728
        %v6730 = vsel %vm532, %v6729, 0.0
        %6731 = vadd.xlane.f32.xlu0 %v6730
        %v6732 = vpop.xlane.xlu0 %6731
        %v6733 = vmul.f32 %v6732, %v2483
        %v6734 = vadd.f32 %v6733, 1e-05
        %v6735 = vrsqrt.pop %v6734
        %v6736 = vmul.f32 %v6728, %v6735
        %v6738 = vlaneseq
        %v6739 = vshrl.u32 %v6738, 7
        %v6740 = vsub.s32 0, %v6739
        %v6741 = vrot.slane %v6721, %v6740
        %v6743 = vmul.f32 %v6736, %v6741
        %v6745 = vlaneseq
        %v6746 = vshrl.u32 %v6745, 7
        %v6747 = vsub.s32 0, %v6746
        %v6748 = vrot.slane %v6723, %v6747
        %v6750 = vadd.f32 %v6743, %v6748
        %s6751 = scalar_lea.vmem %s3, 1152
        %v6752 = vld [vmem:[%s6751] sm:$0xff]
        %v6753 = vld [vmem:[%s6751 + $0x8] sm:$0xff]
        %v6754 = vld [vmem:[%s6751 + $0x10] sm:$0xff]
        %v6755 = vld [vmem:[%s6751 + $0x18] sm:$0xff]
        %s6756 = scalar_lea.vmem %s4, 36
        %v6757 = vld [vmem:[%s6756] sm:$0x1]
        %v6759 = vlaneseq
        %v6760 = vshrl.u32 %v6759, 7
        %v6761 = vsub.s32 0, %v6760
        %v6762 = vrot.slane %v6757, %v6761
        %v6765 = vsel %vm532, %v6750, 0
        %6767 = vmatprep.subr.mxu0 0.0
        %6768 = vmatpush1.msra.mxu0 %v6752
        %6769 = vmatprep.subr.mxu0 0.0
        %6770 = vmatpush1.msra.mxu0 %v6753
        %6771 = vmatprep.subr.mxu0 0.0
        %6772 = vmatpush1.msra.mxu0 %v6754
        %6773 = vmatprep.subr.mxu0 0.0
        %6774 = vmatpush1.msra.mxu0 %v6755
        %6775 = vmatprep.subr.mxu0 0.0
        %6776 = vmatpush1.msra.mxu0 0.0
        %6777 = vmatprep.subr.mxu0 0.0
        %6778 = vmatpush1.msra.mxu0 0.0
        %6779 = vmatprep.subr.mxu0 0.0
        %6780 = vmatpush1.msra.mxu0 0.0
        %6781 = vmatprep.subr.mxu0 0.0
        %6782 = vmatpush1.msra.mxu0 0.0
        %6783 = vmatprep.subr.mxu0 0.0
        %6784 = vmatpush1.msra.mxu0 0.0
        %6785 = vmatprep.subr.mxu0 0.0
        %6786 = vmatpush1.msra.mxu0 0.0
        %6787 = vmatprep.subr.mxu0 0.0
        %6788 = vmatpush1.msra.mxu0 0.0
        %6789 = vmatprep.subr.mxu0 0.0
        %6790 = vmatpush1.msra.mxu0 0.0
        %6791 = vmatprep.subr.mxu0 0.0
        %6792 = vmatpush1.msra.mxu0 0.0
        %6793 = vmatprep.subr.mxu0 0.0
        %6794 = vmatpush1.msra.mxu0 0.0
        %6795 = vmatprep.subr.mxu0 0.0
        %6796 = vmatpush1.msra.mxu0 0.0
        %6797 = vmatprep.subr.mxu0 0.0
        %6798 = vmatpush1.msra.mxu0 0.0
        %6799 = vmatprep.subr.mxu0 0.0
        %6800 = vmatpush1.msra.mxu0 0.0
        %6801 = vmatprep.subr.mxu0 0.0
        %6802 = vmatpush1.msra.mxu0 0.0
        %6803 = vmatprep.subr.mxu0 0.0
        %6804 = vmatpush1.msra.mxu0 0.0
        %6805 = vmatprep.subr.mxu0 0.0
        %6806 = vmatpush1.msra.mxu0 0.0
        %6807 = vmatprep.subr.mxu0 0.0
        %6808 = vmatpush1.msra.mxu0 0.0
        %6809 = vmatprep.subr.mxu0 0.0
        %6810 = vmatpush1.msra.mxu0 0.0
        %6811 = vmatprep.subr.mxu0 0.0
        %6812 = vmatpush1.msra.mxu0 0.0
        %6813 = vmatprep.subr.mxu0 0.0
        %6814 = vmatpush1.msra.mxu0 0.0
        %6815 = vmatprep.subr.mxu0 0.0
        %6816 = vmatpush1.msra.mxu0 0.0
        %6817 = vmatprep.subr.mxu0 0.0
        %6818 = vmatpush1.msra.mxu0 0.0
        %6819 = vmatprep.subr.mxu0 0.0
        %6820 = vmatpush1.msra.mxu0 0.0
        %6821 = vmatprep.subr.mxu0 0.0
        %6822 = vmatpush1.msra.mxu0 0.0
        %6823 = vmatprep.subr.mxu0 0.0
        %6824 = vmatpush1.msra.mxu0 0.0
        %6825 = vmatprep.subr.mxu0 0.0
        %6826 = vmatpush1.msra.mxu0 0.0
        %6827 = vmatprep.subr.mxu0 0.0
        %6828 = vmatpush1.msra.mxu0 0.0
        %6829 = vmatprep.subr.mxu0 0.0
        %6830 = vmatpush1.msra.mxu0 0.0
        %6831 = vmatprep.mubr.f32.mxu0 0.0
        %6832 = vmatmul.mubr.f32.gmra.mrb[0].mxu0 %v6765
        %v6833 = vpop.f32.mrb[0].mxu0
        %v6834 = vadd.f32 %v6762, %v6833
        %v6835 = vpop.f32.mrb[0].mxu0
        %6836 = vdwg.mxu0
        %s6837 = scalar_lea.vmem %s3, 1280
        %v6838 = vld [vmem:[%s6837] sm:$0xff]
        %v6839 = vld [vmem:[%s6837 + $0x8] sm:$0xff]
        %v6840 = vld [vmem:[%s6837 + $0x10] sm:$0xff]
        %v6841 = vld [vmem:[%s6837 + $0x18] sm:$0xff]
        %s6842 = scalar_lea.vmem %s4, 40
        %v6843 = vld [vmem:[%s6842] sm:$0x1]
        %v6845 = vlaneseq
        %v6846 = vshrl.u32 %v6845, 7
        %v6847 = vsub.s32 0, %v6846
        %v6848 = vrot.slane %v6843, %v6847
        %6850 = vmatprep.subr.mxu0 0.0
        %6851 = vmatpush1.msra.mxu0 %v6838
        %6852 = vmatprep.subr.mxu0 0.0
        %6853 = vmatpush1.msra.mxu0 %v6839
        %6854 = vmatprep.subr.mxu0 0.0
        %6855 = vmatpush1.msra.mxu0 %v6840
        %6856 = vmatprep.subr.mxu0 0.0
        %6857 = vmatpush1.msra.mxu0 %v6841
        %6858 = vmatprep.subr.mxu0 0.0
        %6859 = vmatpush1.msra.mxu0 0.0
        %6860 = vmatprep.subr.mxu0 0.0
        %6861 = vmatpush1.msra.mxu0 0.0
        %6862 = vmatprep.subr.mxu0 0.0
        %6863 = vmatpush1.msra.mxu0 0.0
        %6864 = vmatprep.subr.mxu0 0.0
        %6865 = vmatpush1.msra.mxu0 0.0
        %6866 = vmatprep.subr.mxu0 0.0
        %6867 = vmatpush1.msra.mxu0 0.0
        %6868 = vmatprep.subr.mxu0 0.0
        %6869 = vmatpush1.msra.mxu0 0.0
        %6870 = vmatprep.subr.mxu0 0.0
        %6871 = vmatpush1.msra.mxu0 0.0
        %6872 = vmatprep.subr.mxu0 0.0
        %6873 = vmatpush1.msra.mxu0 0.0
        %6874 = vmatprep.subr.mxu0 0.0
        %6875 = vmatpush1.msra.mxu0 0.0
        %6876 = vmatprep.subr.mxu0 0.0
        %6877 = vmatpush1.msra.mxu0 0.0
        %6878 = vmatprep.subr.mxu0 0.0
        %6879 = vmatpush1.msra.mxu0 0.0
        %6880 = vmatprep.subr.mxu0 0.0
        %6881 = vmatpush1.msra.mxu0 0.0
        %6882 = vmatprep.subr.mxu0 0.0
        %6883 = vmatpush1.msra.mxu0 0.0
        %6884 = vmatprep.subr.mxu0 0.0
        %6885 = vmatpush1.msra.mxu0 0.0
        %6886 = vmatprep.subr.mxu0 0.0
        %6887 = vmatpush1.msra.mxu0 0.0
        %6888 = vmatprep.subr.mxu0 0.0
        %6889 = vmatpush1.msra.mxu0 0.0
        %6890 = vmatprep.subr.mxu0 0.0
        %6891 = vmatpush1.msra.mxu0 0.0
        %6892 = vmatprep.subr.mxu0 0.0
        %6893 = vmatpush1.msra.mxu0 0.0
        %6894 = vmatprep.subr.mxu0 0.0
        %6895 = vmatpush1.msra.mxu0 0.0
        %6896 = vmatprep.subr.mxu0 0.0
        %6897 = vmatpush1.msra.mxu0 0.0
        %6898 = vmatprep.subr.mxu0 0.0
        %6899 = vmatpush1.msra.mxu0 0.0
        %6900 = vmatprep.subr.mxu0 0.0
        %6901 = vmatpush1.msra.mxu0 0.0
        %6902 = vmatprep.subr.mxu0 0.0
        %6903 = vmatpush1.msra.mxu0 0.0
        %6904 = vmatprep.subr.mxu0 0.0
        %6905 = vmatpush1.msra.mxu0 0.0
        %6906 = vmatprep.subr.mxu0 0.0
        %6907 = vmatpush1.msra.mxu0 0.0
        %6908 = vmatprep.subr.mxu0 0.0
        %6909 = vmatpush1.msra.mxu0 0.0
        %6910 = vmatprep.subr.mxu0 0.0
        %6911 = vmatpush1.msra.mxu0 0.0
        %6912 = vmatprep.subr.mxu0 0.0
        %6913 = vmatpush1.msra.mxu0 0.0
        %6914 = vmatprep.mubr.f32.mxu0 0.0
        %6915 = vmatmul.mubr.f32.gmra.mrb[0].mxu0 %v2608
        %v6916 = vpop.f32.mrb[0].mxu0
        %v6917 = vadd.f32 %v6848, %v6916
        %v6918 = vpop.f32.mrb[0].mxu0
        %6919 = vmatprep.mubr.f32.mxu0 0.0
        %6920 = vmatmul.mubr.f32.gmra.mrb[0].mxu0 %v2611
        %v6921 = vpop.f32.mrb[0].mxu0
        %v6922 = vadd.f32 %v6848, %v6921
        %v6923 = vpop.f32.mrb[0].mxu0
        %6924 = vdwg.mxu0
        %s6925 = scalar_lea.vmem %s3, 1408
        %v6926 = vld [vmem:[%s6925] sm:$0xff]
        %v6927 = vld [vmem:[%s6925 + $0x8] sm:$0xff]
        %v6928 = vld [vmem:[%s6925 + $0x10] sm:$0xff]
        %v6929 = vld [vmem:[%s6925 + $0x18] sm:$0xff]
        %s6930 = scalar_lea.vmem %s4, 44
        %v6931 = vld [vmem:[%s6930] sm:$0x1]
        %v6933 = vlaneseq
        %v6934 = vshrl.u32 %v6933, 7
        %v6935 = vsub.s32 0, %v6934
        %v6936 = vrot.slane %v6931, %v6935
        %6938 = vmatprep.subr.mxu0 0.0
        %6939 = vmatpush1.msra.mxu0 %v6926
        %6940 = vmatprep.subr.mxu0 0.0
        %6941 = vmatpush1.msra.mxu0 %v6927
        %6942 = vmatprep.subr.mxu0 0.0
        %6943 = vmatpush1.msra.mxu0 %v6928
        %6944 = vmatprep.subr.mxu0 0.0
        %6945 = vmatpush1.msra.mxu0 %v6929
        %6946 = vmatprep.subr.mxu0 0.0
        %6947 = vmatpush1.msra.mxu0 0.0
        %6948 = vmatprep.subr.mxu0 0.0
        %6949 = vmatpush1.msra.mxu0 0.0
        %6950 = vmatprep.subr.mxu0 0.0
        %6951 = vmatpush1.msra.mxu0 0.0
        %6952 = vmatprep.subr.mxu0 0.0
        %6953 = vmatpush1.msra.mxu0 0.0
        %6954 = vmatprep.subr.mxu0 0.0
        %6955 = vmatpush1.msra.mxu0 0.0
        %6956 = vmatprep.subr.mxu0 0.0
        %6957 = vmatpush1.msra.mxu0 0.0
        %6958 = vmatprep.subr.mxu0 0.0
        %6959 = vmatpush1.msra.mxu0 0.0
        %6960 = vmatprep.subr.mxu0 0.0
        %6961 = vmatpush1.msra.mxu0 0.0
        %6962 = vmatprep.subr.mxu0 0.0
        %6963 = vmatpush1.msra.mxu0 0.0
        %6964 = vmatprep.subr.mxu0 0.0
        %6965 = vmatpush1.msra.mxu0 0.0
        %6966 = vmatprep.subr.mxu0 0.0
        %6967 = vmatpush1.msra.mxu0 0.0
        %6968 = vmatprep.subr.mxu0 0.0
        %6969 = vmatpush1.msra.mxu0 0.0
        %6970 = vmatprep.subr.mxu0 0.0
        %6971 = vmatpush1.msra.mxu0 0.0
        %6972 = vmatprep.subr.mxu0 0.0
        %6973 = vmatpush1.msra.mxu0 0.0
        %6974 = vmatprep.subr.mxu0 0.0
        %6975 = vmatpush1.msra.mxu0 0.0
        %6976 = vmatprep.subr.mxu0 0.0
        %6977 = vmatpush1.msra.mxu0 0.0
        %6978 = vmatprep.subr.mxu0 0.0
        %6979 = vmatpush1.msra.mxu0 0.0
        %6980 = vmatprep.subr.mxu0 0.0
        %6981 = vmatpush1.msra.mxu0 0.0
        %6982 = vmatprep.subr.mxu0 0.0
        %6983 = vmatpush1.msra.mxu0 0.0
        %6984 = vmatprep.subr.mxu0 0.0
        %6985 = vmatpush1.msra.mxu0 0.0
        %6986 = vmatprep.subr.mxu0 0.0
        %6987 = vmatpush1.msra.mxu0 0.0
        %6988 = vmatprep.subr.mxu0 0.0
        %6989 = vmatpush1.msra.mxu0 0.0
        %6990 = vmatprep.subr.mxu0 0.0
        %6991 = vmatpush1.msra.mxu0 0.0
        %6992 = vmatprep.subr.mxu0 0.0
        %6993 = vmatpush1.msra.mxu0 0.0
        %6994 = vmatprep.subr.mxu0 0.0
        %6995 = vmatpush1.msra.mxu0 0.0
        %6996 = vmatprep.subr.mxu0 0.0
        %6997 = vmatpush1.msra.mxu0 0.0
        %6998 = vmatprep.subr.mxu0 0.0
        %6999 = vmatpush1.msra.mxu0 0.0
        %7000 = vmatprep.subr.mxu0 0.0
        %7001 = vmatpush1.msra.mxu0 0.0
        %7002 = vmatprep.mubr.f32.mxu0 0.0
        %7003 = vmatmul.mubr.f32.gmra.mrb[0].mxu0 %v2608
        %v7004 = vpop.f32.mrb[0].mxu0
        %v7005 = vadd.f32 %v6936, %v7004
        %v7006 = vpop.f32.mrb[0].mxu0
        %7007 = vmatprep.mubr.f32.mxu0 0.0
        %7008 = vmatmul.mubr.f32.gmra.mrb[0].mxu0 %v2611
        %v7009 = vpop.f32.mrb[0].mxu0
        %v7010 = vadd.f32 %v6936, %v7009
        %v7011 = vpop.f32.mrb[0].mxu0
        %7012 = vdwg.mxu0
        %v7014 = vsel %vm772, %v6834, 0
        %v7017 = vsel %vm772, %v6917, 0
        %v7020 = vsel %vm772, %v6922, 0
        %7022 = vmatprep.subr.mxu0 0.0
        %7023 = vmatpush1.xpose.msra.mxu0 %v7017
        %7024 = vmatprep.subr.mxu0 0.0
        %7025 = vmatpush1.xpose.msra.mxu0 %v7020
        %7026 = vmatprep.subr.mxu0 0.0
        %7027 = vmatpush1.xpose.msra.mxu0 0.0
        %7028 = vmatprep.subr.mxu0 0.0
        %7029 = vmatpush1.xpose.msra.mxu0 0.0
        %7030 = vmatprep.subr.mxu0 0.0
        %7031 = vmatpush1.xpose.msra.mxu0 0.0
        %7032 = vmatprep.subr.mxu0 0.0
        %7033 = vmatpush1.xpose.msra.mxu0 0.0
        %7034 = vmatprep.subr.mxu0 0.0
        %7035 = vmatpush1.xpose.msra.mxu0 0.0
        %7036 = vmatprep.subr.mxu0 0.0
        %7037 = vmatpush1.xpose.msra.mxu0 0.0
        %7038 = vmatprep.subr.mxu0 0.0
        %7039 = vmatpush1.xpose.msra.mxu0 0.0
        %7040 = vmatprep.subr.mxu0 0.0
        %7041 = vmatpush1.xpose.msra.mxu0 0.0
        %7042 = vmatprep.subr.mxu0 0.0
        %7043 = vmatpush1.xpose.msra.mxu0 0.0
        %7044 = vmatprep.subr.mxu0 0.0
        %7045 = vmatpush1.xpose.msra.mxu0 0.0
        %7046 = vmatprep.subr.mxu0 0.0
        %7047 = vmatpush1.xpose.msra.mxu0 0.0
        %7048 = vmatprep.subr.mxu0 0.0
        %7049 = vmatpush1.xpose.msra.mxu0 0.0
        %7050 = vmatprep.subr.mxu0 0.0
        %7051 = vmatpush1.xpose.msra.mxu0 0.0
        %7052 = vmatprep.subr.mxu0 0.0
        %7053 = vmatpush1.xpose.msra.mxu0 0.0
        %7054 = vmatprep.subr.mxu0 0.0
        %7055 = vmatpush1.xpose.msra.mxu0 0.0
        %7056 = vmatprep.subr.mxu0 0.0
        %7057 = vmatpush1.xpose.msra.mxu0 0.0
        %7058 = vmatprep.subr.mxu0 0.0
        %7059 = vmatpush1.xpose.msra.mxu0 0.0
        %7060 = vmatprep.subr.mxu0 0.0
        %7061 = vmatpush1.xpose.msra.mxu0 0.0
        %7062 = vmatprep.subr.mxu0 0.0
        %7063 = vmatpush1.xpose.msra.mxu0 0.0
        %7064 = vmatprep.subr.mxu0 0.0
        %7065 = vmatpush1.xpose.msra.mxu0 0.0
        %7066 = vmatprep.subr.mxu0 0.0
        %7067 = vmatpush1.xpose.msra.mxu0 0.0
        %7068 = vmatprep.subr.mxu0 0.0
        %7069 = vmatpush1.xpose.msra.mxu0 0.0
        %7070 = vmatprep.subr.mxu0 0.0
        %7071 = vmatpush1.xpose.msra.mxu0 0.0
        %7072 = vmatprep.subr.mxu0 0.0
        %7073 = vmatpush1.xpose.msra.mxu0 0.0
        %7074 = vmatprep.subr.mxu0 0.0
        %7075 = vmatpush1.xpose.msra.mxu0 0.0
        %7076 = vmatprep.subr.mxu0 0.0
        %7077 = vmatpush1.xpose.msra.mxu0 0.0
        %7078 = vmatprep.subr.mxu0 0.0
        %7079 = vmatpush1.xpose.msra.mxu0 0.0
        %7080 = vmatprep.subr.mxu0 0.0
        %7081 = vmatpush1.xpose.msra.mxu0 0.0
        %7082 = vmatprep.subr.mxu0 0.0
        %7083 = vmatpush1.xpose.msra.mxu0 0.0
        %7084 = vmatprep.subr.mxu0 0.0
        %7085 = vmatpush1.xpose.msra.mxu0 0.0
        %7086 = vmatprep.mubr.f32.mxu0 0.0
        %7087 = vmatmul.mubr.f32.gmra.mrb[0].mxu0 %v7014
        %v7088 = vpop.f32.mrb[0].mxu0
        %v7089 = vadd.f32 0.0, %v7088
        %v7090 = vpop.f32.mrb[0].mxu0
        %7091 = vdwg.mxu0
        %v7092 = vmul.f32 %v7089, 0.35355338
        %v7093 = vsel %vm2856, %v7092, -inf
        %7094 = vmax.xlane.f32.xlu0 %v7093
        %v7095 = vpop.xlane.xlu0 %7094
        %v7096 = vsub.f32 %v7092, %v7095
        %v7097 = vmul.f32 %v7096, 1.442695
        %v7098 = vpow.pop %v7097
        %v7099 = vsel %vm2856, %v7098, 0.0
        %7100 = vadd.xlane.f32.xlu0 %v7099
        %v7101 = vpop.xlane.xlu0 %7100
        %v7102 = vrcp.pop %v7101
        %v7103 = vmul.f32 %v7098, %v7102
        %v7105 = vsel %vm2856, %v7103, 0
        %7107 = vmatprep.subr.mxu0 0.0
        %7108 = vmatpush1.msra.mxu0 %v7005
        %7109 = vmatprep.subr.mxu0 0.0
        %7110 = vmatpush1.msra.mxu0 %v7010
        %7111 = vmatprep.subr.mxu0 0.0
        %7112 = vmatpush1.msra.mxu0 0.0
        %7113 = vmatprep.subr.mxu0 0.0
        %7114 = vmatpush1.msra.mxu0 0.0
        %7115 = vmatprep.subr.mxu0 0.0
        %7116 = vmatpush1.msra.mxu0 0.0
        %7117 = vmatprep.subr.mxu0 0.0
        %7118 = vmatpush1.msra.mxu0 0.0
        %7119 = vmatprep.subr.mxu0 0.0
        %7120 = vmatpush1.msra.mxu0 0.0
        %7121 = vmatprep.subr.mxu0 0.0
        %7122 = vmatpush1.msra.mxu0 0.0
        %7123 = vmatprep.subr.mxu0 0.0
        %7124 = vmatpush1.msra.mxu0 0.0
        %7125 = vmatprep.subr.mxu0 0.0
        %7126 = vmatpush1.msra.mxu0 0.0
        %7127 = vmatprep.subr.mxu0 0.0
        %7128 = vmatpush1.msra.mxu0 0.0
        %7129 = vmatprep.subr.mxu0 0.0
        %7130 = vmatpush1.msra.mxu0 0.0
        %7131 = vmatprep.subr.mxu0 0.0
        %7132 = vmatpush1.msra.mxu0 0.0
        %7133 = vmatprep.subr.mxu0 0.0
        %7134 = vmatpush1.msra.mxu0 0.0
        %7135 = vmatprep.subr.mxu0 0.0
        %7136 = vmatpush1.msra.mxu0 0.0
        %7137 = vmatprep.subr.mxu0 0.0
        %7138 = vmatpush1.msra.mxu0 0.0
        %7139 = vmatprep.subr.mxu0 0.0
        %7140 = vmatpush1.msra.mxu0 0.0
        %7141 = vmatprep.subr.mxu0 0.0
        %7142 = vmatpush1.msra.mxu0 0.0
        %7143 = vmatprep.subr.mxu0 0.0
        %7144 = vmatpush1.msra.mxu0 0.0
        %7145 = vmatprep.subr.mxu0 0.0
        %7146 = vmatpush1.msra.mxu0 0.0
        %7147 = vmatprep.subr.mxu0 0.0
        %7148 = vmatpush1.msra.mxu0 0.0
        %7149 = vmatprep.subr.mxu0 0.0
        %7150 = vmatpush1.msra.mxu0 0.0
        %7151 = vmatprep.subr.mxu0 0.0
        %7152 = vmatpush1.msra.mxu0 0.0
        %7153 = vmatprep.subr.mxu0 0.0
        %7154 = vmatpush1.msra.mxu0 0.0
        %7155 = vmatprep.subr.mxu0 0.0
        %7156 = vmatpush1.msra.mxu0 0.0
        %7157 = vmatprep.subr.mxu0 0.0
        %7158 = vmatpush1.msra.mxu0 0.0
        %7159 = vmatprep.subr.mxu0 0.0
        %7160 = vmatpush1.msra.mxu0 0.0
        %7161 = vmatprep.subr.mxu0 0.0
        %7162 = vmatpush1.msra.mxu0 0.0
        %7163 = vmatprep.subr.mxu0 0.0
        %7164 = vmatpush1.msra.mxu0 0.0
        %7165 = vmatprep.subr.mxu0 0.0
        %7166 = vmatpush1.msra.mxu0 0.0
        %7167 = vmatprep.subr.mxu0 0.0
        %7168 = vmatpush1.msra.mxu0 0.0
        %7169 = vmatprep.subr.mxu0 0.0
        %7170 = vmatpush1.msra.mxu0 0.0
        %7171 = vmatprep.mubr.f32.mxu0 0.0
        %7172 = vmatmul.mubr.f32.gmra.mrb[0].mxu0 %v7105
        %v7173 = vpop.f32.mrb[0].mxu0
        %v7174 = vadd.f32 0.0, %v7173
        %v7175 = vpop.f32.mrb[0].mxu0
        %7176 = vdwg.mxu0
        %s7177 = scalar_lea.vmem %s5, 96
        %v7178 = vld [vmem:[%s7177] sm:$0xff]
        %s7179 = scalar_lea.vmem %s3, 1184
        %v7180 = vld [vmem:[%s7179] sm:$0xff]
        %v7181 = vld [vmem:[%s7179 + $0x8] sm:$0xff]
        %v7182 = vld [vmem:[%s7179 + $0x10] sm:$0xff]
        %v7183 = vld [vmem:[%s7179 + $0x18] sm:$0xff]
        %s7184 = scalar_lea.vmem %s4, 37
        %v7185 = vld [vmem:[%s7184] sm:$0x1]
        %v7187 = vlaneseq
        %v7188 = vshrl.u32 %v7187, 7
        %v7189 = vsub.s32 0, %v7188
        %v7190 = vrot.slane %v7185, %v7189
        %7192 = vmatprep.subr.mxu0 0.0
        %7193 = vmatpush1.msra.mxu0 %v7180
        %7194 = vmatprep.subr.mxu0 0.0
        %7195 = vmatpush1.msra.mxu0 %v7181
        %7196 = vmatprep.subr.mxu0 0.0
        %7197 = vmatpush1.msra.mxu0 %v7182
        %7198 = vmatprep.subr.mxu0 0.0
        %7199 = vmatpush1.msra.mxu0 %v7183
        %7200 = vmatprep.subr.mxu0 0.0
        %7201 = vmatpush1.msra.mxu0 0.0
        %7202 = vmatprep.subr.mxu0 0.0
        %7203 = vmatpush1.msra.mxu0 0.0
        %7204 = vmatprep.subr.mxu0 0.0
        %7205 = vmatpush1.msra.mxu0 0.0
        %7206 = vmatprep.subr.mxu0 0.0
        %7207 = vmatpush1.msra.mxu0 0.0
        %7208 = vmatprep.subr.mxu0 0.0
        %7209 = vmatpush1.msra.mxu0 0.0
        %7210 = vmatprep.subr.mxu0 0.0
        %7211 = vmatpush1.msra.mxu0 0.0
        %7212 = vmatprep.subr.mxu0 0.0
        %7213 = vmatpush1.msra.mxu0 0.0
        %7214 = vmatprep.subr.mxu0 0.0
        %7215 = vmatpush1.msra.mxu0 0.0
        %7216 = vmatprep.subr.mxu0 0.0
        %7217 = vmatpush1.msra.mxu0 0.0
        %7218 = vmatprep.subr.mxu0 0.0
        %7219 = vmatpush1.msra.mxu0 0.0
        %7220 = vmatprep.subr.mxu0 0.0
        %7221 = vmatpush1.msra.mxu0 0.0
        %7222 = vmatprep.subr.mxu0 0.0
        %7223 = vmatpush1.msra.mxu0 0.0
        %7224 = vmatprep.subr.mxu0 0.0
        %7225 = vmatpush1.msra.mxu0 0.0
        %7226 = vmatprep.subr.mxu0 0.0
        %7227 = vmatpush1.msra.mxu0 0.0
        %7228 = vmatprep.subr.mxu0 0.0
        %7229 = vmatpush1.msra.mxu0 0.0
        %7230 = vmatprep.subr.mxu0 0.0
        %7231 = vmatpush1.msra.mxu0 0.0
        %7232 = vmatprep.subr.mxu0 0.0
        %7233 = vmatpush1.msra.mxu0 0.0
        %7234 = vmatprep.subr.mxu0 0.0
        %7235 = vmatpush1.msra.mxu0 0.0
        %7236 = vmatprep.subr.mxu0 0.0
        %7237 = vmatpush1.msra.mxu0 0.0
        %7238 = vmatprep.subr.mxu0 0.0
        %7239 = vmatpush1.msra.mxu0 0.0
        %7240 = vmatprep.subr.mxu0 0.0
        %7241 = vmatpush1.msra.mxu0 0.0
        %7242 = vmatprep.subr.mxu0 0.0
        %7243 = vmatpush1.msra.mxu0 0.0
        %7244 = vmatprep.subr.mxu0 0.0
        %7245 = vmatpush1.msra.mxu0 0.0
        %7246 = vmatprep.subr.mxu0 0.0
        %7247 = vmatpush1.msra.mxu0 0.0
        %7248 = vmatprep.subr.mxu0 0.0
        %7249 = vmatpush1.msra.mxu0 0.0
        %7250 = vmatprep.subr.mxu0 0.0
        %7251 = vmatpush1.msra.mxu0 0.0
        %7252 = vmatprep.subr.mxu0 0.0
        %7253 = vmatpush1.msra.mxu0 0.0
        %7254 = vmatprep.subr.mxu0 0.0
        %7255 = vmatpush1.msra.mxu0 0.0
        %7256 = vmatprep.mubr.f32.mxu0 0.0
        %7257 = vmatmul.mubr.f32.gmra.mrb[0].mxu0 %v6765
        %v7258 = vpop.f32.mrb[0].mxu0
        %v7259 = vadd.f32 %v7190, %v7258
        %v7260 = vpop.f32.mrb[0].mxu0
        %7261 = vdwg.mxu0
        %s7262 = scalar_lea.vmem %s3, 1312
        %v7263 = vld [vmem:[%s7262] sm:$0xff]
        %v7264 = vld [vmem:[%s7262 + $0x8] sm:$0xff]
        %v7265 = vld [vmem:[%s7262 + $0x10] sm:$0xff]
        %v7266 = vld [vmem:[%s7262 + $0x18] sm:$0xff]
        %s7267 = scalar_lea.vmem %s4, 41
        %v7268 = vld [vmem:[%s7267] sm:$0x1]
        %v7270 = vlaneseq
        %v7271 = vshrl.u32 %v7270, 7
        %v7272 = vsub.s32 0, %v7271
        %v7273 = vrot.slane %v7268, %v7272
        %7275 = vmatprep.subr.mxu0 0.0
        %7276 = vmatpush1.msra.mxu0 %v7263
        %7277 = vmatprep.subr.mxu0 0.0
        %7278 = vmatpush1.msra.mxu0 %v7264
        %7279 = vmatprep.subr.mxu0 0.0
        %7280 = vmatpush1.msra.mxu0 %v7265
        %7281 = vmatprep.subr.mxu0 0.0
        %7282 = vmatpush1.msra.mxu0 %v7266
        %7283 = vmatprep.subr.mxu0 0.0
        %7284 = vmatpush1.msra.mxu0 0.0
        %7285 = vmatprep.subr.mxu0 0.0
        %7286 = vmatpush1.msra.mxu0 0.0
        %7287 = vmatprep.subr.mxu0 0.0
        %7288 = vmatpush1.msra.mxu0 0.0
        %7289 = vmatprep.subr.mxu0 0.0
        %7290 = vmatpush1.msra.mxu0 0.0
        %7291 = vmatprep.subr.mxu0 0.0
        %7292 = vmatpush1.msra.mxu0 0.0
        %7293 = vmatprep.subr.mxu0 0.0
        %7294 = vmatpush1.msra.mxu0 0.0
        %7295 = vmatprep.subr.mxu0 0.0
        %7296 = vmatpush1.msra.mxu0 0.0
        %7297 = vmatprep.subr.mxu0 0.0
        %7298 = vmatpush1.msra.mxu0 0.0
        %7299 = vmatprep.subr.mxu0 0.0
        %7300 = vmatpush1.msra.mxu0 0.0
        %7301 = vmatprep.subr.mxu0 0.0
        %7302 = vmatpush1.msra.mxu0 0.0
        %7303 = vmatprep.subr.mxu0 0.0
        %7304 = vmatpush1.msra.mxu0 0.0
        %7305 = vmatprep.subr.mxu0 0.0
        %7306 = vmatpush1.msra.mxu0 0.0
        %7307 = vmatprep.subr.mxu0 0.0
        %7308 = vmatpush1.msra.mxu0 0.0
        %7309 = vmatprep.subr.mxu0 0.0
        %7310 = vmatpush1.msra.mxu0 0.0
        %7311 = vmatprep.subr.mxu0 0.0
        %7312 = vmatpush1.msra.mxu0 0.0
        %7313 = vmatprep.subr.mxu0 0.0
        %7314 = vmatpush1.msra.mxu0 0.0
        %7315 = vmatprep.subr.mxu0 0.0
        %7316 = vmatpush1.msra.mxu0 0.0
        %7317 = vmatprep.subr.mxu0 0.0
        %7318 = vmatpush1.msra.mxu0 0.0
        %7319 = vmatprep.subr.mxu0 0.0
        %7320 = vmatpush1.msra.mxu0 0.0
        %7321 = vmatprep.subr.mxu0 0.0
        %7322 = vmatpush1.msra.mxu0 0.0
        %7323 = vmatprep.subr.mxu0 0.0
        %7324 = vmatpush1.msra.mxu0 0.0
        %7325 = vmatprep.subr.mxu0 0.0
        %7326 = vmatpush1.msra.mxu0 0.0
        %7327 = vmatprep.subr.mxu0 0.0
        %7328 = vmatpush1.msra.mxu0 0.0
        %7329 = vmatprep.subr.mxu0 0.0
        %7330 = vmatpush1.msra.mxu0 0.0
        %7331 = vmatprep.subr.mxu0 0.0
        %7332 = vmatpush1.msra.mxu0 0.0
        %7333 = vmatprep.subr.mxu0 0.0
        %7334 = vmatpush1.msra.mxu0 0.0
        %7335 = vmatprep.subr.mxu0 0.0
        %7336 = vmatpush1.msra.mxu0 0.0
        %7337 = vmatprep.subr.mxu0 0.0
        %7338 = vmatpush1.msra.mxu0 0.0
        %7339 = vmatprep.mubr.f32.mxu0 0.0
        %7340 = vmatmul.mubr.f32.gmra.mrb[0].mxu0 %v2608
        %v7341 = vpop.f32.mrb[0].mxu0
        %v7342 = vadd.f32 %v7273, %v7341
        %v7343 = vpop.f32.mrb[0].mxu0
        %7344 = vmatprep.mubr.f32.mxu0 0.0
        %7345 = vmatmul.mubr.f32.gmra.mrb[0].mxu0 %v2611
        %v7346 = vpop.f32.mrb[0].mxu0
        %v7347 = vadd.f32 %v7273, %v7346
        %v7348 = vpop.f32.mrb[0].mxu0
        %7349 = vdwg.mxu0
        %s7350 = scalar_lea.vmem %s3, 1440
        %v7351 = vld [vmem:[%s7350] sm:$0xff]
        %v7352 = vld [vmem:[%s7350 + $0x8] sm:$0xff]
        %v7353 = vld [vmem:[%s7350 + $0x10] sm:$0xff]
        %v7354 = vld [vmem:[%s7350 + $0x18] sm:$0xff]
        %s7355 = scalar_lea.vmem %s4, 45
        %v7356 = vld [vmem:[%s7355] sm:$0x1]
        %v7358 = vlaneseq
        %v7359 = vshrl.u32 %v7358, 7
        %v7360 = vsub.s32 0, %v7359
        %v7361 = vrot.slane %v7356, %v7360
        %7363 = vmatprep.subr.mxu0 0.0
        %7364 = vmatpush1.msra.mxu0 %v7351
        %7365 = vmatprep.subr.mxu0 0.0
        %7366 = vmatpush1.msra.mxu0 %v7352
        %7367 = vmatprep.subr.mxu0 0.0
        %7368 = vmatpush1.msra.mxu0 %v7353
        %7369 = vmatprep.subr.mxu0 0.0
        %7370 = vmatpush1.msra.mxu0 %v7354
        %7371 = vmatprep.subr.mxu0 0.0
        %7372 = vmatpush1.msra.mxu0 0.0
        %7373 = vmatprep.subr.mxu0 0.0
        %7374 = vmatpush1.msra.mxu0 0.0
        %7375 = vmatprep.subr.mxu0 0.0
        %7376 = vmatpush1.msra.mxu0 0.0
        %7377 = vmatprep.subr.mxu0 0.0
        %7378 = vmatpush1.msra.mxu0 0.0
        %7379 = vmatprep.subr.mxu0 0.0
        %7380 = vmatpush1.msra.mxu0 0.0
        %7381 = vmatprep.subr.mxu0 0.0
        %7382 = vmatpush1.msra.mxu0 0.0
        %7383 = vmatprep.subr.mxu0 0.0
        %7384 = vmatpush1.msra.mxu0 0.0
        %7385 = vmatprep.subr.mxu0 0.0
        %7386 = vmatpush1.msra.mxu0 0.0
        %7387 = vmatprep.subr.mxu0 0.0
        %7388 = vmatpush1.msra.mxu0 0.0
        %7389 = vmatprep.subr.mxu0 0.0
        %7390 = vmatpush1.msra.mxu0 0.0
        %7391 = vmatprep.subr.mxu0 0.0
        %7392 = vmatpush1.msra.mxu0 0.0
        %7393 = vmatprep.subr.mxu0 0.0
        %7394 = vmatpush1.msra.mxu0 0.0
        %7395 = vmatprep.subr.mxu0 0.0
        %7396 = vmatpush1.msra.mxu0 0.0
        %7397 = vmatprep.subr.mxu0 0.0
        %7398 = vmatpush1.msra.mxu0 0.0
        %7399 = vmatprep.subr.mxu0 0.0
        %7400 = vmatpush1.msra.mxu0 0.0
        %7401 = vmatprep.subr.mxu0 0.0
        %7402 = vmatpush1.msra.mxu0 0.0
        %7403 = vmatprep.subr.mxu0 0.0
        %7404 = vmatpush1.msra.mxu0 0.0
        %7405 = vmatprep.subr.mxu0 0.0
        %7406 = vmatpush1.msra.mxu0 0.0
        %7407 = vmatprep.subr.mxu0 0.0
        %7408 = vmatpush1.msra.mxu0 0.0
        %7409 = vmatprep.subr.mxu0 0.0
        %7410 = vmatpush1.msra.mxu0 0.0
        %7411 = vmatprep.subr.mxu0 0.0
        %7412 = vmatpush1.msra.mxu0 0.0
        %7413 = vmatprep.subr.mxu0 0.0
        %7414 = vmatpush1.msra.mxu0 0.0
        %7415 = vmatprep.subr.mxu0 0.0
        %7416 = vmatpush1.msra.mxu0 0.0
        %7417 = vmatprep.subr.mxu0 0.0
        %7418 = vmatpush1.msra.mxu0 0.0
        %7419 = vmatprep.subr.mxu0 0.0
        %7420 = vmatpush1.msra.mxu0 0.0
        %7421 = vmatprep.subr.mxu0 0.0
        %7422 = vmatpush1.msra.mxu0 0.0
        %7423 = vmatprep.subr.mxu0 0.0
        %7424 = vmatpush1.msra.mxu0 0.0
        %7425 = vmatprep.subr.mxu0 0.0
        %7426 = vmatpush1.msra.mxu0 0.0
        %7427 = vmatprep.mubr.f32.mxu0 0.0
        %7428 = vmatmul.mubr.f32.gmra.mrb[0].mxu0 %v2608
        %v7429 = vpop.f32.mrb[0].mxu0
        %v7430 = vadd.f32 %v7361, %v7429
        %v7431 = vpop.f32.mrb[0].mxu0
        %7432 = vmatprep.mubr.f32.mxu0 0.0
        %7433 = vmatmul.mubr.f32.gmra.mrb[0].mxu0 %v2611
        %v7434 = vpop.f32.mrb[0].mxu0
        %v7435 = vadd.f32 %v7361, %v7434
        %v7436 = vpop.f32.mrb[0].mxu0
        %7437 = vdwg.mxu0
        %v7439 = vsel %vm772, %v7259, 0
        %v7442 = vsel %vm772, %v7342, 0
        %v7445 = vsel %vm772, %v7347, 0
        %7447 = vmatprep.subr.mxu0 0.0
        %7448 = vmatpush1.xpose.msra.mxu0 %v7442
        %7449 = vmatprep.subr.mxu0 0.0
        %7450 = vmatpush1.xpose.msra.mxu0 %v7445
        %7451 = vmatprep.subr.mxu0 0.0
        %7452 = vmatpush1.xpose.msra.mxu0 0.0
        %7453 = vmatprep.subr.mxu0 0.0
        %7454 = vmatpush1.xpose.msra.mxu0 0.0
        %7455 = vmatprep.subr.mxu0 0.0
        %7456 = vmatpush1.xpose.msra.mxu0 0.0
        %7457 = vmatprep.subr.mxu0 0.0
        %7458 = vmatpush1.xpose.msra.mxu0 0.0
        %7459 = vmatprep.subr.mxu0 0.0
        %7460 = vmatpush1.xpose.msra.mxu0 0.0
        %7461 = vmatprep.subr.mxu0 0.0
        %7462 = vmatpush1.xpose.msra.mxu0 0.0
        %7463 = vmatprep.subr.mxu0 0.0
        %7464 = vmatpush1.xpose.msra.mxu0 0.0
        %7465 = vmatprep.subr.mxu0 0.0
        %7466 = vmatpush1.xpose.msra.mxu0 0.0
        %7467 = vmatprep.subr.mxu0 0.0
        %7468 = vmatpush1.xpose.msra.mxu0 0.0
        %7469 = vmatprep.subr.mxu0 0.0
        %7470 = vmatpush1.xpose.msra.mxu0 0.0
        %7471 = vmatprep.subr.mxu0 0.0
        %7472 = vmatpush1.xpose.msra.mxu0 0.0
        %7473 = vmatprep.subr.mxu0 0.0
        %7474 = vmatpush1.xpose.msra.mxu0 0.0
        %7475 = vmatprep.subr.mxu0 0.0
        %7476 = vmatpush1.xpose.msra.mxu0 0.0
        %7477 = vmatprep.subr.mxu0 0.0
        %7478 = vmatpush1.xpose.msra.mxu0 0.0
        %7479 = vmatprep.subr.mxu0 0.0
        %7480 = vmatpush1.xpose.msra.mxu0 0.0
        %7481 = vmatprep.subr.mxu0 0.0
        %7482 = vmatpush1.xpose.msra.mxu0 0.0
        %7483 = vmatprep.subr.mxu0 0.0
        %7484 = vmatpush1.xpose.msra.mxu0 0.0
        %7485 = vmatprep.subr.mxu0 0.0
        %7486 = vmatpush1.xpose.msra.mxu0 0.0
        %7487 = vmatprep.subr.mxu0 0.0
        %7488 = vmatpush1.xpose.msra.mxu0 0.0
        %7489 = vmatprep.subr.mxu0 0.0
        %7490 = vmatpush1.xpose.msra.mxu0 0.0
        %7491 = vmatprep.subr.mxu0 0.0
        %7492 = vmatpush1.xpose.msra.mxu0 0.0
        %7493 = vmatprep.subr.mxu0 0.0
        %7494 = vmatpush1.xpose.msra.mxu0 0.0
        %7495 = vmatprep.subr.mxu0 0.0
        %7496 = vmatpush1.xpose.msra.mxu0 0.0
        %7497 = vmatprep.subr.mxu0 0.0
        %7498 = vmatpush1.xpose.msra.mxu0 0.0
        %7499 = vmatprep.subr.mxu0 0.0
        %7500 = vmatpush1.xpose.msra.mxu0 0.0
        %7501 = vmatprep.subr.mxu0 0.0
        %7502 = vmatpush1.xpose.msra.mxu0 0.0
        %7503 = vmatprep.subr.mxu0 0.0
        %7504 = vmatpush1.xpose.msra.mxu0 0.0
        %7505 = vmatprep.subr.mxu0 0.0
        %7506 = vmatpush1.xpose.msra.mxu0 0.0
        %7507 = vmatprep.subr.mxu0 0.0
        %7508 = vmatpush1.xpose.msra.mxu0 0.0
        %7509 = vmatprep.subr.mxu0 0.0
        %7510 = vmatpush1.xpose.msra.mxu0 0.0
        %7511 = vmatprep.mubr.f32.mxu0 0.0
        %7512 = vmatmul.mubr.f32.gmra.mrb[0].mxu0 %v7439
        %v7513 = vpop.f32.mrb[0].mxu0
        %v7514 = vadd.f32 0.0, %v7513
        %v7515 = vpop.f32.mrb[0].mxu0
        %7516 = vdwg.mxu0
        %v7517 = vmul.f32 %v7514, 0.35355338
        %v7518 = vsel %vm2856, %v7517, -inf
        %7519 = vmax.xlane.f32.xlu0 %v7518
        %v7520 = vpop.xlane.xlu0 %7519
        %v7521 = vsub.f32 %v7517, %v7520
        %v7522 = vmul.f32 %v7521, 1.442695
        %v7523 = vpow.pop %v7522
        %v7524 = vsel %vm2856, %v7523, 0.0
        %7525 = vadd.xlane.f32.xlu0 %v7524
        %v7526 = vpop.xlane.xlu0 %7525
        %v7527 = vrcp.pop %v7526
        %v7528 = vmul.f32 %v7523, %v7527
        %v7530 = vsel %vm2856, %v7528, 0
        %7532 = vmatprep.subr.mxu0 0.0
        %7533 = vmatpush1.msra.mxu0 %v7430
        %7534 = vmatprep.subr.mxu0 0.0
        %7535 = vmatpush1.msra.mxu0 %v7435
        %7536 = vmatprep.subr.mxu0 0.0
        %7537 = vmatpush1.msra.mxu0 0.0
        %7538 = vmatprep.subr.mxu0 0.0
        %7539 = vmatpush1.msra.mxu0 0.0
        %7540 = vmatprep.subr.mxu0 0.0
        %7541 = vmatpush1.msra.mxu0 0.0
        %7542 = vmatprep.subr.mxu0 0.0
        %7543 = vmatpush1.msra.mxu0 0.0
        %7544 = vmatprep.subr.mxu0 0.0
        %7545 = vmatpush1.msra.mxu0 0.0
        %7546 = vmatprep.subr.mxu0 0.0
        %7547 = vmatpush1.msra.mxu0 0.0
        %7548 = vmatprep.subr.mxu0 0.0
        %7549 = vmatpush1.msra.mxu0 0.0
        %7550 = vmatprep.subr.mxu0 0.0
        %7551 = vmatpush1.msra.mxu0 0.0
        %7552 = vmatprep.subr.mxu0 0.0
        %7553 = vmatpush1.msra.mxu0 0.0
        %7554 = vmatprep.subr.mxu0 0.0
        %7555 = vmatpush1.msra.mxu0 0.0
        %7556 = vmatprep.subr.mxu0 0.0
        %7557 = vmatpush1.msra.mxu0 0.0
        %7558 = vmatprep.subr.mxu0 0.0
        %7559 = vmatpush1.msra.mxu0 0.0
        %7560 = vmatprep.subr.mxu0 0.0
        %7561 = vmatpush1.msra.mxu0 0.0
        %7562 = vmatprep.subr.mxu0 0.0
        %7563 = vmatpush1.msra.mxu0 0.0
        %7564 = vmatprep.subr.mxu0 0.0
        %7565 = vmatpush1.msra.mxu0 0.0
        %7566 = vmatprep.subr.mxu0 0.0
        %7567 = vmatpush1.msra.mxu0 0.0
        %7568 = vmatprep.subr.mxu0 0.0
        %7569 = vmatpush1.msra.mxu0 0.0
        %7570 = vmatprep.subr.mxu0 0.0
        %7571 = vmatpush1.msra.mxu0 0.0
        %7572 = vmatprep.subr.mxu0 0.0
        %7573 = vmatpush1.msra.mxu0 0.0
        %7574 = vmatprep.subr.mxu0 0.0
        %7575 = vmatpush1.msra.mxu0 0.0
        %7576 = vmatprep.subr.mxu0 0.0
        %7577 = vmatpush1.msra.mxu0 0.0
        %7578 = vmatprep.subr.mxu0 0.0
        %7579 = vmatpush1.msra.mxu0 0.0
        %7580 = vmatprep.subr.mxu0 0.0
        %7581 = vmatpush1.msra.mxu0 0.0
        %7582 = vmatprep.subr.mxu0 0.0
        %7583 = vmatpush1.msra.mxu0 0.0
        %7584 = vmatprep.subr.mxu0 0.0
        %7585 = vmatpush1.msra.mxu0 0.0
        %7586 = vmatprep.subr.mxu0 0.0
        %7587 = vmatpush1.msra.mxu0 0.0
        %7588 = vmatprep.subr.mxu0 0.0
        %7589 = vmatpush1.msra.mxu0 0.0
        %7590 = vmatprep.subr.mxu0 0.0
        %7591 = vmatpush1.msra.mxu0 0.0
        %7592 = vmatprep.subr.mxu0 0.0
        %7593 = vmatpush1.msra.mxu0 0.0
        %7594 = vmatprep.subr.mxu0 0.0
        %7595 = vmatpush1.msra.mxu0 0.0
        %7596 = vmatprep.mubr.f32.mxu0 0.0
        %7597 = vmatmul.mubr.f32.gmra.mrb[0].mxu0 %v7530
        %v7598 = vpop.f32.mrb[0].mxu0
        %v7599 = vadd.f32 0.0, %v7598
        %v7600 = vpop.f32.mrb[0].mxu0
        %7601 = vdwg.mxu0
        %s7602 = scalar_lea.vmem %s5, 104
        %v7603 = vld [vmem:[%s7602] sm:$0xff]
        %v7605 = vsel %vm772, %v7599, 0
        %7607 = vmatprep.subr.mxu0 0.0
        %7608 = vmatpush1.msra.mxu0 %v7603
        %7609 = vmatprep.subr.mxu0 0.0
        %7610 = vmatpush1.msra.mxu0 0.0
        %7611 = vmatprep.subr.mxu0 0.0
        %7612 = vmatpush1.msra.mxu0 0.0
        %7613 = vmatprep.subr.mxu0 0.0
        %7614 = vmatpush1.msra.mxu0 0.0
        %7615 = vmatprep.subr.mxu0 0.0
        %7616 = vmatpush1.msra.mxu0 0.0
        %7617 = vmatprep.subr.mxu0 0.0
        %7618 = vmatpush1.msra.mxu0 0.0
        %7619 = vmatprep.subr.mxu0 0.0
        %7620 = vmatpush1.msra.mxu0 0.0
        %7621 = vmatprep.subr.mxu0 0.0
        %7622 = vmatpush1.msra.mxu0 0.0
        %7623 = vmatprep.subr.mxu0 0.0
        %7624 = vmatpush1.msra.mxu0 0.0
        %7625 = vmatprep.subr.mxu0 0.0
        %7626 = vmatpush1.msra.mxu0 0.0
        %7627 = vmatprep.subr.mxu0 0.0
        %7628 = vmatpush1.msra.mxu0 0.0
        %7629 = vmatprep.subr.mxu0 0.0
        %7630 = vmatpush1.msra.mxu0 0.0
        %7631 = vmatprep.subr.mxu0 0.0
        %7632 = vmatpush1.msra.mxu0 0.0
        %7633 = vmatprep.subr.mxu0 0.0
        %7634 = vmatpush1.msra.mxu0 0.0
        %7635 = vmatprep.subr.mxu0 0.0
        %7636 = vmatpush1.msra.mxu0 0.0
        %7637 = vmatprep.subr.mxu0 0.0
        %7638 = vmatpush1.msra.mxu0 0.0
        %7639 = vmatprep.subr.mxu0 0.0
        %7640 = vmatpush1.msra.mxu0 0.0
        %7641 = vmatprep.subr.mxu0 0.0
        %7642 = vmatpush1.msra.mxu0 0.0
        %7643 = vmatprep.subr.mxu0 0.0
        %7644 = vmatpush1.msra.mxu0 0.0
        %7645 = vmatprep.subr.mxu0 0.0
        %7646 = vmatpush1.msra.mxu0 0.0
        %7647 = vmatprep.subr.mxu0 0.0
        %7648 = vmatpush1.msra.mxu0 0.0
        %7649 = vmatprep.subr.mxu0 0.0
        %7650 = vmatpush1.msra.mxu0 0.0
        %7651 = vmatprep.subr.mxu0 0.0
        %7652 = vmatpush1.msra.mxu0 0.0
        %7653 = vmatprep.subr.mxu0 0.0
        %7654 = vmatpush1.msra.mxu0 0.0
        %7655 = vmatprep.subr.mxu0 0.0
        %7656 = vmatpush1.msra.mxu0 0.0
        %7657 = vmatprep.subr.mxu0 0.0
        %7658 = vmatpush1.msra.mxu0 0.0
        %7659 = vmatprep.subr.mxu0 0.0
        %7660 = vmatpush1.msra.mxu0 0.0
        %7661 = vmatprep.subr.mxu0 0.0
        %7662 = vmatpush1.msra.mxu0 0.0
        %7663 = vmatprep.subr.mxu0 0.0
        %7664 = vmatpush1.msra.mxu0 0.0
        %7665 = vmatprep.subr.mxu0 0.0
        %7666 = vmatpush1.msra.mxu0 0.0
        %7667 = vmatprep.subr.mxu0 0.0
        %7668 = vmatpush1.msra.mxu0 0.0
        %7669 = vmatprep.subr.mxu0 0.0
        %7670 = vmatpush1.msra.mxu0 0.0
        %7671 = vmatprep.mubr.f32.mxu0 0.0
        %7672 = vmatmul.mubr.f32.gmra.mrb[0].mxu0 %v7605
        %v7673 = vpop.f32.mrb[0].mxu0
        %v7674 = vadd.f32 0.0, %v7673
        %v7675 = vpop.f32.mrb[0].mxu0
        %7676 = vdwg.mxu0
        %v7678 = vsel %vm772, %v7174, 0
        %7680 = vmatprep.subr.mxu0 0.0
        %7681 = vmatpush1.msra.mxu0 %v7178
        %7682 = vmatprep.subr.mxu0 0.0
        %7683 = vmatpush1.msra.mxu0 0.0
        %7684 = vmatprep.subr.mxu0 0.0
        %7685 = vmatpush1.msra.mxu0 0.0
        %7686 = vmatprep.subr.mxu0 0.0
        %7687 = vmatpush1.msra.mxu0 0.0
        %7688 = vmatprep.subr.mxu0 0.0
        %7689 = vmatpush1.msra.mxu0 0.0
        %7690 = vmatprep.subr.mxu0 0.0
        %7691 = vmatpush1.msra.mxu0 0.0
        %7692 = vmatprep.subr.mxu0 0.0
        %7693 = vmatpush1.msra.mxu0 0.0
        %7694 = vmatprep.subr.mxu0 0.0
        %7695 = vmatpush1.msra.mxu0 0.0
        %7696 = vmatprep.subr.mxu0 0.0
        %7697 = vmatpush1.msra.mxu0 0.0
        %7698 = vmatprep.subr.mxu0 0.0
        %7699 = vmatpush1.msra.mxu0 0.0
        %7700 = vmatprep.subr.mxu0 0.0
        %7701 = vmatpush1.msra.mxu0 0.0
        %7702 = vmatprep.subr.mxu0 0.0
        %7703 = vmatpush1.msra.mxu0 0.0
        %7704 = vmatprep.subr.mxu0 0.0
        %7705 = vmatpush1.msra.mxu0 0.0
        %7706 = vmatprep.subr.mxu0 0.0
        %7707 = vmatpush1.msra.mxu0 0.0
        %7708 = vmatprep.subr.mxu0 0.0
        %7709 = vmatpush1.msra.mxu0 0.0
        %7710 = vmatprep.subr.mxu0 0.0
        %7711 = vmatpush1.msra.mxu0 0.0
        %7712 = vmatprep.subr.mxu0 0.0
        %7713 = vmatpush1.msra.mxu0 0.0
        %7714 = vmatprep.subr.mxu0 0.0
        %7715 = vmatpush1.msra.mxu0 0.0
        %7716 = vmatprep.subr.mxu0 0.0
        %7717 = vmatpush1.msra.mxu0 0.0
        %7718 = vmatprep.subr.mxu0 0.0
        %7719 = vmatpush1.msra.mxu0 0.0
        %7720 = vmatprep.subr.mxu0 0.0
        %7721 = vmatpush1.msra.mxu0 0.0
        %7722 = vmatprep.subr.mxu0 0.0
        %7723 = vmatpush1.msra.mxu0 0.0
        %7724 = vmatprep.subr.mxu0 0.0
        %7725 = vmatpush1.msra.mxu0 0.0
        %7726 = vmatprep.subr.mxu0 0.0
        %7727 = vmatpush1.msra.mxu0 0.0
        %7728 = vmatprep.subr.mxu0 0.0
        %7729 = vmatpush1.msra.mxu0 0.0
        %7730 = vmatprep.subr.mxu0 0.0
        %7731 = vmatpush1.msra.mxu0 0.0
        %7732 = vmatprep.subr.mxu0 0.0
        %7733 = vmatpush1.msra.mxu0 0.0
        %7734 = vmatprep.subr.mxu0 0.0
        %7735 = vmatpush1.msra.mxu0 0.0
        %7736 = vmatprep.subr.mxu0 0.0
        %7737 = vmatpush1.msra.mxu0 0.0
        %7738 = vmatprep.subr.mxu0 0.0
        %7739 = vmatpush1.msra.mxu0 0.0
        %7740 = vmatprep.subr.mxu0 0.0
        %7741 = vmatpush1.msra.mxu0 0.0
        %7742 = vmatprep.subr.mxu0 0.0
        %7743 = vmatpush1.msra.mxu0 0.0
        %7744 = vmatprep.mubr.f32.mxu0 0.0
        %7745 = vmatmul.mubr.f32.gmra.mrb[0].mxu0 %v7678
        %v7746 = vpop.f32.mrb[0].mxu0
        %v7747 = vadd.f32 %v7674, %v7746
        %v7748 = vpop.f32.mrb[0].mxu0
        %7749 = vdwg.mxu0
        %s7750 = scalar_lea.vmem %s3, 1216
        %v7751 = vld [vmem:[%s7750] sm:$0xff]
        %v7752 = vld [vmem:[%s7750 + $0x8] sm:$0xff]
        %v7753 = vld [vmem:[%s7750 + $0x10] sm:$0xff]
        %v7754 = vld [vmem:[%s7750 + $0x18] sm:$0xff]
        %s7755 = scalar_lea.vmem %s4, 38
        %v7756 = vld [vmem:[%s7755] sm:$0x1]
        %v7758 = vlaneseq
        %v7759 = vshrl.u32 %v7758, 7
        %v7760 = vsub.s32 0, %v7759
        %v7761 = vrot.slane %v7756, %v7760
        %7763 = vmatprep.subr.mxu0 0.0
        %7764 = vmatpush1.msra.mxu0 %v7751
        %7765 = vmatprep.subr.mxu0 0.0
        %7766 = vmatpush1.msra.mxu0 %v7752
        %7767 = vmatprep.subr.mxu0 0.0
        %7768 = vmatpush1.msra.mxu0 %v7753
        %7769 = vmatprep.subr.mxu0 0.0
        %7770 = vmatpush1.msra.mxu0 %v7754
        %7771 = vmatprep.subr.mxu0 0.0
        %7772 = vmatpush1.msra.mxu0 0.0
        %7773 = vmatprep.subr.mxu0 0.0
        %7774 = vmatpush1.msra.mxu0 0.0
        %7775 = vmatprep.subr.mxu0 0.0
        %7776 = vmatpush1.msra.mxu0 0.0
        %7777 = vmatprep.subr.mxu0 0.0
        %7778 = vmatpush1.msra.mxu0 0.0
        %7779 = vmatprep.subr.mxu0 0.0
        %7780 = vmatpush1.msra.mxu0 0.0
        %7781 = vmatprep.subr.mxu0 0.0
        %7782 = vmatpush1.msra.mxu0 0.0
        %7783 = vmatprep.subr.mxu0 0.0
        %7784 = vmatpush1.msra.mxu0 0.0
        %7785 = vmatprep.subr.mxu0 0.0
        %7786 = vmatpush1.msra.mxu0 0.0
        %7787 = vmatprep.subr.mxu0 0.0
        %7788 = vmatpush1.msra.mxu0 0.0
        %7789 = vmatprep.subr.mxu0 0.0
        %7790 = vmatpush1.msra.mxu0 0.0
        %7791 = vmatprep.subr.mxu0 0.0
        %7792 = vmatpush1.msra.mxu0 0.0
        %7793 = vmatprep.subr.mxu0 0.0
        %7794 = vmatpush1.msra.mxu0 0.0
        %7795 = vmatprep.subr.mxu0 0.0
        %7796 = vmatpush1.msra.mxu0 0.0
        %7797 = vmatprep.subr.mxu0 0.0
        %7798 = vmatpush1.msra.mxu0 0.0
        %7799 = vmatprep.subr.mxu0 0.0
        %7800 = vmatpush1.msra.mxu0 0.0
        %7801 = vmatprep.subr.mxu0 0.0
        %7802 = vmatpush1.msra.mxu0 0.0
        %7803 = vmatprep.subr.mxu0 0.0
        %7804 = vmatpush1.msra.mxu0 0.0
        %7805 = vmatprep.subr.mxu0 0.0
        %7806 = vmatpush1.msra.mxu0 0.0
        %7807 = vmatprep.subr.mxu0 0.0
        %7808 = vmatpush1.msra.mxu0 0.0
        %7809 = vmatprep.subr.mxu0 0.0
        %7810 = vmatpush1.msra.mxu0 0.0
        %7811 = vmatprep.subr.mxu0 0.0
        %7812 = vmatpush1.msra.mxu0 0.0
        %7813 = vmatprep.subr.mxu0 0.0
        %7814 = vmatpush1.msra.mxu0 0.0
        %7815 = vmatprep.subr.mxu0 0.0
        %7816 = vmatpush1.msra.mxu0 0.0
        %7817 = vmatprep.subr.mxu0 0.0
        %7818 = vmatpush1.msra.mxu0 0.0
        %7819 = vmatprep.subr.mxu0 0.0
        %7820 = vmatpush1.msra.mxu0 0.0
        %7821 = vmatprep.subr.mxu0 0.0
        %7822 = vmatpush1.msra.mxu0 0.0
        %7823 = vmatprep.subr.mxu0 0.0
        %7824 = vmatpush1.msra.mxu0 0.0
        %7825 = vmatprep.subr.mxu0 0.0
        %7826 = vmatpush1.msra.mxu0 0.0
        %7827 = vmatprep.mubr.f32.mxu0 0.0
        %7828 = vmatmul.mubr.f32.gmra.mrb[0].mxu0 %v6765
        %v7829 = vpop.f32.mrb[0].mxu0
        %v7830 = vadd.f32 %v7761, %v7829
        %v7831 = vpop.f32.mrb[0].mxu0
        %7832 = vdwg.mxu0
        %s7833 = scalar_lea.vmem %s3, 1344
        %v7834 = vld [vmem:[%s7833] sm:$0xff]
        %v7835 = vld [vmem:[%s7833 + $0x8] sm:$0xff]
        %v7836 = vld [vmem:[%s7833 + $0x10] sm:$0xff]
        %v7837 = vld [vmem:[%s7833 + $0x18] sm:$0xff]
        %s7838 = scalar_lea.vmem %s4, 42
        %v7839 = vld [vmem:[%s7838] sm:$0x1]
        %v7841 = vlaneseq
        %v7842 = vshrl.u32 %v7841, 7
        %v7843 = vsub.s32 0, %v7842
        %v7844 = vrot.slane %v7839, %v7843
        %7846 = vmatprep.subr.mxu0 0.0
        %7847 = vmatpush1.msra.mxu0 %v7834
        %7848 = vmatprep.subr.mxu0 0.0
        %7849 = vmatpush1.msra.mxu0 %v7835
        %7850 = vmatprep.subr.mxu0 0.0
        %7851 = vmatpush1.msra.mxu0 %v7836
        %7852 = vmatprep.subr.mxu0 0.0
        %7853 = vmatpush1.msra.mxu0 %v7837
        %7854 = vmatprep.subr.mxu0 0.0
        %7855 = vmatpush1.msra.mxu0 0.0
        %7856 = vmatprep.subr.mxu0 0.0
        %7857 = vmatpush1.msra.mxu0 0.0
        %7858 = vmatprep.subr.mxu0 0.0
        %7859 = vmatpush1.msra.mxu0 0.0
        %7860 = vmatprep.subr.mxu0 0.0
        %7861 = vmatpush1.msra.mxu0 0.0
        %7862 = vmatprep.subr.mxu0 0.0
        %7863 = vmatpush1.msra.mxu0 0.0
        %7864 = vmatprep.subr.mxu0 0.0
        %7865 = vmatpush1.msra.mxu0 0.0
        %7866 = vmatprep.subr.mxu0 0.0
        %7867 = vmatpush1.msra.mxu0 0.0
        %7868 = vmatprep.subr.mxu0 0.0
        %7869 = vmatpush1.msra.mxu0 0.0
        %7870 = vmatprep.subr.mxu0 0.0
        %7871 = vmatpush1.msra.mxu0 0.0
        %7872 = vmatprep.subr.mxu0 0.0
        %7873 = vmatpush1.msra.mxu0 0.0
        %7874 = vmatprep.subr.mxu0 0.0
        %7875 = vmatpush1.msra.mxu0 0.0
        %7876 = vmatprep.subr.mxu0 0.0
        %7877 = vmatpush1.msra.mxu0 0.0
        %7878 = vmatprep.subr.mxu0 0.0
        %7879 = vmatpush1.msra.mxu0 0.0
        %7880 = vmatprep.subr.mxu0 0.0
        %7881 = vmatpush1.msra.mxu0 0.0
        %7882 = vmatprep.subr.mxu0 0.0
        %7883 = vmatpush1.msra.mxu0 0.0
        %7884 = vmatprep.subr.mxu0 0.0
        %7885 = vmatpush1.msra.mxu0 0.0
        %7886 = vmatprep.subr.mxu0 0.0
        %7887 = vmatpush1.msra.mxu0 0.0
        %7888 = vmatprep.subr.mxu0 0.0
        %7889 = vmatpush1.msra.mxu0 0.0
        %7890 = vmatprep.subr.mxu0 0.0
        %7891 = vmatpush1.msra.mxu0 0.0
        %7892 = vmatprep.subr.mxu0 0.0
        %7893 = vmatpush1.msra.mxu0 0.0
        %7894 = vmatprep.subr.mxu0 0.0
        %7895 = vmatpush1.msra.mxu0 0.0
        %7896 = vmatprep.subr.mxu0 0.0
        %7897 = vmatpush1.msra.mxu0 0.0
        %7898 = vmatprep.subr.mxu0 0.0
        %7899 = vmatpush1.msra.mxu0 0.0
        %7900 = vmatprep.subr.mxu0 0.0
        %7901 = vmatpush1.msra.mxu0 0.0
        %7902 = vmatprep.subr.mxu0 0.0
        %7903 = vmatpush1.msra.mxu0 0.0
        %7904 = vmatprep.subr.mxu0 0.0
        %7905 = vmatpush1.msra.mxu0 0.0
        %7906 = vmatprep.subr.mxu0 0.0
        %7907 = vmatpush1.msra.mxu0 0.0
        %7908 = vmatprep.subr.mxu0 0.0
        %7909 = vmatpush1.msra.mxu0 0.0
        %7910 = vmatprep.mubr.f32.mxu0 0.0
        %7911 = vmatmul.mubr.f32.gmra.mrb[0].mxu0 %v2608
        %v7912 = vpop.f32.mrb[0].mxu0
        %v7913 = vadd.f32 %v7844, %v7912
        %v7914 = vpop.f32.mrb[0].mxu0
        %7915 = vmatprep.mubr.f32.mxu0 0.0
        %7916 = vmatmul.mubr.f32.gmra.mrb[0].mxu0 %v2611
        %v7917 = vpop.f32.mrb[0].mxu0
        %v7918 = vadd.f32 %v7844, %v7917
        %v7919 = vpop.f32.mrb[0].mxu0
        %7920 = vdwg.mxu0
        %s7921 = scalar_lea.vmem %s3, 1472
        %v7922 = vld [vmem:[%s7921] sm:$0xff]
        %v7923 = vld [vmem:[%s7921 + $0x8] sm:$0xff]
        %v7924 = vld [vmem:[%s7921 + $0x10] sm:$0xff]
        %v7925 = vld [vmem:[%s7921 + $0x18] sm:$0xff]
        %s7926 = scalar_lea.vmem %s4, 46
        %v7927 = vld [vmem:[%s7926] sm:$0x1]
        %v7929 = vlaneseq
        %v7930 = vshrl.u32 %v7929, 7
        %v7931 = vsub.s32 0, %v7930
        %v7932 = vrot.slane %v7927, %v7931
        %7934 = vmatprep.subr.mxu0 0.0
        %7935 = vmatpush1.msra.mxu0 %v7922
        %7936 = vmatprep.subr.mxu0 0.0
        %7937 = vmatpush1.msra.mxu0 %v7923
        %7938 = vmatprep.subr.mxu0 0.0
        %7939 = vmatpush1.msra.mxu0 %v7924
        %7940 = vmatprep.subr.mxu0 0.0
        %7941 = vmatpush1.msra.mxu0 %v7925
        %7942 = vmatprep.subr.mxu0 0.0
        %7943 = vmatpush1.msra.mxu0 0.0
        %7944 = vmatprep.subr.mxu0 0.0
        %7945 = vmatpush1.msra.mxu0 0.0
        %7946 = vmatprep.subr.mxu0 0.0
        %7947 = vmatpush1.msra.mxu0 0.0
        %7948 = vmatprep.subr.mxu0 0.0
        %7949 = vmatpush1.msra.mxu0 0.0
        %7950 = vmatprep.subr.mxu0 0.0
        %7951 = vmatpush1.msra.mxu0 0.0
        %7952 = vmatprep.subr.mxu0 0.0
        %7953 = vmatpush1.msra.mxu0 0.0
        %7954 = vmatprep.subr.mxu0 0.0
        %7955 = vmatpush1.msra.mxu0 0.0
        %7956 = vmatprep.subr.mxu0 0.0
        %7957 = vmatpush1.msra.mxu0 0.0
        %7958 = vmatprep.subr.mxu0 0.0
        %7959 = vmatpush1.msra.mxu0 0.0
        %7960 = vmatprep.subr.mxu0 0.0
        %7961 = vmatpush1.msra.mxu0 0.0
        %7962 = vmatprep.subr.mxu0 0.0
        %7963 = vmatpush1.msra.mxu0 0.0
        %7964 = vmatprep.subr.mxu0 0.0
        %7965 = vmatpush1.msra.mxu0 0.0
        %7966 = vmatprep.subr.mxu0 0.0
        %7967 = vmatpush1.msra.mxu0 0.0
        %7968 = vmatprep.subr.mxu0 0.0
        %7969 = vmatpush1.msra.mxu0 0.0
        %7970 = vmatprep.subr.mxu0 0.0
        %7971 = vmatpush1.msra.mxu0 0.0
        %7972 = vmatprep.subr.mxu0 0.0
        %7973 = vmatpush1.msra.mxu0 0.0
        %7974 = vmatprep.subr.mxu0 0.0
        %7975 = vmatpush1.msra.mxu0 0.0
        %7976 = vmatprep.subr.mxu0 0.0
        %7977 = vmatpush1.msra.mxu0 0.0
        %7978 = vmatprep.subr.mxu0 0.0
        %7979 = vmatpush1.msra.mxu0 0.0
        %7980 = vmatprep.subr.mxu0 0.0
        %7981 = vmatpush1.msra.mxu0 0.0
        %7982 = vmatprep.subr.mxu0 0.0
        %7983 = vmatpush1.msra.mxu0 0.0
        %7984 = vmatprep.subr.mxu0 0.0
        %7985 = vmatpush1.msra.mxu0 0.0
        %7986 = vmatprep.subr.mxu0 0.0
        %7987 = vmatpush1.msra.mxu0 0.0
        %7988 = vmatprep.subr.mxu0 0.0
        %7989 = vmatpush1.msra.mxu0 0.0
        %7990 = vmatprep.subr.mxu0 0.0
        %7991 = vmatpush1.msra.mxu0 0.0
        %7992 = vmatprep.subr.mxu0 0.0
        %7993 = vmatpush1.msra.mxu0 0.0
        %7994 = vmatprep.subr.mxu0 0.0
        %7995 = vmatpush1.msra.mxu0 0.0
        %7996 = vmatprep.subr.mxu0 0.0
        %7997 = vmatpush1.msra.mxu0 0.0
        %7998 = vmatprep.mubr.f32.mxu0 0.0
        %7999 = vmatmul.mubr.f32.gmra.mrb[0].mxu0 %v2608
        %v8000 = vpop.f32.mrb[0].mxu0
        %v8001 = vadd.f32 %v7932, %v8000
        %v8002 = vpop.f32.mrb[0].mxu0
        %8003 = vmatprep.mubr.f32.mxu0 0.0
        %8004 = vmatmul.mubr.f32.gmra.mrb[0].mxu0 %v2611
        %v8005 = vpop.f32.mrb[0].mxu0
        %v8006 = vadd.f32 %v7932, %v8005
        %v8007 = vpop.f32.mrb[0].mxu0
        %8008 = vdwg.mxu0
        %v8010 = vsel %vm772, %v7830, 0
        %v8013 = vsel %vm772, %v7913, 0
        %v8016 = vsel %vm772, %v7918, 0
        %8018 = vmatprep.subr.mxu0 0.0
        %8019 = vmatpush1.xpose.msra.mxu0 %v8013
        %8020 = vmatprep.subr.mxu0 0.0
        %8021 = vmatpush1.xpose.msra.mxu0 %v8016
        %8022 = vmatprep.subr.mxu0 0.0
        %8023 = vmatpush1.xpose.msra.mxu0 0.0
        %8024 = vmatprep.subr.mxu0 0.0
        %8025 = vmatpush1.xpose.msra.mxu0 0.0
        %8026 = vmatprep.subr.mxu0 0.0
        %8027 = vmatpush1.xpose.msra.mxu0 0.0
        %8028 = vmatprep.subr.mxu0 0.0
        %8029 = vmatpush1.xpose.msra.mxu0 0.0
        %8030 = vmatprep.subr.mxu0 0.0
        %8031 = vmatpush1.xpose.msra.mxu0 0.0
        %8032 = vmatprep.subr.mxu0 0.0
        %8033 = vmatpush1.xpose.msra.mxu0 0.0
        %8034 = vmatprep.subr.mxu0 0.0
        %8035 = vmatpush1.xpose.msra.mxu0 0.0
        %8036 = vmatprep.subr.mxu0 0.0
        %8037 = vmatpush1.xpose.msra.mxu0 0.0
        %8038 = vmatprep.subr.mxu0 0.0
        %8039 = vmatpush1.xpose.msra.mxu0 0.0
        %8040 = vmatprep.subr.mxu0 0.0
        %8041 = vmatpush1.xpose.msra.mxu0 0.0
        %8042 = vmatprep.subr.mxu0 0.0
        %8043 = vmatpush1.xpose.msra.mxu0 0.0
        %8044 = vmatprep.subr.mxu0 0.0
        %8045 = vmatpush1.xpose.msra.mxu0 0.0
        %8046 = vmatprep.subr.mxu0 0.0
        %8047 = vmatpush1.xpose.msra.mxu0 0.0
        %8048 = vmatprep.subr.mxu0 0.0
        %8049 = vmatpush1.xpose.msra.mxu0 0.0
        %8050 = vmatprep.subr.mxu0 0.0
        %8051 = vmatpush1.xpose.msra.mxu0 0.0
        %8052 = vmatprep.subr.mxu0 0.0
        %8053 = vmatpush1.xpose.msra.mxu0 0.0
        %8054 = vmatprep.subr.mxu0 0.0
        %8055 = vmatpush1.xpose.msra.mxu0 0.0
        %8056 = vmatprep.subr.mxu0 0.0
        %8057 = vmatpush1.xpose.msra.mxu0 0.0
        %8058 = vmatprep.subr.mxu0 0.0
        %8059 = vmatpush1.xpose.msra.mxu0 0.0
        %8060 = vmatprep.subr.mxu0 0.0
        %8061 = vmatpush1.xpose.msra.mxu0 0.0
        %8062 = vmatprep.subr.mxu0 0.0
        %8063 = vmatpush1.xpose.msra.mxu0 0.0
        %8064 = vmatprep.subr.mxu0 0.0
        %8065 = vmatpush1.xpose.msra.mxu0 0.0
        %8066 = vmatprep.subr.mxu0 0.0
        %8067 = vmatpush1.xpose.msra.mxu0 0.0
        %8068 = vmatprep.subr.mxu0 0.0
        %8069 = vmatpush1.xpose.msra.mxu0 0.0
        %8070 = vmatprep.subr.mxu0 0.0
        %8071 = vmatpush1.xpose.msra.mxu0 0.0
        %8072 = vmatprep.subr.mxu0 0.0
        %8073 = vmatpush1.xpose.msra.mxu0 0.0
        %8074 = vmatprep.subr.mxu0 0.0
        %8075 = vmatpush1.xpose.msra.mxu0 0.0
        %8076 = vmatprep.subr.mxu0 0.0
        %8077 = vmatpush1.xpose.msra.mxu0 0.0
        %8078 = vmatprep.subr.mxu0 0.0
        %8079 = vmatpush1.xpose.msra.mxu0 0.0
        %8080 = vmatprep.subr.mxu0 0.0
        %8081 = vmatpush1.xpose.msra.mxu0 0.0
        %8082 = vmatprep.mubr.f32.mxu0 0.0
        %8083 = vmatmul.mubr.f32.gmra.mrb[0].mxu0 %v8010
        %v8084 = vpop.f32.mrb[0].mxu0
        %v8085 = vadd.f32 0.0, %v8084
        %v8086 = vpop.f32.mrb[0].mxu0
        %8087 = vdwg.mxu0
        %v8088 = vmul.f32 %v8085, 0.35355338
        %v8089 = vsel %vm2856, %v8088, -inf
        %8090 = vmax.xlane.f32.xlu0 %v8089
        %v8091 = vpop.xlane.xlu0 %8090
        %v8092 = vsub.f32 %v8088, %v8091
        %v8093 = vmul.f32 %v8092, 1.442695
        %v8094 = vpow.pop %v8093
        %v8095 = vsel %vm2856, %v8094, 0.0
        %8096 = vadd.xlane.f32.xlu0 %v8095
        %v8097 = vpop.xlane.xlu0 %8096
        %v8098 = vrcp.pop %v8097
        %v8099 = vmul.f32 %v8094, %v8098
        %v8101 = vsel %vm2856, %v8099, 0
        %8103 = vmatprep.subr.mxu0 0.0
        %8104 = vmatpush1.msra.mxu0 %v8001
        %8105 = vmatprep.subr.mxu0 0.0
        %8106 = vmatpush1.msra.mxu0 %v8006
        %8107 = vmatprep.subr.mxu0 0.0
        %8108 = vmatpush1.msra.mxu0 0.0
        %8109 = vmatprep.subr.mxu0 0.0
        %8110 = vmatpush1.msra.mxu0 0.0
        %8111 = vmatprep.subr.mxu0 0.0
        %8112 = vmatpush1.msra.mxu0 0.0
        %8113 = vmatprep.subr.mxu0 0.0
        %8114 = vmatpush1.msra.mxu0 0.0
        %8115 = vmatprep.subr.mxu0 0.0
        %8116 = vmatpush1.msra.mxu0 0.0
        %8117 = vmatprep.subr.mxu0 0.0
        %8118 = vmatpush1.msra.mxu0 0.0
        %8119 = vmatprep.subr.mxu0 0.0
        %8120 = vmatpush1.msra.mxu0 0.0
        %8121 = vmatprep.subr.mxu0 0.0
        %8122 = vmatpush1.msra.mxu0 0.0
        %8123 = vmatprep.subr.mxu0 0.0
        %8124 = vmatpush1.msra.mxu0 0.0
        %8125 = vmatprep.subr.mxu0 0.0
        %8126 = vmatpush1.msra.mxu0 0.0
        %8127 = vmatprep.subr.mxu0 0.0
        %8128 = vmatpush1.msra.mxu0 0.0
        %8129 = vmatprep.subr.mxu0 0.0
        %8130 = vmatpush1.msra.mxu0 0.0
        %8131 = vmatprep.subr.mxu0 0.0
        %8132 = vmatpush1.msra.mxu0 0.0
        %8133 = vmatprep.subr.mxu0 0.0
        %8134 = vmatpush1.msra.mxu0 0.0
        %8135 = vmatprep.subr.mxu0 0.0
        %8136 = vmatpush1.msra.mxu0 0.0
        %8137 = vmatprep.subr.mxu0 0.0
        %8138 = vmatpush1.msra.mxu0 0.0
        %8139 = vmatprep.subr.mxu0 0.0
        %8140 = vmatpush1.msra.mxu0 0.0
        %8141 = vmatprep.subr.mxu0 0.0
        %8142 = vmatpush1.msra.mxu0 0.0
        %8143 = vmatprep.subr.mxu0 0.0
        %8144 = vmatpush1.msra.mxu0 0.0
        %8145 = vmatprep.subr.mxu0 0.0
        %8146 = vmatpush1.msra.mxu0 0.0
        %8147 = vmatprep.subr.mxu0 0.0
        %8148 = vmatpush1.msra.mxu0 0.0
        %8149 = vmatprep.subr.mxu0 0.0
        %8150 = vmatpush1.msra.mxu0 0.0
        %8151 = vmatprep.subr.mxu0 0.0
        %8152 = vmatpush1.msra.mxu0 0.0
        %8153 = vmatprep.subr.mxu0 0.0
        %8154 = vmatpush1.msra.mxu0 0.0
        %8155 = vmatprep.subr.mxu0 0.0
        %8156 = vmatpush1.msra.mxu0 0.0
        %8157 = vmatprep.subr.mxu0 0.0
        %8158 = vmatpush1.msra.mxu0 0.0
        %8159 = vmatprep.subr.mxu0 0.0
        %8160 = vmatpush1.msra.mxu0 0.0
        %8161 = vmatprep.subr.mxu0 0.0
        %8162 = vmatpush1.msra.mxu0 0.0
        %8163 = vmatprep.subr.mxu0 0.0
        %8164 = vmatpush1.msra.mxu0 0.0
        %8165 = vmatprep.subr.mxu0 0.0
        %8166 = vmatpush1.msra.mxu0 0.0
        %8167 = vmatprep.mubr.f32.mxu0 0.0
        %8168 = vmatmul.mubr.f32.gmra.mrb[0].mxu0 %v8101
        %v8169 = vpop.f32.mrb[0].mxu0
        %v8170 = vadd.f32 0.0, %v8169
        %v8171 = vpop.f32.mrb[0].mxu0
        %8172 = vdwg.mxu0
        %s8173 = scalar_lea.vmem %s5, 112
        %v8174 = vld [vmem:[%s8173] sm:$0xff]
        %v8176 = vsel %vm772, %v8170, 0
        %8178 = vmatprep.subr.mxu0 0.0
        %8179 = vmatpush1.msra.mxu0 %v8174
        %8180 = vmatprep.subr.mxu0 0.0
        %8181 = vmatpush1.msra.mxu0 0.0
        %8182 = vmatprep.subr.mxu0 0.0
        %8183 = vmatpush1.msra.mxu0 0.0
        %8184 = vmatprep.subr.mxu0 0.0
        %8185 = vmatpush1.msra.mxu0 0.0
        %8186 = vmatprep.subr.mxu0 0.0
        %8187 = vmatpush1.msra.mxu0 0.0
        %8188 = vmatprep.subr.mxu0 0.0
        %8189 = vmatpush1.msra.mxu0 0.0
        %8190 = vmatprep.subr.mxu0 0.0
        %8191 = vmatpush1.msra.mxu0 0.0
        %8192 = vmatprep.subr.mxu0 0.0
        %8193 = vmatpush1.msra.mxu0 0.0
        %8194 = vmatprep.subr.mxu0 0.0
        %8195 = vmatpush1.msra.mxu0 0.0
        %8196 = vmatprep.subr.mxu0 0.0
        %8197 = vmatpush1.msra.mxu0 0.0
        %8198 = vmatprep.subr.mxu0 0.0
        %8199 = vmatpush1.msra.mxu0 0.0
        %8200 = vmatprep.subr.mxu0 0.0
        %8201 = vmatpush1.msra.mxu0 0.0
        %8202 = vmatprep.subr.mxu0 0.0
        %8203 = vmatpush1.msra.mxu0 0.0
        %8204 = vmatprep.subr.mxu0 0.0
        %8205 = vmatpush1.msra.mxu0 0.0
        %8206 = vmatprep.subr.mxu0 0.0
        %8207 = vmatpush1.msra.mxu0 0.0
        %8208 = vmatprep.subr.mxu0 0.0
        %8209 = vmatpush1.msra.mxu0 0.0
        %8210 = vmatprep.subr.mxu0 0.0
        %8211 = vmatpush1.msra.mxu0 0.0
        %8212 = vmatprep.subr.mxu0 0.0
        %8213 = vmatpush1.msra.mxu0 0.0
        %8214 = vmatprep.subr.mxu0 0.0
        %8215 = vmatpush1.msra.mxu0 0.0
        %8216 = vmatprep.subr.mxu0 0.0
        %8217 = vmatpush1.msra.mxu0 0.0
        %8218 = vmatprep.subr.mxu0 0.0
        %8219 = vmatpush1.msra.mxu0 0.0
        %8220 = vmatprep.subr.mxu0 0.0
        %8221 = vmatpush1.msra.mxu0 0.0
        %8222 = vmatprep.subr.mxu0 0.0
        %8223 = vmatpush1.msra.mxu0 0.0
        %8224 = vmatprep.subr.mxu0 0.0
        %8225 = vmatpush1.msra.mxu0 0.0
        %8226 = vmatprep.subr.mxu0 0.0
        %8227 = vmatpush1.msra.mxu0 0.0
        %8228 = vmatprep.subr.mxu0 0.0
        %8229 = vmatpush1.msra.mxu0 0.0
        %8230 = vmatprep.subr.mxu0 0.0
        %8231 = vmatpush1.msra.mxu0 0.0
        %8232 = vmatprep.subr.mxu0 0.0
        %8233 = vmatpush1.msra.mxu0 0.0
        %8234 = vmatprep.subr.mxu0 0.0
        %8235 = vmatpush1.msra.mxu0 0.0
        %8236 = vmatprep.subr.mxu0 0.0
        %8237 = vmatpush1.msra.mxu0 0.0
        %8238 = vmatprep.subr.mxu0 0.0
        %8239 = vmatpush1.msra.mxu0 0.0
        %8240 = vmatprep.subr.mxu0 0.0
        %8241 = vmatpush1.msra.mxu0 0.0
        %8242 = vmatprep.mubr.f32.mxu0 0.0
        %8243 = vmatmul.mubr.f32.gmra.mrb[0].mxu0 %v8176
        %v8244 = vpop.f32.mrb[0].mxu0
        %v8245 = vadd.f32 0.0, %v8244
        %v8246 = vpop.f32.mrb[0].mxu0
        %8247 = vdwg.mxu0
        %v8248 = vadd.f32 %v7747, %v8245
        %s8249 = scalar_lea.vmem %s3, 1248
        %v8250 = vld [vmem:[%s8249] sm:$0xff]
        %v8251 = vld [vmem:[%s8249 + $0x8] sm:$0xff]
        %v8252 = vld [vmem:[%s8249 + $0x10] sm:$0xff]
        %v8253 = vld [vmem:[%s8249 + $0x18] sm:$0xff]
        %s8254 = scalar_lea.vmem %s4, 39
        %v8255 = vld [vmem:[%s8254] sm:$0x1]
        %v8257 = vlaneseq
        %v8258 = vshrl.u32 %v8257, 7
        %v8259 = vsub.s32 0, %v8258
        %v8260 = vrot.slane %v8255, %v8259
        %8262 = vmatprep.subr.mxu0 0.0
        %8263 = vmatpush1.msra.mxu0 %v8250
        %8264 = vmatprep.subr.mxu0 0.0
        %8265 = vmatpush1.msra.mxu0 %v8251
        %8266 = vmatprep.subr.mxu0 0.0
        %8267 = vmatpush1.msra.mxu0 %v8252
        %8268 = vmatprep.subr.mxu0 0.0
        %8269 = vmatpush1.msra.mxu0 %v8253
        %8270 = vmatprep.subr.mxu0 0.0
        %8271 = vmatpush1.msra.mxu0 0.0
        %8272 = vmatprep.subr.mxu0 0.0
        %8273 = vmatpush1.msra.mxu0 0.0
        %8274 = vmatprep.subr.mxu0 0.0
        %8275 = vmatpush1.msra.mxu0 0.0
        %8276 = vmatprep.subr.mxu0 0.0
        %8277 = vmatpush1.msra.mxu0 0.0
        %8278 = vmatprep.subr.mxu0 0.0
        %8279 = vmatpush1.msra.mxu0 0.0
        %8280 = vmatprep.subr.mxu0 0.0
        %8281 = vmatpush1.msra.mxu0 0.0
        %8282 = vmatprep.subr.mxu0 0.0
        %8283 = vmatpush1.msra.mxu0 0.0
        %8284 = vmatprep.subr.mxu0 0.0
        %8285 = vmatpush1.msra.mxu0 0.0
        %8286 = vmatprep.subr.mxu0 0.0
        %8287 = vmatpush1.msra.mxu0 0.0
        %8288 = vmatprep.subr.mxu0 0.0
        %8289 = vmatpush1.msra.mxu0 0.0
        %8290 = vmatprep.subr.mxu0 0.0
        %8291 = vmatpush1.msra.mxu0 0.0
        %8292 = vmatprep.subr.mxu0 0.0
        %8293 = vmatpush1.msra.mxu0 0.0
        %8294 = vmatprep.subr.mxu0 0.0
        %8295 = vmatpush1.msra.mxu0 0.0
        %8296 = vmatprep.subr.mxu0 0.0
        %8297 = vmatpush1.msra.mxu0 0.0
        %8298 = vmatprep.subr.mxu0 0.0
        %8299 = vmatpush1.msra.mxu0 0.0
        %8300 = vmatprep.subr.mxu0 0.0
        %8301 = vmatpush1.msra.mxu0 0.0
        %8302 = vmatprep.subr.mxu0 0.0
        %8303 = vmatpush1.msra.mxu0 0.0
        %8304 = vmatprep.subr.mxu0 0.0
        %8305 = vmatpush1.msra.mxu0 0.0
        %8306 = vmatprep.subr.mxu0 0.0
        %8307 = vmatpush1.msra.mxu0 0.0
        %8308 = vmatprep.subr.mxu0 0.0
        %8309 = vmatpush1.msra.mxu0 0.0
        %8310 = vmatprep.subr.mxu0 0.0
        %8311 = vmatpush1.msra.mxu0 0.0
        %8312 = vmatprep.subr.mxu0 0.0
        %8313 = vmatpush1.msra.mxu0 0.0
        %8314 = vmatprep.subr.mxu0 0.0
        %8315 = vmatpush1.msra.mxu0 0.0
        %8316 = vmatprep.subr.mxu0 0.0
        %8317 = vmatpush1.msra.mxu0 0.0
        %8318 = vmatprep.subr.mxu0 0.0
        %8319 = vmatpush1.msra.mxu0 0.0
        %8320 = vmatprep.subr.mxu0 0.0
        %8321 = vmatpush1.msra.mxu0 0.0
        %8322 = vmatprep.subr.mxu0 0.0
        %8323 = vmatpush1.msra.mxu0 0.0
        %8324 = vmatprep.subr.mxu0 0.0
        %8325 = vmatpush1.msra.mxu0 0.0
        %8326 = vmatprep.mubr.f32.mxu0 0.0
        %8327 = vmatmul.mubr.f32.gmra.mrb[0].mxu0 %v6765
        %v8328 = vpop.f32.mrb[0].mxu0
        %v8329 = vadd.f32 %v8260, %v8328
        %v8330 = vpop.f32.mrb[0].mxu0
        %8331 = vdwg.mxu0
        %s8332 = scalar_lea.vmem %s3, 1376
        %v8333 = vld [vmem:[%s8332] sm:$0xff]
        %v8334 = vld [vmem:[%s8332 + $0x8] sm:$0xff]
        %v8335 = vld [vmem:[%s8332 + $0x10] sm:$0xff]
        %v8336 = vld [vmem:[%s8332 + $0x18] sm:$0xff]
        %s8337 = scalar_lea.vmem %s4, 43
        %v8338 = vld [vmem:[%s8337] sm:$0x1]
        %v8340 = vlaneseq
        %v8341 = vshrl.u32 %v8340, 7
        %v8342 = vsub.s32 0, %v8341
        %v8343 = vrot.slane %v8338, %v8342
        %8345 = vmatprep.subr.mxu0 0.0
        %8346 = vmatpush1.msra.mxu0 %v8333
        %8347 = vmatprep.subr.mxu0 0.0
        %8348 = vmatpush1.msra.mxu0 %v8334
        %8349 = vmatprep.subr.mxu0 0.0
        %8350 = vmatpush1.msra.mxu0 %v8335
        %8351 = vmatprep.subr.mxu0 0.0
        %8352 = vmatpush1.msra.mxu0 %v8336
        %8353 = vmatprep.subr.mxu0 0.0
        %8354 = vmatpush1.msra.mxu0 0.0
        %8355 = vmatprep.subr.mxu0 0.0
        %8356 = vmatpush1.msra.mxu0 0.0
        %8357 = vmatprep.subr.mxu0 0.0
        %8358 = vmatpush1.msra.mxu0 0.0
        %8359 = vmatprep.subr.mxu0 0.0
        %8360 = vmatpush1.msra.mxu0 0.0
        %8361 = vmatprep.subr.mxu0 0.0
        %8362 = vmatpush1.msra.mxu0 0.0
        %8363 = vmatprep.subr.mxu0 0.0
        %8364 = vmatpush1.msra.mxu0 0.0
        %8365 = vmatprep.subr.mxu0 0.0
        %8366 = vmatpush1.msra.mxu0 0.0
        %8367 = vmatprep.subr.mxu0 0.0
        %8368 = vmatpush1.msra.mxu0 0.0
        %8369 = vmatprep.subr.mxu0 0.0
        %8370 = vmatpush1.msra.mxu0 0.0
        %8371 = vmatprep.subr.mxu0 0.0
        %8372 = vmatpush1.msra.mxu0 0.0
        %8373 = vmatprep.subr.mxu0 0.0
        %8374 = vmatpush1.msra.mxu0 0.0
        %8375 = vmatprep.subr.mxu0 0.0
        %8376 = vmatpush1.msra.mxu0 0.0
        %8377 = vmatprep.subr.mxu0 0.0
        %8378 = vmatpush1.msra.mxu0 0.0
        %8379 = vmatprep.subr.mxu0 0.0
        %8380 = vmatpush1.msra.mxu0 0.0
        %8381 = vmatprep.subr.mxu0 0.0
        %8382 = vmatpush1.msra.mxu0 0.0
        %8383 = vmatprep.subr.mxu0 0.0
        %8384 = vmatpush1.msra.mxu0 0.0
        %8385 = vmatprep.subr.mxu0 0.0
        %8386 = vmatpush1.msra.mxu0 0.0
        %8387 = vmatprep.subr.mxu0 0.0
        %8388 = vmatpush1.msra.mxu0 0.0
        %8389 = vmatprep.subr.mxu0 0.0
        %8390 = vmatpush1.msra.mxu0 0.0
        %8391 = vmatprep.subr.mxu0 0.0
        %8392 = vmatpush1.msra.mxu0 0.0
        %8393 = vmatprep.subr.mxu0 0.0
        %8394 = vmatpush1.msra.mxu0 0.0
        %8395 = vmatprep.subr.mxu0 0.0
        %8396 = vmatpush1.msra.mxu0 0.0
        %8397 = vmatprep.subr.mxu0 0.0
        %8398 = vmatpush1.msra.mxu0 0.0
        %8399 = vmatprep.subr.mxu0 0.0
        %8400 = vmatpush1.msra.mxu0 0.0
        %8401 = vmatprep.subr.mxu0 0.0
        %8402 = vmatpush1.msra.mxu0 0.0
        %8403 = vmatprep.subr.mxu0 0.0
        %8404 = vmatpush1.msra.mxu0 0.0
        %8405 = vmatprep.subr.mxu0 0.0
        %8406 = vmatpush1.msra.mxu0 0.0
        %8407 = vmatprep.subr.mxu0 0.0
        %8408 = vmatpush1.msra.mxu0 0.0
        %8409 = vmatprep.mubr.f32.mxu0 0.0
        %8410 = vmatmul.mubr.f32.gmra.mrb[0].mxu0 %v2608
        %v8411 = vpop.f32.mrb[0].mxu0
        %v8412 = vadd.f32 %v8343, %v8411
        %v8413 = vpop.f32.mrb[0].mxu0
        %8414 = vmatprep.mubr.f32.mxu0 0.0
        %8415 = vmatmul.mubr.f32.gmra.mrb[0].mxu0 %v2611
        %v8416 = vpop.f32.mrb[0].mxu0
        %v8417 = vadd.f32 %v8343, %v8416
        %v8418 = vpop.f32.mrb[0].mxu0
        %8419 = vdwg.mxu0
        %s8420 = scalar_lea.vmem %s3, 1504
        %v8421 = vld [vmem:[%s8420] sm:$0xff]
        %v8422 = vld [vmem:[%s8420 + $0x8] sm:$0xff]
        %v8423 = vld [vmem:[%s8420 + $0x10] sm:$0xff]
        %v8424 = vld [vmem:[%s8420 + $0x18] sm:$0xff]
        %s8425 = scalar_lea.vmem %s4, 47
        %v8426 = vld [vmem:[%s8425] sm:$0x1]
        %v8428 = vlaneseq
        %v8429 = vshrl.u32 %v8428, 7
        %v8430 = vsub.s32 0, %v8429
        %v8431 = vrot.slane %v8426, %v8430
        %8433 = vmatprep.subr.mxu0 0.0
        %8434 = vmatpush1.msra.mxu0 %v8421
        %8435 = vmatprep.subr.mxu0 0.0
        %8436 = vmatpush1.msra.mxu0 %v8422
        %8437 = vmatprep.subr.mxu0 0.0
        %8438 = vmatpush1.msra.mxu0 %v8423
        %8439 = vmatprep.subr.mxu0 0.0
        %8440 = vmatpush1.msra.mxu0 %v8424
        %8441 = vmatprep.subr.mxu0 0.0
        %8442 = vmatpush1.msra.mxu0 0.0
        %8443 = vmatprep.subr.mxu0 0.0
        %8444 = vmatpush1.msra.mxu0 0.0
        %8445 = vmatprep.subr.mxu0 0.0
        %8446 = vmatpush1.msra.mxu0 0.0
        %8447 = vmatprep.subr.mxu0 0.0
        %8448 = vmatpush1.msra.mxu0 0.0
        %8449 = vmatprep.subr.mxu0 0.0
        %8450 = vmatpush1.msra.mxu0 0.0
        %8451 = vmatprep.subr.mxu0 0.0
        %8452 = vmatpush1.msra.mxu0 0.0
        %8453 = vmatprep.subr.mxu0 0.0
        %8454 = vmatpush1.msra.mxu0 0.0
        %8455 = vmatprep.subr.mxu0 0.0
        %8456 = vmatpush1.msra.mxu0 0.0
        %8457 = vmatprep.subr.mxu0 0.0
        %8458 = vmatpush1.msra.mxu0 0.0
        %8459 = vmatprep.subr.mxu0 0.0
        %8460 = vmatpush1.msra.mxu0 0.0
        %8461 = vmatprep.subr.mxu0 0.0
        %8462 = vmatpush1.msra.mxu0 0.0
        %8463 = vmatprep.subr.mxu0 0.0
        %8464 = vmatpush1.msra.mxu0 0.0
        %8465 = vmatprep.subr.mxu0 0.0
        %8466 = vmatpush1.msra.mxu0 0.0
        %8467 = vmatprep.subr.mxu0 0.0
        %8468 = vmatpush1.msra.mxu0 0.0
        %8469 = vmatprep.subr.mxu0 0.0
        %8470 = vmatpush1.msra.mxu0 0.0
        %8471 = vmatprep.subr.mxu0 0.0
        %8472 = vmatpush1.msra.mxu0 0.0
        %8473 = vmatprep.subr.mxu0 0.0
        %8474 = vmatpush1.msra.mxu0 0.0
        %8475 = vmatprep.subr.mxu0 0.0
        %8476 = vmatpush1.msra.mxu0 0.0
        %8477 = vmatprep.subr.mxu0 0.0
        %8478 = vmatpush1.msra.mxu0 0.0
        %8479 = vmatprep.subr.mxu0 0.0
        %8480 = vmatpush1.msra.mxu0 0.0
        %8481 = vmatprep.subr.mxu0 0.0
        %8482 = vmatpush1.msra.mxu0 0.0
        %8483 = vmatprep.subr.mxu0 0.0
        %8484 = vmatpush1.msra.mxu0 0.0
        %8485 = vmatprep.subr.mxu0 0.0
        %8486 = vmatpush1.msra.mxu0 0.0
        %8487 = vmatprep.subr.mxu0 0.0
        %8488 = vmatpush1.msra.mxu0 0.0
        %8489 = vmatprep.subr.mxu0 0.0
        %8490 = vmatpush1.msra.mxu0 0.0
        %8491 = vmatprep.subr.mxu0 0.0
        %8492 = vmatpush1.msra.mxu0 0.0
        %8493 = vmatprep.subr.mxu0 0.0
        %8494 = vmatpush1.msra.mxu0 0.0
        %8495 = vmatprep.subr.mxu0 0.0
        %8496 = vmatpush1.msra.mxu0 0.0
        %8497 = vmatprep.mubr.f32.mxu0 0.0
        %8498 = vmatmul.mubr.f32.gmra.mrb[0].mxu0 %v2608
        %v8499 = vpop.f32.mrb[0].mxu0
        %v8500 = vadd.f32 %v8431, %v8499
        %v8501 = vpop.f32.mrb[0].mxu0
        %8502 = vmatprep.mubr.f32.mxu0 0.0
        %8503 = vmatmul.mubr.f32.gmra.mrb[0].mxu0 %v2611
        %v8504 = vpop.f32.mrb[0].mxu0
        %v8505 = vadd.f32 %v8431, %v8504
        %v8506 = vpop.f32.mrb[0].mxu0
        %8507 = vdwg.mxu0
        %v8509 = vsel %vm772, %v8329, 0
        %v8512 = vsel %vm772, %v8412, 0
        %v8515 = vsel %vm772, %v8417, 0
        %8517 = vmatprep.subr.mxu0 0.0
        %8518 = vmatpush1.xpose.msra.mxu0 %v8512
        %8519 = vmatprep.subr.mxu0 0.0
        %8520 = vmatpush1.xpose.msra.mxu0 %v8515
        %8521 = vmatprep.subr.mxu0 0.0
        %8522 = vmatpush1.xpose.msra.mxu0 0.0
        %8523 = vmatprep.subr.mxu0 0.0
        %8524 = vmatpush1.xpose.msra.mxu0 0.0
        %8525 = vmatprep.subr.mxu0 0.0
        %8526 = vmatpush1.xpose.msra.mxu0 0.0
        %8527 = vmatprep.subr.mxu0 0.0
        %8528 = vmatpush1.xpose.msra.mxu0 0.0
        %8529 = vmatprep.subr.mxu0 0.0
        %8530 = vmatpush1.xpose.msra.mxu0 0.0
        %8531 = vmatprep.subr.mxu0 0.0
        %8532 = vmatpush1.xpose.msra.mxu0 0.0
        %8533 = vmatprep.subr.mxu0 0.0
        %8534 = vmatpush1.xpose.msra.mxu0 0.0
        %8535 = vmatprep.subr.mxu0 0.0
        %8536 = vmatpush1.xpose.msra.mxu0 0.0
        %8537 = vmatprep.subr.mxu0 0.0
        %8538 = vmatpush1.xpose.msra.mxu0 0.0
        %8539 = vmatprep.subr.mxu0 0.0
        %8540 = vmatpush1.xpose.msra.mxu0 0.0
        %8541 = vmatprep.subr.mxu0 0.0
        %8542 = vmatpush1.xpose.msra.mxu0 0.0
        %8543 = vmatprep.subr.mxu0 0.0
        %8544 = vmatpush1.xpose.msra.mxu0 0.0
        %8545 = vmatprep.subr.mxu0 0.0
        %8546 = vmatpush1.xpose.msra.mxu0 0.0
        %8547 = vmatprep.subr.mxu0 0.0
        %8548 = vmatpush1.xpose.msra.mxu0 0.0
        %8549 = vmatprep.subr.mxu0 0.0
        %8550 = vmatpush1.xpose.msra.mxu0 0.0
        %8551 = vmatprep.subr.mxu0 0.0
        %8552 = vmatpush1.xpose.msra.mxu0 0.0
        %8553 = vmatprep.subr.mxu0 0.0
        %8554 = vmatpush1.xpose.msra.mxu0 0.0
        %8555 = vmatprep.subr.mxu0 0.0
        %8556 = vmatpush1.xpose.msra.mxu0 0.0
        %8557 = vmatprep.subr.mxu0 0.0
        %8558 = vmatpush1.xpose.msra.mxu0 0.0
        %8559 = vmatprep.subr.mxu0 0.0
        %8560 = vmatpush1.xpose.msra.mxu0 0.0
        %8561 = vmatprep.subr.mxu0 0.0
        %8562 = vmatpush1.xpose.msra.mxu0 0.0
        %8563 = vmatprep.subr.mxu0 0.0
        %8564 = vmatpush1.xpose.msra.mxu0 0.0
        %8565 = vmatprep.subr.mxu0 0.0
        %8566 = vmatpush1.xpose.msra.mxu0 0.0
        %8567 = vmatprep.subr.mxu0 0.0
        %8568 = vmatpush1.xpose.msra.mxu0 0.0
        %8569 = vmatprep.subr.mxu0 0.0
        %8570 = vmatpush1.xpose.msra.mxu0 0.0
        %8571 = vmatprep.subr.mxu0 0.0
        %8572 = vmatpush1.xpose.msra.mxu0 0.0
        %8573 = vmatprep.subr.mxu0 0.0
        %8574 = vmatpush1.xpose.msra.mxu0 0.0
        %8575 = vmatprep.subr.mxu0 0.0
        %8576 = vmatpush1.xpose.msra.mxu0 0.0
        %8577 = vmatprep.subr.mxu0 0.0
        %8578 = vmatpush1.xpose.msra.mxu0 0.0
        %8579 = vmatprep.subr.mxu0 0.0
        %8580 = vmatpush1.xpose.msra.mxu0 0.0
        %8581 = vmatprep.mubr.f32.mxu0 0.0
        %8582 = vmatmul.mubr.f32.gmra.mrb[0].mxu0 %v8509
        %v8583 = vpop.f32.mrb[0].mxu0
        %v8584 = vadd.f32 0.0, %v8583
        %v8585 = vpop.f32.mrb[0].mxu0
        %8586 = vdwg.mxu0
        %v8587 = vmul.f32 %v8584, 0.35355338
        %v8588 = vsel %vm2856, %v8587, -inf
        %8589 = vmax.xlane.f32.xlu0 %v8588
        %v8590 = vpop.xlane.xlu0 %8589
        %v8591 = vsub.f32 %v8587, %v8590
        %v8592 = vmul.f32 %v8591, 1.442695
        %v8593 = vpow.pop %v8592
        %v8594 = vsel %vm2856, %v8593, 0.0
        %8595 = vadd.xlane.f32.xlu0 %v8594
        %v8596 = vpop.xlane.xlu0 %8595
        %v8597 = vrcp.pop %v8596
        %v8598 = vmul.f32 %v8593, %v8597
        %v8600 = vsel %vm2856, %v8598, 0
        %8602 = vmatprep.subr.mxu0 0.0
        %8603 = vmatpush1.msra.mxu0 %v8500
        %8604 = vmatprep.subr.mxu0 0.0
        %8605 = vmatpush1.msra.mxu0 %v8505
        %8606 = vmatprep.subr.mxu0 0.0
        %8607 = vmatpush1.msra.mxu0 0.0
        %8608 = vmatprep.subr.mxu0 0.0
        %8609 = vmatpush1.msra.mxu0 0.0
        %8610 = vmatprep.subr.mxu0 0.0
        %8611 = vmatpush1.msra.mxu0 0.0
        %8612 = vmatprep.subr.mxu0 0.0
        %8613 = vmatpush1.msra.mxu0 0.0
        %8614 = vmatprep.subr.mxu0 0.0
        %8615 = vmatpush1.msra.mxu0 0.0
        %8616 = vmatprep.subr.mxu0 0.0
        %8617 = vmatpush1.msra.mxu0 0.0
        %8618 = vmatprep.subr.mxu0 0.0
        %8619 = vmatpush1.msra.mxu0 0.0
        %8620 = vmatprep.subr.mxu0 0.0
        %8621 = vmatpush1.msra.mxu0 0.0
        %8622 = vmatprep.subr.mxu0 0.0
        %8623 = vmatpush1.msra.mxu0 0.0
        %8624 = vmatprep.subr.mxu0 0.0
        %8625 = vmatpush1.msra.mxu0 0.0
        %8626 = vmatprep.subr.mxu0 0.0
        %8627 = vmatpush1.msra.mxu0 0.0
        %8628 = vmatprep.subr.mxu0 0.0
        %8629 = vmatpush1.msra.mxu0 0.0
        %8630 = vmatprep.subr.mxu0 0.0
        %8631 = vmatpush1.msra.mxu0 0.0
        %8632 = vmatprep.subr.mxu0 0.0
        %8633 = vmatpush1.msra.mxu0 0.0
        %8634 = vmatprep.subr.mxu0 0.0
        %8635 = vmatpush1.msra.mxu0 0.0
        %8636 = vmatprep.subr.mxu0 0.0
        %8637 = vmatpush1.msra.mxu0 0.0
        %8638 = vmatprep.subr.mxu0 0.0
        %8639 = vmatpush1.msra.mxu0 0.0
        %8640 = vmatprep.subr.mxu0 0.0
        %8641 = vmatpush1.msra.mxu0 0.0
        %8642 = vmatprep.subr.mxu0 0.0
        %8643 = vmatpush1.msra.mxu0 0.0
        %8644 = vmatprep.subr.mxu0 0.0
        %8645 = vmatpush1.msra.mxu0 0.0
        %8646 = vmatprep.subr.mxu0 0.0
        %8647 = vmatpush1.msra.mxu0 0.0
        %8648 = vmatprep.subr.mxu0 0.0
        %8649 = vmatpush1.msra.mxu0 0.0
        %8650 = vmatprep.subr.mxu0 0.0
        %8651 = vmatpush1.msra.mxu0 0.0
        %8652 = vmatprep.subr.mxu0 0.0
        %8653 = vmatpush1.msra.mxu0 0.0
        %8654 = vmatprep.subr.mxu0 0.0
        %8655 = vmatpush1.msra.mxu0 0.0
        %8656 = vmatprep.subr.mxu0 0.0
        %8657 = vmatpush1.msra.mxu0 0.0
        %8658 = vmatprep.subr.mxu0 0.0
        %8659 = vmatpush1.msra.mxu0 0.0
        %8660 = vmatprep.subr.mxu0 0.0
        %8661 = vmatpush1.msra.mxu0 0.0
        %8662 = vmatprep.subr.mxu0 0.0
        %8663 = vmatpush1.msra.mxu0 0.0
        %8664 = vmatprep.subr.mxu0 0.0
        %8665 = vmatpush1.msra.mxu0 0.0
        %8666 = vmatprep.mubr.f32.mxu0 0.0
        %8667 = vmatmul.mubr.f32.gmra.mrb[0].mxu0 %v8600
        %v8668 = vpop.f32.mrb[0].mxu0
        %v8669 = vadd.f32 0.0, %v8668
        %v8670 = vpop.f32.mrb[0].mxu0
        %8671 = vdwg.mxu0
        %s8672 = scalar_lea.vmem %s5, 120
        %v8673 = vld [vmem:[%s8672] sm:$0xff]
        %v8675 = vsel %vm772, %v8669, 0
        %8677 = vmatprep.subr.mxu0 0.0
        %8678 = vmatpush1.msra.mxu0 %v8673
        %8679 = vmatprep.subr.mxu0 0.0
        %8680 = vmatpush1.msra.mxu0 0.0
        %8681 = vmatprep.subr.mxu0 0.0
        %8682 = vmatpush1.msra.mxu0 0.0
        %8683 = vmatprep.subr.mxu0 0.0
        %8684 = vmatpush1.msra.mxu0 0.0
        %8685 = vmatprep.subr.mxu0 0.0
        %8686 = vmatpush1.msra.mxu0 0.0
        %8687 = vmatprep.subr.mxu0 0.0
        %8688 = vmatpush1.msra.mxu0 0.0
        %8689 = vmatprep.subr.mxu0 0.0
        %8690 = vmatpush1.msra.mxu0 0.0
        %8691 = vmatprep.subr.mxu0 0.0
        %8692 = vmatpush1.msra.mxu0 0.0
        %8693 = vmatprep.subr.mxu0 0.0
        %8694 = vmatpush1.msra.mxu0 0.0
        %8695 = vmatprep.subr.mxu0 0.0
        %8696 = vmatpush1.msra.mxu0 0.0
        %8697 = vmatprep.subr.mxu0 0.0
        %8698 = vmatpush1.msra.mxu0 0.0
        %8699 = vmatprep.subr.mxu0 0.0
        %8700 = vmatpush1.msra.mxu0 0.0
        %8701 = vmatprep.subr.mxu0 0.0
        %8702 = vmatpush1.msra.mxu0 0.0
        %8703 = vmatprep.subr.mxu0 0.0
        %8704 = vmatpush1.msra.mxu0 0.0
        %8705 = vmatprep.subr.mxu0 0.0
        %8706 = vmatpush1.msra.mxu0 0.0
        %8707 = vmatprep.subr.mxu0 0.0
        %8708 = vmatpush1.msra.mxu0 0.0
        %8709 = vmatprep.subr.mxu0 0.0
        %8710 = vmatpush1.msra.mxu0 0.0
        %8711 = vmatprep.subr.mxu0 0.0
        %8712 = vmatpush1.msra.mxu0 0.0
        %8713 = vmatprep.subr.mxu0 0.0
        %8714 = vmatpush1.msra.mxu0 0.0
        %8715 = vmatprep.subr.mxu0 0.0
        %8716 = vmatpush1.msra.mxu0 0.0
        %8717 = vmatprep.subr.mxu0 0.0
        %8718 = vmatpush1.msra.mxu0 0.0
        %8719 = vmatprep.subr.mxu0 0.0
        %8720 = vmatpush1.msra.mxu0 0.0
        %8721 = vmatprep.subr.mxu0 0.0
        %8722 = vmatpush1.msra.mxu0 0.0
        %8723 = vmatprep.subr.mxu0 0.0
        %8724 = vmatpush1.msra.mxu0 0.0
        %8725 = vmatprep.subr.mxu0 0.0
        %8726 = vmatpush1.msra.mxu0 0.0
        %8727 = vmatprep.subr.mxu0 0.0
        %8728 = vmatpush1.msra.mxu0 0.0
        %8729 = vmatprep.subr.mxu0 0.0
        %8730 = vmatpush1.msra.mxu0 0.0
        %8731 = vmatprep.subr.mxu0 0.0
        %8732 = vmatpush1.msra.mxu0 0.0
        %8733 = vmatprep.subr.mxu0 0.0
        %8734 = vmatpush1.msra.mxu0 0.0
        %8735 = vmatprep.subr.mxu0 0.0
        %8736 = vmatpush1.msra.mxu0 0.0
        %8737 = vmatprep.subr.mxu0 0.0
        %8738 = vmatpush1.msra.mxu0 0.0
        %8739 = vmatprep.subr.mxu0 0.0
        %8740 = vmatpush1.msra.mxu0 0.0
        %8741 = vmatprep.mubr.f32.mxu0 0.0
        %8742 = vmatmul.mubr.f32.gmra.mrb[0].mxu0 %v8675
        %v8743 = vpop.f32.mrb[0].mxu0
        %v8744 = vadd.f32 0.0, %v8743
        %v8745 = vpop.f32.mrb[0].mxu0
        %8746 = vdwg.mxu0
        %v8747 = vadd.f32 %v8248, %v8744
        %s8748 = scalar_lea.vmem %s6, 3
        %v8749 = vld [vmem:[%s8748] sm:$0x1]
        %v8751 = vlaneseq
        %v8752 = vshrl.u32 %v8751, 7
        %v8753 = vsub.s32 0, %v8752
        %v8754 = vrot.slane %v8749, %v8753
        %v8756 = vadd.f32 %v8747, %v8754
        %v8757 = vadd.f32 %v6750, %v8756
        %s8758 = scalar_lea.vmem %s11, 4
        %v8759 = vld [vmem:[%s8758] sm:$0x1]
        %s8760 = scalar_lea.vmem %s12, 4
        %v8761 = vld [vmem:[%s8760] sm:$0x1]
        %v8762 = vsel %vm532, %v8757, 0.0
        %8763 = vadd.xlane.f32.xlu0 %v8762
        %v8764 = vpop.xlane.xlu0 %8763
        %v8765 = vmul.f32 %v8764, %v2483
        %v8766 = vsub.f32 %v8757, %v8765
        %v8767 = vmul.f32 %v8766, %v8766
        %v8768 = vsel %vm532, %v8767, 0.0
        %8769 = vadd.xlane.f32.xlu0 %v8768
        %v8770 = vpop.xlane.xlu0 %8769
        %v8771 = vmul.f32 %v8770, %v2483
        %v8772 = vadd.f32 %v8771, 1e-05
        %v8773 = vrsqrt.pop %v8772
        %v8774 = vmul.f32 %v8766, %v8773
        %v8776 = vlaneseq
        %v8777 = vshrl.u32 %v8776, 7
        %v8778 = vsub.s32 0, %v8777
        %v8779 = vrot.slane %v8759, %v8778
        %v8781 = vmul.f32 %v8774, %v8779
        %v8783 = vlaneseq
        %v8784 = vshrl.u32 %v8783, 7
        %v8785 = vsub.s32 0, %v8784
        %v8786 = vrot.slane %v8761, %v8785
        %v8788 = vadd.f32 %v8781, %v8786
        %s8789 = scalar_lea.vmem %s7, 32
        %v8790 = vld [vmem:[%s8789] sm:$0xff]
        %v8791 = vld [vmem:[%s8789 + $0x8] sm:$0xff]
        %v8792 = vld [vmem:[%s8789 + $0x10] sm:$0xff]
        %v8793 = vld [vmem:[%s8789 + $0x18] sm:$0xff]
        %s8794 = scalar_lea.vmem %s8, 1
        %v8795 = vld [vmem:[%s8794] sm:$0x1]
        %v8797 = vlaneseq
        %v8798 = vshrl.u32 %v8797, 7
        %v8799 = vsub.s32 0, %v8798
        %v8800 = vrot.slane %v8795, %v8799
        %v8803 = vsel %vm532, %v8788, 0
        %8805 = vmatprep.subr.mxu0 0.0
        %8806 = vmatpush1.msra.mxu0 %v8790
        %8807 = vmatprep.subr.mxu0 0.0
        %8808 = vmatpush1.msra.mxu0 %v8791
        %8809 = vmatprep.subr.mxu0 0.0
        %8810 = vmatpush1.msra.mxu0 %v8792
        %8811 = vmatprep.subr.mxu0 0.0
        %8812 = vmatpush1.msra.mxu0 %v8793
        %8813 = vmatprep.subr.mxu0 0.0
        %8814 = vmatpush1.msra.mxu0 0.0
        %8815 = vmatprep.subr.mxu0 0.0
        %8816 = vmatpush1.msra.mxu0 0.0
        %8817 = vmatprep.subr.mxu0 0.0
        %8818 = vmatpush1.msra.mxu0 0.0
        %8819 = vmatprep.subr.mxu0 0.0
        %8820 = vmatpush1.msra.mxu0 0.0
        %8821 = vmatprep.subr.mxu0 0.0
        %8822 = vmatpush1.msra.mxu0 0.0
        %8823 = vmatprep.subr.mxu0 0.0
        %8824 = vmatpush1.msra.mxu0 0.0
        %8825 = vmatprep.subr.mxu0 0.0
        %8826 = vmatpush1.msra.mxu0 0.0
        %8827 = vmatprep.subr.mxu0 0.0
        %8828 = vmatpush1.msra.mxu0 0.0
        %8829 = vmatprep.subr.mxu0 0.0
        %8830 = vmatpush1.msra.mxu0 0.0
        %8831 = vmatprep.subr.mxu0 0.0
        %8832 = vmatpush1.msra.mxu0 0.0
        %8833 = vmatprep.subr.mxu0 0.0
        %8834 = vmatpush1.msra.mxu0 0.0
        %8835 = vmatprep.subr.mxu0 0.0
        %8836 = vmatpush1.msra.mxu0 0.0
        %8837 = vmatprep.subr.mxu0 0.0
        %8838 = vmatpush1.msra.mxu0 0.0
        %8839 = vmatprep.subr.mxu0 0.0
        %8840 = vmatpush1.msra.mxu0 0.0
        %8841 = vmatprep.subr.mxu0 0.0
        %8842 = vmatpush1.msra.mxu0 0.0
        %8843 = vmatprep.subr.mxu0 0.0
        %8844 = vmatpush1.msra.mxu0 0.0
        %8845 = vmatprep.subr.mxu0 0.0
        %8846 = vmatpush1.msra.mxu0 0.0
        %8847 = vmatprep.subr.mxu0 0.0
        %8848 = vmatpush1.msra.mxu0 0.0
        %8849 = vmatprep.subr.mxu0 0.0
        %8850 = vmatpush1.msra.mxu0 0.0
        %8851 = vmatprep.subr.mxu0 0.0
        %8852 = vmatpush1.msra.mxu0 0.0
        %8853 = vmatprep.subr.mxu0 0.0
        %8854 = vmatpush1.msra.mxu0 0.0
        %8855 = vmatprep.subr.mxu0 0.0
        %8856 = vmatpush1.msra.mxu0 0.0
        %8857 = vmatprep.subr.mxu0 0.0
        %8858 = vmatpush1.msra.mxu0 0.0
        %8859 = vmatprep.subr.mxu0 0.0
        %8860 = vmatpush1.msra.mxu0 0.0
        %8861 = vmatprep.subr.mxu0 0.0
        %8862 = vmatpush1.msra.mxu0 0.0
        %8863 = vmatprep.subr.mxu0 0.0
        %8864 = vmatpush1.msra.mxu0 0.0
        %8865 = vmatprep.subr.mxu0 0.0
        %8866 = vmatpush1.msra.mxu0 0.0
        %8867 = vmatprep.subr.mxu0 0.0
        %8868 = vmatpush1.msra.mxu0 0.0
        %8869 = vmatprep.mubr.f32.mxu0 0.0
        %8870 = vmatmul.mubr.f32.gmra.mrb[0].mxu0 %v8803
        %v8871 = vpop.f32.mrb[0].mxu0
        %v8872 = vadd.f32 %v8800, %v8871
        %v8873 = vpop.f32.mrb[0].mxu0
        %8874 = vdwg.mxu0
        %vm8875 = vcmp.gt.f32.partialorder %v8872, 0.0
        %v8876 = vmul.f32 %v8872, 0.01
        %v8877 = vsel %vm8875, %v8872, %v8876
        %s8878 = scalar_lea.vmem %s9, 64
        %v8879 = vld [vmem:[%s8878] sm:$0xff]
        %v8880 = vld [vmem:[%s8878 + $0x8] sm:$0xff]
        %v8881 = vld [vmem:[%s8878 + $0x10] sm:$0xff]
        %v8882 = vld [vmem:[%s8878 + $0x18] sm:$0xff]
        %v8883 = vld [vmem:[%s8878 + $0x20] sm:$0xff]
        %v8884 = vld [vmem:[%s8878 + $0x28] sm:$0xff]
        %v8885 = vld [vmem:[%s8878 + $0x30] sm:$0xff]
        %v8886 = vld [vmem:[%s8878 + $0x38] sm:$0xff]
        %s8887 = scalar_lea.vmem %s10, 1
        %v8888 = vld [vmem:[%s8887] sm:$0x1]
        %v8890 = vlaneseq
        %v8891 = vshrl.u32 %v8890, 7
        %v8892 = vsub.s32 0, %v8891
        %v8893 = vrot.slane %v8888, %v8892
        %v8896 = vsel %vm4655, %v8877, 0
        %8898 = vmatprep.subr.mxu0 0.0
        %8899 = vmatpush1.msra.mxu0 %v8879
        %8900 = vmatprep.subr.mxu0 0.0
        %8901 = vmatpush1.msra.mxu0 %v8880
        %8902 = vmatprep.subr.mxu0 0.0
        %8903 = vmatpush1.msra.mxu0 %v8881
        %8904 = vmatprep.subr.mxu0 0.0
        %8905 = vmatpush1.msra.mxu0 %v8882
        %8906 = vmatprep.subr.mxu0 0.0
        %8907 = vmatpush1.msra.mxu0 %v8883
        %8908 = vmatprep.subr.mxu0 0.0
        %8909 = vmatpush1.msra.mxu0 %v8884
        %8910 = vmatprep.subr.mxu0 0.0
        %8911 = vmatpush1.msra.mxu0 %v8885
        %8912 = vmatprep.subr.mxu0 0.0
        %8913 = vmatpush1.msra.mxu0 %v8886
        %8914 = vmatprep.subr.mxu0 0.0
        %8915 = vmatpush1.msra.mxu0 0.0
        %8916 = vmatprep.subr.mxu0 0.0
        %8917 = vmatpush1.msra.mxu0 0.0
        %8918 = vmatprep.subr.mxu0 0.0
        %8919 = vmatpush1.msra.mxu0 0.0
        %8920 = vmatprep.subr.mxu0 0.0
        %8921 = vmatpush1.msra.mxu0 0.0
        %8922 = vmatprep.subr.mxu0 0.0
        %8923 = vmatpush1.msra.mxu0 0.0
        %8924 = vmatprep.subr.mxu0 0.0
        %8925 = vmatpush1.msra.mxu0 0.0
        %8926 = vmatprep.subr.mxu0 0.0
        %8927 = vmatpush1.msra.mxu0 0.0
        %8928 = vmatprep.subr.mxu0 0.0
        %8929 = vmatpush1.msra.mxu0 0.0
        %8930 = vmatprep.subr.mxu0 0.0
        %8931 = vmatpush1.msra.mxu0 0.0
        %8932 = vmatprep.subr.mxu0 0.0
        %8933 = vmatpush1.msra.mxu0 0.0
        %8934 = vmatprep.subr.mxu0 0.0
        %8935 = vmatpush1.msra.mxu0 0.0
        %8936 = vmatprep.subr.mxu0 0.0
        %8937 = vmatpush1.msra.mxu0 0.0
        %8938 = vmatprep.subr.mxu0 0.0
        %8939 = vmatpush1.msra.mxu0 0.0
        %8940 = vmatprep.subr.mxu0 0.0
        %8941 = vmatpush1.msra.mxu0 0.0
        %8942 = vmatprep.subr.mxu0 0.0
        %8943 = vmatpush1.msra.mxu0 0.0
        %8944 = vmatprep.subr.mxu0 0.0
        %8945 = vmatpush1.msra.mxu0 0.0
        %8946 = vmatprep.subr.mxu0 0.0
        %8947 = vmatpush1.msra.mxu0 0.0
        %8948 = vmatprep.subr.mxu0 0.0
        %8949 = vmatpush1.msra.mxu0 0.0
        %8950 = vmatprep.subr.mxu0 0.0
        %8951 = vmatpush1.msra.mxu0 0.0
        %8952 = vmatprep.subr.mxu0 0.0
        %8953 = vmatpush1.msra.mxu0 0.0
        %8954 = vmatprep.subr.mxu0 0.0
        %8955 = vmatpush1.msra.mxu0 0.0
        %8956 = vmatprep.subr.mxu0 0.0
        %8957 = vmatpush1.msra.mxu0 0.0
        %8958 = vmatprep.subr.mxu0 0.0
        %8959 = vmatpush1.msra.mxu0 0.0
        %8960 = vmatprep.subr.mxu0 0.0
        %8961 = vmatpush1.msra.mxu0 0.0
        %8962 = vmatprep.mubr.f32.mxu0 0.0
        %8963 = vmatmul.mubr.f32.gmra.mrb[0].mxu0 %v8896
        %v8964 = vpop.f32.mrb[0].mxu0
        %v8965 = vadd.f32 %v8893, %v8964
        %v8966 = vpop.f32.mrb[0].mxu0
        %8967 = vdwg.mxu0
        %v8968 = vadd.f32 %v8788, %v8965
        %s8969 = scalar_lea.vmem %s11, 5
        %v8970 = vld [vmem:[%s8969] sm:$0x1]
        %s8971 = scalar_lea.vmem %s12, 5
        %v8972 = vld [vmem:[%s8971] sm:$0x1]
        %v8973 = vsel %vm532, %v8968, 0.0
        %8974 = vadd.xlane.f32.xlu0 %v8973
        %v8975 = vpop.xlane.xlu0 %8974
        %v8976 = vmul.f32 %v8975, %v2483
        %v8977 = vsub.f32 %v8968, %v8976
        %v8978 = vmul.f32 %v8977, %v8977
        %v8979 = vsel %vm532, %v8978, 0.0
        %8980 = vadd.xlane.f32.xlu0 %v8979
        %v8981 = vpop.xlane.xlu0 %8980
        %v8982 = vmul.f32 %v8981, %v2483
        %v8983 = vadd.f32 %v8982, 1e-05
        %v8984 = vrsqrt.pop %v8983
        %v8985 = vmul.f32 %v8977, %v8984
        %v8987 = vlaneseq
        %v8988 = vshrl.u32 %v8987, 7
        %v8989 = vsub.s32 0, %v8988
        %v8990 = vrot.slane %v8970, %v8989
        %v8992 = vmul.f32 %v8985, %v8990
        %v8994 = vlaneseq
        %v8995 = vshrl.u32 %v8994, 7
        %v8996 = vsub.s32 0, %v8995
        %v8997 = vrot.slane %v8972, %v8996
        %v8999 = vadd.f32 %v8992, %v8997
        %v9000 = vld [vmem:[%s13] sm:$0xff]
        %v9001 = vld [vmem:[%s13 + $0x8] sm:$0xff]
        %v9002 = vld [vmem:[%s13 + $0x10] sm:$0xff]
        %v9003 = vld [vmem:[%s13 + $0x18] sm:$0xff]
        %v9004 = vld [vmem:[%s14] sm:$0x1]
        %v9006 = vlaneseq
        %v9007 = vshrl.u32 %v9006, 7
        %v9008 = vsub.s32 0, %v9007
        %v9009 = vrot.slane %v9004, %v9008
        %v9012 = vsel %vm532, %v8999, 0
        %9014 = vmatprep.subr.mxu0 0.0
        %9015 = vmatpush1.msra.mxu0 %v9000
        %9016 = vmatprep.subr.mxu0 0.0
        %9017 = vmatpush1.msra.mxu0 %v9001
        %9018 = vmatprep.subr.mxu0 0.0
        %9019 = vmatpush1.msra.mxu0 %v9002
        %9020 = vmatprep.subr.mxu0 0.0
        %9021 = vmatpush1.msra.mxu0 %v9003
        %9022 = vmatprep.subr.mxu0 0.0
        %9023 = vmatpush1.msra.mxu0 0.0
        %9024 = vmatprep.subr.mxu0 0.0
        %9025 = vmatpush1.msra.mxu0 0.0
        %9026 = vmatprep.subr.mxu0 0.0
        %9027 = vmatpush1.msra.mxu0 0.0
        %9028 = vmatprep.subr.mxu0 0.0
        %9029 = vmatpush1.msra.mxu0 0.0
        %9030 = vmatprep.subr.mxu0 0.0
        %9031 = vmatpush1.msra.mxu0 0.0
        %9032 = vmatprep.subr.mxu0 0.0
        %9033 = vmatpush1.msra.mxu0 0.0
        %9034 = vmatprep.subr.mxu0 0.0
        %9035 = vmatpush1.msra.mxu0 0.0
        %9036 = vmatprep.subr.mxu0 0.0
        %9037 = vmatpush1.msra.mxu0 0.0
        %9038 = vmatprep.subr.mxu0 0.0
        %9039 = vmatpush1.msra.mxu0 0.0
        %9040 = vmatprep.subr.mxu0 0.0
        %9041 = vmatpush1.msra.mxu0 0.0
        %9042 = vmatprep.subr.mxu0 0.0
        %9043 = vmatpush1.msra.mxu0 0.0
        %9044 = vmatprep.subr.mxu0 0.0
        %9045 = vmatpush1.msra.mxu0 0.0
        %9046 = vmatprep.subr.mxu0 0.0
        %9047 = vmatpush1.msra.mxu0 0.0
        %9048 = vmatprep.subr.mxu0 0.0
        %9049 = vmatpush1.msra.mxu0 0.0
        %9050 = vmatprep.subr.mxu0 0.0
        %9051 = vmatpush1.msra.mxu0 0.0
        %9052 = vmatprep.subr.mxu0 0.0
        %9053 = vmatpush1.msra.mxu0 0.0
        %9054 = vmatprep.subr.mxu0 0.0
        %9055 = vmatpush1.msra.mxu0 0.0
        %9056 = vmatprep.subr.mxu0 0.0
        %9057 = vmatpush1.msra.mxu0 0.0
        %9058 = vmatprep.subr.mxu0 0.0
        %9059 = vmatpush1.msra.mxu0 0.0
        %9060 = vmatprep.subr.mxu0 0.0
        %9061 = vmatpush1.msra.mxu0 0.0
        %9062 = vmatprep.subr.mxu0 0.0
        %9063 = vmatpush1.msra.mxu0 0.0
        %9064 = vmatprep.subr.mxu0 0.0
        %9065 = vmatpush1.msra.mxu0 0.0
        %9066 = vmatprep.subr.mxu0 0.0
        %9067 = vmatpush1.msra.mxu0 0.0
        %9068 = vmatprep.subr.mxu0 0.0
        %9069 = vmatpush1.msra.mxu0 0.0
        %9070 = vmatprep.subr.mxu0 0.0
        %9071 = vmatpush1.msra.mxu0 0.0
        %9072 = vmatprep.subr.mxu0 0.0
        %9073 = vmatpush1.msra.mxu0 0.0
        %9074 = vmatprep.subr.mxu0 0.0
        %9075 = vmatpush1.msra.mxu0 0.0
        %9076 = vmatprep.subr.mxu0 0.0
        %9077 = vmatpush1.msra.mxu0 0.0
        %9078 = vmatprep.mubr.f32.mxu0 0.0
        %9079 = vmatmul.mubr.f32.gmra.mrb[0].mxu0 %v9012
        %v9080 = vpop.f32.mrb[0].mxu0
        %v9081 = vadd.f32 %v9009, %v9080
        %v9082 = vpop.f32.mrb[0].mxu0
        %9083 = vdwg.mxu0
        %9084 = vst.msk [vmem:[%s500] sm:$0xff] %vm4655, %v9081
        %s9085 = sand.u32 %s362, 1
        %s9086 = scalar_lea.sflag [#allocation3], %s9085
        %s9087 = sand.u32 %s362, 1
        %s9088 = smul.addr %s9087, 8
        %s9089 = scalar_lea.vmem [#allocation2], %s9088
        // Predicated region
        $region81: #{tpu_custom_call.1} parent=79 // pred_check
          %p9090 = pneg %p372
        $region82: #{tpu_custom_call.1} parent=79 // pred_check_branch
          %9092 = sbr.rel (%p9090) target = $region84
        $region83: #{tpu_custom_call.1} parent=79 // pred_region
          %s9094 = ssub.s32 128, 128
          %9095 = vsyncadd %s9086, %s9094
          %s9096 = smul.addr %s29, 128
          %s9097 = scalar_lea.hbm %s15, %s9096
          %s9099 = sshll.u32 %s9089, 4
          %s9100 = int_to_ptr.vmem [resolvable:$true] %s9099
          %9102 = dma.vmem_to_hbm [thread:$0]  %s9100, 128, %s9097, %s9086
        $region84: #{tpu_custom_call.1} parent=79 // pred_fallthru
          _
      $region80: #{tpu_custom_call.1} parent=5 // pred_fallthru
        _
      %p9103 = scmp.le.s32.totalorder 2, %s24
      // Predicated region
      $region85: #{tpu_custom_call.1} parent=5 // pred_check
        %p9104 = pneg %p9103
      $region86: #{tpu_custom_call.1} parent=5 // pred_check_branch
        %9106 = sbr.rel (%p9104) target = $region88
      $region87: #{tpu_custom_call.1} parent=5 // pred_region
        %s9107 = ssub.s32 %s24, 2
        // Predicated region
        $region89: #{tpu_custom_call.1} parent=87 // pred_check
          %p9108 = pneg %p378
        $region90: #{tpu_custom_call.1} parent=87 // pred_check_branch
          %9110 = sbr.rel (%p9108) target = $region92
        $region91: #{tpu_custom_call.1} parent=87 // pred_region
          %s9111 = sand.u32 %s363, 1
          %s9112 = scalar_lea.sflag [#allocation3], %s9111
          %s9113 = sand.u32 %s363, 1
          %s9114 = smul.addr %s9113, 8
          %s9115 = scalar_lea.vmem [#allocation2], %s9114
          %9116 = dma.done %s9112, 128
        $region92: #{tpu_custom_call.1} parent=87 // pred_fallthru
          _
      $region88: #{tpu_custom_call.1} parent=5 // pred_fallthru
        _
    $region6: #{tpu_custom_call.1} parent=1 // loop_footer
      %s28 = sadd.s32 1, %s24
    $region7: #{tpu_custom_call.1} parent=1 // loop_footer_branch
      %23 = sbr.rel target = $region3
    $region8: #{tpu_custom_call.1} parent=1 // loop_exit
      _
    %9117 = vsyncpa [#allocation3], 1
    %s9118 = scalar_lea.sflag [#allocation3], 1
    %9119 = vsyncpa %s9118, 1

</llo_original>
